<compile_context>
chip_gen: v5e
topology: v5e:2x2
jax: 0.10.0
libtpu: 0.0.40
codegen_flags: <defaults>
</compile_context>

<pallas_src>
import itertools

import jax
import jax.numpy as jnp
from jax.experimental import pallas as pl
from jax.experimental.pallas import tpu as pltpu


def _round_up(x, m):
    return ((x + m - 1) // m) * m


# ---------------------------------------------------------------------------
# Pallas kernel 1: fused tiled matmul + bias + activation (MXU hot path)
# ---------------------------------------------------------------------------
def _make_matmul_kernel(act):
    def kernel(a_ref, b_ref, bias_ref, o_ref, acc_ref):
        @pl.when(pl.program_id(2) == 0)
        def _():
            acc_ref[...] = jnp.zeros_like(acc_ref)

        acc_ref[...] += jnp.dot(a_ref[...], b_ref[...],
                                preferred_element_type=jnp.float32)

        @pl.when(pl.program_id(2) == pl.num_programs(2) - 1)
        def _():
            r = acc_ref[...] + bias_ref[...]
            if act == "relu":
                r = jnp.maximum(r, 0.0)
            elif act == "sigmoid":
                r = jax.nn.sigmoid(r)
            o_ref[...] = r.astype(o_ref.dtype)

    return kernel


def _pick_tiles(M, K, N):
    # Output rows.
    tm = 256 if M >= 256 else _round_up(M, 8)
    # Output cols (lane dim): keep a multiple of 128.
    if N <= 256:
        tn = _round_up(N, 128)
    else:
        tn = 256 if N % 256 == 0 else 128
    # Contraction dim: prefer big tiles but avoid over-padding K.
    if K <= 512:
        tk = _round_up(K, 128)
    elif K % 512 == 0:
        tk = 512
    elif K % 256 == 0:
        tk = 256
    else:
        tk = 128
    return tm, tn, tk


def matmul_bias_act(a, b, bias=None, act="none"):
    """a: (M, K), b: (K, N) -> act(a @ b + bias), f32 out, bf16 MXU inputs."""
    M, K = a.shape
    K2, N = b.shape
    assert K == K2
    tm, tn, tk = _pick_tiles(M, K, N)
    Mp, Kp, Np = _round_up(M, tm), _round_up(K, tk), _round_up(N, tn)

    a_p = jnp.pad(a.astype(jnp.bfloat16), ((0, Mp - M), (0, Kp - K)))
    b_p = jnp.pad(b.astype(jnp.bfloat16), ((0, Kp - K), (0, Np - N)))
    if bias is None:
        bias = jnp.zeros((N,), jnp.float32)
    bias_p = jnp.pad(bias.astype(jnp.float32), (0, Np - N)).reshape(1, Np)

    out = pl.pallas_call(
        _make_matmul_kernel(act),
        out_shape=jax.ShapeDtypeStruct((Mp, Np), jnp.float32),
        grid_spec=pltpu.PrefetchScalarGridSpec(
            num_scalar_prefetch=0,
            grid=(Mp // tm, Np // tn, Kp // tk),
            in_specs=[pl.BlockSpec((tm, tk), lambda i, j, k: (i, k)),
                      pl.BlockSpec((tk, tn), lambda i, j, k: (k, j)),
                      pl.BlockSpec((1, tn), lambda i, j, k: (0, j))],
            out_specs=pl.BlockSpec((tm, tn), lambda i, j, k: (i, j)),
            scratch_shapes=[pltpu.VMEM((tm, tn), jnp.float32)]),
        compiler_params=pltpu.CompilerParams(
            dimension_semantics=("parallel", "parallel", "arbitrary")),
    )(a_p, b_p, bias_p)
    return out[:M, :N]


# ---------------------------------------------------------------------------
# Pallas kernel 2: 3x3/s2 max-pool as row-tiled elementwise max over 9 views
# (no stacked (K, M, C) HBM tensor, pipelined over row blocks)
# ---------------------------------------------------------------------------
def _maxpool9_kernel(*refs):
    o_ref = refs[-1]
    m = refs[0][...]
    for r in refs[1:-1]:
        m = jnp.maximum(m, r[...])
    o_ref[...] = m


def maxpool_3x3_s2(x):
    N, H, W, C = x.shape
    k, s = 3, 2
    Ho = (H - k) // s + 1
    Wo = (W - k) // s + 1
    views = []
    for kh in range(k):
        for kw in range(k):
            v = x[:, kh:kh + (Ho - 1) * s + 1:s,
                  kw:kw + (Wo - 1) * s + 1:s, :]
            views.append(v.reshape(N * Ho * Wo, C))
    M = N * Ho * Wo
    Cp = _round_up(C, 128)
    tm = min(512, _round_up(M, 8))
    Mp = _round_up(M, tm)
    views_p = [jnp.pad(v, ((0, Mp - M), (0, Cp - C))) for v in views]
    out = pl.pallas_call(
        _maxpool9_kernel,
        out_shape=jax.ShapeDtypeStruct((Mp, Cp), jnp.float32),
        grid=(Mp // tm,),
        in_specs=[pl.BlockSpec((tm, Cp), lambda i: (i, 0))] * len(views_p),
        out_specs=pl.BlockSpec((tm, Cp), lambda i: (i, 0)),
        compiler_params=pltpu.CompilerParams(dimension_semantics=("parallel",)),
    )(*views_p)
    return out[:M, :C].reshape(N, Ho, Wo, C)


# ---------------------------------------------------------------------------
# Glue: convolution via im2col (bf16) + fused Pallas matmul; adaptive avg pool
# via a pooling-matrix matmul through the same Pallas kernel.
# ---------------------------------------------------------------------------
def conv2d_bias_act(x, w, b, stride, padding, act="relu"):
    """x: (N, H, W, Cin) NHWC; w: (Cout, Cin, KH, KW) (PyTorch layout)."""
    N, H, W, Cin = x.shape
    Cout, Cin2, KH, KW = w.shape
    assert Cin == Cin2
    Ho = (H + 2 * padding - KH) // stride + 1
    Wo = (W + 2 * padding - KW) // stride + 1
    xb = x.astype(jnp.bfloat16)   # halve HBM traffic of the im2col patches
    if KH == 1 and KW == 1 and stride == 1 and padding == 0:
        a = xb.reshape(N * H * W, Cin)
    else:
        xp = jnp.pad(xb, ((0, 0), (padding, padding), (padding, padding), (0, 0)))
        cols = []
        for kh in range(KH):
            for kw in range(KW):
                cols.append(xp[:, kh:kh + (Ho - 1) * stride + 1:stride,
                               kw:kw + (Wo - 1) * stride + 1:stride, :])
        a = jnp.concatenate(cols, axis=-1).reshape(N * Ho * Wo, KH * KW * Cin)
    wt = jnp.transpose(w, (2, 3, 1, 0)).reshape(KH * KW * Cin, Cout)
    out = matmul_bias_act(a, wt, b, act=act)
    return out.reshape(N, Ho, Wo, Cout)


def adaptive_avg_pool_6x6(x, out_size=6):
    """Exact PyTorch AdaptiveAvgPool2d((6,6)) semantics, any input H, W."""
    N, H, W, C = x.shape

    def pool_matrix(in_size):
        rows = []
        for i in range(out_size):
            s = (i * in_size) // out_size
            e = -((-(i + 1) * in_size) // out_size)   # ceil
            rows.append(jnp.zeros((in_size,), jnp.float32).at[s:e]
                        .set(1.0 / (e - s)))
        return jnp.stack(rows)                        # (out_size, in_size)

    Ph = pool_matrix(H)
    Pw = pool_matrix(W)
    # P[(oi,oj),(h,w)] = Ph[oi,h] * Pw[oj,w]
    P = (Ph[:, None, :, None] * Pw[None, :, None, :]).reshape(
        out_size * out_size, H * W)
    xt = jnp.transpose(x.reshape(N, H * W, C), (1, 0, 2)).reshape(H * W, N * C)
    out = matmul_bias_act(P, xt, None, act="none")    # (36, N*C)
    out = out.reshape(out_size, out_size, N, C)
    return jnp.transpose(out, (2, 0, 1, 3))           # (N, 6, 6, C)


# ---------------------------------------------------------------------------
# AlexNet parameters (deterministic synthetic init) and forward pass
# ---------------------------------------------------------------------------
def init_params(class_count=14, seed=0):
    # TODO(synk): pretrained torchvision weights (isTrained=True) are not
    #             loadable here; deterministic synthetic weights are used.
    root = jax.random.PRNGKey(seed)
    counter = itertools.count()

    def nk():
        return jax.random.fold_in(root, next(counter))

    def conv(cout, cin, k):
        fan_in = cin * k * k
        w = jax.random.normal(nk(), (cout, cin, k, k), jnp.float32) * (2.0 / fan_in) ** 0.5
        b = 0.01 * jax.random.normal(nk(), (cout,), jnp.float32)
        return w, b

    def linear(cout, cin, wscale=None):
        scale = wscale if wscale is not None else (1.0 / cin) ** 0.5
        w = scale * jax.random.normal(nk(), (cout, cin), jnp.float32)
        b = 0.01 * jax.random.normal(nk(), (cout,), jnp.float32)
        return w, b

    p = {
        "conv1": conv(64, 3, 11),
        "conv2": conv(192, 64, 5),
        "conv3": conv(384, 192, 3),
        "conv4": conv(256, 384, 3),
        "conv5": conv(256, 256, 3),
        "fc1": linear(4096, 256 * 6 * 6),
        "fc2": linear(4096, 4096),
        "fc3": linear(class_count, 4096, wscale=0.02),
    }
    return p


def alexnet_forward(x_nchw, params):
    x = jnp.transpose(x_nchw.astype(jnp.float32), (0, 2, 3, 1))        # NCHW -> NHWC
    # --- features ---
    x = conv2d_bias_act(x, *params["conv1"], stride=4, padding=2, act="relu")
    x = maxpool_3x3_s2(x)
    x = conv2d_bias_act(x, *params["conv2"], stride=1, padding=2, act="relu")
    x = maxpool_3x3_s2(x)
    x = conv2d_bias_act(x, *params["conv3"], stride=1, padding=1, act="relu")
    x = conv2d_bias_act(x, *params["conv4"], stride=1, padding=1, act="relu")
    x = conv2d_bias_act(x, *params["conv5"], stride=1, padding=1, act="relu")
    x = maxpool_3x3_s2(x)
    # --- avgpool + flatten (PyTorch NCHW flatten order) ---
    x = adaptive_avg_pool_6x6(x)                                       # (N, 6, 6, 256)
    x = jnp.transpose(x, (0, 3, 1, 2)).reshape(x.shape[0], -1)          # (N, 9216)
    # --- classifier (Dropout is identity in eval-mode inference) ---
    # TODO(synk): nn.Dropout layers are skipped (inference / eval semantics).
    w1, b1 = params["fc1"]
    x = matmul_bias_act(x, w1.T, b1, act="relu")
    w2, b2 = params["fc2"]
    x = matmul_bias_act(x, w2.T, b2, act="relu")
    w3, b3 = params["fc3"]
    x = matmul_bias_act(x, w3.T, b3, act="sigmoid")                     # ACTIVATION_SIGMOID
    return x


if __name__ == "__main__":
    CLASS_COUNT = 14
    params = init_params(class_count=CLASS_COUNT, seed=0)
    x = jax.random.normal(jax.random.PRNGKey(0), (2, 3, 64, 64), jnp.float32)
    fwd = jax.jit(alexnet_forward)
    out = fwd(x, params)
    out = jax.block_until_ready(out)
    assert out.shape == (2, CLASS_COUNT), out.shape
    assert bool(jnp.all(jnp.isfinite(out)))
    assert bool(jnp.all((out >= 0.0) & (out <= 1.0)))   # sigmoid output range
    print("KERNEL_OK")
</pallas_src>

<mosaic_0001>
module attributes {stable_mosaic.version = 11 : i64} {
  func.func @kernel(%arg0: i32, %arg1: i32, %arg2: i32, %arg3: memref<256x384xbf16, #tpu.memory_space<vmem>>, %arg4: memref<384x128xbf16, #tpu.memory_space<vmem>>, %arg5: memref<1x128xf32, #tpu.memory_space<vmem>>, %arg6: memref<256x128xf32, #tpu.memory_space<vmem>>, %arg7: memref<256x128xf32, #tpu.memory_space<vmem>>) attributes {dimension_semantics = [#tpu.dimension_semantics<parallel>, #tpu.dimension_semantics<parallel>, #tpu.dimension_semantics<arbitrary>], iteration_bounds = array<i64: 2, 1, 1>, scalar_prefetch = 0 : i64, scratch_operands = 1 : i64, tpu.core_type = #tpu.core_type<tc>, window_params = [{transform_indices = @transform_0, window_bounds = array<i64: 256, 384>}, {transform_indices = @transform_1, window_bounds = array<i64: 384, 128>}, {transform_indices = @transform_2, window_bounds = array<i64: 1, 128>}, {transform_indices = @transform_3, window_bounds = array<i64: 256, 128>}]} {
    %c0_i32 = arith.constant 0 : i32
    %0 = arith.cmpi eq, %arg2, %c0_i32 : i32
    %1 = arith.extui %0 : i1 to i32
    %c0_i32_0 = arith.constant 0 : i32
    %2 = arith.cmpi ne, %1, %c0_i32_0 : i32
    scf.if %2 {
      %cst_10 = arith.constant 0.000000e+00 : f32
      %12 = vector.broadcast %cst_10 : f32 to vector<256x128xf32>
      %c0_11 = arith.constant 0 : index
      %c0_12 = arith.constant 0 : index
      %13 = vector.load %arg7[%c0_11, %c0_12] : memref<256x128xf32, #tpu.memory_space<vmem>>, vector<256x128xf32>
      tpu.vector_store %arg7[%c0_11, %c0_12], %12 {strides = array<i32>} : memref<256x128xf32, #tpu.memory_space<vmem>>, vector<256x128xf32>,
    } else {
    }
    %c0 = arith.constant 0 : index
    %c0_1 = arith.constant 0 : index
    %3 = vector.load %arg7[%c0, %c0_1] : memref<256x128xf32, #tpu.memory_space<vmem>>, vector<256x128xf32>
    %c0_2 = arith.constant 0 : index
    %c0_3 = arith.constant 0 : index
    %4 = vector.load %arg3[%c0_2, %c0_3] : memref<256x384xbf16, #tpu.memory_space<vmem>>, vector<256x384xbf16>
    %c0_4 = arith.constant 0 : index
    %c0_5 = arith.constant 0 : index
    %5 = vector.load %arg4[%c0_4, %c0_5] : memref<384x128xbf16, #tpu.memory_space<vmem>>, vector<384x128xbf16>
    %cst = arith.constant dense<0.000000e+00> : vector<256x128xf32>
    %6 = tpu.matmul %4, %5, %cst {dimension_numbers = #tpu.dot_dimension_numbers<[1], [0], [0], [1], [0, 0, 1, 1], [], []>} : vector<256x384xbf16>, vector<384x128xbf16>, vector<256x128xf32> -> vector<256x128xf32>
    %7 = arith.addf %3, %6 : vector<256x128xf32>
    %c0_6 = arith.constant 0 : index
    %c0_7 = arith.constant 0 : index
    %8 = vector.load %arg7[%c0_6, %c0_7] : memref<256x128xf32, #tpu.memory_space<vmem>>, vector<256x128xf32>
    tpu.vector_store %arg7[%c0_6, %c0_7], %7 {strides = array<i32>} : memref<256x128xf32, #tpu.memory_space<vmem>>, vector<256x128xf32>,
    %c0_i32_8 = arith.constant 0 : i32
    %9 = arith.cmpi eq, %arg2, %c0_i32_8 : i32
    %10 = arith.extui %9 : i1 to i32
    %c0_i32_9 = arith.constant 0 : i32
    %11 = arith.cmpi ne, %10, %c0_i32_9 : i32
    scf.if %11 {
      %c0_10 = arith.constant 0 : index
      %c0_11 = arith.constant 0 : index
      %12 = vector.load %arg7[%c0_10, %c0_11] : memref<256x128xf32, #tpu.memory_space<vmem>>, vector<256x128xf32>
      %c0_12 = arith.constant 0 : index
      %c0_13 = arith.constant 0 : index
      %13 = vector.load %arg5[%c0_12, %c0_13] : memref<1x128xf32, #tpu.memory_space<vmem>>, vector<1x128xf32>
      %14 = vector.broadcast %13 : vector<1x128xf32> to vector<256x128xf32>
      %15 = arith.addf %12, %14 : vector<256x128xf32>
      %cst_14 = arith.constant 0.000000e+00 : f32
      %16 = vector.broadcast %cst_14 : f32 to vector<256x128xf32>
      %17 = arith.maximumf %15, %16 : vector<256x128xf32>
      %c0_15 = arith.constant 0 : index
      %c0_16 = arith.constant 0 : index
      %18 = vector.load %arg6[%c0_15, %c0_16] : memref<256x128xf32, #tpu.memory_space<vmem>>, vector<256x128xf32>
      tpu.vector_store %arg6[%c0_15, %c0_16], %17 {strides = array<i32>} : memref<256x128xf32, #tpu.memory_space<vmem>>, vector<256x128xf32>,
    } else {
    }
    return
  }
  func.func @transform_0(%arg0: i32, %arg1: i32, %arg2: i32) -> (i32, i32) {
    %c0_i32 = arith.constant 0 : i32
    return %arg0, %arg2 : i32, i32
  }
  func.func @transform_1(%arg0: i32, %arg1: i32, %arg2: i32) -> (i32, i32) {
    %c0_i32 = arith.constant 0 : i32
    return %arg2, %arg1 : i32, i32
  }
  func.func @transform_2(%arg0: i32, %arg1: i32, %arg2: i32) -> (i32, i32) {
    %c0_i32 = arith.constant 0 : i32
    %c0_i32_0 = arith.constant 0 : i32
    return %c0_i32, %arg1 : i32, i32
  }
  func.func @transform_3(%arg0: i32, %arg1: i32, %arg2: i32) -> (i32, i32) {
    %c0_i32 = arith.constant 0 : i32
    return %arg0, %arg1 : i32, i32
  }
}

module attributes {stable_mosaic.version = 11 : i64} {
  func.func @_maxpool9_kernel(%arg0: i32, %arg1: memref<104x128xf32, #tpu.memory_space<vmem>>, %arg2: memref<104x128xf32, #tpu.memory_space<vmem>>, %arg3: memref<104x128xf32, #tpu.memory_space<vmem>>, %arg4: memref<104x128xf32, #tpu.memory_space<vmem>>, %arg5: memref<104x128xf32, #tpu.memory_space<vmem>>, %arg6: memref<104x128xf32, #tpu.memory_space<vmem>>, %arg7: memref<104x128xf32, #tpu.memory_space<vmem>>, %arg8: memref<104x128xf32, #tpu.memory_space<vmem>>, %arg9: memref<104x128xf32, #tpu.memory_space<vmem>>, %arg10: memref<104x128xf32, #tpu.memory_space<vmem>>) attributes {dimension_semantics = [#tpu.dimension_semantics<parallel>], iteration_bounds = array<i64: 1>, scalar_prefetch = 0 : i64, scratch_operands = 0 : i64, tpu.core_type = #tpu.core_type<tc>, window_params = [{transform_indices = @transform_0, window_bounds = array<i64: 104, 128>}, {transform_indices = @transform_1, window_bounds = array<i64: 104, 128>}, {transform_indices = @transform_2, window_bounds = array<i64: 104, 128>}, {transform_indices = @transform_3, window_bounds = array<i64: 104, 128>}, {transform_indices = @transform_4, window_bounds = array<i64: 104, 128>}, {transform_indices = @transform_5, window_bounds = array<i64: 104, 128>}, {transform_indices = @transform_6, window_bounds = array<i64: 104, 128>}, {transform_indices = @transform_7, window_bounds = array<i64: 104, 128>}, {transform_indices = @transform_8, window_bounds = array<i64: 104, 128>}, {transform_indices = @transform_9, window_bounds = array<i64: 104, 128>}]} {
    %c0 = arith.constant 0 : index
    %c0_0 = arith.constant 0 : index
    %0 = vector.load %arg1[%c0, %c0_0] : memref<104x128xf32, #tpu.memory_space<vmem>>, vector<104x128xf32>
    %c0_1 = arith.constant 0 : index
    %c0_2 = arith.constant 0 : index
    %1 = vector.load %arg2[%c0_1, %c0_2] : memref<104x128xf32, #tpu.memory_space<vmem>>, vector<104x128xf32>
    %2 = arith.maximumf %0, %1 : vector<104x128xf32>
    %c0_3 = arith.constant 0 : index
    %c0_4 = arith.constant 0 : index
    %3 = vector.load %arg3[%c0_3, %c0_4] : memref<104x128xf32, #tpu.memory_space<vmem>>, vector<104x128xf32>
    %4 = arith.maximumf %2, %3 : vector<104x128xf32>
    %c0_5 = arith.constant 0 : index
    %c0_6 = arith.constant 0 : index
    %5 = vector.load %arg4[%c0_5, %c0_6] : memref<104x128xf32, #tpu.memory_space<vmem>>, vector<104x128xf32>
    %6 = arith.maximumf %4, %5 : vector<104x128xf32>
    %c0_7 = arith.constant 0 : index
    %c0_8 = arith.constant 0 : index
    %7 = vector.load %arg5[%c0_7, %c0_8] : memref<104x128xf32, #tpu.memory_space<vmem>>, vector<104x128xf32>
    %8 = arith.maximumf %6, %7 : vector<104x128xf32>
    %c0_9 = arith.constant 0 : index
    %c0_10 = arith.constant 0 : index
    %9 = vector.load %arg6[%c0_9, %c0_10] : memref<104x128xf32, #tpu.memory_space<vmem>>, vector<104x128xf32>
    %10 = arith.maximumf %8, %9 : vector<104x128xf32>
    %c0_11 = arith.constant 0 : index
    %c0_12 = arith.constant 0 : index
    %11 = vector.load %arg7[%c0_11, %c0_12] : memref<104x128xf32, #tpu.memory_space<vmem>>, vector<104x128xf32>
    %12 = arith.maximumf %10, %11 : vector<104x128xf32>
    %c0_13 = arith.constant 0 : index
    %c0_14 = arith.constant 0 : index
    %13 = vector.load %arg8[%c0_13, %c0_14] : memref<104x128xf32, #tpu.memory_space<vmem>>, vector<104x128xf32>
    %14 = arith.maximumf %12, %13 : vector<104x128xf32>
    %c0_15 = arith.constant 0 : index
    %c0_16 = arith.constant 0 : index
    %15 = vector.load %arg9[%c0_15, %c0_16] : memref<104x128xf32, #tpu.memory_space<vmem>>, vector<104x128xf32>
    %16 = arith.maximumf %14, %15 : vector<104x128xf32>
    %c0_17 = arith.constant 0 : index
    %c0_18 = arith.constant 0 : index
    %17 = vector.load %arg10[%c0_17, %c0_18] : memref<104x128xf32, #tpu.memory_space<vmem>>, vector<104x128xf32>
    tpu.vector_store %arg10[%c0_17, %c0_18], %16 {strides = array<i32>} : memref<104x128xf32, #tpu.memory_space<vmem>>, vector<104x128xf32>,
    return
  }
  func.func @transform_0(%arg0: i32) -> (i32, i32) {
    %c0_i32 = arith.constant 0 : i32
    %c0_i32_0 = arith.constant 0 : i32
    return %arg0, %c0_i32 : i32, i32
  }
  func.func @transform_1(%arg0: i32) -> (i32, i32) {
    %c0_i32 = arith.constant 0 : i32
    %c0_i32_0 = arith.constant 0 : i32
    return %arg0, %c0_i32 : i32, i32
  }
  func.func @transform_2(%arg0: i32) -> (i32, i32) {
    %c0_i32 = arith.constant 0 : i32
    %c0_i32_0 = arith.constant 0 : i32
    return %arg0, %c0_i32 : i32, i32
  }
  func.func @transform_3(%arg0: i32) -> (i32, i32) {
    %c0_i32 = arith.constant 0 : i32
    %c0_i32_0 = arith.constant 0 : i32
    return %arg0, %c0_i32 : i32, i32
  }
  func.func @transform_4(%arg0: i32) -> (i32, i32) {
    %c0_i32 = arith.constant 0 : i32
    %c0_i32_0 = arith.constant 0 : i32
    return %arg0, %c0_i32 : i32, i32
  }
  func.func @transform_5(%arg0: i32) -> (i32, i32) {
    %c0_i32 = arith.constant 0 : i32
    %c0_i32_0 = arith.constant 0 : i32
    return %arg0, %c0_i32 : i32, i32
  }
  func.func @transform_6(%arg0: i32) -> (i32, i32) {
    %c0_i32 = arith.constant 0 : i32
    %c0_i32_0 = arith.constant 0 : i32
    return %arg0, %c0_i32 : i32, i32
  }
  func.func @transform_7(%arg0: i32) -> (i32, i32) {
    %c0_i32 = arith.constant 0 : i32
    %c0_i32_0 = arith.constant 0 : i32
    return %arg0, %c0_i32 : i32, i32
  }
  func.func @transform_8(%arg0: i32) -> (i32, i32) {
    %c0_i32 = arith.constant 0 : i32
    %c0_i32_0 = arith.constant 0 : i32
    return %arg0, %c0_i32 : i32, i32
  }
  func.func @transform_9(%arg0: i32) -> (i32, i32) {
    %c0_i32 = arith.constant 0 : i32
    %c0_i32_0 = arith.constant 0 : i32
    return %arg0, %c0_i32 : i32, i32
  }
}

module attributes {stable_mosaic.version = 11 : i64} {
  func.func @kernel(%arg0: i32, %arg1: i32, %arg2: i32, %arg3: memref<104x128xbf16, #tpu.memory_space<vmem>>, %arg4: memref<128x256xbf16, #tpu.memory_space<vmem>>, %arg5: memref<1x256xf32, #tpu.memory_space<vmem>>, %arg6: memref<104x256xf32, #tpu.memory_space<vmem>>, %arg7: memref<104x256xf32, #tpu.memory_space<vmem>>) attributes {dimension_semantics = [#tpu.dimension_semantics<parallel>, #tpu.dimension_semantics<parallel>, #tpu.dimension_semantics<arbitrary>], iteration_bounds = array<i64: 1, 1, 13>, scalar_prefetch = 0 : i64, scratch_operands = 1 : i64, tpu.core_type = #tpu.core_type<tc>, window_params = [{transform_indices = @transform_0, window_bounds = array<i64: 104, 128>}, {transform_indices = @transform_1, window_bounds = array<i64: 128, 256>}, {transform_indices = @transform_2, window_bounds = array<i64: 1, 256>}, {transform_indices = @transform_3, window_bounds = array<i64: 104, 256>}]} {
    %c0_i32 = arith.constant 0 : i32
    %0 = arith.cmpi eq, %arg2, %c0_i32 : i32
    %1 = arith.extui %0 : i1 to i32
    %c0_i32_0 = arith.constant 0 : i32
    %2 = arith.cmpi ne, %1, %c0_i32_0 : i32
    scf.if %2 {
      %cst_9 = arith.constant 0.000000e+00 : f32
      %12 = vector.broadcast %cst_9 : f32 to vector<104x256xf32>
      %c0_10 = arith.constant 0 : index
      %c0_11 = arith.constant 0 : index
      %13 = vector.load %arg7[%c0_10, %c0_11] : memref<104x256xf32, #tpu.memory_space<vmem>>, vector<104x256xf32>
      tpu.vector_store %arg7[%c0_10, %c0_11], %12 {strides = array<i32>} : memref<104x256xf32, #tpu.memory_space<vmem>>, vector<104x256xf32>,
    } else {
    }
    %c0 = arith.constant 0 : index
    %c0_1 = arith.constant 0 : index
    %3 = vector.load %arg7[%c0, %c0_1] : memref<104x256xf32, #tpu.memory_space<vmem>>, vector<104x256xf32>
    %c0_2 = arith.constant 0 : index
    %c0_3 = arith.constant 0 : index
    %4 = vector.load %arg3[%c0_2, %c0_3] : memref<104x128xbf16, #tpu.memory_space<vmem>>, vector<104x128xbf16>
    %c0_4 = arith.constant 0 : index
    %c0_5 = arith.constant 0 : index
    %5 = vector.load %arg4[%c0_4, %c0_5] : memref<128x256xbf16, #tpu.memory_space<vmem>>, vector<128x256xbf16>
    %cst = arith.constant dense<0.000000e+00> : vector<104x256xf32>
    %6 = tpu.matmul %4, %5, %cst {dimension_numbers = #tpu.dot_dimension_numbers<[1], [0], [0], [1], [0, 0, 1, 1], [], []>} : vector<104x128xbf16>, vector<128x256xbf16>, vector<104x256xf32> -> vector<104x256xf32>
    %7 = arith.addf %3, %6 : vector<104x256xf32>
    %c0_6 = arith.constant 0 : index
    %c0_7 = arith.constant 0 : index
    %8 = vector.load %arg7[%c0_6, %c0_7] : memref<104x256xf32, #tpu.memory_space<vmem>>, vector<104x256xf32>
    tpu.vector_store %arg7[%c0_6, %c0_7], %7 {strides = array<i32>} : memref<104x256xf32, #tpu.memory_space<vmem>>, vector<104x256xf32>,
    %c12_i32 = arith.constant 12 : i32
    %9 = arith.cmpi eq, %arg2, %c12_i32 : i32
    %10 = arith.extui %9 : i1 to i32
    %c0_i32_8 = arith.constant 0 : i32
    %11 = arith.cmpi ne, %10, %c0_i32_8 : i32
    scf.if %11 {
      %c0_9 = arith.constant 0 : index
      %c0_10 = arith.constant 0 : index
      %12 = vector.load %arg7[%c0_9, %c0_10] : memref<104x256xf32, #tpu.memory_space<vmem>>, vector<104x256xf32>
      %c0_11 = arith.constant 0 : index
      %c0_12 = arith.constant 0 : index
      %13 = vector.load %arg5[%c0_11, %c0_12] : memref<1x256xf32, #tpu.memory_space<vmem>>, vector<1x256xf32>
      %14 = vector.broadcast %13 : vector<1x256xf32> to vector<104x256xf32>
      %15 = arith.addf %12, %14 : vector<104x256xf32>
      %cst_13 = arith.constant 0.000000e+00 : f32
      %16 = vector.broadcast %cst_13 : f32 to vector<104x256xf32>
      %17 = arith.maximumf %15, %16 : vector<104x256xf32>
      %c0_14 = arith.constant 0 : index
      %c0_15 = arith.constant 0 : index
      %18 = vector.load %arg6[%c0_14, %c0_15] : memref<104x256xf32, #tpu.memory_space<vmem>>, vector<104x256xf32>
      tpu.vector_store %arg6[%c0_14, %c0_15], %17 {strides = array<i32>} : memref<104x256xf32, #tpu.memory_space<vmem>>, vector<104x256xf32>,
    } else {
    }
    return
  }
  func.func @transform_0(%arg0: i32, %arg1: i32, %arg2: i32) -> (i32, i32) {
    %c0_i32 = arith.constant 0 : i32
    return %arg0, %arg2 : i32, i32
  }
  func.func @transform_1(%arg0: i32, %arg1: i32, %arg2: i32) -> (i32, i32) {
    %c0_i32 = arith.constant 0 : i32
    return %arg2, %arg1 : i32, i32
  }
  func.func @transform_2(%arg0: i32, %arg1: i32, %arg2: i32) -> (i32, i32) {
    %c0_i32 = arith.constant 0 : i32
    %c0_i32_0 = arith.constant 0 : i32
    return %c0_i32, %arg1 : i32, i32
  }
  func.func @transform_3(%arg0: i32, %arg1: i32, %arg2: i32) -> (i32, i32) {
    %c0_i32 = arith.constant 0 : i32
    return %arg0, %arg1 : i32, i32
  }
}

module attributes {stable_mosaic.version = 11 : i64} {
  func.func @_maxpool9_kernel(%arg0: i32, %arg1: memref<24x256xf32, #tpu.memory_space<vmem>>, %arg2: memref<24x256xf32, #tpu.memory_space<vmem>>, %arg3: memref<24x256xf32, #tpu.memory_space<vmem>>, %arg4: memref<24x256xf32, #tpu.memory_space<vmem>>, %arg5: memref<24x256xf32, #tpu.memory_space<vmem>>, %arg6: memref<24x256xf32, #tpu.memory_space<vmem>>, %arg7: memref<24x256xf32, #tpu.memory_space<vmem>>, %arg8: memref<24x256xf32, #tpu.memory_space<vmem>>, %arg9: memref<24x256xf32, #tpu.memory_space<vmem>>, %arg10: memref<24x256xf32, #tpu.memory_space<vmem>>) attributes {dimension_semantics = [#tpu.dimension_semantics<parallel>], iteration_bounds = array<i64: 1>, scalar_prefetch = 0 : i64, scratch_operands = 0 : i64, tpu.core_type = #tpu.core_type<tc>, window_params = [{transform_indices = @transform_0, window_bounds = array<i64: 24, 256>}, {transform_indices = @transform_1, window_bounds = array<i64: 24, 256>}, {transform_indices = @transform_2, window_bounds = array<i64: 24, 256>}, {transform_indices = @transform_3, window_bounds = array<i64: 24, 256>}, {transform_indices = @transform_4, window_bounds = array<i64: 24, 256>}, {transform_indices = @transform_5, window_bounds = array<i64: 24, 256>}, {transform_indices = @transform_6, window_bounds = array<i64: 24, 256>}, {transform_indices = @transform_7, window_bounds = array<i64: 24, 256>}, {transform_indices = @transform_8, window_bounds = array<i64: 24, 256>}, {transform_indices = @transform_9, window_bounds = array<i64: 24, 256>}]} {
    %c0 = arith.constant 0 : index
    %c0_0 = arith.constant 0 : index
    %0 = vector.load %arg1[%c0, %c0_0] : memref<24x256xf32, #tpu.memory_space<vmem>>, vector<24x256xf32>
    %c0_1 = arith.constant 0 : index
    %c0_2 = arith.constant 0 : index
    %1 = vector.load %arg2[%c0_1, %c0_2] : memref<24x256xf32, #tpu.memory_space<vmem>>, vector<24x256xf32>
    %2 = arith.maximumf %0, %1 : vector<24x256xf32>
    %c0_3 = arith.constant 0 : index
    %c0_4 = arith.constant 0 : index
    %3 = vector.load %arg3[%c0_3, %c0_4] : memref<24x256xf32, #tpu.memory_space<vmem>>, vector<24x256xf32>
    %4 = arith.maximumf %2, %3 : vector<24x256xf32>
    %c0_5 = arith.constant 0 : index
    %c0_6 = arith.constant 0 : index
    %5 = vector.load %arg4[%c0_5, %c0_6] : memref<24x256xf32, #tpu.memory_space<vmem>>, vector<24x256xf32>
    %6 = arith.maximumf %4, %5 : vector<24x256xf32>
    %c0_7 = arith.constant 0 : index
    %c0_8 = arith.constant 0 : index
    %7 = vector.load %arg5[%c0_7, %c0_8] : memref<24x256xf32, #tpu.memory_space<vmem>>, vector<24x256xf32>
    %8 = arith.maximumf %6, %7 : vector<24x256xf32>
    %c0_9 = arith.constant 0 : index
    %c0_10 = arith.constant 0 : index
    %9 = vector.load %arg6[%c0_9, %c0_10] : memref<24x256xf32, #tpu.memory_space<vmem>>, vector<24x256xf32>
    %10 = arith.maximumf %8, %9 : vector<24x256xf32>
    %c0_11 = arith.constant 0 : index
    %c0_12 = arith.constant 0 : index
    %11 = vector.load %arg7[%c0_11, %c0_12] : memref<24x256xf32, #tpu.memory_space<vmem>>, vector<24x256xf32>
    %12 = arith.maximumf %10, %11 : vector<24x256xf32>
    %c0_13 = arith.constant 0 : index
    %c0_14 = arith.constant 0 : index
    %13 = vector.load %arg8[%c0_13, %c0_14] : memref<24x256xf32, #tpu.memory_space<vmem>>, vector<24x256xf32>
    %14 = arith.maximumf %12, %13 : vector<24x256xf32>
    %c0_15 = arith.constant 0 : index
    %c0_16 = arith.constant 0 : index
    %15 = vector.load %arg9[%c0_15, %c0_16] : memref<24x256xf32, #tpu.memory_space<vmem>>, vector<24x256xf32>
    %16 = arith.maximumf %14, %15 : vector<24x256xf32>
    %c0_17 = arith.constant 0 : index
    %c0_18 = arith.constant 0 : index
    %17 = vector.load %arg10[%c0_17, %c0_18] : memref<24x256xf32, #tpu.memory_space<vmem>>, vector<24x256xf32>
    tpu.vector_store %arg10[%c0_17, %c0_18], %16 {strides = array<i32>} : memref<24x256xf32, #tpu.memory_space<vmem>>, vector<24x256xf32>,
    return
  }
  func.func @transform_0(%arg0: i32) -> (i32, i32) {
    %c0_i32 = arith.constant 0 : i32
    %c0_i32_0 = arith.constant 0 : i32
    return %arg0, %c0_i32 : i32, i32
  }
  func.func @transform_1(%arg0: i32) -> (i32, i32) {
    %c0_i32 = arith.constant 0 : i32
    %c0_i32_0 = arith.constant 0 : i32
    return %arg0, %c0_i32 : i32, i32
  }
  func.func @transform_2(%arg0: i32) -> (i32, i32) {
    %c0_i32 = arith.constant 0 : i32
    %c0_i32_0 = arith.constant 0 : i32
    return %arg0, %c0_i32 : i32, i32
  }
  func.func @transform_3(%arg0: i32) -> (i32, i32) {
    %c0_i32 = arith.constant 0 : i32
    %c0_i32_0 = arith.constant 0 : i32
    return %arg0, %c0_i32 : i32, i32
  }
  func.func @transform_4(%arg0: i32) -> (i32, i32) {
    %c0_i32 = arith.constant 0 : i32
    %c0_i32_0 = arith.constant 0 : i32
    return %arg0, %c0_i32 : i32, i32
  }
  func.func @transform_5(%arg0: i32) -> (i32, i32) {
    %c0_i32 = arith.constant 0 : i32
    %c0_i32_0 = arith.constant 0 : i32
    return %arg0, %c0_i32 : i32, i32
  }
  func.func @transform_6(%arg0: i32) -> (i32, i32) {
    %c0_i32 = arith.constant 0 : i32
    %c0_i32_0 = arith.constant 0 : i32
    return %arg0, %c0_i32 : i32, i32
  }
  func.func @transform_7(%arg0: i32) -> (i32, i32) {
    %c0_i32 = arith.constant 0 : i32
    %c0_i32_0 = arith.constant 0 : i32
    return %arg0, %c0_i32 : i32, i32
  }
  func.func @transform_8(%arg0: i32) -> (i32, i32) {
    %c0_i32 = arith.constant 0 : i32
    %c0_i32_0 = arith.constant 0 : i32
    return %arg0, %c0_i32 : i32, i32
  }
  func.func @transform_9(%arg0: i32) -> (i32, i32) {
    %c0_i32 = arith.constant 0 : i32
    %c0_i32_0 = arith.constant 0 : i32
    return %arg0, %c0_i32 : i32, i32
  }
}

module attributes {stable_mosaic.version = 11 : i64} {
  func.func @kernel(%arg0: i32, %arg1: i32, %arg2: i32, %arg3: memref<24x128xbf16, #tpu.memory_space<vmem>>, %arg4: memref<128x128xbf16, #tpu.memory_space<vmem>>, %arg5: memref<1x128xf32, #tpu.memory_space<vmem>>, %arg6: memref<24x128xf32, #tpu.memory_space<vmem>>, %arg7: memref<24x128xf32, #tpu.memory_space<vmem>>) attributes {dimension_semantics = [#tpu.dimension_semantics<parallel>, #tpu.dimension_semantics<parallel>, #tpu.dimension_semantics<arbitrary>], iteration_bounds = array<i64: 1, 3, 14>, scalar_prefetch = 0 : i64, scratch_operands = 1 : i64, tpu.core_type = #tpu.core_type<tc>, window_params = [{transform_indices = @transform_0, window_bounds = array<i64: 24, 128>}, {transform_indices = @transform_1, window_bounds = array<i64: 128, 128>}, {transform_indices = @transform_2, window_bounds = array<i64: 1, 128>}, {transform_indices = @transform_3, window_bounds = array<i64: 24, 128>}]} {
    %c0_i32 = arith.constant 0 : i32
    %0 = arith.cmpi eq, %arg2, %c0_i32 : i32
    %1 = arith.extui %0 : i1 to i32
    %c0_i32_0 = arith.constant 0 : i32
    %2 = arith.cmpi ne, %1, %c0_i32_0 : i32
    scf.if %2 {
      %cst_9 = arith.constant 0.000000e+00 : f32
      %12 = vector.broadcast %cst_9 : f32 to vector<24x128xf32>
      %c0_10 = arith.constant 0 : index
      %c0_11 = arith.constant 0 : index
      %13 = vector.load %arg7[%c0_10, %c0_11] : memref<24x128xf32, #tpu.memory_space<vmem>>, vector<24x128xf32>
      tpu.vector_store %arg7[%c0_10, %c0_11], %12 {strides = array<i32>} : memref<24x128xf32, #tpu.memory_space<vmem>>, vector<24x128xf32>,
    } else {
    }
    %c0 = arith.constant 0 : index
    %c0_1 = arith.constant 0 : index
    %3 = vector.load %arg7[%c0, %c0_1] : memref<24x128xf32, #tpu.memory_space<vmem>>, vector<24x128xf32>
    %c0_2 = arith.constant 0 : index
    %c0_3 = arith.constant 0 : index
    %4 = vector.load %arg3[%c0_2, %c0_3] : memref<24x128xbf16, #tpu.memory_space<vmem>>, vector<24x128xbf16>
    %c0_4 = arith.constant 0 : index
    %c0_5 = arith.constant 0 : index
    %5 = vector.load %arg4[%c0_4, %c0_5] : memref<128x128xbf16, #tpu.memory_space<vmem>>, vector<128x128xbf16>
    %cst = arith.constant dense<0.000000e+00> : vector<24x128xf32>
    %6 = tpu.matmul %4, %5, %cst {dimension_numbers = #tpu.dot_dimension_numbers<[1], [0], [0], [1], [0, 0, 1, 1], [], []>} : vector<24x128xbf16>, vector<128x128xbf16>, vector<24x128xf32> -> vector<24x128xf32>
    %7 = arith.addf %3, %6 : vector<24x128xf32>
    %c0_6 = arith.constant 0 : index
    %c0_7 = arith.constant 0 : index
    %8 = vector.load %arg7[%c0_6, %c0_7] : memref<24x128xf32, #tpu.memory_space<vmem>>, vector<24x128xf32>
    tpu.vector_store %arg7[%c0_6, %c0_7], %7 {strides = array<i32>} : memref<24x128xf32, #tpu.memory_space<vmem>>, vector<24x128xf32>,
    %c13_i32 = arith.constant 13 : i32
    %9 = arith.cmpi eq, %arg2, %c13_i32 : i32
    %10 = arith.extui %9 : i1 to i32
    %c0_i32_8 = arith.constant 0 : i32
    %11 = arith.cmpi ne, %10, %c0_i32_8 : i32
    scf.if %11 {
      %c0_9 = arith.constant 0 : index
      %c0_10 = arith.constant 0 : index
      %12 = vector.load %arg7[%c0_9, %c0_10] : memref<24x128xf32, #tpu.memory_space<vmem>>, vector<24x128xf32>
      %c0_11 = arith.constant 0 : index
      %c0_12 = arith.constant 0 : index
      %13 = vector.load %arg5[%c0_11, %c0_12] : memref<1x128xf32, #tpu.memory_space<vmem>>, vector<1x128xf32>
      %14 = vector.broadcast %13 : vector<1x128xf32> to vector<24x128xf32>
      %15 = arith.addf %12, %14 : vector<24x128xf32>
      %cst_13 = arith.constant 0.000000e+00 : f32
      %16 = vector.broadcast %cst_13 : f32 to vector<24x128xf32>
      %17 = arith.maximumf %15, %16 : vector<24x128xf32>
      %c0_14 = arith.constant 0 : index
      %c0_15 = arith.constant 0 : index
      %18 = vector.load %arg6[%c0_14, %c0_15] : memref<24x128xf32, #tpu.memory_space<vmem>>, vector<24x128xf32>
      tpu.vector_store %arg6[%c0_14, %c0_15], %17 {strides = array<i32>} : memref<24x128xf32, #tpu.memory_space<vmem>>, vector<24x128xf32>,
    } else {
    }
    return
  }
  func.func @transform_0(%arg0: i32, %arg1: i32, %arg2: i32) -> (i32, i32) {
    %c0_i32 = arith.constant 0 : i32
    return %arg0, %arg2 : i32, i32
  }
  func.func @transform_1(%arg0: i32, %arg1: i32, %arg2: i32) -> (i32, i32) {
    %c0_i32 = arith.constant 0 : i32
    return %arg2, %arg1 : i32, i32
  }
  func.func @transform_2(%arg0: i32, %arg1: i32, %arg2: i32) -> (i32, i32) {
    %c0_i32 = arith.constant 0 : i32
    %c0_i32_0 = arith.constant 0 : i32
    return %c0_i32, %arg1 : i32, i32
  }
  func.func @transform_3(%arg0: i32, %arg1: i32, %arg2: i32) -> (i32, i32) {
    %c0_i32 = arith.constant 0 : i32
    return %arg0, %arg1 : i32, i32
  }
}

module attributes {stable_mosaic.version = 11 : i64} {
  func.func @kernel(%arg0: i32, %arg1: i32, %arg2: i32, %arg3: memref<24x128xbf16, #tpu.memory_space<vmem>>, %arg4: memref<128x256xbf16, #tpu.memory_space<vmem>>, %arg5: memref<1x256xf32, #tpu.memory_space<vmem>>, %arg6: memref<24x256xf32, #tpu.memory_space<vmem>>, %arg7: memref<24x256xf32, #tpu.memory_space<vmem>>) attributes {dimension_semantics = [#tpu.dimension_semantics<parallel>, #tpu.dimension_semantics<parallel>, #tpu.dimension_semantics<arbitrary>], iteration_bounds = array<i64: 1, 1, 27>, scalar_prefetch = 0 : i64, scratch_operands = 1 : i64, tpu.core_type = #tpu.core_type<tc>, window_params = [{transform_indices = @transform_0, window_bounds = array<i64: 24, 128>}, {transform_indices = @transform_1, window_bounds = array<i64: 128, 256>}, {transform_indices = @transform_2, window_bounds = array<i64: 1, 256>}, {transform_indices = @transform_3, window_bounds = array<i64: 24, 256>}]} {
    %c0_i32 = arith.constant 0 : i32
    %0 = arith.cmpi eq, %arg2, %c0_i32 : i32
    %1 = arith.extui %0 : i1 to i32
    %c0_i32_0 = arith.constant 0 : i32
    %2 = arith.cmpi ne, %1, %c0_i32_0 : i32
    scf.if %2 {
      %cst_9 = arith.constant 0.000000e+00 : f32
      %12 = vector.broadcast %cst_9 : f32 to vector<24x256xf32>
      %c0_10 = arith.constant 0 : index
      %c0_11 = arith.constant 0 : index
      %13 = vector.load %arg7[%c0_10, %c0_11] : memref<24x256xf32, #tpu.memory_space<vmem>>, vector<24x256xf32>
      tpu.vector_store %arg7[%c0_10, %c0_11], %12 {strides = array<i32>} : memref<24x256xf32, #tpu.memory_space<vmem>>, vector<24x256xf32>,
    } else {
    }
    %c0 = arith.constant 0 : index
    %c0_1 = arith.constant 0 : index
    %3 = vector.load %arg7[%c0, %c0_1] : memref<24x256xf32, #tpu.memory_space<vmem>>, vector<24x256xf32>
    %c0_2 = arith.constant 0 : index
    %c0_3 = arith.constant 0 : index
    %4 = vector.load %arg3[%c0_2, %c0_3] : memref<24x128xbf16, #tpu.memory_space<vmem>>, vector<24x128xbf16>
    %c0_4 = arith.constant 0 : index
    %c0_5 = arith.constant 0 : index
    %5 = vector.load %arg4[%c0_4, %c0_5] : memref<128x256xbf16, #tpu.memory_space<vmem>>, vector<128x256xbf16>
    %cst = arith.constant dense<0.000000e+00> : vector<24x256xf32>
    %6 = tpu.matmul %4, %5, %cst {dimension_numbers = #tpu.dot_dimension_numbers<[1], [0], [0], [1], [0, 0, 1, 1], [], []>} : vector<24x128xbf16>, vector<128x256xbf16>, vector<24x256xf32> -> vector<24x256xf32>
    %7 = arith.addf %3, %6 : vector<24x256xf32>
    %c0_6 = arith.constant 0 : index
    %c0_7 = arith.constant 0 : index
    %8 = vector.load %arg7[%c0_6, %c0_7] : memref<24x256xf32, #tpu.memory_space<vmem>>, vector<24x256xf32>
    tpu.vector_store %arg7[%c0_6, %c0_7], %7 {strides = array<i32>} : memref<24x256xf32, #tpu.memory_space<vmem>>, vector<24x256xf32>,
    %c26_i32 = arith.constant 26 : i32
    %9 = arith.cmpi eq, %arg2, %c26_i32 : i32
    %10 = arith.extui %9 : i1 to i32
    %c0_i32_8 = arith.constant 0 : i32
    %11 = arith.cmpi ne, %10, %c0_i32_8 : i32
    scf.if %11 {
      %c0_9 = arith.constant 0 : index
      %c0_10 = arith.constant 0 : index
      %12 = vector.load %arg7[%c0_9, %c0_10] : memref<24x256xf32, #tpu.memory_space<vmem>>, vector<24x256xf32>
      %c0_11 = arith.constant 0 : index
      %c0_12 = arith.constant 0 : index
      %13 = vector.load %arg5[%c0_11, %c0_12] : memref<1x256xf32, #tpu.memory_space<vmem>>, vector<1x256xf32>
      %14 = vector.broadcast %13 : vector<1x256xf32> to vector<24x256xf32>
      %15 = arith.addf %12, %14 : vector<24x256xf32>
      %cst_13 = arith.constant 0.000000e+00 : f32
      %16 = vector.broadcast %cst_13 : f32 to vector<24x256xf32>
      %17 = arith.maximumf %15, %16 : vector<24x256xf32>
      %c0_14 = arith.constant 0 : index
      %c0_15 = arith.constant 0 : index
      %18 = vector.load %arg6[%c0_14, %c0_15] : memref<24x256xf32, #tpu.memory_space<vmem>>, vector<24x256xf32>
      tpu.vector_store %arg6[%c0_14, %c0_15], %17 {strides = array<i32>} : memref<24x256xf32, #tpu.memory_space<vmem>>, vector<24x256xf32>,
    } else {
    }
    return
  }
  func.func @transform_0(%arg0: i32, %arg1: i32, %arg2: i32) -> (i32, i32) {
    %c0_i32 = arith.constant 0 : i32
    return %arg0, %arg2 : i32, i32
  }
  func.func @transform_1(%arg0: i32, %arg1: i32, %arg2: i32) -> (i32, i32) {
    %c0_i32 = arith.constant 0 : i32
    return %arg2, %arg1 : i32, i32
  }
  func.func @transform_2(%arg0: i32, %arg1: i32, %arg2: i32) -> (i32, i32) {
    %c0_i32 = arith.constant 0 : i32
    %c0_i32_0 = arith.constant 0 : i32
    return %c0_i32, %arg1 : i32, i32
  }
  func.func @transform_3(%arg0: i32, %arg1: i32, %arg2: i32) -> (i32, i32) {
    %c0_i32 = arith.constant 0 : i32
    return %arg0, %arg1 : i32, i32
  }
}

module attributes {stable_mosaic.version = 11 : i64} {
  func.func @kernel(%arg0: i32, %arg1: i32, %arg2: i32, %arg3: memref<24x256xbf16, #tpu.memory_space<vmem>>, %arg4: memref<256x256xbf16, #tpu.memory_space<vmem>>, %arg5: memref<1x256xf32, #tpu.memory_space<vmem>>, %arg6: memref<24x256xf32, #tpu.memory_space<vmem>>, %arg7: memref<24x256xf32, #tpu.memory_space<vmem>>) attributes {dimension_semantics = [#tpu.dimension_semantics<parallel>, #tpu.dimension_semantics<parallel>, #tpu.dimension_semantics<arbitrary>], iteration_bounds = array<i64: 1, 1, 9>, scalar_prefetch = 0 : i64, scratch_operands = 1 : i64, tpu.core_type = #tpu.core_type<tc>, window_params = [{transform_indices = @transform_0, window_bounds = array<i64: 24, 256>}, {transform_indices = @transform_1, window_bounds = array<i64: 256, 256>}, {transform_indices = @transform_2, window_bounds = array<i64: 1, 256>}, {transform_indices = @transform_3, window_bounds = array<i64: 24, 256>}]} {
    %c0_i32 = arith.constant 0 : i32
    %0 = arith.cmpi eq, %arg2, %c0_i32 : i32
    %1 = arith.extui %0 : i1 to i32
    %c0_i32_0 = arith.constant 0 : i32
    %2 = arith.cmpi ne, %1, %c0_i32_0 : i32
    scf.if %2 {
      %cst_9 = arith.constant 0.000000e+00 : f32
      %12 = vector.broadcast %cst_9 : f32 to vector<24x256xf32>
      %c0_10 = arith.constant 0 : index
      %c0_11 = arith.constant 0 : index
      %13 = vector.load %arg7[%c0_10, %c0_11] : memref<24x256xf32, #tpu.memory_space<vmem>>, vector<24x256xf32>
      tpu.vector_store %arg7[%c0_10, %c0_11], %12 {strides = array<i32>} : memref<24x256xf32, #tpu.memory_space<vmem>>, vector<24x256xf32>,
    } else {
    }
    %c0 = arith.constant 0 : index
    %c0_1 = arith.constant 0 : index
    %3 = vector.load %arg7[%c0, %c0_1] : memref<24x256xf32, #tpu.memory_space<vmem>>, vector<24x256xf32>
    %c0_2 = arith.constant 0 : index
    %c0_3 = arith.constant 0 : index
    %4 = vector.load %arg3[%c0_2, %c0_3] : memref<24x256xbf16, #tpu.memory_space<vmem>>, vector<24x256xbf16>
    %c0_4 = arith.constant 0 : index
    %c0_5 = arith.constant 0 : index
    %5 = vector.load %arg4[%c0_4, %c0_5] : memref<256x256xbf16, #tpu.memory_space<vmem>>, vector<256x256xbf16>
    %cst = arith.constant dense<0.000000e+00> : vector<24x256xf32>
    %6 = tpu.matmul %4, %5, %cst {dimension_numbers = #tpu.dot_dimension_numbers<[1], [0], [0], [1], [0, 0, 1, 1], [], []>} : vector<24x256xbf16>, vector<256x256xbf16>, vector<24x256xf32> -> vector<24x256xf32>
    %7 = arith.addf %3, %6 : vector<24x256xf32>
    %c0_6 = arith.constant 0 : index
    %c0_7 = arith.constant 0 : index
    %8 = vector.load %arg7[%c0_6, %c0_7] : memref<24x256xf32, #tpu.memory_space<vmem>>, vector<24x256xf32>
    tpu.vector_store %arg7[%c0_6, %c0_7], %7 {strides = array<i32>} : memref<24x256xf32, #tpu.memory_space<vmem>>, vector<24x256xf32>,
    %c8_i32 = arith.constant 8 : i32
    %9 = arith.cmpi eq, %arg2, %c8_i32 : i32
    %10 = arith.extui %9 : i1 to i32
    %c0_i32_8 = arith.constant 0 : i32
    %11 = arith.cmpi ne, %10, %c0_i32_8 : i32
    scf.if %11 {
      %c0_9 = arith.constant 0 : index
      %c0_10 = arith.constant 0 : index
      %12 = vector.load %arg7[%c0_9, %c0_10] : memref<24x256xf32, #tpu.memory_space<vmem>>, vector<24x256xf32>
      %c0_11 = arith.constant 0 : index
      %c0_12 = arith.constant 0 : index
      %13 = vector.load %arg5[%c0_11, %c0_12] : memref<1x256xf32, #tpu.memory_space<vmem>>, vector<1x256xf32>
      %14 = vector.broadcast %13 : vector<1x256xf32> to vector<24x256xf32>
      %15 = arith.addf %12, %14 : vector<24x256xf32>
      %cst_13 = arith.constant 0.000000e+00 : f32
      %16 = vector.broadcast %cst_13 : f32 to vector<24x256xf32>
      %17 = arith.maximumf %15, %16 : vector<24x256xf32>
      %c0_14 = arith.constant 0 : index
      %c0_15 = arith.constant 0 : index
      %18 = vector.load %arg6[%c0_14, %c0_15] : memref<24x256xf32, #tpu.memory_space<vmem>>, vector<24x256xf32>
      tpu.vector_store %arg6[%c0_14, %c0_15], %17 {strides = array<i32>} : memref<24x256xf32, #tpu.memory_space<vmem>>, vector<24x256xf32>,
    } else {
    }
    return
  }
  func.func @transform_0(%arg0: i32, %arg1: i32, %arg2: i32) -> (i32, i32) {
    %c0_i32 = arith.constant 0 : i32
    return %arg0, %arg2 : i32, i32
  }
  func.func @transform_1(%arg0: i32, %arg1: i32, %arg2: i32) -> (i32, i32) {
    %c0_i32 = arith.constant 0 : i32
    return %arg2, %arg1 : i32, i32
  }
  func.func @transform_2(%arg0: i32, %arg1: i32, %arg2: i32) -> (i32, i32) {
    %c0_i32 = arith.constant 0 : i32
    %c0_i32_0 = arith.constant 0 : i32
    return %c0_i32, %arg1 : i32, i32
  }
  func.func @transform_3(%arg0: i32, %arg1: i32, %arg2: i32) -> (i32, i32) {
    %c0_i32 = arith.constant 0 : i32
    return %arg0, %arg1 : i32, i32
  }
}

module attributes {stable_mosaic.version = 11 : i64} {
  func.func @_maxpool9_kernel(%arg0: i32, %arg1: memref<8x256xf32, #tpu.memory_space<vmem>>, %arg2: memref<8x256xf32, #tpu.memory_space<vmem>>, %arg3: memref<8x256xf32, #tpu.memory_space<vmem>>, %arg4: memref<8x256xf32, #tpu.memory_space<vmem>>, %arg5: memref<8x256xf32, #tpu.memory_space<vmem>>, %arg6: memref<8x256xf32, #tpu.memory_space<vmem>>, %arg7: memref<8x256xf32, #tpu.memory_space<vmem>>, %arg8: memref<8x256xf32, #tpu.memory_space<vmem>>, %arg9: memref<8x256xf32, #tpu.memory_space<vmem>>, %arg10: memref<8x256xf32, #tpu.memory_space<vmem>>) attributes {dimension_semantics = [#tpu.dimension_semantics<parallel>], iteration_bounds = array<i64: 1>, scalar_prefetch = 0 : i64, scratch_operands = 0 : i64, tpu.core_type = #tpu.core_type<tc>, window_params = [{transform_indices = @transform_0, window_bounds = array<i64: 8, 256>}, {transform_indices = @transform_1, window_bounds = array<i64: 8, 256>}, {transform_indices = @transform_2, window_bounds = array<i64: 8, 256>}, {transform_indices = @transform_3, window_bounds = array<i64: 8, 256>}, {transform_indices = @transform_4, window_bounds = array<i64: 8, 256>}, {transform_indices = @transform_5, window_bounds = array<i64: 8, 256>}, {transform_indices = @transform_6, window_bounds = array<i64: 8, 256>}, {transform_indices = @transform_7, window_bounds = array<i64: 8, 256>}, {transform_indices = @transform_8, window_bounds = array<i64: 8, 256>}, {transform_indices = @transform_9, window_bounds = array<i64: 8, 256>}]} {
    %c0 = arith.constant 0 : index
    %c0_0 = arith.constant 0 : index
    %0 = vector.load %arg1[%c0, %c0_0] : memref<8x256xf32, #tpu.memory_space<vmem>>, vector<8x256xf32>
    %c0_1 = arith.constant 0 : index
    %c0_2 = arith.constant 0 : index
    %1 = vector.load %arg2[%c0_1, %c0_2] : memref<8x256xf32, #tpu.memory_space<vmem>>, vector<8x256xf32>
    %2 = arith.maximumf %0, %1 : vector<8x256xf32>
    %c0_3 = arith.constant 0 : index
    %c0_4 = arith.constant 0 : index
    %3 = vector.load %arg3[%c0_3, %c0_4] : memref<8x256xf32, #tpu.memory_space<vmem>>, vector<8x256xf32>
    %4 = arith.maximumf %2, %3 : vector<8x256xf32>
    %c0_5 = arith.constant 0 : index
    %c0_6 = arith.constant 0 : index
    %5 = vector.load %arg4[%c0_5, %c0_6] : memref<8x256xf32, #tpu.memory_space<vmem>>, vector<8x256xf32>
    %6 = arith.maximumf %4, %5 : vector<8x256xf32>
    %c0_7 = arith.constant 0 : index
    %c0_8 = arith.constant 0 : index
    %7 = vector.load %arg5[%c0_7, %c0_8] : memref<8x256xf32, #tpu.memory_space<vmem>>, vector<8x256xf32>
    %8 = arith.maximumf %6, %7 : vector<8x256xf32>
    %c0_9 = arith.constant 0 : index
    %c0_10 = arith.constant 0 : index
    %9 = vector.load %arg6[%c0_9, %c0_10] : memref<8x256xf32, #tpu.memory_space<vmem>>, vector<8x256xf32>
    %10 = arith.maximumf %8, %9 : vector<8x256xf32>
    %c0_11 = arith.constant 0 : index
    %c0_12 = arith.constant 0 : index
    %11 = vector.load %arg7[%c0_11, %c0_12] : memref<8x256xf32, #tpu.memory_space<vmem>>, vector<8x256xf32>
    %12 = arith.maximumf %10, %11 : vector<8x256xf32>
    %c0_13 = arith.constant 0 : index
    %c0_14 = arith.constant 0 : index
    %13 = vector.load %arg8[%c0_13, %c0_14] : memref<8x256xf32, #tpu.memory_space<vmem>>, vector<8x256xf32>
    %14 = arith.maximumf %12, %13 : vector<8x256xf32>
    %c0_15 = arith.constant 0 : index
    %c0_16 = arith.constant 0 : index
    %15 = vector.load %arg9[%c0_15, %c0_16] : memref<8x256xf32, #tpu.memory_space<vmem>>, vector<8x256xf32>
    %16 = arith.maximumf %14, %15 : vector<8x256xf32>
    %c0_17 = arith.constant 0 : index
    %c0_18 = arith.constant 0 : index
    %17 = vector.load %arg10[%c0_17, %c0_18] : memref<8x256xf32, #tpu.memory_space<vmem>>, vector<8x256xf32>
    tpu.vector_store %arg10[%c0_17, %c0_18], %16 {strides = array<i32>} : memref<8x256xf32, #tpu.memory_space<vmem>>, vector<8x256xf32>,
    return
  }
  func.func @transform_0(%arg0: i32) -> (i32, i32) {
    %c0_i32 = arith.constant 0 : i32
    %c0_i32_0 = arith.constant 0 : i32
    return %arg0, %c0_i32 : i32, i32
  }
  func.func @transform_1(%arg0: i32) -> (i32, i32) {
    %c0_i32 = arith.constant 0 : i32
    %c0_i32_0 = arith.constant 0 : i32
    return %arg0, %c0_i32 : i32, i32
  }
  func.func @transform_2(%arg0: i32) -> (i32, i32) {
    %c0_i32 = arith.constant 0 : i32
    %c0_i32_0 = arith.constant 0 : i32
    return %arg0, %c0_i32 : i32, i32
  }
  func.func @transform_3(%arg0: i32) -> (i32, i32) {
    %c0_i32 = arith.constant 0 : i32
    %c0_i32_0 = arith.constant 0 : i32
    return %arg0, %c0_i32 : i32, i32
  }
  func.func @transform_4(%arg0: i32) -> (i32, i32) {
    %c0_i32 = arith.constant 0 : i32
    %c0_i32_0 = arith.constant 0 : i32
    return %arg0, %c0_i32 : i32, i32
  }
  func.func @transform_5(%arg0: i32) -> (i32, i32) {
    %c0_i32 = arith.constant 0 : i32
    %c0_i32_0 = arith.constant 0 : i32
    return %arg0, %c0_i32 : i32, i32
  }
  func.func @transform_6(%arg0: i32) -> (i32, i32) {
    %c0_i32 = arith.constant 0 : i32
    %c0_i32_0 = arith.constant 0 : i32
    return %arg0, %c0_i32 : i32, i32
  }
  func.func @transform_7(%arg0: i32) -> (i32, i32) {
    %c0_i32 = arith.constant 0 : i32
    %c0_i32_0 = arith.constant 0 : i32
    return %arg0, %c0_i32 : i32, i32
  }
  func.func @transform_8(%arg0: i32) -> (i32, i32) {
    %c0_i32 = arith.constant 0 : i32
    %c0_i32_0 = arith.constant 0 : i32
    return %arg0, %c0_i32 : i32, i32
  }
  func.func @transform_9(%arg0: i32) -> (i32, i32) {
    %c0_i32 = arith.constant 0 : i32
    %c0_i32_0 = arith.constant 0 : i32
    return %arg0, %c0_i32 : i32, i32
  }
}

module attributes {stable_mosaic.version = 11 : i64} {
  func.func @kernel(%arg0: i32, %arg1: i32, %arg2: i32, %arg3: memref<40x128xbf16, #tpu.memory_space<vmem>>, %arg4: memref<128x256xbf16, #tpu.memory_space<vmem>>, %arg5: memref<1x256xf32, #tpu.memory_space<vmem>>, %arg6: memref<40x256xf32, #tpu.memory_space<vmem>>, %arg7: memref<40x256xf32, #tpu.memory_space<vmem>>) attributes {dimension_semantics = [#tpu.dimension_semantics<parallel>, #tpu.dimension_semantics<parallel>, #tpu.dimension_semantics<arbitrary>], iteration_bounds = array<i64: 1, 2, 1>, scalar_prefetch = 0 : i64, scratch_operands = 1 : i64, tpu.core_type = #tpu.core_type<tc>, window_params = [{transform_indices = @transform_0, window_bounds = array<i64: 40, 128>}, {transform_indices = @transform_1, window_bounds = array<i64: 128, 256>}, {transform_indices = @transform_2, window_bounds = array<i64: 1, 256>}, {transform_indices = @transform_3, window_bounds = array<i64: 40, 256>}]} {
    %c0_i32 = arith.constant 0 : i32
    %0 = arith.cmpi eq, %arg2, %c0_i32 : i32
    %1 = arith.extui %0 : i1 to i32
    %c0_i32_0 = arith.constant 0 : i32
    %2 = arith.cmpi ne, %1, %c0_i32_0 : i32
    scf.if %2 {
      %cst_10 = arith.constant 0.000000e+00 : f32
      %12 = vector.broadcast %cst_10 : f32 to vector<40x256xf32>
      %c0_11 = arith.constant 0 : index
      %c0_12 = arith.constant 0 : index
      %13 = vector.load %arg7[%c0_11, %c0_12] : memref<40x256xf32, #tpu.memory_space<vmem>>, vector<40x256xf32>
      tpu.vector_store %arg7[%c0_11, %c0_12], %12 {strides = array<i32>} : memref<40x256xf32, #tpu.memory_space<vmem>>, vector<40x256xf32>,
    } else {
    }
    %c0 = arith.constant 0 : index
    %c0_1 = arith.constant 0 : index
    %3 = vector.load %arg7[%c0, %c0_1] : memref<40x256xf32, #tpu.memory_space<vmem>>, vector<40x256xf32>
    %c0_2 = arith.constant 0 : index
    %c0_3 = arith.constant 0 : index
    %4 = vector.load %arg3[%c0_2, %c0_3] : memref<40x128xbf16, #tpu.memory_space<vmem>>, vector<40x128xbf16>
    %c0_4 = arith.constant 0 : index
    %c0_5 = arith.constant 0 : index
    %5 = vector.load %arg4[%c0_4, %c0_5] : memref<128x256xbf16, #tpu.memory_space<vmem>>, vector<128x256xbf16>
    %cst = arith.constant dense<0.000000e+00> : vector<40x256xf32>
    %6 = tpu.matmul %4, %5, %cst {dimension_numbers = #tpu.dot_dimension_numbers<[1], [0], [0], [1], [0, 0, 1, 1], [], []>} : vector<40x128xbf16>, vector<128x256xbf16>, vector<40x256xf32> -> vector<40x256xf32>
    %7 = arith.addf %3, %6 : vector<40x256xf32>
    %c0_6 = arith.constant 0 : index
    %c0_7 = arith.constant 0 : index
    %8 = vector.load %arg7[%c0_6, %c0_7] : memref<40x256xf32, #tpu.memory_space<vmem>>, vector<40x256xf32>
    tpu.vector_store %arg7[%c0_6, %c0_7], %7 {strides = array<i32>} : memref<40x256xf32, #tpu.memory_space<vmem>>, vector<40x256xf32>,
    %c0_i32_8 = arith.constant 0 : i32
    %9 = arith.cmpi eq, %arg2, %c0_i32_8 : i32
    %10 = arith.extui %9 : i1 to i32
    %c0_i32_9 = arith.constant 0 : i32
    %11 = arith.cmpi ne, %10, %c0_i32_9 : i32
    scf.if %11 {
      %c0_10 = arith.constant 0 : index
      %c0_11 = arith.constant 0 : index
      %12 = vector.load %arg7[%c0_10, %c0_11] : memref<40x256xf32, #tpu.memory_space<vmem>>, vector<40x256xf32>
      %c0_12 = arith.constant 0 : index
      %c0_13 = arith.constant 0 : index
      %13 = vector.load %arg5[%c0_12, %c0_13] : memref<1x256xf32, #tpu.memory_space<vmem>>, vector<1x256xf32>
      %14 = vector.broadcast %13 : vector<1x256xf32> to vector<40x256xf32>
      %15 = arith.addf %12, %14 : vector<40x256xf32>
      %c0_14 = arith.constant 0 : index
      %c0_15 = arith.constant 0 : index
      %16 = vector.load %arg6[%c0_14, %c0_15] : memref<40x256xf32, #tpu.memory_space<vmem>>, vector<40x256xf32>
      tpu.vector_store %arg6[%c0_14, %c0_15], %15 {strides = array<i32>} : memref<40x256xf32, #tpu.memory_space<vmem>>, vector<40x256xf32>,
    } else {
    }
    return
  }
  func.func @transform_0(%arg0: i32, %arg1: i32, %arg2: i32) -> (i32, i32) {
    %c0_i32 = arith.constant 0 : i32
    return %arg0, %arg2 : i32, i32
  }
  func.func @transform_1(%arg0: i32, %arg1: i32, %arg2: i32) -> (i32, i32) {
    %c0_i32 = arith.constant 0 : i32
    return %arg2, %arg1 : i32, i32
  }
  func.func @transform_2(%arg0: i32, %arg1: i32, %arg2: i32) -> (i32, i32) {
    %c0_i32 = arith.constant 0 : i32
    %c0_i32_0 = arith.constant 0 : i32
    return %c0_i32, %arg1 : i32, i32
  }
  func.func @transform_3(%arg0: i32, %arg1: i32, %arg2: i32) -> (i32, i32) {
    %c0_i32 = arith.constant 0 : i32
    return %arg0, %arg1 : i32, i32
  }
}

module attributes {stable_mosaic.version = 11 : i64} {
  func.func @kernel(%arg0: i32, %arg1: i32, %arg2: i32, %arg3: memref<8x512xbf16, #tpu.memory_space<vmem>>, %arg4: memref<512x256xbf16, #tpu.memory_space<vmem>>, %arg5: memref<1x256xf32, #tpu.memory_space<vmem>>, %arg6: memref<8x256xf32, #tpu.memory_space<vmem>>, %arg7: memref<8x256xf32, #tpu.memory_space<vmem>>) attributes {dimension_semantics = [#tpu.dimension_semantics<parallel>, #tpu.dimension_semantics<parallel>, #tpu.dimension_semantics<arbitrary>], iteration_bounds = array<i64: 1, 16, 18>, scalar_prefetch = 0 : i64, scratch_operands = 1 : i64, tpu.core_type = #tpu.core_type<tc>, window_params = [{transform_indices = @transform_0, window_bounds = array<i64: 8, 512>}, {transform_indices = @transform_1, window_bounds = array<i64: 512, 256>}, {transform_indices = @transform_2, window_bounds = array<i64: 1, 256>}, {transform_indices = @transform_3, window_bounds = array<i64: 8, 256>}]} {
    %c0_i32 = arith.constant 0 : i32
    %0 = arith.cmpi eq, %arg2, %c0_i32 : i32
    %1 = arith.extui %0 : i1 to i32
    %c0_i32_0 = arith.constant 0 : i32
    %2 = arith.cmpi ne, %1, %c0_i32_0 : i32
    scf.if %2 {
      %cst_9 = arith.constant 0.000000e+00 : f32
      %12 = vector.broadcast %cst_9 : f32 to vector<8x256xf32>
      %c0_10 = arith.constant 0 : index
      %c0_11 = arith.constant 0 : index
      %13 = vector.load %arg7[%c0_10, %c0_11] : memref<8x256xf32, #tpu.memory_space<vmem>>, vector<8x256xf32>
      tpu.vector_store %arg7[%c0_10, %c0_11], %12 {strides = array<i32>} : memref<8x256xf32, #tpu.memory_space<vmem>>, vector<8x256xf32>,
    } else {
    }
    %c0 = arith.constant 0 : index
    %c0_1 = arith.constant 0 : index
    %3 = vector.load %arg7[%c0, %c0_1] : memref<8x256xf32, #tpu.memory_space<vmem>>, vector<8x256xf32>
    %c0_2 = arith.constant 0 : index
    %c0_3 = arith.constant 0 : index
    %4 = vector.load %arg3[%c0_2, %c0_3] : memref<8x512xbf16, #tpu.memory_space<vmem>>, vector<8x512xbf16>
    %c0_4 = arith.constant 0 : index
    %c0_5 = arith.constant 0 : index
    %5 = vector.load %arg4[%c0_4, %c0_5] : memref<512x256xbf16, #tpu.memory_space<vmem>>, vector<512x256xbf16>
    %cst = arith.constant dense<0.000000e+00> : vector<8x256xf32>
    %6 = tpu.matmul %4, %5, %cst {dimension_numbers = #tpu.dot_dimension_numbers<[1], [0], [0], [1], [0, 0, 1, 1], [], []>} : vector<8x512xbf16>, vector<512x256xbf16>, vector<8x256xf32> -> vector<8x256xf32>
    %7 = arith.addf %3, %6 : vector<8x256xf32>
    %c0_6 = arith.constant 0 : index
    %c0_7 = arith.constant 0 : index
    %8 = vector.load %arg7[%c0_6, %c0_7] : memref<8x256xf32, #tpu.memory_space<vmem>>, vector<8x256xf32>
    tpu.vector_store %arg7[%c0_6, %c0_7], %7 {strides = array<i32>} : memref<8x256xf32, #tpu.memory_space<vmem>>, vector<8x256xf32>,
    %c17_i32 = arith.constant 17 : i32
    %9 = arith.cmpi eq, %arg2, %c17_i32 : i32
    %10 = arith.extui %9 : i1 to i32
    %c0_i32_8 = arith.constant 0 : i32
    %11 = arith.cmpi ne, %10, %c0_i32_8 : i32
    scf.if %11 {
      %c0_9 = arith.constant 0 : index
      %c0_10 = arith.constant 0 : index
      %12 = vector.load %arg7[%c0_9, %c0_10] : memref<8x256xf32, #tpu.memory_space<vmem>>, vector<8x256xf32>
      %c0_11 = arith.constant 0 : index
      %c0_12 = arith.constant 0 : index
      %13 = vector.load %arg5[%c0_11, %c0_12] : memref<1x256xf32, #tpu.memory_space<vmem>>, vector<1x256xf32>
      %14 = vector.broadcast %13 : vector<1x256xf32> to vector<8x256xf32>
      %15 = arith.addf %12, %14 : vector<8x256xf32>
      %cst_13 = arith.constant 0.000000e+00 : f32
      %16 = vector.broadcast %cst_13 : f32 to vector<8x256xf32>
      %17 = arith.maximumf %15, %16 : vector<8x256xf32>
      %c0_14 = arith.constant 0 : index
      %c0_15 = arith.constant 0 : index
      %18 = vector.load %arg6[%c0_14, %c0_15] : memref<8x256xf32, #tpu.memory_space<vmem>>, vector<8x256xf32>
      tpu.vector_store %arg6[%c0_14, %c0_15], %17 {strides = array<i32>} : memref<8x256xf32, #tpu.memory_space<vmem>>, vector<8x256xf32>,
    } else {
    }
    return
  }
  func.func @transform_0(%arg0: i32, %arg1: i32, %arg2: i32) -> (i32, i32) {
    %c0_i32 = arith.constant 0 : i32
    return %arg0, %arg2 : i32, i32
  }
  func.func @transform_1(%arg0: i32, %arg1: i32, %arg2: i32) -> (i32, i32) {
    %c0_i32 = arith.constant 0 : i32
    return %arg2, %arg1 : i32, i32
  }
  func.func @transform_2(%arg0: i32, %arg1: i32, %arg2: i32) -> (i32, i32) {
    %c0_i32 = arith.constant 0 : i32
    %c0_i32_0 = arith.constant 0 : i32
    return %c0_i32, %arg1 : i32, i32
  }
  func.func @transform_3(%arg0: i32, %arg1: i32, %arg2: i32) -> (i32, i32) {
    %c0_i32 = arith.constant 0 : i32
    return %arg0, %arg1 : i32, i32
  }
}

module attributes {stable_mosaic.version = 11 : i64} {
  func.func @kernel(%arg0: i32, %arg1: i32, %arg2: i32, %arg3: memref<8x512xbf16, #tpu.memory_space<vmem>>, %arg4: memref<512x256xbf16, #tpu.memory_space<vmem>>, %arg5: memref<1x256xf32, #tpu.memory_space<vmem>>, %arg6: memref<8x256xf32, #tpu.memory_space<vmem>>, %arg7: memref<8x256xf32, #tpu.memory_space<vmem>>) attributes {dimension_semantics = [#tpu.dimension_semantics<parallel>, #tpu.dimension_semantics<parallel>, #tpu.dimension_semantics<arbitrary>], iteration_bounds = array<i64: 1, 16, 8>, scalar_prefetch = 0 : i64, scratch_operands = 1 : i64, tpu.core_type = #tpu.core_type<tc>, window_params = [{transform_indices = @transform_0, window_bounds = array<i64: 8, 512>}, {transform_indices = @transform_1, window_bounds = array<i64: 512, 256>}, {transform_indices = @transform_2, window_bounds = array<i64: 1, 256>}, {transform_indices = @transform_3, window_bounds = array<i64: 8, 256>}]} {
    %c0_i32 = arith.constant 0 : i32
    %0 = arith.cmpi eq, %arg2, %c0_i32 : i32
    %1 = arith.extui %0 : i1 to i32
    %c0_i32_0 = arith.constant 0 : i32
    %2 = arith.cmpi ne, %1, %c0_i32_0 : i32
    scf.if %2 {
      %cst_9 = arith.constant 0.000000e+00 : f32
      %12 = vector.broadcast %cst_9 : f32 to vector<8x256xf32>
      %c0_10 = arith.constant 0 : index
      %c0_11 = arith.constant 0 : index
      %13 = vector.load %arg7[%c0_10, %c0_11] : memref<8x256xf32, #tpu.memory_space<vmem>>, vector<8x256xf32>
      tpu.vector_store %arg7[%c0_10, %c0_11], %12 {strides = array<i32>} : memref<8x256xf32, #tpu.memory_space<vmem>>, vector<8x256xf32>,
    } else {
    }
    %c0 = arith.constant 0 : index
    %c0_1 = arith.constant 0 : index
    %3 = vector.load %arg7[%c0, %c0_1] : memref<8x256xf32, #tpu.memory_space<vmem>>, vector<8x256xf32>
    %c0_2 = arith.constant 0 : index
    %c0_3 = arith.constant 0 : index
    %4 = vector.load %arg3[%c0_2, %c0_3] : memref<8x512xbf16, #tpu.memory_space<vmem>>, vector<8x512xbf16>
    %c0_4 = arith.constant 0 : index
    %c0_5 = arith.constant 0 : index
    %5 = vector.load %arg4[%c0_4, %c0_5] : memref<512x256xbf16, #tpu.memory_space<vmem>>, vector<512x256xbf16>
    %cst = arith.constant dense<0.000000e+00> : vector<8x256xf32>
    %6 = tpu.matmul %4, %5, %cst {dimension_numbers = #tpu.dot_dimension_numbers<[1], [0], [0], [1], [0, 0, 1, 1], [], []>} : vector<8x512xbf16>, vector<512x256xbf16>, vector<8x256xf32> -> vector<8x256xf32>
    %7 = arith.addf %3, %6 : vector<8x256xf32>
    %c0_6 = arith.constant 0 : index
    %c0_7 = arith.constant 0 : index
    %8 = vector.load %arg7[%c0_6, %c0_7] : memref<8x256xf32, #tpu.memory_space<vmem>>, vector<8x256xf32>
    tpu.vector_store %arg7[%c0_6, %c0_7], %7 {strides = array<i32>} : memref<8x256xf32, #tpu.memory_space<vmem>>, vector<8x256xf32>,
    %c7_i32 = arith.constant 7 : i32
    %9 = arith.cmpi eq, %arg2, %c7_i32 : i32
    %10 = arith.extui %9 : i1 to i32
    %c0_i32_8 = arith.constant 0 : i32
    %11 = arith.cmpi ne, %10, %c0_i32_8 : i32
    scf.if %11 {
      %c0_9 = arith.constant 0 : index
      %c0_10 = arith.constant 0 : index
      %12 = vector.load %arg7[%c0_9, %c0_10] : memref<8x256xf32, #tpu.memory_space<vmem>>, vector<8x256xf32>
      %c0_11 = arith.constant 0 : index
      %c0_12 = arith.constant 0 : index
      %13 = vector.load %arg5[%c0_11, %c0_12] : memref<1x256xf32, #tpu.memory_space<vmem>>, vector<1x256xf32>
      %14 = vector.broadcast %13 : vector<1x256xf32> to vector<8x256xf32>
      %15 = arith.addf %12, %14 : vector<8x256xf32>
      %cst_13 = arith.constant 0.000000e+00 : f32
      %16 = vector.broadcast %cst_13 : f32 to vector<8x256xf32>
      %17 = arith.maximumf %15, %16 : vector<8x256xf32>
      %c0_14 = arith.constant 0 : index
      %c0_15 = arith.constant 0 : index
      %18 = vector.load %arg6[%c0_14, %c0_15] : memref<8x256xf32, #tpu.memory_space<vmem>>, vector<8x256xf32>
      tpu.vector_store %arg6[%c0_14, %c0_15], %17 {strides = array<i32>} : memref<8x256xf32, #tpu.memory_space<vmem>>, vector<8x256xf32>,
    } else {
    }
    return
  }
  func.func @transform_0(%arg0: i32, %arg1: i32, %arg2: i32) -> (i32, i32) {
    %c0_i32 = arith.constant 0 : i32
    return %arg0, %arg2 : i32, i32
  }
  func.func @transform_1(%arg0: i32, %arg1: i32, %arg2: i32) -> (i32, i32) {
    %c0_i32 = arith.constant 0 : i32
    return %arg2, %arg1 : i32, i32
  }
  func.func @transform_2(%arg0: i32, %arg1: i32, %arg2: i32) -> (i32, i32) {
    %c0_i32 = arith.constant 0 : i32
    %c0_i32_0 = arith.constant 0 : i32
    return %c0_i32, %arg1 : i32, i32
  }
  func.func @transform_3(%arg0: i32, %arg1: i32, %arg2: i32) -> (i32, i32) {
    %c0_i32 = arith.constant 0 : i32
    return %arg0, %arg1 : i32, i32
  }
}

module attributes {stable_mosaic.version = 11 : i64} {
  func.func @kernel(%arg0: i32, %arg1: i32, %arg2: i32, %arg3: memref<8x512xbf16, #tpu.memory_space<vmem>>, %arg4: memref<512x128xbf16, #tpu.memory_space<vmem>>, %arg5: memref<1x128xf32, #tpu.memory_space<vmem>>, %arg6: memref<8x128xf32, #tpu.memory_space<vmem>>, %arg7: memref<8x128xf32, #tpu.memory_space<vmem>>) attributes {dimension_semantics = [#tpu.dimension_semantics<parallel>, #tpu.dimension_semantics<parallel>, #tpu.dimension_semantics<arbitrary>], iteration_bounds = array<i64: 1, 1, 8>, scalar_prefetch = 0 : i64, scratch_operands = 1 : i64, tpu.core_type = #tpu.core_type<tc>, window_params = [{transform_indices = @transform_0, window_bounds = array<i64: 8, 512>}, {transform_indices = @transform_1, window_bounds = array<i64: 512, 128>}, {transform_indices = @transform_2, window_bounds = array<i64: 1, 128>}, {transform_indices = @transform_3, window_bounds = array<i64: 8, 128>}]} {
    %c0_i32 = arith.constant 0 : i32
    %0 = arith.cmpi eq, %arg2, %c0_i32 : i32
    %1 = arith.extui %0 : i1 to i32
    %c0_i32_0 = arith.constant 0 : i32
    %2 = arith.cmpi ne, %1, %c0_i32_0 : i32
    scf.if %2 {
      %cst_9 = arith.constant 0.000000e+00 : f32
      %12 = vector.broadcast %cst_9 : f32 to vector<8x128xf32>
      %c0_10 = arith.constant 0 : index
      %c0_11 = arith.constant 0 : index
      %13 = vector.load %arg7[%c0_10, %c0_11] : memref<8x128xf32, #tpu.memory_space<vmem>>, vector<8x128xf32>
      tpu.vector_store %arg7[%c0_10, %c0_11], %12 {strides = array<i32>} : memref<8x128xf32, #tpu.memory_space<vmem>>, vector<8x128xf32>,
    } else {
    }
    %c0 = arith.constant 0 : index
    %c0_1 = arith.constant 0 : index
    %3 = vector.load %arg7[%c0, %c0_1] : memref<8x128xf32, #tpu.memory_space<vmem>>, vector<8x128xf32>
    %c0_2 = arith.constant 0 : index
    %c0_3 = arith.constant 0 : index
    %4 = vector.load %arg3[%c0_2, %c0_3] : memref<8x512xbf16, #tpu.memory_space<vmem>>, vector<8x512xbf16>
    %c0_4 = arith.constant 0 : index
    %c0_5 = arith.constant 0 : index
    %5 = vector.load %arg4[%c0_4, %c0_5] : memref<512x128xbf16, #tpu.memory_space<vmem>>, vector<512x128xbf16>
    %cst = arith.constant dense<0.000000e+00> : vector<8x128xf32>
    %6 = tpu.matmul %4, %5, %cst {dimension_numbers = #tpu.dot_dimension_numbers<[1], [0], [0], [1], [0, 0, 1, 1], [], []>} : vector<8x512xbf16>, vector<512x128xbf16>, vector<8x128xf32> -> vector<8x128xf32>
    %7 = arith.addf %3, %6 : vector<8x128xf32>
    %c0_6 = arith.constant 0 : index
    %c0_7 = arith.constant 0 : index
    %8 = vector.load %arg7[%c0_6, %c0_7] : memref<8x128xf32, #tpu.memory_space<vmem>>, vector<8x128xf32>
    tpu.vector_store %arg7[%c0_6, %c0_7], %7 {strides = array<i32>} : memref<8x128xf32, #tpu.memory_space<vmem>>, vector<8x128xf32>,
    %c7_i32 = arith.constant 7 : i32
    %9 = arith.cmpi eq, %arg2, %c7_i32 : i32
    %10 = arith.extui %9 : i1 to i32
    %c0_i32_8 = arith.constant 0 : i32
    %11 = arith.cmpi ne, %10, %c0_i32_8 : i32
    scf.if %11 {
      %c0_9 = arith.constant 0 : index
      %c0_10 = arith.constant 0 : index
      %12 = vector.load %arg7[%c0_9, %c0_10] : memref<8x128xf32, #tpu.memory_space<vmem>>, vector<8x128xf32>
      %c0_11 = arith.constant 0 : index
      %c0_12 = arith.constant 0 : index
      %13 = vector.load %arg5[%c0_11, %c0_12] : memref<1x128xf32, #tpu.memory_space<vmem>>, vector<1x128xf32>
      %14 = vector.broadcast %13 : vector<1x128xf32> to vector<8x128xf32>
      %15 = arith.addf %12, %14 : vector<8x128xf32>
      %16 = arith.negf %15 : vector<8x128xf32>
      %17 = math.exp %16 : vector<8x128xf32>
      %cst_13 = arith.constant 1.000000e+00 : f32
      %18 = vector.broadcast %cst_13 : f32 to vector<8x128xf32>
      %19 = arith.addf %18, %17 : vector<8x128xf32>
      %20 = arith.divf %18, %19 : vector<8x128xf32>
      %c0_14 = arith.constant 0 : index
      %c0_15 = arith.constant 0 : index
      %21 = vector.load %arg6[%c0_14, %c0_15] : memref<8x128xf32, #tpu.memory_space<vmem>>, vector<8x128xf32>
      tpu.vector_store %arg6[%c0_14, %c0_15], %20 {strides = array<i32>} : memref<8x128xf32, #tpu.memory_space<vmem>>, vector<8x128xf32>,
    } else {
    }
    return
  }
  func.func @transform_0(%arg0: i32, %arg1: i32, %arg2: i32) -> (i32, i32) {
    %c0_i32 = arith.constant 0 : i32
    return %arg0, %arg2 : i32, i32
  }
  func.func @transform_1(%arg0: i32, %arg1: i32, %arg2: i32) -> (i32, i32) {
    %c0_i32 = arith.constant 0 : i32
    return %arg2, %arg1 : i32, i32
  }
  func.func @transform_2(%arg0: i32, %arg1: i32, %arg2: i32) -> (i32, i32) {
    %c0_i32 = arith.constant 0 : i32
    %c0_i32_0 = arith.constant 0 : i32
    return %c0_i32, %arg1 : i32, i32
  }
  func.func @transform_3(%arg0: i32, %arg1: i32, %arg2: i32) -> (i32, i32) {
    %c0_i32 = arith.constant 0 : i32
    return %arg0, %arg1 : i32, i32
  }
}

</mosaic_0001>

<llo_original>
// kernel: alexnet_forward.12
$region0: #{alexnet_forward.12}
  #allocation0 [shape = 'u32[]', space=smem, size = 0x4, offset = 0x4, fixed_abs, tag = 'smem constant byte address 0x4 - core index']
  #allocation1 [shape = 'u32[72,128]{1,0:T(1,128)}', space=vmem, size = 0x9000, scoped, tag = 'internal scratch']
  #allocation2 [shape = 'f32[256,128]{1,0:T(8,128)}', space=vmem, size = 0x20000, scoped, tag = 'scratch operand']
  %s0 = inlined_call_operand.vmem [shape: bf16[512,384], index: 0, kind: input, shape index: {}]
  %s1 = inlined_call_operand.vmem [shape: bf16[384,128], index: 1, kind: input, shape index: {}]
  %s2 = inlined_call_operand.vmem [shape: f32[1,128], index: 2, kind: input, shape index: {}]
  %s3 = inlined_call_operand.vmem [shape: f32[512,128], index: 3, kind: output, shape index: {}]
  %s4 = sld [smem:[#allocation0]]
  $region53: #{alexnet_forward.12} parent=0
    _
  %s6 = ssub.s32 1, %s4
  %s7 = scalar_select 0, %s6, %s4
  loop: start=0, step=1, limit=4
  $region2: #{alexnet_forward.12} parent=0 // loop_pre_header
    _
  $region3: #{alexnet_forward.12} parent=0 // loop_header
    %s9 = sphi 0, %s13
    %p10 = scmp.ge.s32.totalorder %s9, 4
    %s16 = sphi 0, %s35
    %s17 = sphi 0, %s31
    %s18 = sphi 0, %s27
    %s19 = sphi 0, %s16
    %s20 = sphi 0, %s17
    %s21 = sphi 0, %s18
    %s22 = sphi 0, %s19
    %s23 = sphi 0, %s20
    %s24 = sphi 0, %s21
    %s40 = sphi 0, %s42
    %s43 = sphi 0, %s40
    %s44 = sphi 0, %s43
    %s60 = sphi 0, %s44
    %s68 = sphi 0, %s70
    %s71 = sphi 0, %s68
    %s72 = sphi 0, %s71
    %s88 = sphi 0, %s72
    %s94 = sphi 0, %s96
    %s97 = sphi 0, %s94
    %s98 = sphi 0, %s97
    %s114 = sphi 0, %s98
    %s122 = sphi 0, %s124
    %s125 = sphi 0, %s122
    %s126 = sphi 0, %s125
    %s142 = sphi 0, %s126
  $region4: #{alexnet_forward.12} parent=0 // loop_header_branch
    %12 = sbr.rel (%p10) target = $region8
  $region5: #{alexnet_forward.12} parent=0 // loop_body
    %s14 = ssub.s32 %s9, 1
    %s15 = ssub.s32 %s9, 2
    %s25 = sadd.s32 1, %s18
    %p26 = scmp.ge.s32.totalorder %s25, 1
    %s27 = scalar_select %p26, 0, %s25
    %s28 = sadd.s32 1, %s17
    %s29 = scalar_select %p26, %s28, %s17
    %p30 = scmp.ge.s32.totalorder %s29, 1
    %s31 = scalar_select %p30, 0, %s29
    %s32 = sadd.s32 1, %s16
    %s33 = scalar_select %p30, %s32, %s16
    %p34 = scmp.ge.s32.totalorder %s33, 2
    %s35 = scalar_select %p34, 0, %s33
    %s36 = ssub.s32 %s16, %s35
    %s37 = ssub.s32 %s18, %s27
    %s38 = sor.u32 %s36, %s37
    %p39 = scmp.eq.s32.totalorder %s38, 0
    %s41 = sadd.s32 %s40, 1
    %s42 = scalar_select %p39, %s40, %s41
    %p45 = pneg %p39
    %p46 = scmp.eq.s32.totalorder %s9, 1
    %p47 = por %p45, %p46
    %p48 = scmp.ne.s32.totalorder %s40, %s43
    %p49 = scmp.eq.s32.totalorder %s9, 0
    %p50 = por %p48, %p49
    %p51 = scmp.ne.s32.totalorder %s40, %s43
    %p52 = scmp.eq.s32.totalorder %s14, 1
    %p53 = por %p51, %p52
    %p54 = scmp.ne.s32.totalorder %s43, %s44
    %p55 = scmp.eq.s32.totalorder %s14, 0
    %p56 = por %p54, %p55
    %p57 = scmp.ne.s32.totalorder %s43, %s44
    %p58 = scmp.eq.s32.totalorder %s15, 1
    %p59 = por %p57, %p58
    %p61 = scmp.ne.s32.totalorder %s44, %s60
    %p62 = scmp.eq.s32.totalorder %s15, 0
    %p63 = por %p61, %p62
    %s64 = ssub.s32 %s18, %s27
    %s65 = ssub.s32 %s17, %s31
    %s66 = sor.u32 %s64, %s65
    %p67 = scmp.eq.s32.totalorder %s66, 0
    %s69 = sadd.s32 %s68, 1
    %s70 = scalar_select %p67, %s68, %s69
    %p73 = pneg %p67
    %p74 = scmp.eq.s32.totalorder %s9, 1
    %p75 = por %p73, %p74
    %p76 = scmp.ne.s32.totalorder %s68, %s71
    %p77 = scmp.eq.s32.totalorder %s9, 0
    %p78 = por %p76, %p77
    %p79 = scmp.ne.s32.totalorder %s68, %s71
    %p80 = scmp.eq.s32.totalorder %s14, 1
    %p81 = por %p79, %p80
    %p82 = scmp.ne.s32.totalorder %s71, %s72
    %p83 = scmp.eq.s32.totalorder %s14, 0
    %p84 = por %p82, %p83
    %p85 = scmp.ne.s32.totalorder %s71, %s72
    %p86 = scmp.eq.s32.totalorder %s15, 1
    %p87 = por %p85, %p86
    %p89 = scmp.ne.s32.totalorder %s72, %s88
    %p90 = scmp.eq.s32.totalorder %s15, 0
    %p91 = por %p89, %p90
    %s92 = ssub.s32 %s17, %s31
    %p93 = scmp.eq.s32.totalorder %s92, 0
    %s95 = sadd.s32 %s94, 1
    %s96 = scalar_select %p93, %s94, %s95
    %p99 = pneg %p93
    %p100 = scmp.eq.s32.totalorder %s9, 1
    %p101 = por %p99, %p100
    %p102 = scmp.ne.s32.totalorder %s94, %s97
    %p103 = scmp.eq.s32.totalorder %s9, 0
    %p104 = por %p102, %p103
    %p105 = scmp.ne.s32.totalorder %s94, %s97
    %p106 = scmp.eq.s32.totalorder %s14, 1
    %p107 = por %p105, %p106
    %p108 = scmp.ne.s32.totalorder %s97, %s98
    %p109 = scmp.eq.s32.totalorder %s14, 0
    %p110 = por %p108, %p109
    %p111 = scmp.ne.s32.totalorder %s97, %s98
    %p112 = scmp.eq.s32.totalorder %s15, 1
    %p113 = por %p111, %p112
    %p115 = scmp.ne.s32.totalorder %s98, %s114
    %p116 = scmp.eq.s32.totalorder %s15, 0
    %p117 = por %p115, %p116
    %s118 = ssub.s32 %s16, %s35
    %s119 = ssub.s32 %s17, %s31
    %s120 = sor.u32 %s118, %s119
    %p121 = scmp.eq.s32.totalorder %s120, 0
    %s123 = sadd.s32 %s122, 1
    %s124 = scalar_select %p121, %s122, %s123
    %p127 = pneg %p121
    %p128 = scmp.eq.s32.totalorder %s9, 1
    %p129 = por %p127, %p128
    %p130 = scmp.ne.s32.totalorder %s122, %s125
    %p131 = scmp.eq.s32.totalorder %s9, 0
    %p132 = por %p130, %p131
    %p133 = scmp.ne.s32.totalorder %s122, %s125
    %p134 = scmp.eq.s32.totalorder %s14, 1
    %p135 = por %p133, %p134
    %p136 = scmp.ne.s32.totalorder %s125, %s126
    %p137 = scmp.eq.s32.totalorder %s14, 0
    %p138 = por %p136, %p137
    %p139 = scmp.ne.s32.totalorder %s125, %s126
    %p140 = scmp.eq.s32.totalorder %s15, 1
    %p141 = por %p139, %p140
    %p143 = scmp.ne.s32.totalorder %s126, %s142
    %p144 = scmp.eq.s32.totalorder %s15, 0
    %p145 = por %p143, %p144
    %p146 = scmp.le.s32.totalorder 1, %s9
    %p147 = scmp.lt.s32.totalorder %s9, 3
    %p148 = pnand %p146, %p147
    %p149 = pneg %p148
    // Predicated region
    $region9: #{alexnet_forward.12} parent=5 // pred_check
      _
    $region10: #{alexnet_forward.12} parent=5 // pred_check_branch
      %151 = sbr.rel (%p148) target = $region12
    $region11: #{alexnet_forward.12} parent=5 // pred_region
      %s152 = ssub.s32 %s9, 1
      // Predicated region
      $region13: #{alexnet_forward.12} parent=11 // pred_check
        %p153 = pneg %p84
      $region14: #{alexnet_forward.12} parent=11 // pred_check_branch
        %155 = sbr.rel (%p153) target = $region16
      $region15: #{alexnet_forward.12} parent=11 // pred_region
        %s156 = smul.u32 48, %s21
        %p157 = scmp.lt.s32.totalorder %s156, 47
        %s158 = scalar_select %p157, %s156, 47
        %p159 = scmp.lt.s32.totalorder %s20, 0
        %s160 = scalar_select %p159, %s20, 0
        %s161 = sadd.s32 %s160, %s158
        %s162 = smul.addr %s161, 4
        %s163 = scalar_lea.vmem %s1, %s162
        %s164 = smul.u32 48, %s21
      $region16: #{alexnet_forward.12} parent=11 // pred_fallthru
        _
      // Predicated region
      $region17: #{alexnet_forward.12} parent=11 // pred_check
        %p165 = pneg %p110
      $region18: #{alexnet_forward.12} parent=11 // pred_check_branch
        %167 = sbr.rel (%p165) target = $region20
      $region19: #{alexnet_forward.12} parent=11 // pred_region
        %p168 = scmp.lt.s32.totalorder %s20, 0
        %s169 = scalar_select %p168, %s20, 0
        %s170 = scalar_lea.vmem %s2, %s169
      $region20: #{alexnet_forward.12} parent=11 // pred_fallthru
        _
    $region12: #{alexnet_forward.12} parent=5 // pred_fallthru
      _
    %p171 = scmp.lt.s32.totalorder %s9, 2
    // Predicated region
    $region21: #{alexnet_forward.12} parent=5 // pred_check
      %p172 = pneg %p171
    $region22: #{alexnet_forward.12} parent=5 // pred_check_branch
      %174 = sbr.rel (%p172) target = $region24
    $region23: #{alexnet_forward.12} parent=5 // pred_region
      // Predicated region
      $region25: #{alexnet_forward.12} parent=23 // pred_check
        %p175 = pneg %p50
      $region26: #{alexnet_forward.12} parent=23 // pred_check_branch
        %177 = sbr.rel (%p175) target = $region28
      $region27: #{alexnet_forward.12} parent=23 // pred_region
        %s178 = smul.u32 32, %s16
        %s179 = smul.u32 3, %s18
        %p180 = scmp.lt.s32.totalorder %s178, 63
        %s181 = scalar_select %p180, %s178, 63
        %p182 = scmp.lt.s32.totalorder %s179, 2
        %s183 = scalar_select %p182, %s179, 2
        %s184 = smul.addr %s181, 3
        %s185 = sadd.s32 %s183, %s184
        %s186 = smul.addr %s185, 4
        %s187 = scalar_lea.vmem %s0, %s186
        %s188 = smul.u32 32, %s16
        %s189 = smul.u32 3, %s18
      $region28: #{alexnet_forward.12} parent=23 // pred_fallthru
        _
    $region24: #{alexnet_forward.12} parent=5 // pred_fallthru
      _
    %p190 = scmp.le.s32.totalorder 1, %s9
    %p191 = scmp.lt.s32.totalorder %s9, 3
    %p192 = pnand %p190, %p191
    %p193 = pneg %p192
    // Predicated region
    $region29: #{alexnet_forward.12} parent=5 // pred_check
      _
    $region30: #{alexnet_forward.12} parent=5 // pred_check_branch
      %195 = sbr.rel (%p192) target = $region32
    $region31: #{alexnet_forward.12} parent=5 // pred_region
      %s196 = ssub.s32 %s9, 1
      %s197 = smul.u32 32, %s19
      %s198 = smul.u32 3, %s21
      %p199 = scmp.lt.s32.totalorder %s197, 63
      %s200 = scalar_select %p199, %s197, 63
      %p201 = scmp.lt.s32.totalorder %s198, 2
      %s202 = scalar_select %p201, %s198, 2
      %s203 = smul.addr %s200, 3
      %s204 = sadd.s32 %s202, %s203
      %s205 = smul.addr %s204, 4
      %s206 = scalar_lea.vmem %s0, %s205
      %p207 = pneg %p56
      %p208 = pneg %p53
      %s209 = smul.u32 48, %s21
      %p210 = scmp.lt.s32.totalorder %s209, 47
      %s211 = scalar_select %p210, %s209, 47
      %p212 = scmp.lt.s32.totalorder %s20, 0
      %s213 = scalar_select %p212, %s20, 0
      %s214 = sadd.s32 %s213, %s211
      %s215 = smul.addr %s214, 4
      %s216 = scalar_lea.vmem %s1, %s215
      %p217 = pneg %p84
      %p218 = pneg %p81
      %p219 = scmp.lt.s32.totalorder %s20, 0
      %s220 = scalar_select %p219, %s20, 0
      %s221 = scalar_lea.vmem %s2, %s220
      %p222 = pneg %p110
      %p223 = pneg %p107
      %p224 = pneg %p138
      %p225 = pneg %p135
      %s226 = smul.u32 32, %s19
      %p227 = scmp.lt.s32.totalorder %s226, 63
      %s228 = scalar_select %p227, %s226, 63
      %p229 = scmp.lt.s32.totalorder %s20, 0
      %s230 = scalar_select %p229, %s20, 0
      %s231 = sadd.s32 %s230, %s228
      %s232 = smul.addr %s231, 8
      %s233 = scalar_lea.vmem %s3, %s232
      %s234 = smul.u32 32, %s19
      %s235 = smul.u32 3, %s21
      %p236 = scmp.lt.s32.totalorder %s234, 63
      %s237 = scalar_select %p236, %s234, 63
      %p238 = scmp.lt.s32.totalorder %s235, 2
      %s239 = scalar_select %p238, %s235, 2
      %s240 = smul.addr %s237, 3
      %s241 = sadd.s32 %s239, %s240
      %s242 = smul.addr %s241, 4
      %s243 = scalar_lea.vmem %s0, %s242
      %s244 = smul.u32 32, %s19
      %s245 = smul.u32 3, %s21
      %s246 = smul.u32 48, %s21
      %p247 = scmp.lt.s32.totalorder %s246, 47
      %s248 = scalar_select %p247, %s246, 47
      %p249 = scmp.lt.s32.totalorder %s20, 0
      %s250 = scalar_select %p249, %s20, 0
      %s251 = sadd.s32 %s250, %s248
      %s252 = smul.addr %s251, 4
      %s253 = scalar_lea.vmem %s1, %s252
      %s254 = smul.u32 48, %s21
      %p255 = scmp.lt.s32.totalorder %s20, 0
      %s256 = scalar_select %p255, %s20, 0
      %s257 = scalar_lea.vmem %s2, %s256
      %s258 = smul.u32 32, %s19
      %p259 = scmp.lt.s32.totalorder %s258, 63
      %s260 = scalar_select %p259, %s258, 63
      %p261 = scmp.lt.s32.totalorder %s20, 0
      %s262 = scalar_select %p261, %s20, 0
      %s263 = sadd.s32 %s262, %s260
      %s264 = smul.addr %s263, 8
      %s265 = scalar_lea.vmem %s3, %s264
      %s266 = smul.u32 32, %s19
      %p267 = scmp.eq.s32.totalorder %s21, 0
      // Predicated region
      $region33: #{alexnet_forward.12} parent=31 // pred_check
        %p268 = pneg %p267
      $region34: #{alexnet_forward.12} parent=31 // pred_check_branch
        %270 = sbr.rel (%p268) target = $region36
      $region35: #{alexnet_forward.12} parent=31 // pred_region
        %271 = vst [vmem:[#allocation2] sm:$0xff] 0.0
        %272 = vst [vmem:[#allocation2 + $0x8] sm:$0xff] 0.0
        %273 = vst [vmem:[#allocation2 + $0x10] sm:$0xff] 0.0
        %274 = vst [vmem:[#allocation2 + $0x18] sm:$0xff] 0.0
        %275 = vst [vmem:[#allocation2 + $0x20] sm:$0xff] 0.0
        %276 = vst [vmem:[#allocation2 + $0x28] sm:$0xff] 0.0
        %277 = vst [vmem:[#allocation2 + $0x30] sm:$0xff] 0.0
        %278 = vst [vmem:[#allocation2 + $0x38] sm:$0xff] 0.0
        %279 = vst [vmem:[#allocation2 + $0x40] sm:$0xff] 0.0
        %280 = vst [vmem:[#allocation2 + $0x48] sm:$0xff] 0.0
        %281 = vst [vmem:[#allocation2 + $0x50] sm:$0xff] 0.0
        %282 = vst [vmem:[#allocation2 + $0x58] sm:$0xff] 0.0
        %283 = vst [vmem:[#allocation2 + $0x60] sm:$0xff] 0.0
        %284 = vst [vmem:[#allocation2 + $0x68] sm:$0xff] 0.0
        %285 = vst [vmem:[#allocation2 + $0x70] sm:$0xff] 0.0
        %286 = vst [vmem:[#allocation2 + $0x78] sm:$0xff] 0.0
        %287 = vst [vmem:[#allocation2 + $0x80] sm:$0xff] 0.0
        %288 = vst [vmem:[#allocation2 + $0x88] sm:$0xff] 0.0
        %289 = vst [vmem:[#allocation2 + $0x90] sm:$0xff] 0.0
        %290 = vst [vmem:[#allocation2 + $0x98] sm:$0xff] 0.0
        %291 = vst [vmem:[#allocation2 + $0xa0] sm:$0xff] 0.0
        %292 = vst [vmem:[#allocation2 + $0xa8] sm:$0xff] 0.0
        %293 = vst [vmem:[#allocation2 + $0xb0] sm:$0xff] 0.0
        %294 = vst [vmem:[#allocation2 + $0xb8] sm:$0xff] 0.0
        %295 = vst [vmem:[#allocation2 + $0xc0] sm:$0xff] 0.0
        %296 = vst [vmem:[#allocation2 + $0xc8] sm:$0xff] 0.0
        %297 = vst [vmem:[#allocation2 + $0xd0] sm:$0xff] 0.0
        %298 = vst [vmem:[#allocation2 + $0xd8] sm:$0xff] 0.0
        %299 = vst [vmem:[#allocation2 + $0xe0] sm:$0xff] 0.0
        %300 = vst [vmem:[#allocation2 + $0xe8] sm:$0xff] 0.0
        %301 = vst [vmem:[#allocation2 + $0xf0] sm:$0xff] 0.0
        %302 = vst [vmem:[#allocation2 + $0xf8] sm:$0xff] 0.0
      $region36: #{alexnet_forward.12} parent=31 // pred_fallthru
        _
      %v303 = vld [vmem:[#allocation2] sm:$0xff]
      %v304 = vld [vmem:[#allocation2 + $0x8] sm:$0xff]
      %v305 = vld [vmem:[#allocation2 + $0x10] sm:$0xff]
      %v306 = vld [vmem:[#allocation2 + $0x18] sm:$0xff]
      %v307 = vld [vmem:[#allocation2 + $0x20] sm:$0xff]
      %v308 = vld [vmem:[#allocation2 + $0x28] sm:$0xff]
      %v309 = vld [vmem:[#allocation2 + $0x30] sm:$0xff]
      %v310 = vld [vmem:[#allocation2 + $0x38] sm:$0xff]
      %v311 = vld [vmem:[#allocation2 + $0x40] sm:$0xff]
      %v312 = vld [vmem:[#allocation2 + $0x48] sm:$0xff]
      %v313 = vld [vmem:[#allocation2 + $0x50] sm:$0xff]
      %v314 = vld [vmem:[#allocation2 + $0x58] sm:$0xff]
      %v315 = vld [vmem:[#allocation2 + $0x60] sm:$0xff]
      %v316 = vld [vmem:[#allocation2 + $0x68] sm:$0xff]
      %v317 = vld [vmem:[#allocation2 + $0x70] sm:$0xff]
      %v318 = vld [vmem:[#allocation2 + $0x78] sm:$0xff]
      %v319 = vld [vmem:[#allocation2 + $0x80] sm:$0xff]
      %v320 = vld [vmem:[#allocation2 + $0x88] sm:$0xff]
      %v321 = vld [vmem:[#allocation2 + $0x90] sm:$0xff]
      %v322 = vld [vmem:[#allocation2 + $0x98] sm:$0xff]
      %v323 = vld [vmem:[#allocation2 + $0xa0] sm:$0xff]
      %v324 = vld [vmem:[#allocation2 + $0xa8] sm:$0xff]
      %v325 = vld [vmem:[#allocation2 + $0xb0] sm:$0xff]
      %v326 = vld [vmem:[#allocation2 + $0xb8] sm:$0xff]
      %v327 = vld [vmem:[#allocation2 + $0xc0] sm:$0xff]
      %v328 = vld [vmem:[#allocation2 + $0xc8] sm:$0xff]
      %v329 = vld [vmem:[#allocation2 + $0xd0] sm:$0xff]
      %v330 = vld [vmem:[#allocation2 + $0xd8] sm:$0xff]
      %v331 = vld [vmem:[#allocation2 + $0xe0] sm:$0xff]
      %v332 = vld [vmem:[#allocation2 + $0xe8] sm:$0xff]
      %v333 = vld [vmem:[#allocation2 + $0xf0] sm:$0xff]
      %v334 = vld [vmem:[#allocation2 + $0xf8] sm:$0xff]
      %v335 = vld [vmem:[%s243] sm:$0xff]
      %v336 = vld [vmem:[%s243 + $0x8] sm:$0xf]
      %v337 = vld [vmem:[%s243 + $0xc] sm:$0xff]
      %v338 = vld [vmem:[%s243 + $0x14] sm:$0xf]
      %v339 = vld [vmem:[%s243 + $0x18] sm:$0xff]
      %v340 = vld [vmem:[%s243 + $0x20] sm:$0xf]
      %v341 = vld [vmem:[%s243 + $0x24] sm:$0xff]
      %v342 = vld [vmem:[%s243 + $0x2c] sm:$0xf]
      %v343 = vld [vmem:[%s243 + $0x30] sm:$0xff]
      %v344 = vld [vmem:[%s243 + $0x38] sm:$0xf]
      %v345 = vld [vmem:[%s243 + $0x3c] sm:$0xff]
      %v346 = vld [vmem:[%s243 + $0x44] sm:$0xf]
      %v347 = vld [vmem:[%s243 + $0x48] sm:$0xff]
      %v348 = vld [vmem:[%s243 + $0x50] sm:$0xf]
      %v349 = vld [vmem:[%s243 + $0x54] sm:$0xff]
      %v350 = vld [vmem:[%s243 + $0x5c] sm:$0xf]
      %v351 = vld [vmem:[%s243 + $0x60] sm:$0xff]
      %v352 = vld [vmem:[%s243 + $0x68] sm:$0xf]
      %v353 = vld [vmem:[%s243 + $0x6c] sm:$0xff]
      %v354 = vld [vmem:[%s243 + $0x74] sm:$0xf]
      %v355 = vld [vmem:[%s243 + $0x78] sm:$0xff]
      %v356 = vld [vmem:[%s243 + $0x80] sm:$0xf]
      %v357 = vld [vmem:[%s243 + $0x84] sm:$0xff]
      %v358 = vld [vmem:[%s243 + $0x8c] sm:$0xf]
      %v359 = vld [vmem:[%s243 + $0x90] sm:$0xff]
      %v360 = vld [vmem:[%s243 + $0x98] sm:$0xf]
      %v361 = vld [vmem:[%s243 + $0x9c] sm:$0xff]
      %v362 = vld [vmem:[%s243 + $0xa4] sm:$0xf]
      %v363 = vld [vmem:[%s243 + $0xa8] sm:$0xff]
      %v364 = vld [vmem:[%s243 + $0xb0] sm:$0xf]
      %v365 = vld [vmem:[%s243 + $0xb4] sm:$0xff]
      %v366 = vld [vmem:[%s243 + $0xbc] sm:$0xf]
      %v367 = vld [vmem:[%s243 + $0xc0] sm:$0xff]
      %v368 = vld [vmem:[%s243 + $0xc8] sm:$0xf]
      %v369 = vld [vmem:[%s243 + $0xcc] sm:$0xff]
      %v370 = vld [vmem:[%s243 + $0xd4] sm:$0xf]
      %v371 = vld [vmem:[%s243 + $0xd8] sm:$0xff]
      %v372 = vld [vmem:[%s243 + $0xe0] sm:$0xf]
      %v373 = vld [vmem:[%s243 + $0xe4] sm:$0xff]
      %v374 = vld [vmem:[%s243 + $0xec] sm:$0xf]
      %v375 = vld [vmem:[%s243 + $0xf0] sm:$0xff]
      %v376 = vld [vmem:[%s243 + $0xf8] sm:$0xf]
      %v377 = vld [vmem:[%s243 + $0xfc] sm:$0xff]
      %v378 = vld [vmem:[%s243 + $0x104] sm:$0xf]
      %v379 = vld [vmem:[%s243 + $0x108] sm:$0xff]
      %v380 = vld [vmem:[%s243 + $0x110] sm:$0xf]
      %v381 = vld [vmem:[%s243 + $0x114] sm:$0xff]
      %v382 = vld [vmem:[%s243 + $0x11c] sm:$0xf]
      %v383 = vld [vmem:[%s243 + $0x120] sm:$0xff]
      %v384 = vld [vmem:[%s243 + $0x128] sm:$0xf]
      %v385 = vld [vmem:[%s243 + $0x12c] sm:$0xff]
      %v386 = vld [vmem:[%s243 + $0x134] sm:$0xf]
      %v387 = vld [vmem:[%s243 + $0x138] sm:$0xff]
      %v388 = vld [vmem:[%s243 + $0x140] sm:$0xf]
      %v389 = vld [vmem:[%s243 + $0x144] sm:$0xff]
      %v390 = vld [vmem:[%s243 + $0x14c] sm:$0xf]
      %v391 = vld [vmem:[%s243 + $0x150] sm:$0xff]
      %v392 = vld [vmem:[%s243 + $0x158] sm:$0xf]
      %v393 = vld [vmem:[%s243 + $0x15c] sm:$0xff]
      %v394 = vld [vmem:[%s243 + $0x164] sm:$0xf]
      %v395 = vld [vmem:[%s243 + $0x168] sm:$0xff]
      %v396 = vld [vmem:[%s243 + $0x170] sm:$0xf]
      %v397 = vld [vmem:[%s243 + $0x174] sm:$0xff]
      %v398 = vld [vmem:[%s243 + $0x17c] sm:$0xf]
      %v399 = vld [vmem:[%s253] sm:$0xf]
      %v400 = vld [vmem:[%s253 + $0x4] sm:$0xf]
      %v401 = vld [vmem:[%s253 + $0x8] sm:$0xf]
      %v402 = vld [vmem:[%s253 + $0xc] sm:$0xf]
      %v403 = vld [vmem:[%s253 + $0x10] sm:$0xf]
      %v404 = vld [vmem:[%s253 + $0x14] sm:$0xf]
      %v405 = vld [vmem:[%s253 + $0x18] sm:$0xf]
      %v406 = vld [vmem:[%s253 + $0x1c] sm:$0xf]
      %v407 = vld [vmem:[%s253 + $0x20] sm:$0xf]
      %v408 = vld [vmem:[%s253 + $0x24] sm:$0xf]
      %v409 = vld [vmem:[%s253 + $0x28] sm:$0xf]
      %v410 = vld [vmem:[%s253 + $0x2c] sm:$0xf]
      %v411 = vld [vmem:[%s253 + $0x30] sm:$0xf]
      %v412 = vld [vmem:[%s253 + $0x34] sm:$0xf]
      %v413 = vld [vmem:[%s253 + $0x38] sm:$0xf]
      %v414 = vld [vmem:[%s253 + $0x3c] sm:$0xf]
      %v415 = vld [vmem:[%s253 + $0x40] sm:$0xf]
      %v416 = vld [vmem:[%s253 + $0x44] sm:$0xf]
      %v417 = vld [vmem:[%s253 + $0x48] sm:$0xf]
      %v418 = vld [vmem:[%s253 + $0x4c] sm:$0xf]
      %v419 = vld [vmem:[%s253 + $0x50] sm:$0xf]
      %v420 = vld [vmem:[%s253 + $0x54] sm:$0xf]
      %v421 = vld [vmem:[%s253 + $0x58] sm:$0xf]
      %v422 = vld [vmem:[%s253 + $0x5c] sm:$0xf]
      %v423 = vld [vmem:[%s253 + $0x60] sm:$0xf]
      %v424 = vld [vmem:[%s253 + $0x64] sm:$0xf]
      %v425 = vld [vmem:[%s253 + $0x68] sm:$0xf]
      %v426 = vld [vmem:[%s253 + $0x6c] sm:$0xf]
      %v427 = vld [vmem:[%s253 + $0x70] sm:$0xf]
      %v428 = vld [vmem:[%s253 + $0x74] sm:$0xf]
      %v429 = vld [vmem:[%s253 + $0x78] sm:$0xf]
      %v430 = vld [vmem:[%s253 + $0x7c] sm:$0xf]
      %v431 = vld [vmem:[%s253 + $0x80] sm:$0xf]
      %v432 = vld [vmem:[%s253 + $0x84] sm:$0xf]
      %v433 = vld [vmem:[%s253 + $0x88] sm:$0xf]
      %v434 = vld [vmem:[%s253 + $0x8c] sm:$0xf]
      %v435 = vld [vmem:[%s253 + $0x90] sm:$0xf]
      %v436 = vld [vmem:[%s253 + $0x94] sm:$0xf]
      %v437 = vld [vmem:[%s253 + $0x98] sm:$0xf]
      %v438 = vld [vmem:[%s253 + $0x9c] sm:$0xf]
      %v439 = vld [vmem:[%s253 + $0xa0] sm:$0xf]
      %v440 = vld [vmem:[%s253 + $0xa4] sm:$0xf]
      %v441 = vld [vmem:[%s253 + $0xa8] sm:$0xf]
      %v442 = vld [vmem:[%s253 + $0xac] sm:$0xf]
      %v443 = vld [vmem:[%s253 + $0xb0] sm:$0xf]
      %v444 = vld [vmem:[%s253 + $0xb4] sm:$0xf]
      %v445 = vld [vmem:[%s253 + $0xb8] sm:$0xf]
      %v446 = vld [vmem:[%s253 + $0xbc] sm:$0xf]
      %v511 = vunpack.c.l.b16 %v335
      %v512 = vunpack.c.h.b16 %v335
      %v513 = vunpack.c.l.b16 %v336
      %v514 = vunpack.c.l.b16 %v337
      %v515 = vunpack.c.h.b16 %v337
      %v516 = vunpack.c.l.b16 %v338
      %v517 = vunpack.c.l.b16 %v339
      %v518 = vunpack.c.h.b16 %v339
      %v519 = vunpack.c.l.b16 %v340
      %v520 = vunpack.c.l.b16 %v341
      %v521 = vunpack.c.h.b16 %v341
      %v522 = vunpack.c.l.b16 %v342
      %v523 = vunpack.c.l.b16 %v343
      %v524 = vunpack.c.h.b16 %v343
      %v525 = vunpack.c.l.b16 %v344
      %v526 = vunpack.c.l.b16 %v345
      %v527 = vunpack.c.h.b16 %v345
      %v528 = vunpack.c.l.b16 %v346
      %v529 = vunpack.c.l.b16 %v347
      %v530 = vunpack.c.h.b16 %v347
      %v531 = vunpack.c.l.b16 %v348
      %v532 = vunpack.c.l.b16 %v349
      %v533 = vunpack.c.h.b16 %v349
      %v534 = vunpack.c.l.b16 %v350
      %v535 = vunpack.c.l.b16 %v351
      %v536 = vunpack.c.h.b16 %v351
      %v537 = vunpack.c.l.b16 %v352
      %v538 = vunpack.c.l.b16 %v353
      %v539 = vunpack.c.h.b16 %v353
      %v540 = vunpack.c.l.b16 %v354
      %v541 = vunpack.c.l.b16 %v355
      %v542 = vunpack.c.h.b16 %v355
      %v543 = vunpack.c.l.b16 %v356
      %v544 = vunpack.c.l.b16 %v357
      %v545 = vunpack.c.h.b16 %v357
      %v546 = vunpack.c.l.b16 %v358
      %v547 = vunpack.c.l.b16 %v359
      %v548 = vunpack.c.h.b16 %v359
      %v549 = vunpack.c.l.b16 %v360
      %v550 = vunpack.c.l.b16 %v361
      %v551 = vunpack.c.h.b16 %v361
      %v552 = vunpack.c.l.b16 %v362
      %v553 = vunpack.c.l.b16 %v363
      %v554 = vunpack.c.h.b16 %v363
      %v555 = vunpack.c.l.b16 %v364
      %v556 = vunpack.c.l.b16 %v365
      %v557 = vunpack.c.h.b16 %v365
      %v558 = vunpack.c.l.b16 %v366
      %v559 = vunpack.c.l.b16 %v367
      %v560 = vunpack.c.h.b16 %v367
      %v561 = vunpack.c.l.b16 %v368
      %v562 = vunpack.c.l.b16 %v369
      %v563 = vunpack.c.h.b16 %v369
      %v564 = vunpack.c.l.b16 %v370
      %v565 = vunpack.c.l.b16 %v371
      %v566 = vunpack.c.h.b16 %v371
      %v567 = vunpack.c.l.b16 %v372
      %v568 = vunpack.c.l.b16 %v373
      %v569 = vunpack.c.h.b16 %v373
      %v570 = vunpack.c.l.b16 %v374
      %v571 = vunpack.c.l.b16 %v375
      %v572 = vunpack.c.h.b16 %v375
      %v573 = vunpack.c.l.b16 %v376
      %v574 = vunpack.c.l.b16 %v377
      %v575 = vunpack.c.h.b16 %v377
      %v576 = vunpack.c.l.b16 %v378
      %v577 = vunpack.c.l.b16 %v379
      %v578 = vunpack.c.h.b16 %v379
      %v579 = vunpack.c.l.b16 %v380
      %v580 = vunpack.c.l.b16 %v381
      %v581 = vunpack.c.h.b16 %v381
      %v582 = vunpack.c.l.b16 %v382
      %v583 = vunpack.c.l.b16 %v383
      %v584 = vunpack.c.h.b16 %v383
      %v585 = vunpack.c.l.b16 %v384
      %v586 = vunpack.c.l.b16 %v385
      %v587 = vunpack.c.h.b16 %v385
      %v588 = vunpack.c.l.b16 %v386
      %v589 = vunpack.c.l.b16 %v387
      %v590 = vunpack.c.h.b16 %v387
      %v591 = vunpack.c.l.b16 %v388
      %v592 = vunpack.c.l.b16 %v389
      %v593 = vunpack.c.h.b16 %v389
      %v594 = vunpack.c.l.b16 %v390
      %v595 = vunpack.c.l.b16 %v391
      %v596 = vunpack.c.h.b16 %v391
      %v597 = vunpack.c.l.b16 %v392
      %v598 = vunpack.c.l.b16 %v393
      %v599 = vunpack.c.h.b16 %v393
      %v600 = vunpack.c.l.b16 %v394
      %v601 = vunpack.c.l.b16 %v395
      %v602 = vunpack.c.h.b16 %v395
      %v603 = vunpack.c.l.b16 %v396
      %v604 = vunpack.c.l.b16 %v397
      %v605 = vunpack.c.h.b16 %v397
      %v606 = vunpack.c.l.b16 %v398
      %v607 = vpack.c.b16 %v514, %v511
      %v608 = vpack.c.b16 %v515, %v512
      %v609 = vpack.c.b16 %v516, %v513
      %v610 = vpack.c.b16 %v520, %v517
      %v611 = vpack.c.b16 %v521, %v518
      %v612 = vpack.c.b16 %v522, %v519
      %v613 = vpack.c.b16 %v526, %v523
      %v614 = vpack.c.b16 %v527, %v524
      %v615 = vpack.c.b16 %v528, %v525
      %v616 = vpack.c.b16 %v532, %v529
      %v617 = vpack.c.b16 %v533, %v530
      %v618 = vpack.c.b16 %v534, %v531
      %v619 = vpack.c.b16 %v538, %v535
      %v620 = vpack.c.b16 %v539, %v536
      %v621 = vpack.c.b16 %v540, %v537
      %v622 = vpack.c.b16 %v544, %v541
      %v623 = vpack.c.b16 %v545, %v542
      %v624 = vpack.c.b16 %v546, %v543
      %v625 = vpack.c.b16 %v550, %v547
      %v626 = vpack.c.b16 %v551, %v548
      %v627 = vpack.c.b16 %v552, %v549
      %v628 = vpack.c.b16 %v556, %v553
      %v629 = vpack.c.b16 %v557, %v554
      %v630 = vpack.c.b16 %v558, %v555
      %v631 = vpack.c.b16 %v562, %v559
      %v632 = vpack.c.b16 %v563, %v560
      %v633 = vpack.c.b16 %v564, %v561
      %v634 = vpack.c.b16 %v568, %v565
      %v635 = vpack.c.b16 %v569, %v566
      %v636 = vpack.c.b16 %v570, %v567
      %v637 = vpack.c.b16 %v574, %v571
      %v638 = vpack.c.b16 %v575, %v572
      %v639 = vpack.c.b16 %v576, %v573
      %v640 = vpack.c.b16 %v580, %v577
      %v641 = vpack.c.b16 %v581, %v578
      %v642 = vpack.c.b16 %v582, %v579
      %v643 = vpack.c.b16 %v586, %v583
      %v644 = vpack.c.b16 %v587, %v584
      %v645 = vpack.c.b16 %v588, %v585
      %v646 = vpack.c.b16 %v592, %v589
      %v647 = vpack.c.b16 %v593, %v590
      %v648 = vpack.c.b16 %v594, %v591
      %v649 = vpack.c.b16 %v598, %v595
      %v650 = vpack.c.b16 %v599, %v596
      %v651 = vpack.c.b16 %v600, %v597
      %v652 = vpack.c.b16 %v604, %v601
      %v653 = vpack.c.b16 %v605, %v602
      %v654 = vpack.c.b16 %v606, %v603
      %v751 = vunpack.c.l.b16 %v399
      %v752 = vunpack.c.l.b16 %v400
      %v753 = vunpack.c.l.b16 %v401
      %v754 = vunpack.c.l.b16 %v402
      %v755 = vunpack.c.l.b16 %v403
      %v756 = vunpack.c.l.b16 %v404
      %v757 = vunpack.c.l.b16 %v405
      %v758 = vunpack.c.l.b16 %v406
      %v759 = vunpack.c.l.b16 %v407
      %v760 = vunpack.c.l.b16 %v408
      %v761 = vunpack.c.l.b16 %v409
      %v762 = vunpack.c.l.b16 %v410
      %v763 = vunpack.c.l.b16 %v411
      %v764 = vunpack.c.l.b16 %v412
      %v765 = vunpack.c.l.b16 %v413
      %v766 = vunpack.c.l.b16 %v414
      %v767 = vunpack.c.l.b16 %v415
      %v768 = vunpack.c.l.b16 %v416
      %v769 = vunpack.c.l.b16 %v417
      %v770 = vunpack.c.l.b16 %v418
      %v771 = vunpack.c.l.b16 %v419
      %v772 = vunpack.c.l.b16 %v420
      %v773 = vunpack.c.l.b16 %v421
      %v774 = vunpack.c.l.b16 %v422
      %v775 = vunpack.c.l.b16 %v423
      %v776 = vunpack.c.l.b16 %v424
      %v777 = vunpack.c.l.b16 %v425
      %v778 = vunpack.c.l.b16 %v426
      %v779 = vunpack.c.l.b16 %v427
      %v780 = vunpack.c.l.b16 %v428
      %v781 = vunpack.c.l.b16 %v429
      %v782 = vunpack.c.l.b16 %v430
      %v783 = vunpack.c.l.b16 %v431
      %v784 = vunpack.c.l.b16 %v432
      %v785 = vunpack.c.l.b16 %v433
      %v786 = vunpack.c.l.b16 %v434
      %v787 = vunpack.c.l.b16 %v435
      %v788 = vunpack.c.l.b16 %v436
      %v789 = vunpack.c.l.b16 %v437
      %v790 = vunpack.c.l.b16 %v438
      %v791 = vunpack.c.l.b16 %v439
      %v792 = vunpack.c.l.b16 %v440
      %v793 = vunpack.c.l.b16 %v441
      %v794 = vunpack.c.l.b16 %v442
      %v795 = vunpack.c.l.b16 %v443
      %v796 = vunpack.c.l.b16 %v444
      %v797 = vunpack.c.l.b16 %v445
      %v798 = vunpack.c.l.b16 %v446
      %v799 = vpack.c.b16 %v752, %v751
      %v800 = vpack.c.b16 %v754, %v753
      %v801 = vpack.c.b16 %v756, %v755
      %v802 = vpack.c.b16 %v758, %v757
      %v803 = vpack.c.b16 %v760, %v759
      %v804 = vpack.c.b16 %v762, %v761
      %v805 = vpack.c.b16 %v764, %v763
      %v806 = vpack.c.b16 %v766, %v765
      %v807 = vpack.c.b16 %v768, %v767
      %v808 = vpack.c.b16 %v770, %v769
      %v809 = vpack.c.b16 %v772, %v771
      %v810 = vpack.c.b16 %v774, %v773
      %v811 = vpack.c.b16 %v776, %v775
      %v812 = vpack.c.b16 %v778, %v777
      %v813 = vpack.c.b16 %v780, %v779
      %v814 = vpack.c.b16 %v782, %v781
      %v815 = vpack.c.b16 %v784, %v783
      %v816 = vpack.c.b16 %v786, %v785
      %v817 = vpack.c.b16 %v788, %v787
      %v818 = vpack.c.b16 %v790, %v789
      %v819 = vpack.c.b16 %v792, %v791
      %v820 = vpack.c.b16 %v794, %v793
      %v821 = vpack.c.b16 %v796, %v795
      %v822 = vpack.c.b16 %v798, %v797
      %847 = vmatpush.bf16.msra.mxu0 %v806
      %848 = vmatpush.bf16.msra.mxu0 %v805
      %849 = vmatpush.bf16.msra.mxu0 %v804
      %850 = vmatpush.bf16.msra.mxu0 %v803
      %851 = vmatpush.bf16.msra.mxu0 %v802
      %852 = vmatpush.bf16.msra.mxu0 %v801
      %853 = vmatpush.bf16.msra.mxu0 %v800
      %854 = vmatpush.bf16.msra.mxu0 %v799
      %855 = vmatmul.bf16.gmra.mxu0 %v607
      %v856 = vpop.f32.mrf.mxu0
      %v857 = vadd.f32 0.0, %v856
      %v858 = vpop.f32.mrf.mxu0
      %v859 = vadd.f32 0.0, %v858
      %860 = vmatmul.bf16.gmra.mxu0 %v610
      %v861 = vpop.f32.mrf.mxu0
      %v862 = vadd.f32 0.0, %v861
      %v863 = vpop.f32.mrf.mxu0
      %v864 = vadd.f32 0.0, %v863
      %865 = vmatmul.bf16.gmra.mxu0 %v613
      %v866 = vpop.f32.mrf.mxu0
      %v867 = vadd.f32 0.0, %v866
      %v868 = vpop.f32.mrf.mxu0
      %v869 = vadd.f32 0.0, %v868
      %870 = vmatmul.bf16.gmra.mxu0 %v616
      %v871 = vpop.f32.mrf.mxu0
      %v872 = vadd.f32 0.0, %v871
      %v873 = vpop.f32.mrf.mxu0
      %v874 = vadd.f32 0.0, %v873
      %875 = vmatmul.bf16.gmra.mxu0 %v619
      %v876 = vpop.f32.mrf.mxu0
      %v877 = vadd.f32 0.0, %v876
      %v878 = vpop.f32.mrf.mxu0
      %v879 = vadd.f32 0.0, %v878
      %880 = vmatmul.bf16.gmra.mxu0 %v622
      %v881 = vpop.f32.mrf.mxu0
      %v882 = vadd.f32 0.0, %v881
      %v883 = vpop.f32.mrf.mxu0
      %v884 = vadd.f32 0.0, %v883
      %885 = vmatmul.bf16.gmra.mxu0 %v625
      %v886 = vpop.f32.mrf.mxu0
      %v887 = vadd.f32 0.0, %v886
      %v888 = vpop.f32.mrf.mxu0
      %v889 = vadd.f32 0.0, %v888
      %890 = vmatmul.bf16.gmra.mxu0 %v628
      %v891 = vpop.f32.mrf.mxu0
      %v892 = vadd.f32 0.0, %v891
      %v893 = vpop.f32.mrf.mxu0
      %v894 = vadd.f32 0.0, %v893
      %895 = vmatmul.bf16.gmra.mxu0 %v631
      %v896 = vpop.f32.mrf.mxu0
      %v897 = vadd.f32 0.0, %v896
      %v898 = vpop.f32.mrf.mxu0
      %v899 = vadd.f32 0.0, %v898
      %900 = vmatmul.bf16.gmra.mxu0 %v634
      %v901 = vpop.f32.mrf.mxu0
      %v902 = vadd.f32 0.0, %v901
      %v903 = vpop.f32.mrf.mxu0
      %v904 = vadd.f32 0.0, %v903
      %905 = vmatmul.bf16.gmra.mxu0 %v637
      %v906 = vpop.f32.mrf.mxu0
      %v907 = vadd.f32 0.0, %v906
      %v908 = vpop.f32.mrf.mxu0
      %v909 = vadd.f32 0.0, %v908
      %910 = vmatmul.bf16.gmra.mxu0 %v640
      %v911 = vpop.f32.mrf.mxu0
      %v912 = vadd.f32 0.0, %v911
      %v913 = vpop.f32.mrf.mxu0
      %v914 = vadd.f32 0.0, %v913
      %915 = vmatmul.bf16.gmra.mxu0 %v643
      %v916 = vpop.f32.mrf.mxu0
      %v917 = vadd.f32 0.0, %v916
      %v918 = vpop.f32.mrf.mxu0
      %v919 = vadd.f32 0.0, %v918
      %920 = vmatmul.bf16.gmra.mxu0 %v646
      %v921 = vpop.f32.mrf.mxu0
      %v922 = vadd.f32 0.0, %v921
      %v923 = vpop.f32.mrf.mxu0
      %v924 = vadd.f32 0.0, %v923
      %925 = vmatmul.bf16.gmra.mxu0 %v649
      %v926 = vpop.f32.mrf.mxu0
      %v927 = vadd.f32 0.0, %v926
      %v928 = vpop.f32.mrf.mxu0
      %v929 = vadd.f32 0.0, %v928
      %930 = vmatmul.bf16.gmra.mxu0 %v652
      %v931 = vpop.f32.mrf.mxu0
      %v932 = vadd.f32 0.0, %v931
      %v933 = vpop.f32.mrf.mxu0
      %v934 = vadd.f32 0.0, %v933
      %935 = vdwg.mxu0
      %936 = vmatpush.bf16.msra.mxu0 %v814
      %937 = vmatpush.bf16.msra.mxu0 %v813
      %938 = vmatpush.bf16.msra.mxu0 %v812
      %939 = vmatpush.bf16.msra.mxu0 %v811
      %940 = vmatpush.bf16.msra.mxu0 %v810
      %941 = vmatpush.bf16.msra.mxu0 %v809
      %942 = vmatpush.bf16.msra.mxu0 %v808
      %943 = vmatpush.bf16.msra.mxu0 %v807
      %944 = vmatmul.bf16.gmra.mxu0 %v608
      %v945 = vpop.f32.mrf.mxu0
      %v946 = vadd.f32 %v857, %v945
      %v947 = vpop.f32.mrf.mxu0
      %v948 = vadd.f32 %v859, %v947
      %949 = vmatmul.bf16.gmra.mxu0 %v611
      %v950 = vpop.f32.mrf.mxu0
      %v951 = vadd.f32 %v862, %v950
      %v952 = vpop.f32.mrf.mxu0
      %v953 = vadd.f32 %v864, %v952
      %954 = vmatmul.bf16.gmra.mxu0 %v614
      %v955 = vpop.f32.mrf.mxu0
      %v956 = vadd.f32 %v867, %v955
      %v957 = vpop.f32.mrf.mxu0
      %v958 = vadd.f32 %v869, %v957
      %959 = vmatmul.bf16.gmra.mxu0 %v617
      %v960 = vpop.f32.mrf.mxu0
      %v961 = vadd.f32 %v872, %v960
      %v962 = vpop.f32.mrf.mxu0
      %v963 = vadd.f32 %v874, %v962
      %964 = vmatmul.bf16.gmra.mxu0 %v620
      %v965 = vpop.f32.mrf.mxu0
      %v966 = vadd.f32 %v877, %v965
      %v967 = vpop.f32.mrf.mxu0
      %v968 = vadd.f32 %v879, %v967
      %969 = vmatmul.bf16.gmra.mxu0 %v623
      %v970 = vpop.f32.mrf.mxu0
      %v971 = vadd.f32 %v882, %v970
      %v972 = vpop.f32.mrf.mxu0
      %v973 = vadd.f32 %v884, %v972
      %974 = vmatmul.bf16.gmra.mxu0 %v626
      %v975 = vpop.f32.mrf.mxu0
      %v976 = vadd.f32 %v887, %v975
      %v977 = vpop.f32.mrf.mxu0
      %v978 = vadd.f32 %v889, %v977
      %979 = vmatmul.bf16.gmra.mxu0 %v629
      %v980 = vpop.f32.mrf.mxu0
      %v981 = vadd.f32 %v892, %v980
      %v982 = vpop.f32.mrf.mxu0
      %v983 = vadd.f32 %v894, %v982
      %984 = vmatmul.bf16.gmra.mxu0 %v632
      %v985 = vpop.f32.mrf.mxu0
      %v986 = vadd.f32 %v897, %v985
      %v987 = vpop.f32.mrf.mxu0
      %v988 = vadd.f32 %v899, %v987
      %989 = vmatmul.bf16.gmra.mxu0 %v635
      %v990 = vpop.f32.mrf.mxu0
      %v991 = vadd.f32 %v902, %v990
      %v992 = vpop.f32.mrf.mxu0
      %v993 = vadd.f32 %v904, %v992
      %994 = vmatmul.bf16.gmra.mxu0 %v638
      %v995 = vpop.f32.mrf.mxu0
      %v996 = vadd.f32 %v907, %v995
      %v997 = vpop.f32.mrf.mxu0
      %v998 = vadd.f32 %v909, %v997
      %999 = vmatmul.bf16.gmra.mxu0 %v641
      %v1000 = vpop.f32.mrf.mxu0
      %v1001 = vadd.f32 %v912, %v1000
      %v1002 = vpop.f32.mrf.mxu0
      %v1003 = vadd.f32 %v914, %v1002
      %1004 = vmatmul.bf16.gmra.mxu0 %v644
      %v1005 = vpop.f32.mrf.mxu0
      %v1006 = vadd.f32 %v917, %v1005
      %v1007 = vpop.f32.mrf.mxu0
      %v1008 = vadd.f32 %v919, %v1007
      %1009 = vmatmul.bf16.gmra.mxu0 %v647
      %v1010 = vpop.f32.mrf.mxu0
      %v1011 = vadd.f32 %v922, %v1010
      %v1012 = vpop.f32.mrf.mxu0
      %v1013 = vadd.f32 %v924, %v1012
      %1014 = vmatmul.bf16.gmra.mxu0 %v650
      %v1015 = vpop.f32.mrf.mxu0
      %v1016 = vadd.f32 %v927, %v1015
      %v1017 = vpop.f32.mrf.mxu0
      %v1018 = vadd.f32 %v929, %v1017
      %1019 = vmatmul.bf16.gmra.mxu0 %v653
      %v1020 = vpop.f32.mrf.mxu0
      %v1021 = vadd.f32 %v932, %v1020
      %v1022 = vpop.f32.mrf.mxu0
      %v1023 = vadd.f32 %v934, %v1022
      %1024 = vdwg.mxu0
      %1025 = vmatpush.bf16.msra.mxu0 %v822
      %1026 = vmatpush.bf16.msra.mxu0 %v821
      %1027 = vmatpush.bf16.msra.mxu0 %v820
      %1028 = vmatpush.bf16.msra.mxu0 %v819
      %1029 = vmatpush.bf16.msra.mxu0 %v818
      %1030 = vmatpush.bf16.msra.mxu0 %v817
      %1031 = vmatpush.bf16.msra.mxu0 %v816
      %1032 = vmatpush.bf16.msra.mxu0 %v815
      %1033 = vmatmul.bf16.gmra.mxu0 %v609
      %v1034 = vpop.f32.mrf.mxu0
      %v1035 = vadd.f32 %v946, %v1034
      %v1036 = vpop.f32.mrf.mxu0
      %v1037 = vadd.f32 %v948, %v1036
      %1038 = vmatmul.bf16.gmra.mxu0 %v612
      %v1039 = vpop.f32.mrf.mxu0
      %v1040 = vadd.f32 %v951, %v1039
      %v1041 = vpop.f32.mrf.mxu0
      %v1042 = vadd.f32 %v953, %v1041
      %1043 = vmatmul.bf16.gmra.mxu0 %v615
      %v1044 = vpop.f32.mrf.mxu0
      %v1045 = vadd.f32 %v956, %v1044
      %v1046 = vpop.f32.mrf.mxu0
      %v1047 = vadd.f32 %v958, %v1046
      %1048 = vmatmul.bf16.gmra.mxu0 %v618
      %v1049 = vpop.f32.mrf.mxu0
      %v1050 = vadd.f32 %v961, %v1049
      %v1051 = vpop.f32.mrf.mxu0
      %v1052 = vadd.f32 %v963, %v1051
      %1053 = vmatmul.bf16.gmra.mxu0 %v621
      %v1054 = vpop.f32.mrf.mxu0
      %v1055 = vadd.f32 %v966, %v1054
      %v1056 = vpop.f32.mrf.mxu0
      %v1057 = vadd.f32 %v968, %v1056
      %1058 = vmatmul.bf16.gmra.mxu0 %v624
      %v1059 = vpop.f32.mrf.mxu0
      %v1060 = vadd.f32 %v971, %v1059
      %v1061 = vpop.f32.mrf.mxu0
      %v1062 = vadd.f32 %v973, %v1061
      %1063 = vmatmul.bf16.gmra.mxu0 %v627
      %v1064 = vpop.f32.mrf.mxu0
      %v1065 = vadd.f32 %v976, %v1064
      %v1066 = vpop.f32.mrf.mxu0
      %v1067 = vadd.f32 %v978, %v1066
      %1068 = vmatmul.bf16.gmra.mxu0 %v630
      %v1069 = vpop.f32.mrf.mxu0
      %v1070 = vadd.f32 %v981, %v1069
      %v1071 = vpop.f32.mrf.mxu0
      %v1072 = vadd.f32 %v983, %v1071
      %1073 = vmatmul.bf16.gmra.mxu0 %v633
      %v1074 = vpop.f32.mrf.mxu0
      %v1075 = vadd.f32 %v986, %v1074
      %v1076 = vpop.f32.mrf.mxu0
      %v1077 = vadd.f32 %v988, %v1076
      %1078 = vmatmul.bf16.gmra.mxu0 %v636
      %v1079 = vpop.f32.mrf.mxu0
      %v1080 = vadd.f32 %v991, %v1079
      %v1081 = vpop.f32.mrf.mxu0
      %v1082 = vadd.f32 %v993, %v1081
      %1083 = vmatmul.bf16.gmra.mxu0 %v639
      %v1084 = vpop.f32.mrf.mxu0
      %v1085 = vadd.f32 %v996, %v1084
      %v1086 = vpop.f32.mrf.mxu0
      %v1087 = vadd.f32 %v998, %v1086
      %1088 = vmatmul.bf16.gmra.mxu0 %v642
      %v1089 = vpop.f32.mrf.mxu0
      %v1090 = vadd.f32 %v1001, %v1089
      %v1091 = vpop.f32.mrf.mxu0
      %v1092 = vadd.f32 %v1003, %v1091
      %1093 = vmatmul.bf16.gmra.mxu0 %v645
      %v1094 = vpop.f32.mrf.mxu0
      %v1095 = vadd.f32 %v1006, %v1094
      %v1096 = vpop.f32.mrf.mxu0
      %v1097 = vadd.f32 %v1008, %v1096
      %1098 = vmatmul.bf16.gmra.mxu0 %v648
      %v1099 = vpop.f32.mrf.mxu0
      %v1100 = vadd.f32 %v1011, %v1099
      %v1101 = vpop.f32.mrf.mxu0
      %v1102 = vadd.f32 %v1013, %v1101
      %1103 = vmatmul.bf16.gmra.mxu0 %v651
      %v1104 = vpop.f32.mrf.mxu0
      %v1105 = vadd.f32 %v1016, %v1104
      %v1106 = vpop.f32.mrf.mxu0
      %v1107 = vadd.f32 %v1018, %v1106
      %1108 = vmatmul.bf16.gmra.mxu0 %v654
      %v1109 = vpop.f32.mrf.mxu0
      %v1110 = vadd.f32 %v1021, %v1109
      %v1111 = vpop.f32.mrf.mxu0
      %v1112 = vadd.f32 %v1023, %v1111
      %1113 = vdwg.mxu0
      %v1114 = vadd.f32 %v303, %v1035
      %v1115 = vadd.f32 %v304, %v1037
      %v1116 = vadd.f32 %v305, %v1040
      %v1117 = vadd.f32 %v306, %v1042
      %v1118 = vadd.f32 %v307, %v1045
      %v1119 = vadd.f32 %v308, %v1047
      %v1120 = vadd.f32 %v309, %v1050
      %v1121 = vadd.f32 %v310, %v1052
      %v1122 = vadd.f32 %v311, %v1055
      %v1123 = vadd.f32 %v312, %v1057
      %v1124 = vadd.f32 %v313, %v1060
      %v1125 = vadd.f32 %v314, %v1062
      %v1126 = vadd.f32 %v315, %v1065
      %v1127 = vadd.f32 %v316, %v1067
      %v1128 = vadd.f32 %v317, %v1070
      %v1129 = vadd.f32 %v318, %v1072
      %v1130 = vadd.f32 %v319, %v1075
      %v1131 = vadd.f32 %v320, %v1077
      %v1132 = vadd.f32 %v321, %v1080
      %v1133 = vadd.f32 %v322, %v1082
      %v1134 = vadd.f32 %v323, %v1085
      %v1135 = vadd.f32 %v324, %v1087
      %v1136 = vadd.f32 %v325, %v1090
      %v1137 = vadd.f32 %v326, %v1092
      %v1138 = vadd.f32 %v327, %v1095
      %v1139 = vadd.f32 %v328, %v1097
      %v1140 = vadd.f32 %v329, %v1100
      %v1141 = vadd.f32 %v330, %v1102
      %v1142 = vadd.f32 %v331, %v1105
      %v1143 = vadd.f32 %v332, %v1107
      %v1144 = vadd.f32 %v333, %v1110
      %v1145 = vadd.f32 %v334, %v1112
      %1146 = vst [vmem:[#allocation2] sm:$0xff] %v1114
      %1147 = vst [vmem:[#allocation2 + $0x8] sm:$0xff] %v1115
      %1148 = vst [vmem:[#allocation2 + $0x10] sm:$0xff] %v1116
      %1149 = vst [vmem:[#allocation2 + $0x18] sm:$0xff] %v1117
      %1150 = vst [vmem:[#allocation2 + $0x20] sm:$0xff] %v1118
      %1151 = vst [vmem:[#allocation2 + $0x28] sm:$0xff] %v1119
      %1152 = vst [vmem:[#allocation2 + $0x30] sm:$0xff] %v1120
      %1153 = vst [vmem:[#allocation2 + $0x38] sm:$0xff] %v1121
      %1154 = vst [vmem:[#allocation2 + $0x40] sm:$0xff] %v1122
      %1155 = vst [vmem:[#allocation2 + $0x48] sm:$0xff] %v1123
      %1156 = vst [vmem:[#allocation2 + $0x50] sm:$0xff] %v1124
      %1157 = vst [vmem:[#allocation2 + $0x58] sm:$0xff] %v1125
      %1158 = vst [vmem:[#allocation2 + $0x60] sm:$0xff] %v1126
      %1159 = vst [vmem:[#allocation2 + $0x68] sm:$0xff] %v1127
      %1160 = vst [vmem:[#allocation2 + $0x70] sm:$0xff] %v1128
      %1161 = vst [vmem:[#allocation2 + $0x78] sm:$0xff] %v1129
      %1162 = vst [vmem:[#allocation2 + $0x80] sm:$0xff] %v1130
      %1163 = vst [vmem:[#allocation2 + $0x88] sm:$0xff] %v1131
      %1164 = vst [vmem:[#allocation2 + $0x90] sm:$0xff] %v1132
      %1165 = vst [vmem:[#allocation2 + $0x98] sm:$0xff] %v1133
      %1166 = vst [vmem:[#allocation2 + $0xa0] sm:$0xff] %v1134
      %1167 = vst [vmem:[#allocation2 + $0xa8] sm:$0xff] %v1135
      %1168 = vst [vmem:[#allocation2 + $0xb0] sm:$0xff] %v1136
      %1169 = vst [vmem:[#allocation2 + $0xb8] sm:$0xff] %v1137
      %1170 = vst [vmem:[#allocation2 + $0xc0] sm:$0xff] %v1138
      %1171 = vst [vmem:[#allocation2 + $0xc8] sm:$0xff] %v1139
      %1172 = vst [vmem:[#allocation2 + $0xd0] sm:$0xff] %v1140
      %1173 = vst [vmem:[#allocation2 + $0xd8] sm:$0xff] %v1141
      %1174 = vst [vmem:[#allocation2 + $0xe0] sm:$0xff] %v1142
      %1175 = vst [vmem:[#allocation2 + $0xe8] sm:$0xff] %v1143
      %1176 = vst [vmem:[#allocation2 + $0xf0] sm:$0xff] %v1144
      %1177 = vst [vmem:[#allocation2 + $0xf8] sm:$0xff] %v1145
      // Predicated region
      $region37: #{alexnet_forward.12} parent=31 // pred_check
        %p1178 = pneg %p267
      $region38: #{alexnet_forward.12} parent=31 // pred_check_branch
        %1180 = sbr.rel (%p1178) target = $region40
      $region39: #{alexnet_forward.12} parent=31 // pred_region
        %v1181 = vld [vmem:[#allocation2] sm:$0xff]
        %v1182 = vld [vmem:[#allocation2 + $0x8] sm:$0xff]
        %v1183 = vld [vmem:[#allocation2 + $0x10] sm:$0xff]
        %v1184 = vld [vmem:[#allocation2 + $0x18] sm:$0xff]
        %v1185 = vld [vmem:[#allocation2 + $0x20] sm:$0xff]
        %v1186 = vld [vmem:[#allocation2 + $0x28] sm:$0xff]
        %v1187 = vld [vmem:[#allocation2 + $0x30] sm:$0xff]
        %v1188 = vld [vmem:[#allocation2 + $0x38] sm:$0xff]
        %v1189 = vld [vmem:[#allocation2 + $0x40] sm:$0xff]
        %v1190 = vld [vmem:[#allocation2 + $0x48] sm:$0xff]
        %v1191 = vld [vmem:[#allocation2 + $0x50] sm:$0xff]
        %v1192 = vld [vmem:[#allocation2 + $0x58] sm:$0xff]
        %v1193 = vld [vmem:[#allocation2 + $0x60] sm:$0xff]
        %v1194 = vld [vmem:[#allocation2 + $0x68] sm:$0xff]
        %v1195 = vld [vmem:[#allocation2 + $0x70] sm:$0xff]
        %v1196 = vld [vmem:[#allocation2 + $0x78] sm:$0xff]
        %v1197 = vld [vmem:[#allocation2 + $0x80] sm:$0xff]
        %v1198 = vld [vmem:[#allocation2 + $0x88] sm:$0xff]
        %v1199 = vld [vmem:[#allocation2 + $0x90] sm:$0xff]
        %v1200 = vld [vmem:[#allocation2 + $0x98] sm:$0xff]
        %v1201 = vld [vmem:[#allocation2 + $0xa0] sm:$0xff]
        %v1202 = vld [vmem:[#allocation2 + $0xa8] sm:$0xff]
        %v1203 = vld [vmem:[#allocation2 + $0xb0] sm:$0xff]
        %v1204 = vld [vmem:[#allocation2 + $0xb8] sm:$0xff]
        %v1205 = vld [vmem:[#allocation2 + $0xc0] sm:$0xff]
        %v1206 = vld [vmem:[#allocation2 + $0xc8] sm:$0xff]
        %v1207 = vld [vmem:[#allocation2 + $0xd0] sm:$0xff]
        %v1208 = vld [vmem:[#allocation2 + $0xd8] sm:$0xff]
        %v1209 = vld [vmem:[#allocation2 + $0xe0] sm:$0xff]
        %v1210 = vld [vmem:[#allocation2 + $0xe8] sm:$0xff]
        %v1211 = vld [vmem:[#allocation2 + $0xf0] sm:$0xff]
        %v1212 = vld [vmem:[#allocation2 + $0xf8] sm:$0xff]
        %v1213 = vld [vmem:[%s257] sm:$0x1]
        %v1215 = vperm.slane %v1213, 0
        %v1217 = vadd.f32 %v1181, %v1215
        %v1218 = vadd.f32 %v1182, %v1215
        %v1219 = vadd.f32 %v1183, %v1215
        %v1220 = vadd.f32 %v1184, %v1215
        %v1221 = vadd.f32 %v1185, %v1215
        %v1222 = vadd.f32 %v1186, %v1215
        %v1223 = vadd.f32 %v1187, %v1215
        %v1224 = vadd.f32 %v1188, %v1215
        %v1225 = vadd.f32 %v1189, %v1215
        %v1226 = vadd.f32 %v1190, %v1215
        %v1227 = vadd.f32 %v1191, %v1215
        %v1228 = vadd.f32 %v1192, %v1215
        %v1229 = vadd.f32 %v1193, %v1215
        %v1230 = vadd.f32 %v1194, %v1215
        %v1231 = vadd.f32 %v1195, %v1215
        %v1232 = vadd.f32 %v1196, %v1215
        %v1233 = vadd.f32 %v1197, %v1215
        %v1234 = vadd.f32 %v1198, %v1215
        %v1235 = vadd.f32 %v1199, %v1215
        %v1236 = vadd.f32 %v1200, %v1215
        %v1237 = vadd.f32 %v1201, %v1215
        %v1238 = vadd.f32 %v1202, %v1215
        %v1239 = vadd.f32 %v1203, %v1215
        %v1240 = vadd.f32 %v1204, %v1215
        %v1241 = vadd.f32 %v1205, %v1215
        %v1242 = vadd.f32 %v1206, %v1215
        %v1243 = vadd.f32 %v1207, %v1215
        %v1244 = vadd.f32 %v1208, %v1215
        %v1245 = vadd.f32 %v1209, %v1215
        %v1246 = vadd.f32 %v1210, %v1215
        %v1247 = vadd.f32 %v1211, %v1215
        %v1248 = vadd.f32 %v1212, %v1215
        %v1249 = vmax.f32 %v1217, 0.0
        %v1250 = vmax.f32 %v1218, 0.0
        %v1251 = vmax.f32 %v1219, 0.0
        %v1252 = vmax.f32 %v1220, 0.0
        %v1253 = vmax.f32 %v1221, 0.0
        %v1254 = vmax.f32 %v1222, 0.0
        %v1255 = vmax.f32 %v1223, 0.0
        %v1256 = vmax.f32 %v1224, 0.0
        %v1257 = vmax.f32 %v1225, 0.0
        %v1258 = vmax.f32 %v1226, 0.0
        %v1259 = vmax.f32 %v1227, 0.0
        %v1260 = vmax.f32 %v1228, 0.0
        %v1261 = vmax.f32 %v1229, 0.0
        %v1262 = vmax.f32 %v1230, 0.0
        %v1263 = vmax.f32 %v1231, 0.0
        %v1264 = vmax.f32 %v1232, 0.0
        %v1265 = vmax.f32 %v1233, 0.0
        %v1266 = vmax.f32 %v1234, 0.0
        %v1267 = vmax.f32 %v1235, 0.0
        %v1268 = vmax.f32 %v1236, 0.0
        %v1269 = vmax.f32 %v1237, 0.0
        %v1270 = vmax.f32 %v1238, 0.0
        %v1271 = vmax.f32 %v1239, 0.0
        %v1272 = vmax.f32 %v1240, 0.0
        %v1273 = vmax.f32 %v1241, 0.0
        %v1274 = vmax.f32 %v1242, 0.0
        %v1275 = vmax.f32 %v1243, 0.0
        %v1276 = vmax.f32 %v1244, 0.0
        %v1277 = vmax.f32 %v1245, 0.0
        %v1278 = vmax.f32 %v1246, 0.0
        %v1279 = vmax.f32 %v1247, 0.0
        %v1280 = vmax.f32 %v1248, 0.0
        %1281 = vst [vmem:[%s265] sm:$0xff] %v1249
        %1282 = vst [vmem:[%s265 + $0x8] sm:$0xff] %v1250
        %1283 = vst [vmem:[%s265 + $0x10] sm:$0xff] %v1251
        %1284 = vst [vmem:[%s265 + $0x18] sm:$0xff] %v1252
        %1285 = vst [vmem:[%s265 + $0x20] sm:$0xff] %v1253
        %1286 = vst [vmem:[%s265 + $0x28] sm:$0xff] %v1254
        %1287 = vst [vmem:[%s265 + $0x30] sm:$0xff] %v1255
        %1288 = vst [vmem:[%s265 + $0x38] sm:$0xff] %v1256
        %1289 = vst [vmem:[%s265 + $0x40] sm:$0xff] %v1257
        %1290 = vst [vmem:[%s265 + $0x48] sm:$0xff] %v1258
        %1291 = vst [vmem:[%s265 + $0x50] sm:$0xff] %v1259
        %1292 = vst [vmem:[%s265 + $0x58] sm:$0xff] %v1260
        %1293 = vst [vmem:[%s265 + $0x60] sm:$0xff] %v1261
        %1294 = vst [vmem:[%s265 + $0x68] sm:$0xff] %v1262
        %1295 = vst [vmem:[%s265 + $0x70] sm:$0xff] %v1263
        %1296 = vst [vmem:[%s265 + $0x78] sm:$0xff] %v1264
        %1297 = vst [vmem:[%s265 + $0x80] sm:$0xff] %v1265
        %1298 = vst [vmem:[%s265 + $0x88] sm:$0xff] %v1266
        %1299 = vst [vmem:[%s265 + $0x90] sm:$0xff] %v1267
        %1300 = vst [vmem:[%s265 + $0x98] sm:$0xff] %v1268
        %1301 = vst [vmem:[%s265 + $0xa0] sm:$0xff] %v1269
        %1302 = vst [vmem:[%s265 + $0xa8] sm:$0xff] %v1270
        %1303 = vst [vmem:[%s265 + $0xb0] sm:$0xff] %v1271
        %1304 = vst [vmem:[%s265 + $0xb8] sm:$0xff] %v1272
        %1305 = vst [vmem:[%s265 + $0xc0] sm:$0xff] %v1273
        %1306 = vst [vmem:[%s265 + $0xc8] sm:$0xff] %v1274
        %1307 = vst [vmem:[%s265 + $0xd0] sm:$0xff] %v1275
        %1308 = vst [vmem:[%s265 + $0xd8] sm:$0xff] %v1276
        %1309 = vst [vmem:[%s265 + $0xe0] sm:$0xff] %v1277
        %1310 = vst [vmem:[%s265 + $0xe8] sm:$0xff] %v1278
        %1311 = vst [vmem:[%s265 + $0xf0] sm:$0xff] %v1279
        %1312 = vst [vmem:[%s265 + $0xf8] sm:$0xff] %v1280
      $region40: #{alexnet_forward.12} parent=31 // pred_fallthru
        _
      %s1313 = smul.u32 32, %s19
      %p1314 = scmp.lt.s32.totalorder %s1313, 63
      %s1315 = scalar_select %p1314, %s1313, 63
      %p1316 = scmp.lt.s32.totalorder %s20, 0
      %s1317 = scalar_select %p1316, %s20, 0
      %s1318 = sadd.s32 %s1317, %s1315
      %s1319 = smul.addr %s1318, 8
      %s1320 = scalar_lea.vmem %s3, %s1319
      // Predicated region
      $region41: #{alexnet_forward.12} parent=31 // pred_check
        %p1321 = pneg %p135
      $region42: #{alexnet_forward.12} parent=31 // pred_check_branch
        %1323 = sbr.rel (%p1321) target = $region44
      $region43: #{alexnet_forward.12} parent=31 // pred_region
        %s1324 = smul.u32 32, %s19
      $region44: #{alexnet_forward.12} parent=31 // pred_fallthru
        _
    $region32: #{alexnet_forward.12} parent=5 // pred_fallthru
      _
    %p1325 = scmp.le.s32.totalorder 2, %s9
    // Predicated region
    $region45: #{alexnet_forward.12} parent=5 // pred_check
      %p1326 = pneg %p1325
    $region46: #{alexnet_forward.12} parent=5 // pred_check_branch
      %1328 = sbr.rel (%p1326) target = $region48
    $region47: #{alexnet_forward.12} parent=5 // pred_region
      %s1329 = ssub.s32 %s9, 2
      // Predicated region
      $region49: #{alexnet_forward.12} parent=47 // pred_check
        %p1330 = pneg %p141
      $region50: #{alexnet_forward.12} parent=47 // pred_check_branch
        %1332 = sbr.rel (%p1330) target = $region52
      $region51: #{alexnet_forward.12} parent=47 // pred_region
        %s1333 = smul.u32 32, %s22
        %p1334 = scmp.lt.s32.totalorder %s1333, 63
        %s1335 = scalar_select %p1334, %s1333, 63
        %p1336 = scmp.lt.s32.totalorder %s23, 0
        %s1337 = scalar_select %p1336, %s23, 0
        %s1338 = sadd.s32 %s1337, %s1335
        %s1339 = smul.addr %s1338, 8
        %s1340 = scalar_lea.vmem %s3, %s1339
      $region52: #{alexnet_forward.12} parent=47 // pred_fallthru
        _
    $region48: #{alexnet_forward.12} parent=5 // pred_fallthru
      _
  $region6: #{alexnet_forward.12} parent=0 // loop_footer
    %s13 = sadd.s32 1, %s9
  $region7: #{alexnet_forward.12} parent=0 // loop_footer_branch
    %8 = sbr.rel target = $region3
  $region8: #{alexnet_forward.12} parent=0 // loop_exit
    _

// kernel: alexnet_forward.13
$region0: #{alexnet_forward.13}
  #allocation0 [shape = 'u32[]', space=smem, size = 0x4, offset = 0x4, fixed_abs, tag = 'smem constant byte address 0x4 - core index']
  #allocation1 [shape = 'u32[72,128]{1,0:T(1,128)}', space=vmem, size = 0x9000, scoped, tag = 'internal scratch']
  %s0 = inlined_call_operand.vmem [shape: f32[104,128], index: 0, kind: input, shape index: {}]
  %s1 = inlined_call_operand.vmem [shape: f32[104,128], index: 1, kind: input, shape index: {}]
  %s2 = inlined_call_operand.vmem [shape: f32[104,128], index: 2, kind: input, shape index: {}]
  %s3 = inlined_call_operand.vmem [shape: f32[104,128], index: 3, kind: input, shape index: {}]
  %s4 = inlined_call_operand.vmem [shape: f32[104,128], index: 4, kind: input, shape index: {}]
  %s5 = inlined_call_operand.vmem [shape: f32[104,128], index: 5, kind: input, shape index: {}]
  %s6 = inlined_call_operand.vmem [shape: f32[104,128], index: 6, kind: input, shape index: {}]
  %s7 = inlined_call_operand.vmem [shape: f32[104,128], index: 7, kind: input, shape index: {}]
  %s8 = inlined_call_operand.vmem [shape: f32[104,128], index: 8, kind: input, shape index: {}]
  %s9 = inlined_call_operand.vmem [shape: f32[104,128], index: 9, kind: output, shape index: {}]
  %s10 = sld [smem:[#allocation0]]
  $region46: #{alexnet_forward.13} parent=0
    _
  %s12 = ssub.s32 1, %s10
  %s13 = scalar_select 0, %s12, %s10
  // Predicated region
  $region2: #{alexnet_forward.13} parent=0 // pred_check
    _
  $region3: #{alexnet_forward.13} parent=0 // pred_check_branch
    %15 = sbr.rel (0) target = $region5
  $region4: #{alexnet_forward.13} parent=0 // pred_region
    _
  $region5: #{alexnet_forward.13} parent=0 // pred_fallthru
    _
  // Predicated region
  $region6: #{alexnet_forward.13} parent=0 // pred_check
    _
  $region7: #{alexnet_forward.13} parent=0 // pred_check_branch
    %17 = sbr.rel (0) target = $region9
  $region8: #{alexnet_forward.13} parent=0 // pred_region
    _
  $region9: #{alexnet_forward.13} parent=0 // pred_fallthru
    _
  // Predicated region
  $region10: #{alexnet_forward.13} parent=0 // pred_check
    _
  $region11: #{alexnet_forward.13} parent=0 // pred_check_branch
    %19 = sbr.rel (0) target = $region13
  $region12: #{alexnet_forward.13} parent=0 // pred_region
    _
  $region13: #{alexnet_forward.13} parent=0 // pred_fallthru
    _
  // Predicated region
  $region14: #{alexnet_forward.13} parent=0 // pred_check
    _
  $region15: #{alexnet_forward.13} parent=0 // pred_check_branch
    %21 = sbr.rel (0) target = $region17
  $region16: #{alexnet_forward.13} parent=0 // pred_region
    _
  $region17: #{alexnet_forward.13} parent=0 // pred_fallthru
    _
  // Predicated region
  $region18: #{alexnet_forward.13} parent=0 // pred_check
    _
  $region19: #{alexnet_forward.13} parent=0 // pred_check_branch
    %23 = sbr.rel (0) target = $region21
  $region20: #{alexnet_forward.13} parent=0 // pred_region
    _
  $region21: #{alexnet_forward.13} parent=0 // pred_fallthru
    _
  // Predicated region
  $region22: #{alexnet_forward.13} parent=0 // pred_check
    _
  $region23: #{alexnet_forward.13} parent=0 // pred_check_branch
    %25 = sbr.rel (0) target = $region25
  $region24: #{alexnet_forward.13} parent=0 // pred_region
    _
  $region25: #{alexnet_forward.13} parent=0 // pred_fallthru
    _
  // Predicated region
  $region26: #{alexnet_forward.13} parent=0 // pred_check
    _
  $region27: #{alexnet_forward.13} parent=0 // pred_check_branch
    %27 = sbr.rel (0) target = $region29
  $region28: #{alexnet_forward.13} parent=0 // pred_region
    _
  $region29: #{alexnet_forward.13} parent=0 // pred_fallthru
    _
  // Predicated region
  $region30: #{alexnet_forward.13} parent=0 // pred_check
    _
  $region31: #{alexnet_forward.13} parent=0 // pred_check_branch
    %29 = sbr.rel (0) target = $region33
  $region32: #{alexnet_forward.13} parent=0 // pred_region
    _
  $region33: #{alexnet_forward.13} parent=0 // pred_fallthru
    _
  // Predicated region
  $region34: #{alexnet_forward.13} parent=0 // pred_check
    _
  $region35: #{alexnet_forward.13} parent=0 // pred_check_branch
    %31 = sbr.rel (0) target = $region37
  $region36: #{alexnet_forward.13} parent=0 // pred_region
    _
  $region37: #{alexnet_forward.13} parent=0 // pred_fallthru
    _
  %v32 = vld [vmem:[%s0] sm:$0xff]
  %v33 = vld [vmem:[%s0 + $0x8] sm:$0xff]
  %v34 = vld [vmem:[%s0 + $0x10] sm:$0xff]
  %v35 = vld [vmem:[%s0 + $0x18] sm:$0xff]
  %v36 = vld [vmem:[%s0 + $0x20] sm:$0xff]
  %v37 = vld [vmem:[%s0 + $0x28] sm:$0xff]
  %v38 = vld [vmem:[%s0 + $0x30] sm:$0xff]
  %v39 = vld [vmem:[%s0 + $0x38] sm:$0xff]
  %v40 = vld [vmem:[%s0 + $0x40] sm:$0xff]
  %v41 = vld [vmem:[%s0 + $0x48] sm:$0xff]
  %v42 = vld [vmem:[%s0 + $0x50] sm:$0xff]
  %v43 = vld [vmem:[%s0 + $0x58] sm:$0xff]
  %v44 = vld [vmem:[%s0 + $0x60] sm:$0xff]
  %v45 = vld [vmem:[%s1] sm:$0xff]
  %v46 = vld [vmem:[%s1 + $0x8] sm:$0xff]
  %v47 = vld [vmem:[%s1 + $0x10] sm:$0xff]
  %v48 = vld [vmem:[%s1 + $0x18] sm:$0xff]
  %v49 = vld [vmem:[%s1 + $0x20] sm:$0xff]
  %v50 = vld [vmem:[%s1 + $0x28] sm:$0xff]
  %v51 = vld [vmem:[%s1 + $0x30] sm:$0xff]
  %v52 = vld [vmem:[%s1 + $0x38] sm:$0xff]
  %v53 = vld [vmem:[%s1 + $0x40] sm:$0xff]
  %v54 = vld [vmem:[%s1 + $0x48] sm:$0xff]
  %v55 = vld [vmem:[%s1 + $0x50] sm:$0xff]
  %v56 = vld [vmem:[%s1 + $0x58] sm:$0xff]
  %v57 = vld [vmem:[%s1 + $0x60] sm:$0xff]
  %v58 = vmax.f32 %v32, %v45
  %v59 = vmax.f32 %v33, %v46
  %v60 = vmax.f32 %v34, %v47
  %v61 = vmax.f32 %v35, %v48
  %v62 = vmax.f32 %v36, %v49
  %v63 = vmax.f32 %v37, %v50
  %v64 = vmax.f32 %v38, %v51
  %v65 = vmax.f32 %v39, %v52
  %v66 = vmax.f32 %v40, %v53
  %v67 = vmax.f32 %v41, %v54
  %v68 = vmax.f32 %v42, %v55
  %v69 = vmax.f32 %v43, %v56
  %v70 = vmax.f32 %v44, %v57
  %v71 = vld [vmem:[%s2] sm:$0xff]
  %v72 = vld [vmem:[%s2 + $0x8] sm:$0xff]
  %v73 = vld [vmem:[%s2 + $0x10] sm:$0xff]
  %v74 = vld [vmem:[%s2 + $0x18] sm:$0xff]
  %v75 = vld [vmem:[%s2 + $0x20] sm:$0xff]
  %v76 = vld [vmem:[%s2 + $0x28] sm:$0xff]
  %v77 = vld [vmem:[%s2 + $0x30] sm:$0xff]
  %v78 = vld [vmem:[%s2 + $0x38] sm:$0xff]
  %v79 = vld [vmem:[%s2 + $0x40] sm:$0xff]
  %v80 = vld [vmem:[%s2 + $0x48] sm:$0xff]
  %v81 = vld [vmem:[%s2 + $0x50] sm:$0xff]
  %v82 = vld [vmem:[%s2 + $0x58] sm:$0xff]
  %v83 = vld [vmem:[%s2 + $0x60] sm:$0xff]
  %v84 = vmax.f32 %v58, %v71
  %v85 = vmax.f32 %v59, %v72
  %v86 = vmax.f32 %v60, %v73
  %v87 = vmax.f32 %v61, %v74
  %v88 = vmax.f32 %v62, %v75
  %v89 = vmax.f32 %v63, %v76
  %v90 = vmax.f32 %v64, %v77
  %v91 = vmax.f32 %v65, %v78
  %v92 = vmax.f32 %v66, %v79
  %v93 = vmax.f32 %v67, %v80
  %v94 = vmax.f32 %v68, %v81
  %v95 = vmax.f32 %v69, %v82
  %v96 = vmax.f32 %v70, %v83
  %v97 = vld [vmem:[%s3] sm:$0xff]
  %v98 = vld [vmem:[%s3 + $0x8] sm:$0xff]
  %v99 = vld [vmem:[%s3 + $0x10] sm:$0xff]
  %v100 = vld [vmem:[%s3 + $0x18] sm:$0xff]
  %v101 = vld [vmem:[%s3 + $0x20] sm:$0xff]
  %v102 = vld [vmem:[%s3 + $0x28] sm:$0xff]
  %v103 = vld [vmem:[%s3 + $0x30] sm:$0xff]
  %v104 = vld [vmem:[%s3 + $0x38] sm:$0xff]
  %v105 = vld [vmem:[%s3 + $0x40] sm:$0xff]
  %v106 = vld [vmem:[%s3 + $0x48] sm:$0xff]
  %v107 = vld [vmem:[%s3 + $0x50] sm:$0xff]
  %v108 = vld [vmem:[%s3 + $0x58] sm:$0xff]
  %v109 = vld [vmem:[%s3 + $0x60] sm:$0xff]
  %v110 = vmax.f32 %v84, %v97
  %v111 = vmax.f32 %v85, %v98
  %v112 = vmax.f32 %v86, %v99
  %v113 = vmax.f32 %v87, %v100
  %v114 = vmax.f32 %v88, %v101
  %v115 = vmax.f32 %v89, %v102
  %v116 = vmax.f32 %v90, %v103
  %v117 = vmax.f32 %v91, %v104
  %v118 = vmax.f32 %v92, %v105
  %v119 = vmax.f32 %v93, %v106
  %v120 = vmax.f32 %v94, %v107
  %v121 = vmax.f32 %v95, %v108
  %v122 = vmax.f32 %v96, %v109
  %v123 = vld [vmem:[%s4] sm:$0xff]
  %v124 = vld [vmem:[%s4 + $0x8] sm:$0xff]
  %v125 = vld [vmem:[%s4 + $0x10] sm:$0xff]
  %v126 = vld [vmem:[%s4 + $0x18] sm:$0xff]
  %v127 = vld [vmem:[%s4 + $0x20] sm:$0xff]
  %v128 = vld [vmem:[%s4 + $0x28] sm:$0xff]
  %v129 = vld [vmem:[%s4 + $0x30] sm:$0xff]
  %v130 = vld [vmem:[%s4 + $0x38] sm:$0xff]
  %v131 = vld [vmem:[%s4 + $0x40] sm:$0xff]
  %v132 = vld [vmem:[%s4 + $0x48] sm:$0xff]
  %v133 = vld [vmem:[%s4 + $0x50] sm:$0xff]
  %v134 = vld [vmem:[%s4 + $0x58] sm:$0xff]
  %v135 = vld [vmem:[%s4 + $0x60] sm:$0xff]
  %v136 = vmax.f32 %v110, %v123
  %v137 = vmax.f32 %v111, %v124
  %v138 = vmax.f32 %v112, %v125
  %v139 = vmax.f32 %v113, %v126
  %v140 = vmax.f32 %v114, %v127
  %v141 = vmax.f32 %v115, %v128
  %v142 = vmax.f32 %v116, %v129
  %v143 = vmax.f32 %v117, %v130
  %v144 = vmax.f32 %v118, %v131
  %v145 = vmax.f32 %v119, %v132
  %v146 = vmax.f32 %v120, %v133
  %v147 = vmax.f32 %v121, %v134
  %v148 = vmax.f32 %v122, %v135
  %v149 = vld [vmem:[%s5] sm:$0xff]
  %v150 = vld [vmem:[%s5 + $0x8] sm:$0xff]
  %v151 = vld [vmem:[%s5 + $0x10] sm:$0xff]
  %v152 = vld [vmem:[%s5 + $0x18] sm:$0xff]
  %v153 = vld [vmem:[%s5 + $0x20] sm:$0xff]
  %v154 = vld [vmem:[%s5 + $0x28] sm:$0xff]
  %v155 = vld [vmem:[%s5 + $0x30] sm:$0xff]
  %v156 = vld [vmem:[%s5 + $0x38] sm:$0xff]
  %v157 = vld [vmem:[%s5 + $0x40] sm:$0xff]
  %v158 = vld [vmem:[%s5 + $0x48] sm:$0xff]
  %v159 = vld [vmem:[%s5 + $0x50] sm:$0xff]
  %v160 = vld [vmem:[%s5 + $0x58] sm:$0xff]
  %v161 = vld [vmem:[%s5 + $0x60] sm:$0xff]
  %v162 = vmax.f32 %v136, %v149
  %v163 = vmax.f32 %v137, %v150
  %v164 = vmax.f32 %v138, %v151
  %v165 = vmax.f32 %v139, %v152
  %v166 = vmax.f32 %v140, %v153
  %v167 = vmax.f32 %v141, %v154
  %v168 = vmax.f32 %v142, %v155
  %v169 = vmax.f32 %v143, %v156
  %v170 = vmax.f32 %v144, %v157
  %v171 = vmax.f32 %v145, %v158
  %v172 = vmax.f32 %v146, %v159
  %v173 = vmax.f32 %v147, %v160
  %v174 = vmax.f32 %v148, %v161
  %v175 = vld [vmem:[%s6] sm:$0xff]
  %v176 = vld [vmem:[%s6 + $0x8] sm:$0xff]
  %v177 = vld [vmem:[%s6 + $0x10] sm:$0xff]
  %v178 = vld [vmem:[%s6 + $0x18] sm:$0xff]
  %v179 = vld [vmem:[%s6 + $0x20] sm:$0xff]
  %v180 = vld [vmem:[%s6 + $0x28] sm:$0xff]
  %v181 = vld [vmem:[%s6 + $0x30] sm:$0xff]
  %v182 = vld [vmem:[%s6 + $0x38] sm:$0xff]
  %v183 = vld [vmem:[%s6 + $0x40] sm:$0xff]
  %v184 = vld [vmem:[%s6 + $0x48] sm:$0xff]
  %v185 = vld [vmem:[%s6 + $0x50] sm:$0xff]
  %v186 = vld [vmem:[%s6 + $0x58] sm:$0xff]
  %v187 = vld [vmem:[%s6 + $0x60] sm:$0xff]
  %v188 = vmax.f32 %v162, %v175
  %v189 = vmax.f32 %v163, %v176
  %v190 = vmax.f32 %v164, %v177
  %v191 = vmax.f32 %v165, %v178
  %v192 = vmax.f32 %v166, %v179
  %v193 = vmax.f32 %v167, %v180
  %v194 = vmax.f32 %v168, %v181
  %v195 = vmax.f32 %v169, %v182
  %v196 = vmax.f32 %v170, %v183
  %v197 = vmax.f32 %v171, %v184
  %v198 = vmax.f32 %v172, %v185
  %v199 = vmax.f32 %v173, %v186
  %v200 = vmax.f32 %v174, %v187
  %v201 = vld [vmem:[%s7] sm:$0xff]
  %v202 = vld [vmem:[%s7 + $0x8] sm:$0xff]
  %v203 = vld [vmem:[%s7 + $0x10] sm:$0xff]
  %v204 = vld [vmem:[%s7 + $0x18] sm:$0xff]
  %v205 = vld [vmem:[%s7 + $0x20] sm:$0xff]
  %v206 = vld [vmem:[%s7 + $0x28] sm:$0xff]
  %v207 = vld [vmem:[%s7 + $0x30] sm:$0xff]
  %v208 = vld [vmem:[%s7 + $0x38] sm:$0xff]
  %v209 = vld [vmem:[%s7 + $0x40] sm:$0xff]
  %v210 = vld [vmem:[%s7 + $0x48] sm:$0xff]
  %v211 = vld [vmem:[%s7 + $0x50] sm:$0xff]
  %v212 = vld [vmem:[%s7 + $0x58] sm:$0xff]
  %v213 = vld [vmem:[%s7 + $0x60] sm:$0xff]
  %v214 = vmax.f32 %v188, %v201
  %v215 = vmax.f32 %v189, %v202
  %v216 = vmax.f32 %v190, %v203
  %v217 = vmax.f32 %v191, %v204
  %v218 = vmax.f32 %v192, %v205
  %v219 = vmax.f32 %v193, %v206
  %v220 = vmax.f32 %v194, %v207
  %v221 = vmax.f32 %v195, %v208
  %v222 = vmax.f32 %v196, %v209
  %v223 = vmax.f32 %v197, %v210
  %v224 = vmax.f32 %v198, %v211
  %v225 = vmax.f32 %v199, %v212
  %v226 = vmax.f32 %v200, %v213
  %v227 = vld [vmem:[%s8] sm:$0xff]
  %v228 = vld [vmem:[%s8 + $0x8] sm:$0xff]
  %v229 = vld [vmem:[%s8 + $0x10] sm:$0xff]
  %v230 = vld [vmem:[%s8 + $0x18] sm:$0xff]
  %v231 = vld [vmem:[%s8 + $0x20] sm:$0xff]
  %v232 = vld [vmem:[%s8 + $0x28] sm:$0xff]
  %v233 = vld [vmem:[%s8 + $0x30] sm:$0xff]
  %v234 = vld [vmem:[%s8 + $0x38] sm:$0xff]
  %v235 = vld [vmem:[%s8 + $0x40] sm:$0xff]
  %v236 = vld [vmem:[%s8 + $0x48] sm:$0xff]
  %v237 = vld [vmem:[%s8 + $0x50] sm:$0xff]
  %v238 = vld [vmem:[%s8 + $0x58] sm:$0xff]
  %v239 = vld [vmem:[%s8 + $0x60] sm:$0xff]
  %v240 = vmax.f32 %v214, %v227
  %v241 = vmax.f32 %v215, %v228
  %v242 = vmax.f32 %v216, %v229
  %v243 = vmax.f32 %v217, %v230
  %v244 = vmax.f32 %v218, %v231
  %v245 = vmax.f32 %v219, %v232
  %v246 = vmax.f32 %v220, %v233
  %v247 = vmax.f32 %v221, %v234
  %v248 = vmax.f32 %v222, %v235
  %v249 = vmax.f32 %v223, %v236
  %v250 = vmax.f32 %v224, %v237
  %v251 = vmax.f32 %v225, %v238
  %v252 = vmax.f32 %v226, %v239
  %253 = vst [vmem:[%s9] sm:$0xff] %v240
  %254 = vst [vmem:[%s9 + $0x8] sm:$0xff] %v241
  %255 = vst [vmem:[%s9 + $0x10] sm:$0xff] %v242
  %256 = vst [vmem:[%s9 + $0x18] sm:$0xff] %v243
  %257 = vst [vmem:[%s9 + $0x20] sm:$0xff] %v244
  %258 = vst [vmem:[%s9 + $0x28] sm:$0xff] %v245
  %259 = vst [vmem:[%s9 + $0x30] sm:$0xff] %v246
  %260 = vst [vmem:[%s9 + $0x38] sm:$0xff] %v247
  %261 = vst [vmem:[%s9 + $0x40] sm:$0xff] %v248
  %262 = vst [vmem:[%s9 + $0x48] sm:$0xff] %v249
  %263 = vst [vmem:[%s9 + $0x50] sm:$0xff] %v250
  %264 = vst [vmem:[%s9 + $0x58] sm:$0xff] %v251
  %265 = vst [vmem:[%s9 + $0x60] sm:$0xff] %v252
  // Predicated region
  $region38: #{alexnet_forward.13} parent=0 // pred_check
    _
  $region39: #{alexnet_forward.13} parent=0 // pred_check_branch
    %267 = sbr.rel (0) target = $region41
  $region40: #{alexnet_forward.13} parent=0 // pred_region
    _
  $region41: #{alexnet_forward.13} parent=0 // pred_fallthru
    _
  // Predicated region
  $region42: #{alexnet_forward.13} parent=0 // pred_check
    _
  $region43: #{alexnet_forward.13} parent=0 // pred_check_branch
    %269 = sbr.rel (0) target = $region45
  $region44: #{alexnet_forward.13} parent=0 // pred_region
    _
  $region45: #{alexnet_forward.13} parent=0 // pred_fallthru
    _

// kernel: alexnet_forward.14
$region0: #{alexnet_forward.14}
  #allocation0 [shape = 'u32[]', space=smem, size = 0x4, offset = 0x4, fixed_abs, tag = 'smem constant byte address 0x4 - core index']
  #allocation1 [shape = 'u32[72,128]{1,0:T(1,128)}', space=vmem, size = 0x9000, scoped, tag = 'internal scratch']
  #allocation2 [shape = 'f32[104,256]{1,0:T(8,128)}', space=vmem, size = 0x1a000, scoped, tag = 'scratch operand']
  %s0 = inlined_call_operand.vmem [shape: bf16[104,1664], index: 0, kind: input, shape index: {}]
  %s1 = inlined_call_operand.vmem [shape: bf16[1664,256], index: 1, kind: input, shape index: {}]
  %s2 = inlined_call_operand.vmem [shape: f32[1,256], index: 2, kind: input, shape index: {}]
  %s3 = inlined_call_operand.vmem [shape: f32[104,256], index: 3, kind: output, shape index: {}]
  %s4 = sld [smem:[#allocation0]]
  $region94: #{alexnet_forward.14} parent=0
    _
  %s6 = ssub.s32 1, %s4
  %s7 = scalar_select 0, %s6, %s4
  $region1: #{alexnet_forward.14} parent=0
    #allocation3 [shape = 'u8[53248]{0}', space=vmem, size = 0xd000, scoped, tag = 'input window, operand 0']
    loop: start=0, step=1, limit=15
    $region2: #{alexnet_forward.14} parent=1 // loop_pre_header
      _
    $region3: #{alexnet_forward.14} parent=1 // loop_header
      %s9 = sphi 0, %s13
      %p10 = scmp.ge.s32.totalorder %s9, 15
      %s16 = sphi 0, %s35
      %s17 = sphi 0, %s31
      %s18 = sphi 0, %s27
      %s19 = sphi 0, %s16
      %s20 = sphi 0, %s17
      %s21 = sphi 0, %s18
      %s22 = sphi 0, %s19
      %s23 = sphi 0, %s20
      %s24 = sphi 0, %s21
      %s40 = sphi 0, %s42
      %s43 = sphi 0, %s40
      %s44 = sphi 0, %s43
      %s60 = sphi 0, %s44
      %s68 = sphi 0, %s70
      %s71 = sphi 0, %s68
      %s72 = sphi 0, %s71
      %s88 = sphi 0, %s72
      %s94 = sphi 0, %s96
      %s97 = sphi 0, %s94
      %s98 = sphi 0, %s97
      %s114 = sphi 0, %s98
      %s122 = sphi 0, %s124
      %s125 = sphi 0, %s122
      %s126 = sphi 0, %s125
      %s142 = sphi 0, %s126
    $region4: #{alexnet_forward.14} parent=1 // loop_header_branch
      %12 = sbr.rel (%p10) target = $region8
    $region5: #{alexnet_forward.14} parent=1 // loop_body
      %s14 = ssub.s32 %s9, 1
      %s15 = ssub.s32 %s9, 2
      %s25 = sadd.s32 1, %s18
      %p26 = scmp.ge.s32.totalorder %s25, 13
      %s27 = scalar_select %p26, 0, %s25
      %s28 = sadd.s32 1, %s17
      %s29 = scalar_select %p26, %s28, %s17
      %p30 = scmp.ge.s32.totalorder %s29, 1
      %s31 = scalar_select %p30, 0, %s29
      %s32 = sadd.s32 1, %s16
      %s33 = scalar_select %p30, %s32, %s16
      %p34 = scmp.ge.s32.totalorder %s33, 1
      %s35 = scalar_select %p34, 0, %s33
      %s36 = ssub.s32 %s16, %s35
      %s37 = ssub.s32 %s18, %s27
      %s38 = sor.u32 %s36, %s37
      %p39 = scmp.eq.s32.totalorder %s38, 0
      %s41 = sadd.s32 %s40, 1
      %s42 = scalar_select %p39, %s40, %s41
      %p45 = pneg %p39
      %p46 = scmp.eq.s32.totalorder %s9, 12
      %p47 = por %p45, %p46
      %p48 = scmp.ne.s32.totalorder %s40, %s43
      %p49 = scmp.eq.s32.totalorder %s9, 0
      %p50 = por %p48, %p49
      %p51 = scmp.ne.s32.totalorder %s40, %s43
      %p52 = scmp.eq.s32.totalorder %s14, 12
      %p53 = por %p51, %p52
      %p54 = scmp.ne.s32.totalorder %s43, %s44
      %p55 = scmp.eq.s32.totalorder %s14, 0
      %p56 = por %p54, %p55
      %p57 = scmp.ne.s32.totalorder %s43, %s44
      %p58 = scmp.eq.s32.totalorder %s15, 12
      %p59 = por %p57, %p58
      %p61 = scmp.ne.s32.totalorder %s44, %s60
      %p62 = scmp.eq.s32.totalorder %s15, 0
      %p63 = por %p61, %p62
      %s64 = ssub.s32 %s18, %s27
      %s65 = ssub.s32 %s17, %s31
      %s66 = sor.u32 %s64, %s65
      %p67 = scmp.eq.s32.totalorder %s66, 0
      %s69 = sadd.s32 %s68, 1
      %s70 = scalar_select %p67, %s68, %s69
      %p73 = pneg %p67
      %p74 = scmp.eq.s32.totalorder %s9, 12
      %p75 = por %p73, %p74
      %p76 = scmp.ne.s32.totalorder %s68, %s71
      %p77 = scmp.eq.s32.totalorder %s9, 0
      %p78 = por %p76, %p77
      %p79 = scmp.ne.s32.totalorder %s68, %s71
      %p80 = scmp.eq.s32.totalorder %s14, 12
      %p81 = por %p79, %p80
      %p82 = scmp.ne.s32.totalorder %s71, %s72
      %p83 = scmp.eq.s32.totalorder %s14, 0
      %p84 = por %p82, %p83
      %p85 = scmp.ne.s32.totalorder %s71, %s72
      %p86 = scmp.eq.s32.totalorder %s15, 12
      %p87 = por %p85, %p86
      %p89 = scmp.ne.s32.totalorder %s72, %s88
      %p90 = scmp.eq.s32.totalorder %s15, 0
      %p91 = por %p89, %p90
      %s92 = ssub.s32 %s17, %s31
      %p93 = scmp.eq.s32.totalorder %s92, 0
      %s95 = sadd.s32 %s94, 1
      %s96 = scalar_select %p93, %s94, %s95
      %p99 = pneg %p93
      %p100 = scmp.eq.s32.totalorder %s9, 12
      %p101 = por %p99, %p100
      %p102 = scmp.ne.s32.totalorder %s94, %s97
      %p103 = scmp.eq.s32.totalorder %s9, 0
      %p104 = por %p102, %p103
      %p105 = scmp.ne.s32.totalorder %s94, %s97
      %p106 = scmp.eq.s32.totalorder %s14, 12
      %p107 = por %p105, %p106
      %p108 = scmp.ne.s32.totalorder %s97, %s98
      %p109 = scmp.eq.s32.totalorder %s14, 0
      %p110 = por %p108, %p109
      %p111 = scmp.ne.s32.totalorder %s97, %s98
      %p112 = scmp.eq.s32.totalorder %s15, 12
      %p113 = por %p111, %p112
      %p115 = scmp.ne.s32.totalorder %s98, %s114
      %p116 = scmp.eq.s32.totalorder %s15, 0
      %p117 = por %p115, %p116
      %s118 = ssub.s32 %s16, %s35
      %s119 = ssub.s32 %s17, %s31
      %s120 = sor.u32 %s118, %s119
      %p121 = scmp.eq.s32.totalorder %s120, 0
      %s123 = sadd.s32 %s122, 1
      %s124 = scalar_select %p121, %s122, %s123
      %p127 = pneg %p121
      %p128 = scmp.eq.s32.totalorder %s9, 12
      %p129 = por %p127, %p128
      %p130 = scmp.ne.s32.totalorder %s122, %s125
      %p131 = scmp.eq.s32.totalorder %s9, 0
      %p132 = por %p130, %p131
      %p133 = scmp.ne.s32.totalorder %s122, %s125
      %p134 = scmp.eq.s32.totalorder %s14, 12
      %p135 = por %p133, %p134
      %p136 = scmp.ne.s32.totalorder %s125, %s126
      %p137 = scmp.eq.s32.totalorder %s14, 0
      %p138 = por %p136, %p137
      %p139 = scmp.ne.s32.totalorder %s125, %s126
      %p140 = scmp.eq.s32.totalorder %s15, 12
      %p141 = por %p139, %p140
      %p143 = scmp.ne.s32.totalorder %s126, %s142
      %p144 = scmp.eq.s32.totalorder %s15, 0
      %p145 = por %p143, %p144
      %p146 = scmp.le.s32.totalorder 1, %s9
      %p147 = scmp.lt.s32.totalorder %s9, 14
      %p148 = pnand %p146, %p147
      %p149 = pneg %p148
      // Predicated region
      $region9: #{alexnet_forward.14} parent=5 // pred_check
        _
      $region10: #{alexnet_forward.14} parent=5 // pred_check_branch
        %151 = sbr.rel (%p148) target = $region12
      $region11: #{alexnet_forward.14} parent=5 // pred_region
        %s152 = ssub.s32 %s9, 1
        // Predicated region
        $region13: #{alexnet_forward.14} parent=11 // pred_check
          %p153 = pneg %p110
        $region14: #{alexnet_forward.14} parent=11 // pred_check_branch
          %155 = sbr.rel (%p153) target = $region16
        $region15: #{alexnet_forward.14} parent=11 // pred_region
          %s156 = smul.u32 2, %s20
          %p157 = scmp.lt.s32.totalorder %s156, 1
          %s158 = scalar_select %p157, %s156, 1
          %s159 = scalar_lea.vmem %s2, %s158
          %s160 = smul.u32 2, %s20
        $region16: #{alexnet_forward.14} parent=11 // pred_fallthru
          _
      $region12: #{alexnet_forward.14} parent=5 // pred_fallthru
        _
      %p161 = scmp.lt.s32.totalorder %s9, 13
      // Predicated region
      $region17: #{alexnet_forward.14} parent=5 // pred_check
        %p162 = pneg %p161
      $region18: #{alexnet_forward.14} parent=5 // pred_check_branch
        %164 = sbr.rel (%p162) target = $region20
      $region19: #{alexnet_forward.14} parent=5 // pred_region
        // Predicated region
        $region21: #{alexnet_forward.14} parent=19 // pred_check
          %p165 = pneg %p50
        $region22: #{alexnet_forward.14} parent=19 // pred_check_branch
          %167 = sbr.rel (%p165) target = $region24
        $region23: #{alexnet_forward.14} parent=19 // pred_region
          %s168 = sand.u32 %s40, 1
          %s169 = sand.u32 %s40, 1
          %s170 = smul.addr %s169, 52
          %s171 = scalar_lea.vmem [#allocation3], %s170
          %s172 = smul.u32 13, %s16
          %s173 = smul.addr %s172, 13
          %s174 = sadd.s32 %s18, %s173
          %s175 = smul.addr %s174, 4
          %s176 = scalar_lea.vmem %s0, %s175
          // Predicated region
          $region25: #{alexnet_forward.14} parent=23 // pred_check
            _
          $region26: #{alexnet_forward.14} parent=23 // pred_check_branch
            %178 = sbr.rel (0) target = $region28
          $region27: #{alexnet_forward.14} parent=23 // pred_region
            // Predicated region
            $region29: #{alexnet_forward.14} parent=27 // pred_check
              _
            $region30: #{alexnet_forward.14} parent=27 // pred_check_branch
              %180 = sbr.rel target = $region32
            $region31: #{alexnet_forward.14} parent=27 // pred_region
              // Predicated region
              $region44: #{alexnet_forward.14} parent=31 // pred_check
                _
              $region45: #{alexnet_forward.14} parent=31 // pred_check_branch
                %220 = sbr.rel (0) target = $region47
              $region46: #{alexnet_forward.14} parent=31 // pred_region
                loop: start=0, step=1, limit=1
                $region48: #{alexnet_forward.14} parent=46 // loop_pre_header
                  _
                $region49: #{alexnet_forward.14} parent=46 // loop_header
                  %s222 = sphi 0, %s226
                  %p223 = scmp.ge.s32.totalorder %s222, 1
                  %s227 = sphi %s176, %s176
                  %s228 = sphi %s171, %s171
                $region50: #{alexnet_forward.14} parent=46 // loop_header_branch
                  %225 = sbr.rel (%p223) target = $region54
                $region51: #{alexnet_forward.14} parent=46 // loop_body
                  _
                $region52: #{alexnet_forward.14} parent=46 // loop_footer
                  %s226 = sadd.s32 1, %s222
                $region53: #{alexnet_forward.14} parent=46 // loop_footer_branch
                  %221 = sbr.rel target = $region49
                $region54: #{alexnet_forward.14} parent=46 // loop_exit
                  _
                %s230 = ssub.s32 16, 1
                loop: start=0, step=1, limit=1
                $region55: #{alexnet_forward.14} parent=46 // loop_pre_header
                  _
                $region56: #{alexnet_forward.14} parent=46 // loop_header
                  %s232 = sphi 0, %s236
                  %p233 = scmp.ge.s32.totalorder %s232, 1
                  %s237 = sphi %s176, %s176
                  %s238 = sphi %s171, %s171
                $region57: #{alexnet_forward.14} parent=46 // loop_header_branch
                  %235 = sbr.rel (%p233) target = $region61
                $region58: #{alexnet_forward.14} parent=46 // loop_body
                  %v239 = vld [vmem:[%s237] sm:%s230]
                  %240 = vst [vmem:[%s238] sm:%s230] %v239
                  %v241 = vld [vmem:[%s237 + $0x34] sm:%s230]
                  %242 = vst [vmem:[%s238 + $0x4] sm:%s230] %v241
                  %v243 = vld [vmem:[%s237 + $0x68] sm:%s230]
                  %244 = vst [vmem:[%s238 + $0x8] sm:%s230] %v243
                  %v245 = vld [vmem:[%s237 + $0x9c] sm:%s230]
                  %246 = vst [vmem:[%s238 + $0xc] sm:%s230] %v245
                  %v247 = vld [vmem:[%s237 + $0xd0] sm:%s230]
                  %248 = vst [vmem:[%s238 + $0x10] sm:%s230] %v247
                  %v249 = vld [vmem:[%s237 + $0x104] sm:%s230]
                  %250 = vst [vmem:[%s238 + $0x14] sm:%s230] %v249
                  %v251 = vld [vmem:[%s237 + $0x138] sm:%s230]
                  %252 = vst [vmem:[%s238 + $0x18] sm:%s230] %v251
                  %v253 = vld [vmem:[%s237 + $0x16c] sm:%s230]
                  %254 = vst [vmem:[%s238 + $0x1c] sm:%s230] %v253
                  %v255 = vld [vmem:[%s237 + $0x1a0] sm:%s230]
                  %256 = vst [vmem:[%s238 + $0x20] sm:%s230] %v255
                  %v257 = vld [vmem:[%s237 + $0x1d4] sm:%s230]
                  %258 = vst [vmem:[%s238 + $0x24] sm:%s230] %v257
                  %v259 = vld [vmem:[%s237 + $0x208] sm:%s230]
                  %260 = vst [vmem:[%s238 + $0x28] sm:%s230] %v259
                  %v261 = vld [vmem:[%s237 + $0x23c] sm:%s230]
                  %262 = vst [vmem:[%s238 + $0x2c] sm:%s230] %v261
                  %v263 = vld [vmem:[%s237 + $0x270] sm:%s230]
                  %264 = vst [vmem:[%s238 + $0x30] sm:%s230] %v263
                $region59: #{alexnet_forward.14} parent=46 // loop_footer
                  %s236 = sadd.s32 1, %s232
                $region60: #{alexnet_forward.14} parent=46 // loop_footer_branch
                  %231 = sbr.rel target = $region56
                $region61: #{alexnet_forward.14} parent=46 // loop_exit
                  _
              $region47: #{alexnet_forward.14} parent=31 // pred_fallthru
                _
            $region32: #{alexnet_forward.14} parent=27 // pred_fallthru
              _
            // Predicated region
            $region33: #{alexnet_forward.14} parent=27 // pred_check
              _
            $region34: #{alexnet_forward.14} parent=27 // pred_check_branch
              %182 = sbr.rel (0) target = $region36
            $region35: #{alexnet_forward.14} parent=27 // pred_region
              %s184 = ssub.s32 16, 1
              loop: start=0, step=1, limit=1
              $region37: #{alexnet_forward.14} parent=35 // loop_pre_header
                _
              $region38: #{alexnet_forward.14} parent=35 // loop_header
                %s186 = sphi 0, %s190
                %p187 = scmp.ge.s32.totalorder %s186, 1
                %s191 = sphi %s176, %s176
                %s192 = sphi %s171, %s171
              $region39: #{alexnet_forward.14} parent=35 // loop_header_branch
                %189 = sbr.rel (%p187) target = $region43
              $region40: #{alexnet_forward.14} parent=35 // loop_body
                %v193 = vld [vmem:[%s191] sm:%s184]
                %194 = vst [vmem:[%s192] sm:%s184] %v193
                %v195 = vld [vmem:[%s191 + $0x34] sm:%s184]
                %196 = vst [vmem:[%s192 + $0x4] sm:%s184] %v195
                %v197 = vld [vmem:[%s191 + $0x68] sm:%s184]
                %198 = vst [vmem:[%s192 + $0x8] sm:%s184] %v197
                %v199 = vld [vmem:[%s191 + $0x9c] sm:%s184]
                %200 = vst [vmem:[%s192 + $0xc] sm:%s184] %v199
                %v201 = vld [vmem:[%s191 + $0xd0] sm:%s184]
                %202 = vst [vmem:[%s192 + $0x10] sm:%s184] %v201
                %v203 = vld [vmem:[%s191 + $0x104] sm:%s184]
                %204 = vst [vmem:[%s192 + $0x14] sm:%s184] %v203
                %v205 = vld [vmem:[%s191 + $0x138] sm:%s184]
                %206 = vst [vmem:[%s192 + $0x18] sm:%s184] %v205
                %v207 = vld [vmem:[%s191 + $0x16c] sm:%s184]
                %208 = vst [vmem:[%s192 + $0x1c] sm:%s184] %v207
                %v209 = vld [vmem:[%s191 + $0x1a0] sm:%s184]
                %210 = vst [vmem:[%s192 + $0x20] sm:%s184] %v209
                %v211 = vld [vmem:[%s191 + $0x1d4] sm:%s184]
                %212 = vst [vmem:[%s192 + $0x24] sm:%s184] %v211
                %v213 = vld [vmem:[%s191 + $0x208] sm:%s184]
                %214 = vst [vmem:[%s192 + $0x28] sm:%s184] %v213
                %v215 = vld [vmem:[%s191 + $0x23c] sm:%s184]
                %216 = vst [vmem:[%s192 + $0x2c] sm:%s184] %v215
                %v217 = vld [vmem:[%s191 + $0x270] sm:%s184]
                %218 = vst [vmem:[%s192 + $0x30] sm:%s184] %v217
              $region41: #{alexnet_forward.14} parent=35 // loop_footer
                %s190 = sadd.s32 1, %s186
              $region42: #{alexnet_forward.14} parent=35 // loop_footer_branch
                %185 = sbr.rel target = $region38
              $region43: #{alexnet_forward.14} parent=35 // loop_exit
                _
            $region36: #{alexnet_forward.14} parent=27 // pred_fallthru
              _
          $region28: #{alexnet_forward.14} parent=23 // pred_fallthru
            _
          %265 = vnop
        $region24: #{alexnet_forward.14} parent=19 // pred_fallthru
          _
        // Predicated region
        $region62: #{alexnet_forward.14} parent=19 // pred_check
          %p266 = pneg %p78
        $region63: #{alexnet_forward.14} parent=19 // pred_check_branch
          %268 = sbr.rel (%p266) target = $region65
        $region64: #{alexnet_forward.14} parent=19 // pred_region
          %s269 = smul.u32 16, %s18
          %s270 = smul.u32 2, %s17
          %p271 = scmp.lt.s32.totalorder %s269, 207
          %s272 = scalar_select %p271, %s269, 207
          %p273 = scmp.lt.s32.totalorder %s270, 1
          %s274 = scalar_select %p273, %s270, 1
          %s275 = smul.addr %s272, 2
          %s276 = sadd.s32 %s274, %s275
          %s277 = smul.addr %s276, 4
          %s278 = scalar_lea.vmem %s1, %s277
          %s279 = smul.u32 16, %s18
          %s280 = smul.u32 2, %s17
        $region65: #{alexnet_forward.14} parent=19 // pred_fallthru
          _
      $region20: #{alexnet_forward.14} parent=5 // pred_fallthru
        _
      %p281 = scmp.le.s32.totalorder 1, %s9
      %p282 = scmp.lt.s32.totalorder %s9, 14
      %p283 = pnand %p281, %p282
      %p284 = pneg %p283
      // Predicated region
      $region66: #{alexnet_forward.14} parent=5 // pred_check
        _
      $region67: #{alexnet_forward.14} parent=5 // pred_check_branch
        %286 = sbr.rel (%p283) target = $region69
      $region68: #{alexnet_forward.14} parent=5 // pred_region
        %s287 = ssub.s32 %s9, 1
        %s288 = sand.u32 %s43, 1
        %s289 = sand.u32 %s43, 1
        %s290 = smul.addr %s289, 52
        %s291 = scalar_lea.vmem [#allocation3], %s290
        // Predicated region
        $region70: #{alexnet_forward.14} parent=68 // pred_check
          %p292 = pneg %p56
        $region71: #{alexnet_forward.14} parent=68 // pred_check_branch
          %294 = sbr.rel (%p292) target = $region73
        $region72: #{alexnet_forward.14} parent=68 // pred_region
          _
        $region73: #{alexnet_forward.14} parent=68 // pred_fallthru
          _
        %s295 = sand.u32 %s43, 1
        %s296 = sand.u32 %s43, 1
        %s297 = smul.addr %s296, 52
        %s298 = scalar_lea.vmem [#allocation3], %s297
        %p299 = pneg %p56
        %p300 = pneg %p53
        %s301 = smul.u32 16, %s21
        %s302 = smul.u32 2, %s20
        %p303 = scmp.lt.s32.totalorder %s301, 207
        %s304 = scalar_select %p303, %s301, 207
        %p305 = scmp.lt.s32.totalorder %s302, 1
        %s306 = scalar_select %p305, %s302, 1
        %s307 = smul.addr %s304, 2
        %s308 = sadd.s32 %s306, %s307
        %s309 = smul.addr %s308, 4
        %s310 = scalar_lea.vmem %s1, %s309
        %p311 = pneg %p84
        %p312 = pneg %p81
        %s313 = smul.u32 2, %s20
        %p314 = scmp.lt.s32.totalorder %s313, 1
        %s315 = scalar_select %p314, %s313, 1
        %s316 = scalar_lea.vmem %s2, %s315
        %p317 = pneg %p110
        %p318 = pneg %p107
        %p319 = pneg %p138
        %p320 = pneg %p135
        %s321 = smul.u32 13, %s19
        %s322 = smul.u32 2, %s20
        %p323 = scmp.lt.s32.totalorder %s321, 12
        %s324 = scalar_select %p323, %s321, 12
        %p325 = scmp.lt.s32.totalorder %s322, 1
        %s326 = scalar_select %p325, %s322, 1
        %s327 = smul.addr %s324, 2
        %s328 = sadd.s32 %s326, %s327
        %s329 = smul.addr %s328, 8
        %s330 = scalar_lea.vmem %s3, %s329
        %s331 = smul.u32 13, %s19
        %s332 = smul.u32 16, %s21
        %s333 = smul.u32 2, %s20
        %p334 = scmp.lt.s32.totalorder %s332, 207
        %s335 = scalar_select %p334, %s332, 207
        %p336 = scmp.lt.s32.totalorder %s333, 1
        %s337 = scalar_select %p336, %s333, 1
        %s338 = smul.addr %s335, 2
        %s339 = sadd.s32 %s337, %s338
        %s340 = smul.addr %s339, 4
        %s341 = scalar_lea.vmem %s1, %s340
        %s342 = smul.u32 16, %s21
        %s343 = smul.u32 2, %s20
        %s344 = smul.u32 2, %s20
        %p345 = scmp.lt.s32.totalorder %s344, 1
        %s346 = scalar_select %p345, %s344, 1
        %s347 = scalar_lea.vmem %s2, %s346
        %s348 = smul.u32 2, %s20
        %s349 = smul.u32 13, %s19
        %s350 = smul.u32 2, %s20
        %p351 = scmp.lt.s32.totalorder %s349, 12
        %s352 = scalar_select %p351, %s349, 12
        %p353 = scmp.lt.s32.totalorder %s350, 1
        %s354 = scalar_select %p353, %s350, 1
        %s355 = smul.addr %s352, 2
        %s356 = sadd.s32 %s354, %s355
        %s357 = smul.addr %s356, 8
        %s358 = scalar_lea.vmem %s3, %s357
        %s359 = smul.u32 13, %s19
        %s360 = smul.u32 2, %s20
        %p361 = scmp.eq.s32.totalorder %s21, 0
        // Predicated region
        $region74: #{alexnet_forward.14} parent=68 // pred_check
          %p362 = pneg %p361
        $region75: #{alexnet_forward.14} parent=68 // pred_check_branch
          %364 = sbr.rel (%p362) target = $region77
        $region76: #{alexnet_forward.14} parent=68 // pred_region
          %365 = vst [vmem:[#allocation2] sm:$0xff] 0.0
          %366 = vst [vmem:[#allocation2 + $0x8] sm:$0xff] 0.0
          %367 = vst [vmem:[#allocation2 + $0x10] sm:$0xff] 0.0
          %368 = vst [vmem:[#allocation2 + $0x18] sm:$0xff] 0.0
          %369 = vst [vmem:[#allocation2 + $0x20] sm:$0xff] 0.0
          %370 = vst [vmem:[#allocation2 + $0x28] sm:$0xff] 0.0
          %371 = vst [vmem:[#allocation2 + $0x30] sm:$0xff] 0.0
          %372 = vst [vmem:[#allocation2 + $0x38] sm:$0xff] 0.0
          %373 = vst [vmem:[#allocation2 + $0x40] sm:$0xff] 0.0
          %374 = vst [vmem:[#allocation2 + $0x48] sm:$0xff] 0.0
          %375 = vst [vmem:[#allocation2 + $0x50] sm:$0xff] 0.0
          %376 = vst [vmem:[#allocation2 + $0x58] sm:$0xff] 0.0
          %377 = vst [vmem:[#allocation2 + $0x60] sm:$0xff] 0.0
          %378 = vst [vmem:[#allocation2 + $0x68] sm:$0xff] 0.0
          %379 = vst [vmem:[#allocation2 + $0x70] sm:$0xff] 0.0
          %380 = vst [vmem:[#allocation2 + $0x78] sm:$0xff] 0.0
          %381 = vst [vmem:[#allocation2 + $0x80] sm:$0xff] 0.0
          %382 = vst [vmem:[#allocation2 + $0x88] sm:$0xff] 0.0
          %383 = vst [vmem:[#allocation2 + $0x90] sm:$0xff] 0.0
          %384 = vst [vmem:[#allocation2 + $0x98] sm:$0xff] 0.0
          %385 = vst [vmem:[#allocation2 + $0xa0] sm:$0xff] 0.0
          %386 = vst [vmem:[#allocation2 + $0xa8] sm:$0xff] 0.0
          %387 = vst [vmem:[#allocation2 + $0xb0] sm:$0xff] 0.0
          %388 = vst [vmem:[#allocation2 + $0xb8] sm:$0xff] 0.0
          %389 = vst [vmem:[#allocation2 + $0xc0] sm:$0xff] 0.0
          %390 = vst [vmem:[#allocation2 + $0xc8] sm:$0xff] 0.0
        $region77: #{alexnet_forward.14} parent=68 // pred_fallthru
          _
        %v391 = vld [vmem:[#allocation2] sm:$0xff]
        %v392 = vld [vmem:[#allocation2 + $0x8] sm:$0xff]
        %v393 = vld [vmem:[#allocation2 + $0x10] sm:$0xff]
        %v394 = vld [vmem:[#allocation2 + $0x18] sm:$0xff]
        %v395 = vld [vmem:[#allocation2 + $0x20] sm:$0xff]
        %v396 = vld [vmem:[#allocation2 + $0x28] sm:$0xff]
        %v397 = vld [vmem:[#allocation2 + $0x30] sm:$0xff]
        %v398 = vld [vmem:[#allocation2 + $0x38] sm:$0xff]
        %v399 = vld [vmem:[#allocation2 + $0x40] sm:$0xff]
        %v400 = vld [vmem:[#allocation2 + $0x48] sm:$0xff]
        %v401 = vld [vmem:[#allocation2 + $0x50] sm:$0xff]
        %v402 = vld [vmem:[#allocation2 + $0x58] sm:$0xff]
        %v403 = vld [vmem:[#allocation2 + $0x60] sm:$0xff]
        %v404 = vld [vmem:[#allocation2 + $0x68] sm:$0xff]
        %v405 = vld [vmem:[#allocation2 + $0x70] sm:$0xff]
        %v406 = vld [vmem:[#allocation2 + $0x78] sm:$0xff]
        %v407 = vld [vmem:[#allocation2 + $0x80] sm:$0xff]
        %v408 = vld [vmem:[#allocation2 + $0x88] sm:$0xff]
        %v409 = vld [vmem:[#allocation2 + $0x90] sm:$0xff]
        %v410 = vld [vmem:[#allocation2 + $0x98] sm:$0xff]
        %v411 = vld [vmem:[#allocation2 + $0xa0] sm:$0xff]
        %v412 = vld [vmem:[#allocation2 + $0xa8] sm:$0xff]
        %v413 = vld [vmem:[#allocation2 + $0xb0] sm:$0xff]
        %v414 = vld [vmem:[#allocation2 + $0xb8] sm:$0xff]
        %v415 = vld [vmem:[#allocation2 + $0xc0] sm:$0xff]
        %v416 = vld [vmem:[#allocation2 + $0xc8] sm:$0xff]
        %v417 = vld [vmem:[%s291] sm:$0xf]
        %v418 = vld [vmem:[%s291 + $0x4] sm:$0xf]
        %v419 = vld [vmem:[%s291 + $0x8] sm:$0xf]
        %v420 = vld [vmem:[%s291 + $0xc] sm:$0xf]
        %v421 = vld [vmem:[%s291 + $0x10] sm:$0xf]
        %v422 = vld [vmem:[%s291 + $0x14] sm:$0xf]
        %v423 = vld [vmem:[%s291 + $0x18] sm:$0xf]
        %v424 = vld [vmem:[%s291 + $0x1c] sm:$0xf]
        %v425 = vld [vmem:[%s291 + $0x20] sm:$0xf]
        %v426 = vld [vmem:[%s291 + $0x24] sm:$0xf]
        %v427 = vld [vmem:[%s291 + $0x28] sm:$0xf]
        %v428 = vld [vmem:[%s291 + $0x2c] sm:$0xf]
        %v429 = vld [vmem:[%s291 + $0x30] sm:$0xf]
        %v430 = vld [vmem:[%s341] sm:$0xff]
        %v431 = vld [vmem:[%s341 + $0x8] sm:$0xff]
        %v432 = vld [vmem:[%s341 + $0x10] sm:$0xff]
        %v433 = vld [vmem:[%s341 + $0x18] sm:$0xff]
        %v434 = vld [vmem:[%s341 + $0x20] sm:$0xff]
        %v435 = vld [vmem:[%s341 + $0x28] sm:$0xff]
        %v436 = vld [vmem:[%s341 + $0x30] sm:$0xff]
        %v437 = vld [vmem:[%s341 + $0x38] sm:$0xff]
        %v438 = vld [vmem:[%s341 + $0x40] sm:$0xff]
        %v439 = vld [vmem:[%s341 + $0x48] sm:$0xff]
        %v440 = vld [vmem:[%s341 + $0x50] sm:$0xff]
        %v441 = vld [vmem:[%s341 + $0x58] sm:$0xff]
        %v442 = vld [vmem:[%s341 + $0x60] sm:$0xff]
        %v443 = vld [vmem:[%s341 + $0x68] sm:$0xff]
        %v444 = vld [vmem:[%s341 + $0x70] sm:$0xff]
        %v445 = vld [vmem:[%s341 + $0x78] sm:$0xff]
        %v459 = vunpack.c.l.b16 %v417
        %v460 = vunpack.c.l.b16 %v418
        %v461 = vunpack.c.l.b16 %v419
        %v462 = vunpack.c.l.b16 %v420
        %v463 = vunpack.c.l.b16 %v421
        %v464 = vunpack.c.l.b16 %v422
        %v465 = vunpack.c.l.b16 %v423
        %v466 = vunpack.c.l.b16 %v424
        %v467 = vunpack.c.l.b16 %v425
        %v468 = vunpack.c.l.b16 %v426
        %v469 = vunpack.c.l.b16 %v427
        %v470 = vunpack.c.l.b16 %v428
        %v471 = vunpack.c.l.b16 %v429
        %v472 = vpack.c.b16 %v460, %v459
        %v473 = vpack.c.b16 %v462, %v461
        %v474 = vpack.c.b16 %v464, %v463
        %v475 = vpack.c.b16 %v466, %v465
        %v476 = vpack.c.b16 %v468, %v467
        %v477 = vpack.c.b16 %v470, %v469
        %v478 = vpack.c.b16 %v471, %v471
        %v502 = vunpack.c.l.b16 %v430
        %v503 = vunpack.c.h.b16 %v430
        %v504 = vunpack.c.l.b16 %v431
        %v505 = vunpack.c.h.b16 %v431
        %v506 = vunpack.c.l.b16 %v432
        %v507 = vunpack.c.h.b16 %v432
        %v508 = vunpack.c.l.b16 %v433
        %v509 = vunpack.c.h.b16 %v433
        %v510 = vunpack.c.l.b16 %v434
        %v511 = vunpack.c.h.b16 %v434
        %v512 = vunpack.c.l.b16 %v435
        %v513 = vunpack.c.h.b16 %v435
        %v514 = vunpack.c.l.b16 %v436
        %v515 = vunpack.c.h.b16 %v436
        %v516 = vunpack.c.l.b16 %v437
        %v517 = vunpack.c.h.b16 %v437
        %v518 = vunpack.c.l.b16 %v438
        %v519 = vunpack.c.h.b16 %v438
        %v520 = vunpack.c.l.b16 %v439
        %v521 = vunpack.c.h.b16 %v439
        %v522 = vunpack.c.l.b16 %v440
        %v523 = vunpack.c.h.b16 %v440
        %v524 = vunpack.c.l.b16 %v441
        %v525 = vunpack.c.h.b16 %v441
        %v526 = vunpack.c.l.b16 %v442
        %v527 = vunpack.c.h.b16 %v442
        %v528 = vunpack.c.l.b16 %v443
        %v529 = vunpack.c.h.b16 %v443
        %v530 = vunpack.c.l.b16 %v444
        %v531 = vunpack.c.h.b16 %v444
        %v532 = vunpack.c.l.b16 %v445
        %v533 = vunpack.c.h.b16 %v445
        %v534 = vpack.c.b16 %v504, %v502
        %v535 = vpack.c.b16 %v505, %v503
        %v536 = vpack.c.b16 %v508, %v506
        %v537 = vpack.c.b16 %v509, %v507
        %v538 = vpack.c.b16 %v512, %v510
        %v539 = vpack.c.b16 %v513, %v511
        %v540 = vpack.c.b16 %v516, %v514
        %v541 = vpack.c.b16 %v517, %v515
        %v542 = vpack.c.b16 %v520, %v518
        %v543 = vpack.c.b16 %v521, %v519
        %v544 = vpack.c.b16 %v524, %v522
        %v545 = vpack.c.b16 %v525, %v523
        %v546 = vpack.c.b16 %v528, %v526
        %v547 = vpack.c.b16 %v529, %v527
        %v548 = vpack.c.b16 %v532, %v530
        %v549 = vpack.c.b16 %v533, %v531
        %566 = vmatpush.bf16.msra.mxu0 %v548
        %567 = vmatpush.bf16.msra.mxu0 %v546
        %568 = vmatpush.bf16.msra.mxu0 %v544
        %569 = vmatpush.bf16.msra.mxu0 %v542
        %570 = vmatpush.bf16.msra.mxu0 %v540
        %571 = vmatpush.bf16.msra.mxu0 %v538
        %572 = vmatpush.bf16.msra.mxu0 %v536
        %573 = vmatpush.bf16.msra.mxu0 %v534
        %574 = vmatmul.bf16.gmra.mxu0 %v472
        %v575 = vpop.f32.mrf.mxu0
        %v576 = vadd.f32 0.0, %v575
        %v577 = vpop.f32.mrf.mxu0
        %v578 = vadd.f32 0.0, %v577
        %579 = vmatmul.bf16.gmra.mxu0 %v473
        %v580 = vpop.f32.mrf.mxu0
        %v581 = vadd.f32 0.0, %v580
        %v582 = vpop.f32.mrf.mxu0
        %v583 = vadd.f32 0.0, %v582
        %584 = vmatmul.bf16.gmra.mxu0 %v474
        %v585 = vpop.f32.mrf.mxu0
        %v586 = vadd.f32 0.0, %v585
        %v587 = vpop.f32.mrf.mxu0
        %v588 = vadd.f32 0.0, %v587
        %589 = vmatmul.bf16.gmra.mxu0 %v475
        %v590 = vpop.f32.mrf.mxu0
        %v591 = vadd.f32 0.0, %v590
        %v592 = vpop.f32.mrf.mxu0
        %v593 = vadd.f32 0.0, %v592
        %594 = vmatmul.bf16.gmra.mxu0 %v476
        %v595 = vpop.f32.mrf.mxu0
        %v596 = vadd.f32 0.0, %v595
        %v597 = vpop.f32.mrf.mxu0
        %v598 = vadd.f32 0.0, %v597
        %599 = vmatmul.bf16.gmra.mxu0 %v477
        %v600 = vpop.f32.mrf.mxu0
        %v601 = vadd.f32 0.0, %v600
        %v602 = vpop.f32.mrf.mxu0
        %v603 = vadd.f32 0.0, %v602
        %604 = vmatmul.bf16.gmra.mxu0 %v478
        %v605 = vpop.f32.mrf.mxu0
        %v606 = vadd.f32 0.0, %v605
        %v607 = vpop.f32.mrf.mxu0
        %608 = vdwg.mxu0
        %609 = vmatpush.bf16.msra.mxu0 %v549
        %610 = vmatpush.bf16.msra.mxu0 %v547
        %611 = vmatpush.bf16.msra.mxu0 %v545
        %612 = vmatpush.bf16.msra.mxu0 %v543
        %613 = vmatpush.bf16.msra.mxu0 %v541
        %614 = vmatpush.bf16.msra.mxu0 %v539
        %615 = vmatpush.bf16.msra.mxu0 %v537
        %616 = vmatpush.bf16.msra.mxu0 %v535
        %617 = vmatmul.bf16.gmra.mxu0 %v472
        %v618 = vpop.f32.mrf.mxu0
        %v619 = vadd.f32 0.0, %v618
        %v620 = vpop.f32.mrf.mxu0
        %v621 = vadd.f32 0.0, %v620
        %622 = vmatmul.bf16.gmra.mxu0 %v473
        %v623 = vpop.f32.mrf.mxu0
        %v624 = vadd.f32 0.0, %v623
        %v625 = vpop.f32.mrf.mxu0
        %v626 = vadd.f32 0.0, %v625
        %627 = vmatmul.bf16.gmra.mxu0 %v474
        %v628 = vpop.f32.mrf.mxu0
        %v629 = vadd.f32 0.0, %v628
        %v630 = vpop.f32.mrf.mxu0
        %v631 = vadd.f32 0.0, %v630
        %632 = vmatmul.bf16.gmra.mxu0 %v475
        %v633 = vpop.f32.mrf.mxu0
        %v634 = vadd.f32 0.0, %v633
        %v635 = vpop.f32.mrf.mxu0
        %v636 = vadd.f32 0.0, %v635
        %637 = vmatmul.bf16.gmra.mxu0 %v476
        %v638 = vpop.f32.mrf.mxu0
        %v639 = vadd.f32 0.0, %v638
        %v640 = vpop.f32.mrf.mxu0
        %v641 = vadd.f32 0.0, %v640
        %642 = vmatmul.bf16.gmra.mxu0 %v477
        %v643 = vpop.f32.mrf.mxu0
        %v644 = vadd.f32 0.0, %v643
        %v645 = vpop.f32.mrf.mxu0
        %v646 = vadd.f32 0.0, %v645
        %647 = vmatmul.bf16.gmra.mxu0 %v478
        %v648 = vpop.f32.mrf.mxu0
        %v649 = vadd.f32 0.0, %v648
        %v650 = vpop.f32.mrf.mxu0
        %651 = vdwg.mxu0
        %v652 = vadd.f32 %v391, %v576
        %v653 = vadd.f32 %v392, %v619
        %v654 = vadd.f32 %v393, %v578
        %v655 = vadd.f32 %v394, %v621
        %v656 = vadd.f32 %v395, %v581
        %v657 = vadd.f32 %v396, %v624
        %v658 = vadd.f32 %v397, %v583
        %v659 = vadd.f32 %v398, %v626
        %v660 = vadd.f32 %v399, %v586
        %v661 = vadd.f32 %v400, %v629
        %v662 = vadd.f32 %v401, %v588
        %v663 = vadd.f32 %v402, %v631
        %v664 = vadd.f32 %v403, %v591
        %v665 = vadd.f32 %v404, %v634
        %v666 = vadd.f32 %v405, %v593
        %v667 = vadd.f32 %v406, %v636
        %v668 = vadd.f32 %v407, %v596
        %v669 = vadd.f32 %v408, %v639
        %v670 = vadd.f32 %v409, %v598
        %v671 = vadd.f32 %v410, %v641
        %v672 = vadd.f32 %v411, %v601
        %v673 = vadd.f32 %v412, %v644
        %v674 = vadd.f32 %v413, %v603
        %v675 = vadd.f32 %v414, %v646
        %v676 = vadd.f32 %v415, %v606
        %v677 = vadd.f32 %v416, %v649
        %678 = vst [vmem:[#allocation2] sm:$0xff] %v652
        %679 = vst [vmem:[#allocation2 + $0x8] sm:$0xff] %v653
        %680 = vst [vmem:[#allocation2 + $0x10] sm:$0xff] %v654
        %681 = vst [vmem:[#allocation2 + $0x18] sm:$0xff] %v655
        %682 = vst [vmem:[#allocation2 + $0x20] sm:$0xff] %v656
        %683 = vst [vmem:[#allocation2 + $0x28] sm:$0xff] %v657
        %684 = vst [vmem:[#allocation2 + $0x30] sm:$0xff] %v658
        %685 = vst [vmem:[#allocation2 + $0x38] sm:$0xff] %v659
        %686 = vst [vmem:[#allocation2 + $0x40] sm:$0xff] %v660
        %687 = vst [vmem:[#allocation2 + $0x48] sm:$0xff] %v661
        %688 = vst [vmem:[#allocation2 + $0x50] sm:$0xff] %v662
        %689 = vst [vmem:[#allocation2 + $0x58] sm:$0xff] %v663
        %690 = vst [vmem:[#allocation2 + $0x60] sm:$0xff] %v664
        %691 = vst [vmem:[#allocation2 + $0x68] sm:$0xff] %v665
        %692 = vst [vmem:[#allocation2 + $0x70] sm:$0xff] %v666
        %693 = vst [vmem:[#allocation2 + $0x78] sm:$0xff] %v667
        %694 = vst [vmem:[#allocation2 + $0x80] sm:$0xff] %v668
        %695 = vst [vmem:[#allocation2 + $0x88] sm:$0xff] %v669
        %696 = vst [vmem:[#allocation2 + $0x90] sm:$0xff] %v670
        %697 = vst [vmem:[#allocation2 + $0x98] sm:$0xff] %v671
        %698 = vst [vmem:[#allocation2 + $0xa0] sm:$0xff] %v672
        %699 = vst [vmem:[#allocation2 + $0xa8] sm:$0xff] %v673
        %700 = vst [vmem:[#allocation2 + $0xb0] sm:$0xff] %v674
        %701 = vst [vmem:[#allocation2 + $0xb8] sm:$0xff] %v675
        %702 = vst [vmem:[#allocation2 + $0xc0] sm:$0xff] %v676
        %703 = vst [vmem:[#allocation2 + $0xc8] sm:$0xff] %v677
        %p704 = scmp.eq.s32.totalorder %s21, 12
        // Predicated region
        $region78: #{alexnet_forward.14} parent=68 // pred_check
          %p705 = pneg %p704
        $region79: #{alexnet_forward.14} parent=68 // pred_check_branch
          %707 = sbr.rel (%p705) target = $region81
        $region80: #{alexnet_forward.14} parent=68 // pred_region
          %v708 = vld [vmem:[#allocation2] sm:$0xff]
          %v709 = vld [vmem:[#allocation2 + $0x8] sm:$0xff]
          %v710 = vld [vmem:[#allocation2 + $0x10] sm:$0xff]
          %v711 = vld [vmem:[#allocation2 + $0x18] sm:$0xff]
          %v712 = vld [vmem:[#allocation2 + $0x20] sm:$0xff]
          %v713 = vld [vmem:[#allocation2 + $0x28] sm:$0xff]
          %v714 = vld [vmem:[#allocation2 + $0x30] sm:$0xff]
          %v715 = vld [vmem:[#allocation2 + $0x38] sm:$0xff]
          %v716 = vld [vmem:[#allocation2 + $0x40] sm:$0xff]
          %v717 = vld [vmem:[#allocation2 + $0x48] sm:$0xff]
          %v718 = vld [vmem:[#allocation2 + $0x50] sm:$0xff]
          %v719 = vld [vmem:[#allocation2 + $0x58] sm:$0xff]
          %v720 = vld [vmem:[#allocation2 + $0x60] sm:$0xff]
          %v721 = vld [vmem:[#allocation2 + $0x68] sm:$0xff]
          %v722 = vld [vmem:[#allocation2 + $0x70] sm:$0xff]
          %v723 = vld [vmem:[#allocation2 + $0x78] sm:$0xff]
          %v724 = vld [vmem:[#allocation2 + $0x80] sm:$0xff]
          %v725 = vld [vmem:[#allocation2 + $0x88] sm:$0xff]
          %v726 = vld [vmem:[#allocation2 + $0x90] sm:$0xff]
          %v727 = vld [vmem:[#allocation2 + $0x98] sm:$0xff]
          %v728 = vld [vmem:[#allocation2 + $0xa0] sm:$0xff]
          %v729 = vld [vmem:[#allocation2 + $0xa8] sm:$0xff]
          %v730 = vld [vmem:[#allocation2 + $0xb0] sm:$0xff]
          %v731 = vld [vmem:[#allocation2 + $0xb8] sm:$0xff]
          %v732 = vld [vmem:[#allocation2 + $0xc0] sm:$0xff]
          %v733 = vld [vmem:[#allocation2 + $0xc8] sm:$0xff]
          %v734 = vld [vmem:[%s347] sm:$0x3]
          %v736 = vperm.slane %v734, 0
          %v737 = vperm.slane %v734, 1
          %v740 = vadd.f32 %v708, %v736
          %v741 = vadd.f32 %v709, %v737
          %v742 = vadd.f32 %v710, %v736
          %v743 = vadd.f32 %v711, %v737
          %v744 = vadd.f32 %v712, %v736
          %v745 = vadd.f32 %v713, %v737
          %v746 = vadd.f32 %v714, %v736
          %v747 = vadd.f32 %v715, %v737
          %v748 = vadd.f32 %v716, %v736
          %v749 = vadd.f32 %v717, %v737
          %v750 = vadd.f32 %v718, %v736
          %v751 = vadd.f32 %v719, %v737
          %v752 = vadd.f32 %v720, %v736
          %v753 = vadd.f32 %v721, %v737
          %v754 = vadd.f32 %v722, %v736
          %v755 = vadd.f32 %v723, %v737
          %v756 = vadd.f32 %v724, %v736
          %v757 = vadd.f32 %v725, %v737
          %v758 = vadd.f32 %v726, %v736
          %v759 = vadd.f32 %v727, %v737
          %v760 = vadd.f32 %v728, %v736
          %v761 = vadd.f32 %v729, %v737
          %v762 = vadd.f32 %v730, %v736
          %v763 = vadd.f32 %v731, %v737
          %v764 = vadd.f32 %v732, %v736
          %v765 = vadd.f32 %v733, %v737
          %v766 = vmax.f32 %v740, 0.0
          %v767 = vmax.f32 %v741, 0.0
          %v768 = vmax.f32 %v742, 0.0
          %v769 = vmax.f32 %v743, 0.0
          %v770 = vmax.f32 %v744, 0.0
          %v771 = vmax.f32 %v745, 0.0
          %v772 = vmax.f32 %v746, 0.0
          %v773 = vmax.f32 %v747, 0.0
          %v774 = vmax.f32 %v748, 0.0
          %v775 = vmax.f32 %v749, 0.0
          %v776 = vmax.f32 %v750, 0.0
          %v777 = vmax.f32 %v751, 0.0
          %v778 = vmax.f32 %v752, 0.0
          %v779 = vmax.f32 %v753, 0.0
          %v780 = vmax.f32 %v754, 0.0
          %v781 = vmax.f32 %v755, 0.0
          %v782 = vmax.f32 %v756, 0.0
          %v783 = vmax.f32 %v757, 0.0
          %v784 = vmax.f32 %v758, 0.0
          %v785 = vmax.f32 %v759, 0.0
          %v786 = vmax.f32 %v760, 0.0
          %v787 = vmax.f32 %v761, 0.0
          %v788 = vmax.f32 %v762, 0.0
          %v789 = vmax.f32 %v763, 0.0
          %v790 = vmax.f32 %v764, 0.0
          %v791 = vmax.f32 %v765, 0.0
          %792 = vst [vmem:[%s358] sm:$0xff] %v766
          %793 = vst [vmem:[%s358 + $0x8] sm:$0xff] %v767
          %794 = vst [vmem:[%s358 + $0x10] sm:$0xff] %v768
          %795 = vst [vmem:[%s358 + $0x18] sm:$0xff] %v769
          %796 = vst [vmem:[%s358 + $0x20] sm:$0xff] %v770
          %797 = vst [vmem:[%s358 + $0x28] sm:$0xff] %v771
          %798 = vst [vmem:[%s358 + $0x30] sm:$0xff] %v772
          %799 = vst [vmem:[%s358 + $0x38] sm:$0xff] %v773
          %800 = vst [vmem:[%s358 + $0x40] sm:$0xff] %v774
          %801 = vst [vmem:[%s358 + $0x48] sm:$0xff] %v775
          %802 = vst [vmem:[%s358 + $0x50] sm:$0xff] %v776
          %803 = vst [vmem:[%s358 + $0x58] sm:$0xff] %v777
          %804 = vst [vmem:[%s358 + $0x60] sm:$0xff] %v778
          %805 = vst [vmem:[%s358 + $0x68] sm:$0xff] %v779
          %806 = vst [vmem:[%s358 + $0x70] sm:$0xff] %v780
          %807 = vst [vmem:[%s358 + $0x78] sm:$0xff] %v781
          %808 = vst [vmem:[%s358 + $0x80] sm:$0xff] %v782
          %809 = vst [vmem:[%s358 + $0x88] sm:$0xff] %v783
          %810 = vst [vmem:[%s358 + $0x90] sm:$0xff] %v784
          %811 = vst [vmem:[%s358 + $0x98] sm:$0xff] %v785
          %812 = vst [vmem:[%s358 + $0xa0] sm:$0xff] %v786
          %813 = vst [vmem:[%s358 + $0xa8] sm:$0xff] %v787
          %814 = vst [vmem:[%s358 + $0xb0] sm:$0xff] %v788
          %815 = vst [vmem:[%s358 + $0xb8] sm:$0xff] %v789
          %816 = vst [vmem:[%s358 + $0xc0] sm:$0xff] %v790
          %817 = vst [vmem:[%s358 + $0xc8] sm:$0xff] %v791
        $region81: #{alexnet_forward.14} parent=68 // pred_fallthru
          _
        %s818 = smul.u32 13, %s19
        %s819 = smul.u32 2, %s20
        %p820 = scmp.lt.s32.totalorder %s818, 12
        %s821 = scalar_select %p820, %s818, 12
        %p822 = scmp.lt.s32.totalorder %s819, 1
        %s823 = scalar_select %p822, %s819, 1
        %s824 = smul.addr %s821, 2
        %s825 = sadd.s32 %s823, %s824
        %s826 = smul.addr %s825, 8
        %s827 = scalar_lea.vmem %s3, %s826
        // Predicated region
        $region82: #{alexnet_forward.14} parent=68 // pred_check
          %p828 = pneg %p135
        $region83: #{alexnet_forward.14} parent=68 // pred_check_branch
          %830 = sbr.rel (%p828) target = $region85
        $region84: #{alexnet_forward.14} parent=68 // pred_region
          %s831 = smul.u32 13, %s19
          %s832 = smul.u32 2, %s20
        $region85: #{alexnet_forward.14} parent=68 // pred_fallthru
          _
        // Predicated region
        $region86: #{alexnet_forward.14} parent=68 // pred_check
          %p833 = pneg %p135
        $region87: #{alexnet_forward.14} parent=68 // pred_check_branch
          %835 = sbr.rel (%p833) target = $region89
        $region88: #{alexnet_forward.14} parent=68 // pred_region
          %s836 = smul.u32 13, %s19
          %s837 = smul.u32 2, %s20
          %p838 = scmp.lt.s32.totalorder %s836, 12
          %s839 = scalar_select %p838, %s836, 12
          %p840 = scmp.lt.s32.totalorder %s837, 1
          %s841 = scalar_select %p840, %s837, 1
          %s842 = smul.addr %s839, 2
          %s843 = sadd.s32 %s841, %s842
          %s844 = smul.addr %s843, 8
          %s845 = scalar_lea.vmem %s3, %s844
        $region89: #{alexnet_forward.14} parent=68 // pred_fallthru
          _
      $region69: #{alexnet_forward.14} parent=5 // pred_fallthru
        _
      %p846 = scmp.le.s32.totalorder 2, %s9
      // Predicated region
      $region90: #{alexnet_forward.14} parent=5 // pred_check
        %p847 = pneg %p846
      $region91: #{alexnet_forward.14} parent=5 // pred_check_branch
        %849 = sbr.rel (%p847) target = $region93
      $region92: #{alexnet_forward.14} parent=5 // pred_region
        %s850 = ssub.s32 %s9, 2
      $region93: #{alexnet_forward.14} parent=5 // pred_fallthru
        _
    $region6: #{alexnet_forward.14} parent=1 // loop_footer
      %s13 = sadd.s32 1, %s9
    $region7: #{alexnet_forward.14} parent=1 // loop_footer_branch
      %8 = sbr.rel target = $region3
    $region8: #{alexnet_forward.14} parent=1 // loop_exit
      _

// kernel: alexnet_forward.15
$region0: #{alexnet_forward.15}
  #allocation0 [shape = 'u32[]', space=smem, size = 0x4, offset = 0x4, fixed_abs, tag = 'smem constant byte address 0x4 - core index']
  #allocation1 [shape = 'u32[72,128]{1,0:T(1,128)}', space=vmem, size = 0x9000, scoped, tag = 'internal scratch']
  %s0 = inlined_call_operand.vmem [shape: f32[24,256], index: 0, kind: input, shape index: {}]
  %s1 = inlined_call_operand.vmem [shape: f32[24,256], index: 1, kind: input, shape index: {}]
  %s2 = inlined_call_operand.vmem [shape: f32[24,256], index: 2, kind: input, shape index: {}]
  %s3 = inlined_call_operand.vmem [shape: f32[24,256], index: 3, kind: input, shape index: {}]
  %s4 = inlined_call_operand.vmem [shape: f32[24,256], index: 4, kind: input, shape index: {}]
  %s5 = inlined_call_operand.vmem [shape: f32[24,256], index: 5, kind: input, shape index: {}]
  %s6 = inlined_call_operand.vmem [shape: f32[24,256], index: 6, kind: input, shape index: {}]
  %s7 = inlined_call_operand.vmem [shape: f32[24,256], index: 7, kind: input, shape index: {}]
  %s8 = inlined_call_operand.vmem [shape: f32[24,256], index: 8, kind: input, shape index: {}]
  %s9 = inlined_call_operand.vmem [shape: f32[24,256], index: 9, kind: output, shape index: {}]
  %s10 = sld [smem:[#allocation0]]
  $region46: #{alexnet_forward.15} parent=0
    _
  %s12 = ssub.s32 1, %s10
  %s13 = scalar_select 0, %s12, %s10
  // Predicated region
  $region2: #{alexnet_forward.15} parent=0 // pred_check
    _
  $region3: #{alexnet_forward.15} parent=0 // pred_check_branch
    %15 = sbr.rel (0) target = $region5
  $region4: #{alexnet_forward.15} parent=0 // pred_region
    _
  $region5: #{alexnet_forward.15} parent=0 // pred_fallthru
    _
  // Predicated region
  $region6: #{alexnet_forward.15} parent=0 // pred_check
    _
  $region7: #{alexnet_forward.15} parent=0 // pred_check_branch
    %17 = sbr.rel (0) target = $region9
  $region8: #{alexnet_forward.15} parent=0 // pred_region
    _
  $region9: #{alexnet_forward.15} parent=0 // pred_fallthru
    _
  // Predicated region
  $region10: #{alexnet_forward.15} parent=0 // pred_check
    _
  $region11: #{alexnet_forward.15} parent=0 // pred_check_branch
    %19 = sbr.rel (0) target = $region13
  $region12: #{alexnet_forward.15} parent=0 // pred_region
    _
  $region13: #{alexnet_forward.15} parent=0 // pred_fallthru
    _
  // Predicated region
  $region14: #{alexnet_forward.15} parent=0 // pred_check
    _
  $region15: #{alexnet_forward.15} parent=0 // pred_check_branch
    %21 = sbr.rel (0) target = $region17
  $region16: #{alexnet_forward.15} parent=0 // pred_region
    _
  $region17: #{alexnet_forward.15} parent=0 // pred_fallthru
    _
  // Predicated region
  $region18: #{alexnet_forward.15} parent=0 // pred_check
    _
  $region19: #{alexnet_forward.15} parent=0 // pred_check_branch
    %23 = sbr.rel (0) target = $region21
  $region20: #{alexnet_forward.15} parent=0 // pred_region
    _
  $region21: #{alexnet_forward.15} parent=0 // pred_fallthru
    _
  // Predicated region
  $region22: #{alexnet_forward.15} parent=0 // pred_check
    _
  $region23: #{alexnet_forward.15} parent=0 // pred_check_branch
    %25 = sbr.rel (0) target = $region25
  $region24: #{alexnet_forward.15} parent=0 // pred_region
    _
  $region25: #{alexnet_forward.15} parent=0 // pred_fallthru
    _
  // Predicated region
  $region26: #{alexnet_forward.15} parent=0 // pred_check
    _
  $region27: #{alexnet_forward.15} parent=0 // pred_check_branch
    %27 = sbr.rel (0) target = $region29
  $region28: #{alexnet_forward.15} parent=0 // pred_region
    _
  $region29: #{alexnet_forward.15} parent=0 // pred_fallthru
    _
  // Predicated region
  $region30: #{alexnet_forward.15} parent=0 // pred_check
    _
  $region31: #{alexnet_forward.15} parent=0 // pred_check_branch
    %29 = sbr.rel (0) target = $region33
  $region32: #{alexnet_forward.15} parent=0 // pred_region
    _
  $region33: #{alexnet_forward.15} parent=0 // pred_fallthru
    _
  // Predicated region
  $region34: #{alexnet_forward.15} parent=0 // pred_check
    _
  $region35: #{alexnet_forward.15} parent=0 // pred_check_branch
    %31 = sbr.rel (0) target = $region37
  $region36: #{alexnet_forward.15} parent=0 // pred_region
    _
  $region37: #{alexnet_forward.15} parent=0 // pred_fallthru
    _
  %v32 = vld [vmem:[%s0] sm:$0xff]
  %v33 = vld [vmem:[%s0 + $0x8] sm:$0xff]
  %v34 = vld [vmem:[%s0 + $0x10] sm:$0xff]
  %v35 = vld [vmem:[%s0 + $0x18] sm:$0xff]
  %v36 = vld [vmem:[%s0 + $0x20] sm:$0xff]
  %v37 = vld [vmem:[%s0 + $0x28] sm:$0xff]
  %v38 = vld [vmem:[%s1] sm:$0xff]
  %v39 = vld [vmem:[%s1 + $0x8] sm:$0xff]
  %v40 = vld [vmem:[%s1 + $0x10] sm:$0xff]
  %v41 = vld [vmem:[%s1 + $0x18] sm:$0xff]
  %v42 = vld [vmem:[%s1 + $0x20] sm:$0xff]
  %v43 = vld [vmem:[%s1 + $0x28] sm:$0xff]
  %v44 = vmax.f32 %v32, %v38
  %v45 = vmax.f32 %v33, %v39
  %v46 = vmax.f32 %v34, %v40
  %v47 = vmax.f32 %v35, %v41
  %v48 = vmax.f32 %v36, %v42
  %v49 = vmax.f32 %v37, %v43
  %v50 = vld [vmem:[%s2] sm:$0xff]
  %v51 = vld [vmem:[%s2 + $0x8] sm:$0xff]
  %v52 = vld [vmem:[%s2 + $0x10] sm:$0xff]
  %v53 = vld [vmem:[%s2 + $0x18] sm:$0xff]
  %v54 = vld [vmem:[%s2 + $0x20] sm:$0xff]
  %v55 = vld [vmem:[%s2 + $0x28] sm:$0xff]
  %v56 = vmax.f32 %v44, %v50
  %v57 = vmax.f32 %v45, %v51
  %v58 = vmax.f32 %v46, %v52
  %v59 = vmax.f32 %v47, %v53
  %v60 = vmax.f32 %v48, %v54
  %v61 = vmax.f32 %v49, %v55
  %v62 = vld [vmem:[%s3] sm:$0xff]
  %v63 = vld [vmem:[%s3 + $0x8] sm:$0xff]
  %v64 = vld [vmem:[%s3 + $0x10] sm:$0xff]
  %v65 = vld [vmem:[%s3 + $0x18] sm:$0xff]
  %v66 = vld [vmem:[%s3 + $0x20] sm:$0xff]
  %v67 = vld [vmem:[%s3 + $0x28] sm:$0xff]
  %v68 = vmax.f32 %v56, %v62
  %v69 = vmax.f32 %v57, %v63
  %v70 = vmax.f32 %v58, %v64
  %v71 = vmax.f32 %v59, %v65
  %v72 = vmax.f32 %v60, %v66
  %v73 = vmax.f32 %v61, %v67
  %v74 = vld [vmem:[%s4] sm:$0xff]
  %v75 = vld [vmem:[%s4 + $0x8] sm:$0xff]
  %v76 = vld [vmem:[%s4 + $0x10] sm:$0xff]
  %v77 = vld [vmem:[%s4 + $0x18] sm:$0xff]
  %v78 = vld [vmem:[%s4 + $0x20] sm:$0xff]
  %v79 = vld [vmem:[%s4 + $0x28] sm:$0xff]
  %v80 = vmax.f32 %v68, %v74
  %v81 = vmax.f32 %v69, %v75
  %v82 = vmax.f32 %v70, %v76
  %v83 = vmax.f32 %v71, %v77
  %v84 = vmax.f32 %v72, %v78
  %v85 = vmax.f32 %v73, %v79
  %v86 = vld [vmem:[%s5] sm:$0xff]
  %v87 = vld [vmem:[%s5 + $0x8] sm:$0xff]
  %v88 = vld [vmem:[%s5 + $0x10] sm:$0xff]
  %v89 = vld [vmem:[%s5 + $0x18] sm:$0xff]
  %v90 = vld [vmem:[%s5 + $0x20] sm:$0xff]
  %v91 = vld [vmem:[%s5 + $0x28] sm:$0xff]
  %v92 = vmax.f32 %v80, %v86
  %v93 = vmax.f32 %v81, %v87
  %v94 = vmax.f32 %v82, %v88
  %v95 = vmax.f32 %v83, %v89
  %v96 = vmax.f32 %v84, %v90
  %v97 = vmax.f32 %v85, %v91
  %v98 = vld [vmem:[%s6] sm:$0xff]
  %v99 = vld [vmem:[%s6 + $0x8] sm:$0xff]
  %v100 = vld [vmem:[%s6 + $0x10] sm:$0xff]
  %v101 = vld [vmem:[%s6 + $0x18] sm:$0xff]
  %v102 = vld [vmem:[%s6 + $0x20] sm:$0xff]
  %v103 = vld [vmem:[%s6 + $0x28] sm:$0xff]
  %v104 = vmax.f32 %v92, %v98
  %v105 = vmax.f32 %v93, %v99
  %v106 = vmax.f32 %v94, %v100
  %v107 = vmax.f32 %v95, %v101
  %v108 = vmax.f32 %v96, %v102
  %v109 = vmax.f32 %v97, %v103
  %v110 = vld [vmem:[%s7] sm:$0xff]
  %v111 = vld [vmem:[%s7 + $0x8] sm:$0xff]
  %v112 = vld [vmem:[%s7 + $0x10] sm:$0xff]
  %v113 = vld [vmem:[%s7 + $0x18] sm:$0xff]
  %v114 = vld [vmem:[%s7 + $0x20] sm:$0xff]
  %v115 = vld [vmem:[%s7 + $0x28] sm:$0xff]
  %v116 = vmax.f32 %v104, %v110
  %v117 = vmax.f32 %v105, %v111
  %v118 = vmax.f32 %v106, %v112
  %v119 = vmax.f32 %v107, %v113
  %v120 = vmax.f32 %v108, %v114
  %v121 = vmax.f32 %v109, %v115
  %v122 = vld [vmem:[%s8] sm:$0xff]
  %v123 = vld [vmem:[%s8 + $0x8] sm:$0xff]
  %v124 = vld [vmem:[%s8 + $0x10] sm:$0xff]
  %v125 = vld [vmem:[%s8 + $0x18] sm:$0xff]
  %v126 = vld [vmem:[%s8 + $0x20] sm:$0xff]
  %v127 = vld [vmem:[%s8 + $0x28] sm:$0xff]
  %v128 = vmax.f32 %v116, %v122
  %v129 = vmax.f32 %v117, %v123
  %v130 = vmax.f32 %v118, %v124
  %v131 = vmax.f32 %v119, %v125
  %v132 = vmax.f32 %v120, %v126
  %v133 = vmax.f32 %v121, %v127
  %134 = vst [vmem:[%s9] sm:$0xff] %v128
  %135 = vst [vmem:[%s9 + $0x8] sm:$0xff] %v129
  %136 = vst [vmem:[%s9 + $0x10] sm:$0xff] %v130
  %137 = vst [vmem:[%s9 + $0x18] sm:$0xff] %v131
  %138 = vst [vmem:[%s9 + $0x20] sm:$0xff] %v132
  %139 = vst [vmem:[%s9 + $0x28] sm:$0xff] %v133
  // Predicated region
  $region38: #{alexnet_forward.15} parent=0 // pred_check
    _
  $region39: #{alexnet_forward.15} parent=0 // pred_check_branch
    %141 = sbr.rel (0) target = $region41
  $region40: #{alexnet_forward.15} parent=0 // pred_region
    _
  $region41: #{alexnet_forward.15} parent=0 // pred_fallthru
    _
  // Predicated region
  $region42: #{alexnet_forward.15} parent=0 // pred_check
    _
  $region43: #{alexnet_forward.15} parent=0 // pred_check_branch
    %143 = sbr.rel (0) target = $region45
  $region44: #{alexnet_forward.15} parent=0 // pred_region
    _
  $region45: #{alexnet_forward.15} parent=0 // pred_fallthru
    _

// kernel: alexnet_forward.16
$region0: #{alexnet_forward.16}
  #allocation0 [shape = 'u32[]', space=smem, size = 0x4, offset = 0x4, fixed_abs, tag = 'smem constant byte address 0x4 - core index']
  #allocation1 [shape = 'u32[72,128]{1,0:T(1,128)}', space=vmem, size = 0x9000, scoped, tag = 'internal scratch']
  #allocation2 [shape = 'f32[24,128]{1,0:T(8,128)}', space=vmem, size = 0x3000, scoped, tag = 'scratch operand']
  %s0 = inlined_call_operand.vmem [shape: bf16[24,1792], index: 0, kind: input, shape index: {}]
  %s1 = inlined_call_operand.vmem [shape: bf16[1792,384], index: 1, kind: input, shape index: {}]
  %s2 = inlined_call_operand.vmem [shape: f32[1,384], index: 2, kind: input, shape index: {}]
  %s3 = inlined_call_operand.vmem [shape: f32[24,384], index: 3, kind: output, shape index: {}]
  %s4 = sld [smem:[#allocation0]]
  $region169: #{alexnet_forward.16} parent=0
    _
  %s6 = ssub.s32 1, %s4
  %s7 = scalar_select 0, %s6, %s4
  $region1: #{alexnet_forward.16} parent=0
    #allocation3 [shape = 'u8[12288]{0}', space=vmem, size = 0x3000, scoped, tag = 'input window, operand 0']
    #allocation4 [shape = 'u8[65536]{0}', space=vmem, size = 0x10000, scoped, tag = 'input window, operand 1']
    #allocation5 [shape = 'u8[24576]{0}', space=vmem, size = 0x6000, scoped, tag = 'output window, operand 0']
    loop: start=0, step=1, limit=44
    $region2: #{alexnet_forward.16} parent=1 // loop_pre_header
      _
    $region3: #{alexnet_forward.16} parent=1 // loop_header
      %s9 = sphi 0, %s13
      %p10 = scmp.ge.s32.totalorder %s9, 44
      %s16 = sphi 0, %s35
      %s17 = sphi 0, %s31
      %s18 = sphi 0, %s27
      %s19 = sphi 0, %s16
      %s20 = sphi 0, %s17
      %s21 = sphi 0, %s18
      %s22 = sphi 0, %s19
      %s23 = sphi 0, %s20
      %s24 = sphi 0, %s21
      %s40 = sphi 0, %s42
      %s43 = sphi 0, %s40
      %s44 = sphi 0, %s43
      %s60 = sphi 0, %s44
      %s68 = sphi 0, %s70
      %s71 = sphi 0, %s68
      %s72 = sphi 0, %s71
      %s88 = sphi 0, %s72
      %s94 = sphi 0, %s96
      %s97 = sphi 0, %s94
      %s98 = sphi 0, %s97
      %s114 = sphi 0, %s98
      %s122 = sphi 0, %s124
      %s125 = sphi 0, %s122
      %s126 = sphi 0, %s125
      %s142 = sphi 0, %s126
    $region4: #{alexnet_forward.16} parent=1 // loop_header_branch
      %12 = sbr.rel (%p10) target = $region8
    $region5: #{alexnet_forward.16} parent=1 // loop_body
      %s14 = ssub.s32 %s9, 1
      %s15 = ssub.s32 %s9, 2
      %s25 = sadd.s32 1, %s18
      %p26 = scmp.ge.s32.totalorder %s25, 14
      %s27 = scalar_select %p26, 0, %s25
      %s28 = sadd.s32 1, %s17
      %s29 = scalar_select %p26, %s28, %s17
      %p30 = scmp.ge.s32.totalorder %s29, 3
      %s31 = scalar_select %p30, 0, %s29
      %s32 = sadd.s32 1, %s16
      %s33 = scalar_select %p30, %s32, %s16
      %p34 = scmp.ge.s32.totalorder %s33, 1
      %s35 = scalar_select %p34, 0, %s33
      %s36 = ssub.s32 %s16, %s35
      %s37 = ssub.s32 %s18, %s27
      %s38 = sor.u32 %s36, %s37
      %p39 = scmp.eq.s32.totalorder %s38, 0
      %s41 = sadd.s32 %s40, 1
      %s42 = scalar_select %p39, %s40, %s41
      %p45 = pneg %p39
      %p46 = scmp.eq.s32.totalorder %s9, 41
      %p47 = por %p45, %p46
      %p48 = scmp.ne.s32.totalorder %s40, %s43
      %p49 = scmp.eq.s32.totalorder %s9, 0
      %p50 = por %p48, %p49
      %p51 = scmp.ne.s32.totalorder %s40, %s43
      %p52 = scmp.eq.s32.totalorder %s14, 41
      %p53 = por %p51, %p52
      %p54 = scmp.ne.s32.totalorder %s43, %s44
      %p55 = scmp.eq.s32.totalorder %s14, 0
      %p56 = por %p54, %p55
      %p57 = scmp.ne.s32.totalorder %s43, %s44
      %p58 = scmp.eq.s32.totalorder %s15, 41
      %p59 = por %p57, %p58
      %p61 = scmp.ne.s32.totalorder %s44, %s60
      %p62 = scmp.eq.s32.totalorder %s15, 0
      %p63 = por %p61, %p62
      %s64 = ssub.s32 %s18, %s27
      %s65 = ssub.s32 %s17, %s31
      %s66 = sor.u32 %s64, %s65
      %p67 = scmp.eq.s32.totalorder %s66, 0
      %s69 = sadd.s32 %s68, 1
      %s70 = scalar_select %p67, %s68, %s69
      %p73 = pneg %p67
      %p74 = scmp.eq.s32.totalorder %s9, 41
      %p75 = por %p73, %p74
      %p76 = scmp.ne.s32.totalorder %s68, %s71
      %p77 = scmp.eq.s32.totalorder %s9, 0
      %p78 = por %p76, %p77
      %p79 = scmp.ne.s32.totalorder %s68, %s71
      %p80 = scmp.eq.s32.totalorder %s14, 41
      %p81 = por %p79, %p80
      %p82 = scmp.ne.s32.totalorder %s71, %s72
      %p83 = scmp.eq.s32.totalorder %s14, 0
      %p84 = por %p82, %p83
      %p85 = scmp.ne.s32.totalorder %s71, %s72
      %p86 = scmp.eq.s32.totalorder %s15, 41
      %p87 = por %p85, %p86
      %p89 = scmp.ne.s32.totalorder %s72, %s88
      %p90 = scmp.eq.s32.totalorder %s15, 0
      %p91 = por %p89, %p90
      %s92 = ssub.s32 %s17, %s31
      %p93 = scmp.eq.s32.totalorder %s92, 0
      %s95 = sadd.s32 %s94, 1
      %s96 = scalar_select %p93, %s94, %s95
      %p99 = pneg %p93
      %p100 = scmp.eq.s32.totalorder %s9, 41
      %p101 = por %p99, %p100
      %p102 = scmp.ne.s32.totalorder %s94, %s97
      %p103 = scmp.eq.s32.totalorder %s9, 0
      %p104 = por %p102, %p103
      %p105 = scmp.ne.s32.totalorder %s94, %s97
      %p106 = scmp.eq.s32.totalorder %s14, 41
      %p107 = por %p105, %p106
      %p108 = scmp.ne.s32.totalorder %s97, %s98
      %p109 = scmp.eq.s32.totalorder %s14, 0
      %p110 = por %p108, %p109
      %p111 = scmp.ne.s32.totalorder %s97, %s98
      %p112 = scmp.eq.s32.totalorder %s15, 41
      %p113 = por %p111, %p112
      %p115 = scmp.ne.s32.totalorder %s98, %s114
      %p116 = scmp.eq.s32.totalorder %s15, 0
      %p117 = por %p115, %p116
      %s118 = ssub.s32 %s16, %s35
      %s119 = ssub.s32 %s17, %s31
      %s120 = sor.u32 %s118, %s119
      %p121 = scmp.eq.s32.totalorder %s120, 0
      %s123 = sadd.s32 %s122, 1
      %s124 = scalar_select %p121, %s122, %s123
      %p127 = pneg %p121
      %p128 = scmp.eq.s32.totalorder %s9, 41
      %p129 = por %p127, %p128
      %p130 = scmp.ne.s32.totalorder %s122, %s125
      %p131 = scmp.eq.s32.totalorder %s9, 0
      %p132 = por %p130, %p131
      %p133 = scmp.ne.s32.totalorder %s122, %s125
      %p134 = scmp.eq.s32.totalorder %s14, 41
      %p135 = por %p133, %p134
      %p136 = scmp.ne.s32.totalorder %s125, %s126
      %p137 = scmp.eq.s32.totalorder %s14, 0
      %p138 = por %p136, %p137
      %p139 = scmp.ne.s32.totalorder %s125, %s126
      %p140 = scmp.eq.s32.totalorder %s15, 41
      %p141 = por %p139, %p140
      %p143 = scmp.ne.s32.totalorder %s126, %s142
      %p144 = scmp.eq.s32.totalorder %s15, 0
      %p145 = por %p143, %p144
      %p146 = scmp.le.s32.totalorder 1, %s9
      %p147 = scmp.lt.s32.totalorder %s9, 43
      %p148 = pnand %p146, %p147
      %p149 = pneg %p148
      // Predicated region
      $region9: #{alexnet_forward.16} parent=5 // pred_check
        _
      $region10: #{alexnet_forward.16} parent=5 // pred_check_branch
        %151 = sbr.rel (%p148) target = $region12
      $region11: #{alexnet_forward.16} parent=5 // pred_region
        %s152 = ssub.s32 %s9, 1
      $region12: #{alexnet_forward.16} parent=5 // pred_fallthru
        _
      %p153 = scmp.lt.s32.totalorder %s9, 42
      // Predicated region
      $region13: #{alexnet_forward.16} parent=5 // pred_check
        %p154 = pneg %p153
      $region14: #{alexnet_forward.16} parent=5 // pred_check_branch
        %156 = sbr.rel (%p154) target = $region16
      $region15: #{alexnet_forward.16} parent=5 // pred_region
        // Predicated region
        $region17: #{alexnet_forward.16} parent=15 // pred_check
          %p157 = pneg %p50
        $region18: #{alexnet_forward.16} parent=15 // pred_check_branch
          %159 = sbr.rel (%p157) target = $region20
        $region19: #{alexnet_forward.16} parent=15 // pred_region
          %s160 = sand.u32 %s40, 1
          %s161 = sand.u32 %s40, 1
          %s162 = smul.addr %s161, 12
          %s163 = scalar_lea.vmem [#allocation3], %s162
          %s164 = smul.u32 3, %s16
          %s165 = smul.addr %s164, 14
          %s166 = sadd.s32 %s18, %s165
          %s167 = smul.addr %s166, 4
          %s168 = scalar_lea.vmem %s0, %s167
          // Predicated region
          $region21: #{alexnet_forward.16} parent=19 // pred_check
            _
          $region22: #{alexnet_forward.16} parent=19 // pred_check_branch
            %170 = sbr.rel (0) target = $region24
          $region23: #{alexnet_forward.16} parent=19 // pred_region
            // Predicated region
            $region25: #{alexnet_forward.16} parent=23 // pred_check
              _
            $region26: #{alexnet_forward.16} parent=23 // pred_check_branch
              %172 = sbr.rel target = $region28
            $region27: #{alexnet_forward.16} parent=23 // pred_region
              // Predicated region
              $region40: #{alexnet_forward.16} parent=27 // pred_check
                _
              $region41: #{alexnet_forward.16} parent=27 // pred_check_branch
                %192 = sbr.rel (0) target = $region43
              $region42: #{alexnet_forward.16} parent=27 // pred_region
                loop: start=0, step=1, limit=1
                $region44: #{alexnet_forward.16} parent=42 // loop_pre_header
                  _
                $region45: #{alexnet_forward.16} parent=42 // loop_header
                  %s194 = sphi 0, %s198
                  %p195 = scmp.ge.s32.totalorder %s194, 1
                  %s199 = sphi %s168, %s168
                  %s200 = sphi %s163, %s163
                $region46: #{alexnet_forward.16} parent=42 // loop_header_branch
                  %197 = sbr.rel (%p195) target = $region50
                $region47: #{alexnet_forward.16} parent=42 // loop_body
                  _
                $region48: #{alexnet_forward.16} parent=42 // loop_footer
                  %s198 = sadd.s32 1, %s194
                $region49: #{alexnet_forward.16} parent=42 // loop_footer_branch
                  %193 = sbr.rel target = $region45
                $region50: #{alexnet_forward.16} parent=42 // loop_exit
                  _
                %s202 = ssub.s32 16, 1
                loop: start=0, step=1, limit=1
                $region51: #{alexnet_forward.16} parent=42 // loop_pre_header
                  _
                $region52: #{alexnet_forward.16} parent=42 // loop_header
                  %s204 = sphi 0, %s208
                  %p205 = scmp.ge.s32.totalorder %s204, 1
                  %s209 = sphi %s168, %s168
                  %s210 = sphi %s163, %s163
                $region53: #{alexnet_forward.16} parent=42 // loop_header_branch
                  %207 = sbr.rel (%p205) target = $region57
                $region54: #{alexnet_forward.16} parent=42 // loop_body
                  %v211 = vld [vmem:[%s209] sm:%s202]
                  %212 = vst [vmem:[%s210] sm:%s202] %v211
                  %v213 = vld [vmem:[%s209 + $0x38] sm:%s202]
                  %214 = vst [vmem:[%s210 + $0x4] sm:%s202] %v213
                  %v215 = vld [vmem:[%s209 + $0x70] sm:%s202]
                  %216 = vst [vmem:[%s210 + $0x8] sm:%s202] %v215
                $region55: #{alexnet_forward.16} parent=42 // loop_footer
                  %s208 = sadd.s32 1, %s204
                $region56: #{alexnet_forward.16} parent=42 // loop_footer_branch
                  %203 = sbr.rel target = $region52
                $region57: #{alexnet_forward.16} parent=42 // loop_exit
                  _
              $region43: #{alexnet_forward.16} parent=27 // pred_fallthru
                _
            $region28: #{alexnet_forward.16} parent=23 // pred_fallthru
              _
            // Predicated region
            $region29: #{alexnet_forward.16} parent=23 // pred_check
              _
            $region30: #{alexnet_forward.16} parent=23 // pred_check_branch
              %174 = sbr.rel (0) target = $region32
            $region31: #{alexnet_forward.16} parent=23 // pred_region
              %s176 = ssub.s32 16, 1
              loop: start=0, step=1, limit=1
              $region33: #{alexnet_forward.16} parent=31 // loop_pre_header
                _
              $region34: #{alexnet_forward.16} parent=31 // loop_header
                %s178 = sphi 0, %s182
                %p179 = scmp.ge.s32.totalorder %s178, 1
                %s183 = sphi %s168, %s168
                %s184 = sphi %s163, %s163
              $region35: #{alexnet_forward.16} parent=31 // loop_header_branch
                %181 = sbr.rel (%p179) target = $region39
              $region36: #{alexnet_forward.16} parent=31 // loop_body
                %v185 = vld [vmem:[%s183] sm:%s176]
                %186 = vst [vmem:[%s184] sm:%s176] %v185
                %v187 = vld [vmem:[%s183 + $0x38] sm:%s176]
                %188 = vst [vmem:[%s184 + $0x4] sm:%s176] %v187
                %v189 = vld [vmem:[%s183 + $0x70] sm:%s176]
                %190 = vst [vmem:[%s184 + $0x8] sm:%s176] %v189
              $region37: #{alexnet_forward.16} parent=31 // loop_footer
                %s182 = sadd.s32 1, %s178
              $region38: #{alexnet_forward.16} parent=31 // loop_footer_branch
                %177 = sbr.rel target = $region34
              $region39: #{alexnet_forward.16} parent=31 // loop_exit
                _
            $region32: #{alexnet_forward.16} parent=23 // pred_fallthru
              _
          $region24: #{alexnet_forward.16} parent=19 // pred_fallthru
            _
          %217 = vnop
        $region20: #{alexnet_forward.16} parent=15 // pred_fallthru
          _
        // Predicated region
        $region58: #{alexnet_forward.16} parent=15 // pred_check
          %p218 = pneg %p78
        $region59: #{alexnet_forward.16} parent=15 // pred_check_branch
          %220 = sbr.rel (%p218) target = $region61
        $region60: #{alexnet_forward.16} parent=15 // pred_region
          %s221 = sand.u32 %s68, 1
          %s222 = sand.u32 %s68, 1
          %s223 = smul.addr %s222, 64
          %s224 = scalar_lea.vmem [#allocation4], %s223
          %s225 = smul.u32 16, %s18
          %s226 = smul.addr %s225, 3
          %s227 = sadd.s32 %s17, %s226
          %s228 = smul.addr %s227, 4
          %s229 = scalar_lea.vmem %s1, %s228
          // Predicated region
          $region62: #{alexnet_forward.16} parent=60 // pred_check
            _
          $region63: #{alexnet_forward.16} parent=60 // pred_check_branch
            %231 = sbr.rel (0) target = $region65
          $region64: #{alexnet_forward.16} parent=60 // pred_region
            // Predicated region
            $region66: #{alexnet_forward.16} parent=64 // pred_check
              _
            $region67: #{alexnet_forward.16} parent=64 // pred_check_branch
              %233 = sbr.rel target = $region69
            $region68: #{alexnet_forward.16} parent=64 // pred_region
              // Predicated region
              $region81: #{alexnet_forward.16} parent=68 // pred_check
                _
              $region82: #{alexnet_forward.16} parent=68 // pred_check_branch
                %279 = sbr.rel (0) target = $region84
              $region83: #{alexnet_forward.16} parent=68 // pred_region
                loop: start=0, step=1, limit=1
                $region85: #{alexnet_forward.16} parent=83 // loop_pre_header
                  _
                $region86: #{alexnet_forward.16} parent=83 // loop_header
                  %s281 = sphi 0, %s285
                  %p282 = scmp.ge.s32.totalorder %s281, 1
                  %s286 = sphi %s229, %s229
                  %s287 = sphi %s224, %s224
                $region87: #{alexnet_forward.16} parent=83 // loop_header_branch
                  %284 = sbr.rel (%p282) target = $region91
                $region88: #{alexnet_forward.16} parent=83 // loop_body
                  _
                $region89: #{alexnet_forward.16} parent=83 // loop_footer
                  %s285 = sadd.s32 1, %s281
                $region90: #{alexnet_forward.16} parent=83 // loop_footer_branch
                  %280 = sbr.rel target = $region86
                $region91: #{alexnet_forward.16} parent=83 // loop_exit
                  _
                %s289 = ssub.s32 16, 1
                loop: start=0, step=1, limit=1
                $region92: #{alexnet_forward.16} parent=83 // loop_pre_header
                  _
                $region93: #{alexnet_forward.16} parent=83 // loop_header
                  %s291 = sphi 0, %s295
                  %p292 = scmp.ge.s32.totalorder %s291, 1
                  %s296 = sphi %s229, %s229
                  %s297 = sphi %s224, %s224
                $region94: #{alexnet_forward.16} parent=83 // loop_header_branch
                  %294 = sbr.rel (%p292) target = $region98
                $region95: #{alexnet_forward.16} parent=83 // loop_body
                  %v298 = vld [vmem:[%s296] sm:%s289]
                  %299 = vst [vmem:[%s297] sm:%s289] %v298
                  %v300 = vld [vmem:[%s296 + $0xc] sm:%s289]
                  %301 = vst [vmem:[%s297 + $0x4] sm:%s289] %v300
                  %v302 = vld [vmem:[%s296 + $0x18] sm:%s289]
                  %303 = vst [vmem:[%s297 + $0x8] sm:%s289] %v302
                  %v304 = vld [vmem:[%s296 + $0x24] sm:%s289]
                  %305 = vst [vmem:[%s297 + $0xc] sm:%s289] %v304
                  %v306 = vld [vmem:[%s296 + $0x30] sm:%s289]
                  %307 = vst [vmem:[%s297 + $0x10] sm:%s289] %v306
                  %v308 = vld [vmem:[%s296 + $0x3c] sm:%s289]
                  %309 = vst [vmem:[%s297 + $0x14] sm:%s289] %v308
                  %v310 = vld [vmem:[%s296 + $0x48] sm:%s289]
                  %311 = vst [vmem:[%s297 + $0x18] sm:%s289] %v310
                  %v312 = vld [vmem:[%s296 + $0x54] sm:%s289]
                  %313 = vst [vmem:[%s297 + $0x1c] sm:%s289] %v312
                  %v314 = vld [vmem:[%s296 + $0x60] sm:%s289]
                  %315 = vst [vmem:[%s297 + $0x20] sm:%s289] %v314
                  %v316 = vld [vmem:[%s296 + $0x6c] sm:%s289]
                  %317 = vst [vmem:[%s297 + $0x24] sm:%s289] %v316
                  %v318 = vld [vmem:[%s296 + $0x78] sm:%s289]
                  %319 = vst [vmem:[%s297 + $0x28] sm:%s289] %v318
                  %v320 = vld [vmem:[%s296 + $0x84] sm:%s289]
                  %321 = vst [vmem:[%s297 + $0x2c] sm:%s289] %v320
                  %v322 = vld [vmem:[%s296 + $0x90] sm:%s289]
                  %323 = vst [vmem:[%s297 + $0x30] sm:%s289] %v322
                  %v324 = vld [vmem:[%s296 + $0x9c] sm:%s289]
                  %325 = vst [vmem:[%s297 + $0x34] sm:%s289] %v324
                  %v326 = vld [vmem:[%s296 + $0xa8] sm:%s289]
                  %327 = vst [vmem:[%s297 + $0x38] sm:%s289] %v326
                  %v328 = vld [vmem:[%s296 + $0xb4] sm:%s289]
                  %329 = vst [vmem:[%s297 + $0x3c] sm:%s289] %v328
                $region96: #{alexnet_forward.16} parent=83 // loop_footer
                  %s295 = sadd.s32 1, %s291
                $region97: #{alexnet_forward.16} parent=83 // loop_footer_branch
                  %290 = sbr.rel target = $region93
                $region98: #{alexnet_forward.16} parent=83 // loop_exit
                  _
              $region84: #{alexnet_forward.16} parent=68 // pred_fallthru
                _
            $region69: #{alexnet_forward.16} parent=64 // pred_fallthru
              _
            // Predicated region
            $region70: #{alexnet_forward.16} parent=64 // pred_check
              _
            $region71: #{alexnet_forward.16} parent=64 // pred_check_branch
              %235 = sbr.rel (0) target = $region73
            $region72: #{alexnet_forward.16} parent=64 // pred_region
              %s237 = ssub.s32 16, 1
              loop: start=0, step=1, limit=1
              $region74: #{alexnet_forward.16} parent=72 // loop_pre_header
                _
              $region75: #{alexnet_forward.16} parent=72 // loop_header
                %s239 = sphi 0, %s243
                %p240 = scmp.ge.s32.totalorder %s239, 1
                %s244 = sphi %s229, %s229
                %s245 = sphi %s224, %s224
              $region76: #{alexnet_forward.16} parent=72 // loop_header_branch
                %242 = sbr.rel (%p240) target = $region80
              $region77: #{alexnet_forward.16} parent=72 // loop_body
                %v246 = vld [vmem:[%s244] sm:%s237]
                %247 = vst [vmem:[%s245] sm:%s237] %v246
                %v248 = vld [vmem:[%s244 + $0xc] sm:%s237]
                %249 = vst [vmem:[%s245 + $0x4] sm:%s237] %v248
                %v250 = vld [vmem:[%s244 + $0x18] sm:%s237]
                %251 = vst [vmem:[%s245 + $0x8] sm:%s237] %v250
                %v252 = vld [vmem:[%s244 + $0x24] sm:%s237]
                %253 = vst [vmem:[%s245 + $0xc] sm:%s237] %v252
                %v254 = vld [vmem:[%s244 + $0x30] sm:%s237]
                %255 = vst [vmem:[%s245 + $0x10] sm:%s237] %v254
                %v256 = vld [vmem:[%s244 + $0x3c] sm:%s237]
                %257 = vst [vmem:[%s245 + $0x14] sm:%s237] %v256
                %v258 = vld [vmem:[%s244 + $0x48] sm:%s237]
                %259 = vst [vmem:[%s245 + $0x18] sm:%s237] %v258
                %v260 = vld [vmem:[%s244 + $0x54] sm:%s237]
                %261 = vst [vmem:[%s245 + $0x1c] sm:%s237] %v260
                %v262 = vld [vmem:[%s244 + $0x60] sm:%s237]
                %263 = vst [vmem:[%s245 + $0x20] sm:%s237] %v262
                %v264 = vld [vmem:[%s244 + $0x6c] sm:%s237]
                %265 = vst [vmem:[%s245 + $0x24] sm:%s237] %v264
                %v266 = vld [vmem:[%s244 + $0x78] sm:%s237]
                %267 = vst [vmem:[%s245 + $0x28] sm:%s237] %v266
                %v268 = vld [vmem:[%s244 + $0x84] sm:%s237]
                %269 = vst [vmem:[%s245 + $0x2c] sm:%s237] %v268
                %v270 = vld [vmem:[%s244 + $0x90] sm:%s237]
                %271 = vst [vmem:[%s245 + $0x30] sm:%s237] %v270
                %v272 = vld [vmem:[%s244 + $0x9c] sm:%s237]
                %273 = vst [vmem:[%s245 + $0x34] sm:%s237] %v272
                %v274 = vld [vmem:[%s244 + $0xa8] sm:%s237]
                %275 = vst [vmem:[%s245 + $0x38] sm:%s237] %v274
                %v276 = vld [vmem:[%s244 + $0xb4] sm:%s237]
                %277 = vst [vmem:[%s245 + $0x3c] sm:%s237] %v276
              $region78: #{alexnet_forward.16} parent=72 // loop_footer
                %s243 = sadd.s32 1, %s239
              $region79: #{alexnet_forward.16} parent=72 // loop_footer_branch
                %238 = sbr.rel target = $region75
              $region80: #{alexnet_forward.16} parent=72 // loop_exit
                _
            $region73: #{alexnet_forward.16} parent=64 // pred_fallthru
              _
          $region65: #{alexnet_forward.16} parent=60 // pred_fallthru
            _
          %330 = vnop
        $region61: #{alexnet_forward.16} parent=15 // pred_fallthru
          _
        // Predicated region
        $region99: #{alexnet_forward.16} parent=15 // pred_check
          %p331 = pneg %p104
        $region100: #{alexnet_forward.16} parent=15 // pred_check_branch
          %333 = sbr.rel (%p331) target = $region102
        $region101: #{alexnet_forward.16} parent=15 // pred_region
          %p334 = scmp.lt.s32.totalorder %s17, 2
          %s335 = scalar_select %p334, %s17, 2
          %s336 = scalar_lea.vmem %s2, %s335
        $region102: #{alexnet_forward.16} parent=15 // pred_fallthru
          _
      $region16: #{alexnet_forward.16} parent=5 // pred_fallthru
        _
      %p337 = scmp.le.s32.totalorder 1, %s9
      %p338 = scmp.lt.s32.totalorder %s9, 43
      %p339 = pnand %p337, %p338
      %p340 = pneg %p339
      // Predicated region
      $region103: #{alexnet_forward.16} parent=5 // pred_check
        _
      $region104: #{alexnet_forward.16} parent=5 // pred_check_branch
        %342 = sbr.rel (%p339) target = $region106
      $region105: #{alexnet_forward.16} parent=5 // pred_region
        %s343 = ssub.s32 %s9, 1
        %s344 = sand.u32 %s43, 1
        %s345 = sand.u32 %s43, 1
        %s346 = smul.addr %s345, 12
        %s347 = scalar_lea.vmem [#allocation3], %s346
        // Predicated region
        $region107: #{alexnet_forward.16} parent=105 // pred_check
          %p348 = pneg %p56
        $region108: #{alexnet_forward.16} parent=105 // pred_check_branch
          %350 = sbr.rel (%p348) target = $region110
        $region109: #{alexnet_forward.16} parent=105 // pred_region
          _
        $region110: #{alexnet_forward.16} parent=105 // pred_fallthru
          _
        %s351 = sand.u32 %s71, 1
        %s352 = sand.u32 %s71, 1
        %s353 = smul.addr %s352, 64
        %s354 = scalar_lea.vmem [#allocation4], %s353
        // Predicated region
        $region111: #{alexnet_forward.16} parent=105 // pred_check
          %p355 = pneg %p84
        $region112: #{alexnet_forward.16} parent=105 // pred_check_branch
          %357 = sbr.rel (%p355) target = $region114
        $region113: #{alexnet_forward.16} parent=105 // pred_region
          _
        $region114: #{alexnet_forward.16} parent=105 // pred_fallthru
          _
        %s358 = sand.u32 %s43, 1
        %s359 = sand.u32 %s43, 1
        %s360 = smul.addr %s359, 12
        %s361 = scalar_lea.vmem [#allocation3], %s360
        %p362 = pneg %p56
        %p363 = pneg %p53
        %s364 = sand.u32 %s71, 1
        %s365 = sand.u32 %s71, 1
        %s366 = smul.addr %s365, 64
        %s367 = scalar_lea.vmem [#allocation4], %s366
        %p368 = pneg %p84
        %p369 = pneg %p81
        %p370 = scmp.lt.s32.totalorder %s20, 2
        %s371 = scalar_select %p370, %s20, 2
        %s372 = scalar_lea.vmem %s2, %s371
        %p373 = pneg %p110
        %p374 = pneg %p107
        %p375 = pneg %p138
        %p376 = pneg %p135
        %s377 = sand.u32 %s125, 1
        %s378 = sand.u32 %s125, 1
        %s379 = smul.addr %s378, 24
        %s380 = scalar_lea.vmem [#allocation5], %s379
        %s381 = smul.u32 3, %s19
        %s382 = smul.u32 16, %s21
        %p383 = scmp.lt.s32.totalorder %s20, 2
        %s384 = scalar_select %p383, %s20, 2
        %s385 = scalar_lea.vmem %s2, %s384
        %s386 = smul.u32 3, %s19
        %p387 = scmp.eq.s32.totalorder %s21, 0
        // Predicated region
        $region115: #{alexnet_forward.16} parent=105 // pred_check
          %p388 = pneg %p387
        $region116: #{alexnet_forward.16} parent=105 // pred_check_branch
          %390 = sbr.rel (%p388) target = $region118
        $region117: #{alexnet_forward.16} parent=105 // pred_region
          %391 = vst [vmem:[#allocation2] sm:$0xff] 0.0
          %392 = vst [vmem:[#allocation2 + $0x8] sm:$0xff] 0.0
          %393 = vst [vmem:[#allocation2 + $0x10] sm:$0xff] 0.0
        $region118: #{alexnet_forward.16} parent=105 // pred_fallthru
          _
        %v394 = vld [vmem:[#allocation2] sm:$0xff]
        %v395 = vld [vmem:[#allocation2 + $0x8] sm:$0xff]
        %v396 = vld [vmem:[#allocation2 + $0x10] sm:$0xff]
        %v397 = vld [vmem:[%s347] sm:$0xf]
        %v398 = vld [vmem:[%s347 + $0x4] sm:$0xf]
        %v399 = vld [vmem:[%s347 + $0x8] sm:$0xf]
        %v400 = vld [vmem:[%s354] sm:$0xf]
        %v401 = vld [vmem:[%s354 + $0x4] sm:$0xf]
        %v402 = vld [vmem:[%s354 + $0x8] sm:$0xf]
        %v403 = vld [vmem:[%s354 + $0xc] sm:$0xf]
        %v404 = vld [vmem:[%s354 + $0x10] sm:$0xf]
        %v405 = vld [vmem:[%s354 + $0x14] sm:$0xf]
        %v406 = vld [vmem:[%s354 + $0x18] sm:$0xf]
        %v407 = vld [vmem:[%s354 + $0x1c] sm:$0xf]
        %v408 = vld [vmem:[%s354 + $0x20] sm:$0xf]
        %v409 = vld [vmem:[%s354 + $0x24] sm:$0xf]
        %v410 = vld [vmem:[%s354 + $0x28] sm:$0xf]
        %v411 = vld [vmem:[%s354 + $0x2c] sm:$0xf]
        %v412 = vld [vmem:[%s354 + $0x30] sm:$0xf]
        %v413 = vld [vmem:[%s354 + $0x34] sm:$0xf]
        %v414 = vld [vmem:[%s354 + $0x38] sm:$0xf]
        %v415 = vld [vmem:[%s354 + $0x3c] sm:$0xf]
        %v419 = vunpack.c.l.b16 %v397
        %v420 = vunpack.c.l.b16 %v398
        %v421 = vunpack.c.l.b16 %v399
        %v422 = vpack.c.b16 %v420, %v419
        %v423 = vpack.c.b16 %v421, %v421
        %v442 = vunpack.c.l.b16 %v400
        %v443 = vunpack.c.l.b16 %v401
        %v444 = vunpack.c.l.b16 %v402
        %v445 = vunpack.c.l.b16 %v403
        %v446 = vunpack.c.l.b16 %v404
        %v447 = vunpack.c.l.b16 %v405
        %v448 = vunpack.c.l.b16 %v406
        %v449 = vunpack.c.l.b16 %v407
        %v450 = vunpack.c.l.b16 %v408
        %v451 = vunpack.c.l.b16 %v409
        %v452 = vunpack.c.l.b16 %v410
        %v453 = vunpack.c.l.b16 %v411
        %v454 = vunpack.c.l.b16 %v412
        %v455 = vunpack.c.l.b16 %v413
        %v456 = vunpack.c.l.b16 %v414
        %v457 = vunpack.c.l.b16 %v415
        %v458 = vpack.c.b16 %v443, %v442
        %v459 = vpack.c.b16 %v445, %v444
        %v460 = vpack.c.b16 %v447, %v446
        %v461 = vpack.c.b16 %v449, %v448
        %v462 = vpack.c.b16 %v451, %v450
        %v463 = vpack.c.b16 %v453, %v452
        %v464 = vpack.c.b16 %v455, %v454
        %v465 = vpack.c.b16 %v457, %v456
        %474 = vmatpush.bf16.msra.mxu0 %v465
        %475 = vmatpush.bf16.msra.mxu0 %v464
        %476 = vmatpush.bf16.msra.mxu0 %v463
        %477 = vmatpush.bf16.msra.mxu0 %v462
        %478 = vmatpush.bf16.msra.mxu0 %v461
        %479 = vmatpush.bf16.msra.mxu0 %v460
        %480 = vmatpush.bf16.msra.mxu0 %v459
        %481 = vmatpush.bf16.msra.mxu0 %v458
        %482 = vmatmul.bf16.gmra.mxu0 %v422
        %v483 = vpop.f32.mrf.mxu0
        %v484 = vadd.f32 0.0, %v483
        %v485 = vpop.f32.mrf.mxu0
        %v486 = vadd.f32 0.0, %v485
        %487 = vmatmul.bf16.gmra.mxu0 %v423
        %v488 = vpop.f32.mrf.mxu0
        %v489 = vadd.f32 0.0, %v488
        %v490 = vpop.f32.mrf.mxu0
        %491 = vdwg.mxu0
        %v492 = vadd.f32 %v394, %v484
        %v493 = vadd.f32 %v395, %v486
        %v494 = vadd.f32 %v396, %v489
        %495 = vst [vmem:[#allocation2] sm:$0xff] %v492
        %496 = vst [vmem:[#allocation2 + $0x8] sm:$0xff] %v493
        %497 = vst [vmem:[#allocation2 + $0x10] sm:$0xff] %v494
        %p498 = scmp.eq.s32.totalorder %s21, 13
        // Predicated region
        $region119: #{alexnet_forward.16} parent=105 // pred_check
          %p499 = pneg %p498
        $region120: #{alexnet_forward.16} parent=105 // pred_check_branch
          %501 = sbr.rel (%p499) target = $region122
        $region121: #{alexnet_forward.16} parent=105 // pred_region
          %v502 = vld [vmem:[#allocation2] sm:$0xff]
          %v503 = vld [vmem:[#allocation2 + $0x8] sm:$0xff]
          %v504 = vld [vmem:[#allocation2 + $0x10] sm:$0xff]
          %v505 = vld [vmem:[%s385] sm:$0x1]
          %v507 = vperm.slane %v505, 0
          %v509 = vadd.f32 %v502, %v507
          %v510 = vadd.f32 %v503, %v507
          %v511 = vadd.f32 %v504, %v507
          %v512 = vmax.f32 %v509, 0.0
          %v513 = vmax.f32 %v510, 0.0
          %v514 = vmax.f32 %v511, 0.0
          %515 = vst [vmem:[%s380] sm:$0xff] %v512
          %516 = vst [vmem:[%s380 + $0x8] sm:$0xff] %v513
          %517 = vst [vmem:[%s380 + $0x10] sm:$0xff] %v514
        $region122: #{alexnet_forward.16} parent=105 // pred_fallthru
          _
        %s518 = sand.u32 %s125, 1
        %s519 = sand.u32 %s125, 1
        %s520 = smul.addr %s519, 24
        %s521 = scalar_lea.vmem [#allocation5], %s520
        // Predicated region
        $region123: #{alexnet_forward.16} parent=105 // pred_check
          %p522 = pneg %p135
        $region124: #{alexnet_forward.16} parent=105 // pred_check_branch
          %524 = sbr.rel (%p522) target = $region126
        $region125: #{alexnet_forward.16} parent=105 // pred_region
          %s525 = smul.u32 3, %s19
          %s526 = smul.addr %s525, 3
          %s527 = sadd.s32 %s20, %s526
          %s528 = smul.addr %s527, 8
          %s529 = scalar_lea.vmem %s3, %s528
          // Predicated region
          $region127: #{alexnet_forward.16} parent=125 // pred_check
            _
          $region128: #{alexnet_forward.16} parent=125 // pred_check_branch
            %531 = sbr.rel (0) target = $region130
          $region129: #{alexnet_forward.16} parent=125 // pred_region
            // Predicated region
            $region131: #{alexnet_forward.16} parent=129 // pred_check
              _
            $region132: #{alexnet_forward.16} parent=129 // pred_check_branch
              %533 = sbr.rel (0) target = $region134
            $region133: #{alexnet_forward.16} parent=129 // pred_region
              // Predicated region
              $region146: #{alexnet_forward.16} parent=133 // pred_check
                _
              $region147: #{alexnet_forward.16} parent=133 // pred_check_branch
                %553 = sbr.rel (0) target = $region149
              $region148: #{alexnet_forward.16} parent=133 // pred_region
                loop: start=0, step=1, limit=1
                $region150: #{alexnet_forward.16} parent=148 // loop_pre_header
                  _
                $region151: #{alexnet_forward.16} parent=148 // loop_header
                  %s555 = sphi 0, %s559
                  %p556 = scmp.ge.s32.totalorder %s555, 1
                  %s560 = sphi %s521, %s521
                  %s561 = sphi %s529, %s529
                $region152: #{alexnet_forward.16} parent=148 // loop_header_branch
                  %558 = sbr.rel (%p556) target = $region156
                $region153: #{alexnet_forward.16} parent=148 // loop_body
                  %v562 = vld [vmem:[%s560] sm:$0xff]
                  %563 = vst [vmem:[%s561] sm:$0xff] %v562
                  %v564 = vld [vmem:[%s560 + $0x8] sm:$0xff]
                  %565 = vst [vmem:[%s561 + $0x18] sm:$0xff] %v564
                  %v566 = vld [vmem:[%s560 + $0x10] sm:$0xff]
                  %567 = vst [vmem:[%s561 + $0x30] sm:$0xff] %v566
                $region154: #{alexnet_forward.16} parent=148 // loop_footer
                  %s559 = sadd.s32 1, %s555
                $region155: #{alexnet_forward.16} parent=148 // loop_footer_branch
                  %554 = sbr.rel target = $region151
                $region156: #{alexnet_forward.16} parent=148 // loop_exit
                  _
              $region149: #{alexnet_forward.16} parent=133 // pred_fallthru
                _
              // Predicated region
              $region157: #{alexnet_forward.16} parent=133 // pred_check
                _
              $region158: #{alexnet_forward.16} parent=133 // pred_check_branch
                %569 = sbr.rel target = $region160
              $region159: #{alexnet_forward.16} parent=133 // pred_region
                _
              $region160: #{alexnet_forward.16} parent=133 // pred_fallthru
                _
            $region134: #{alexnet_forward.16} parent=129 // pred_fallthru
              _
            // Predicated region
            $region135: #{alexnet_forward.16} parent=129 // pred_check
              _
            $region136: #{alexnet_forward.16} parent=129 // pred_check_branch
              %535 = sbr.rel target = $region138
            $region137: #{alexnet_forward.16} parent=129 // pred_region
              %s537 = ssub.s32 256, 1
              loop: start=0, step=1, limit=1
              $region139: #{alexnet_forward.16} parent=137 // loop_pre_header
                _
              $region140: #{alexnet_forward.16} parent=137 // loop_header
                %s539 = sphi 0, %s543
                %p540 = scmp.ge.s32.totalorder %s539, 1
                %s544 = sphi %s521, %s521
                %s545 = sphi %s529, %s529
              $region141: #{alexnet_forward.16} parent=137 // loop_header_branch
                %542 = sbr.rel (%p540) target = $region145
              $region142: #{alexnet_forward.16} parent=137 // loop_body
                %v546 = vld [vmem:[%s544] sm:%s537]
                %547 = vst [vmem:[%s545] sm:%s537] %v546
                %v548 = vld [vmem:[%s544 + $0x8] sm:%s537]
                %549 = vst [vmem:[%s545 + $0x18] sm:%s537] %v548
                %v550 = vld [vmem:[%s544 + $0x10] sm:%s537]
                %551 = vst [vmem:[%s545 + $0x30] sm:%s537] %v550
              $region143: #{alexnet_forward.16} parent=137 // loop_footer
                %s543 = sadd.s32 1, %s539
              $region144: #{alexnet_forward.16} parent=137 // loop_footer_branch
                %538 = sbr.rel target = $region140
              $region145: #{alexnet_forward.16} parent=137 // loop_exit
                _
            $region138: #{alexnet_forward.16} parent=129 // pred_fallthru
              _
          $region130: #{alexnet_forward.16} parent=125 // pred_fallthru
            _
          %570 = vnop
        $region126: #{alexnet_forward.16} parent=105 // pred_fallthru
          _
      $region106: #{alexnet_forward.16} parent=5 // pred_fallthru
        _
      %p571 = scmp.le.s32.totalorder 2, %s9
      // Predicated region
      $region161: #{alexnet_forward.16} parent=5 // pred_check
        %p572 = pneg %p571
      $region162: #{alexnet_forward.16} parent=5 // pred_check_branch
        %574 = sbr.rel (%p572) target = $region164
      $region163: #{alexnet_forward.16} parent=5 // pred_region
        %s575 = ssub.s32 %s9, 2
        // Predicated region
        $region165: #{alexnet_forward.16} parent=163 // pred_check
          %p576 = pneg %p141
        $region166: #{alexnet_forward.16} parent=163 // pred_check_branch
          %578 = sbr.rel (%p576) target = $region168
        $region167: #{alexnet_forward.16} parent=163 // pred_region
          %s579 = sand.u32 %s126, 1
          %s580 = sand.u32 %s126, 1
          %s581 = smul.addr %s580, 24
          %s582 = scalar_lea.vmem [#allocation5], %s581
        $region168: #{alexnet_forward.16} parent=163 // pred_fallthru
          _
      $region164: #{alexnet_forward.16} parent=5 // pred_fallthru
        _
    $region6: #{alexnet_forward.16} parent=1 // loop_footer
      %s13 = sadd.s32 1, %s9
    $region7: #{alexnet_forward.16} parent=1 // loop_footer_branch
      %8 = sbr.rel target = $region3
    $region8: #{alexnet_forward.16} parent=1 // loop_exit
      _

// kernel: alexnet_forward.17
$region0: #{alexnet_forward.17}
  #allocation0 [shape = 'u32[]', space=smem, size = 0x4, offset = 0x4, fixed_abs, tag = 'smem constant byte address 0x4 - core index']
  #allocation1 [shape = 'u32[72,128]{1,0:T(1,128)}', space=vmem, size = 0x9000, scoped, tag = 'internal scratch']
  #allocation2 [shape = 'f32[24,256]{1,0:T(8,128)}', space=vmem, size = 0x6000, scoped, tag = 'scratch operand']
  %s0 = inlined_call_operand.vmem [shape: bf16[24,3456], index: 0, kind: input, shape index: {}]
  %s1 = inlined_call_operand.vmem [shape: bf16[3456,256], index: 1, kind: input, shape index: {}]
  %s2 = inlined_call_operand.vmem [shape: f32[1,256], index: 2, kind: input, shape index: {}]
  %s3 = inlined_call_operand.vmem [shape: f32[24,256], index: 3, kind: output, shape index: {}]
  %s4 = sld [smem:[#allocation0]]
  $region94: #{alexnet_forward.17} parent=0
    _
  %s6 = ssub.s32 1, %s4
  %s7 = scalar_select 0, %s6, %s4
  $region1: #{alexnet_forward.17} parent=0
    #allocation3 [shape = 'u8[12288]{0}', space=vmem, size = 0x3000, scoped, tag = 'input window, operand 0']
    loop: start=0, step=1, limit=29
    $region2: #{alexnet_forward.17} parent=1 // loop_pre_header
      _
    $region3: #{alexnet_forward.17} parent=1 // loop_header
      %s9 = sphi 0, %s13
      %p10 = scmp.ge.s32.totalorder %s9, 29
      %s16 = sphi 0, %s35
      %s17 = sphi 0, %s31
      %s18 = sphi 0, %s27
      %s19 = sphi 0, %s16
      %s20 = sphi 0, %s17
      %s21 = sphi 0, %s18
      %s22 = sphi 0, %s19
      %s23 = sphi 0, %s20
      %s24 = sphi 0, %s21
      %s40 = sphi 0, %s42
      %s43 = sphi 0, %s40
      %s44 = sphi 0, %s43
      %s60 = sphi 0, %s44
      %s68 = sphi 0, %s70
      %s71 = sphi 0, %s68
      %s72 = sphi 0, %s71
      %s88 = sphi 0, %s72
      %s94 = sphi 0, %s96
      %s97 = sphi 0, %s94
      %s98 = sphi 0, %s97
      %s114 = sphi 0, %s98
      %s122 = sphi 0, %s124
      %s125 = sphi 0, %s122
      %s126 = sphi 0, %s125
      %s142 = sphi 0, %s126
    $region4: #{alexnet_forward.17} parent=1 // loop_header_branch
      %12 = sbr.rel (%p10) target = $region8
    $region5: #{alexnet_forward.17} parent=1 // loop_body
      %s14 = ssub.s32 %s9, 1
      %s15 = ssub.s32 %s9, 2
      %s25 = sadd.s32 1, %s18
      %p26 = scmp.ge.s32.totalorder %s25, 27
      %s27 = scalar_select %p26, 0, %s25
      %s28 = sadd.s32 1, %s17
      %s29 = scalar_select %p26, %s28, %s17
      %p30 = scmp.ge.s32.totalorder %s29, 1
      %s31 = scalar_select %p30, 0, %s29
      %s32 = sadd.s32 1, %s16
      %s33 = scalar_select %p30, %s32, %s16
      %p34 = scmp.ge.s32.totalorder %s33, 1
      %s35 = scalar_select %p34, 0, %s33
      %s36 = ssub.s32 %s16, %s35
      %s37 = ssub.s32 %s18, %s27
      %s38 = sor.u32 %s36, %s37
      %p39 = scmp.eq.s32.totalorder %s38, 0
      %s41 = sadd.s32 %s40, 1
      %s42 = scalar_select %p39, %s40, %s41
      %p45 = pneg %p39
      %p46 = scmp.eq.s32.totalorder %s9, 26
      %p47 = por %p45, %p46
      %p48 = scmp.ne.s32.totalorder %s40, %s43
      %p49 = scmp.eq.s32.totalorder %s9, 0
      %p50 = por %p48, %p49
      %p51 = scmp.ne.s32.totalorder %s40, %s43
      %p52 = scmp.eq.s32.totalorder %s14, 26
      %p53 = por %p51, %p52
      %p54 = scmp.ne.s32.totalorder %s43, %s44
      %p55 = scmp.eq.s32.totalorder %s14, 0
      %p56 = por %p54, %p55
      %p57 = scmp.ne.s32.totalorder %s43, %s44
      %p58 = scmp.eq.s32.totalorder %s15, 26
      %p59 = por %p57, %p58
      %p61 = scmp.ne.s32.totalorder %s44, %s60
      %p62 = scmp.eq.s32.totalorder %s15, 0
      %p63 = por %p61, %p62
      %s64 = ssub.s32 %s18, %s27
      %s65 = ssub.s32 %s17, %s31
      %s66 = sor.u32 %s64, %s65
      %p67 = scmp.eq.s32.totalorder %s66, 0
      %s69 = sadd.s32 %s68, 1
      %s70 = scalar_select %p67, %s68, %s69
      %p73 = pneg %p67
      %p74 = scmp.eq.s32.totalorder %s9, 26
      %p75 = por %p73, %p74
      %p76 = scmp.ne.s32.totalorder %s68, %s71
      %p77 = scmp.eq.s32.totalorder %s9, 0
      %p78 = por %p76, %p77
      %p79 = scmp.ne.s32.totalorder %s68, %s71
      %p80 = scmp.eq.s32.totalorder %s14, 26
      %p81 = por %p79, %p80
      %p82 = scmp.ne.s32.totalorder %s71, %s72
      %p83 = scmp.eq.s32.totalorder %s14, 0
      %p84 = por %p82, %p83
      %p85 = scmp.ne.s32.totalorder %s71, %s72
      %p86 = scmp.eq.s32.totalorder %s15, 26
      %p87 = por %p85, %p86
      %p89 = scmp.ne.s32.totalorder %s72, %s88
      %p90 = scmp.eq.s32.totalorder %s15, 0
      %p91 = por %p89, %p90
      %s92 = ssub.s32 %s17, %s31
      %p93 = scmp.eq.s32.totalorder %s92, 0
      %s95 = sadd.s32 %s94, 1
      %s96 = scalar_select %p93, %s94, %s95
      %p99 = pneg %p93
      %p100 = scmp.eq.s32.totalorder %s9, 26
      %p101 = por %p99, %p100
      %p102 = scmp.ne.s32.totalorder %s94, %s97
      %p103 = scmp.eq.s32.totalorder %s9, 0
      %p104 = por %p102, %p103
      %p105 = scmp.ne.s32.totalorder %s94, %s97
      %p106 = scmp.eq.s32.totalorder %s14, 26
      %p107 = por %p105, %p106
      %p108 = scmp.ne.s32.totalorder %s97, %s98
      %p109 = scmp.eq.s32.totalorder %s14, 0
      %p110 = por %p108, %p109
      %p111 = scmp.ne.s32.totalorder %s97, %s98
      %p112 = scmp.eq.s32.totalorder %s15, 26
      %p113 = por %p111, %p112
      %p115 = scmp.ne.s32.totalorder %s98, %s114
      %p116 = scmp.eq.s32.totalorder %s15, 0
      %p117 = por %p115, %p116
      %s118 = ssub.s32 %s16, %s35
      %s119 = ssub.s32 %s17, %s31
      %s120 = sor.u32 %s118, %s119
      %p121 = scmp.eq.s32.totalorder %s120, 0
      %s123 = sadd.s32 %s122, 1
      %s124 = scalar_select %p121, %s122, %s123
      %p127 = pneg %p121
      %p128 = scmp.eq.s32.totalorder %s9, 26
      %p129 = por %p127, %p128
      %p130 = scmp.ne.s32.totalorder %s122, %s125
      %p131 = scmp.eq.s32.totalorder %s9, 0
      %p132 = por %p130, %p131
      %p133 = scmp.ne.s32.totalorder %s122, %s125
      %p134 = scmp.eq.s32.totalorder %s14, 26
      %p135 = por %p133, %p134
      %p136 = scmp.ne.s32.totalorder %s125, %s126
      %p137 = scmp.eq.s32.totalorder %s14, 0
      %p138 = por %p136, %p137
      %p139 = scmp.ne.s32.totalorder %s125, %s126
      %p140 = scmp.eq.s32.totalorder %s15, 26
      %p141 = por %p139, %p140
      %p143 = scmp.ne.s32.totalorder %s126, %s142
      %p144 = scmp.eq.s32.totalorder %s15, 0
      %p145 = por %p143, %p144
      %p146 = scmp.le.s32.totalorder 1, %s9
      %p147 = scmp.lt.s32.totalorder %s9, 28
      %p148 = pnand %p146, %p147
      %p149 = pneg %p148
      // Predicated region
      $region9: #{alexnet_forward.17} parent=5 // pred_check
        _
      $region10: #{alexnet_forward.17} parent=5 // pred_check_branch
        %151 = sbr.rel (%p148) target = $region12
      $region11: #{alexnet_forward.17} parent=5 // pred_region
        %s152 = ssub.s32 %s9, 1
        // Predicated region
        $region13: #{alexnet_forward.17} parent=11 // pred_check
          %p153 = pneg %p110
        $region14: #{alexnet_forward.17} parent=11 // pred_check_branch
          %155 = sbr.rel (%p153) target = $region16
        $region15: #{alexnet_forward.17} parent=11 // pred_region
          %s156 = smul.u32 2, %s20
          %p157 = scmp.lt.s32.totalorder %s156, 1
          %s158 = scalar_select %p157, %s156, 1
          %s159 = scalar_lea.vmem %s2, %s158
          %s160 = smul.u32 2, %s20
        $region16: #{alexnet_forward.17} parent=11 // pred_fallthru
          _
      $region12: #{alexnet_forward.17} parent=5 // pred_fallthru
        _
      %p161 = scmp.lt.s32.totalorder %s9, 27
      // Predicated region
      $region17: #{alexnet_forward.17} parent=5 // pred_check
        %p162 = pneg %p161
      $region18: #{alexnet_forward.17} parent=5 // pred_check_branch
        %164 = sbr.rel (%p162) target = $region20
      $region19: #{alexnet_forward.17} parent=5 // pred_region
        // Predicated region
        $region21: #{alexnet_forward.17} parent=19 // pred_check
          %p165 = pneg %p50
        $region22: #{alexnet_forward.17} parent=19 // pred_check_branch
          %167 = sbr.rel (%p165) target = $region24
        $region23: #{alexnet_forward.17} parent=19 // pred_region
          %s168 = sand.u32 %s40, 1
          %s169 = sand.u32 %s40, 1
          %s170 = smul.addr %s169, 12
          %s171 = scalar_lea.vmem [#allocation3], %s170
          %s172 = smul.u32 3, %s16
          %s173 = smul.addr %s172, 27
          %s174 = sadd.s32 %s18, %s173
          %s175 = smul.addr %s174, 4
          %s176 = scalar_lea.vmem %s0, %s175
          // Predicated region
          $region25: #{alexnet_forward.17} parent=23 // pred_check
            _
          $region26: #{alexnet_forward.17} parent=23 // pred_check_branch
            %178 = sbr.rel (0) target = $region28
          $region27: #{alexnet_forward.17} parent=23 // pred_region
            // Predicated region
            $region29: #{alexnet_forward.17} parent=27 // pred_check
              _
            $region30: #{alexnet_forward.17} parent=27 // pred_check_branch
              %180 = sbr.rel target = $region32
            $region31: #{alexnet_forward.17} parent=27 // pred_region
              // Predicated region
              $region44: #{alexnet_forward.17} parent=31 // pred_check
                _
              $region45: #{alexnet_forward.17} parent=31 // pred_check_branch
                %200 = sbr.rel (0) target = $region47
              $region46: #{alexnet_forward.17} parent=31 // pred_region
                loop: start=0, step=1, limit=1
                $region48: #{alexnet_forward.17} parent=46 // loop_pre_header
                  _
                $region49: #{alexnet_forward.17} parent=46 // loop_header
                  %s202 = sphi 0, %s206
                  %p203 = scmp.ge.s32.totalorder %s202, 1
                  %s207 = sphi %s176, %s176
                  %s208 = sphi %s171, %s171
                $region50: #{alexnet_forward.17} parent=46 // loop_header_branch
                  %205 = sbr.rel (%p203) target = $region54
                $region51: #{alexnet_forward.17} parent=46 // loop_body
                  _
                $region52: #{alexnet_forward.17} parent=46 // loop_footer
                  %s206 = sadd.s32 1, %s202
                $region53: #{alexnet_forward.17} parent=46 // loop_footer_branch
                  %201 = sbr.rel target = $region49
                $region54: #{alexnet_forward.17} parent=46 // loop_exit
                  _
                %s210 = ssub.s32 16, 1
                loop: start=0, step=1, limit=1
                $region55: #{alexnet_forward.17} parent=46 // loop_pre_header
                  _
                $region56: #{alexnet_forward.17} parent=46 // loop_header
                  %s212 = sphi 0, %s216
                  %p213 = scmp.ge.s32.totalorder %s212, 1
                  %s217 = sphi %s176, %s176
                  %s218 = sphi %s171, %s171
                $region57: #{alexnet_forward.17} parent=46 // loop_header_branch
                  %215 = sbr.rel (%p213) target = $region61
                $region58: #{alexnet_forward.17} parent=46 // loop_body
                  %v219 = vld [vmem:[%s217] sm:%s210]
                  %220 = vst [vmem:[%s218] sm:%s210] %v219
                  %v221 = vld [vmem:[%s217 + $0x6c] sm:%s210]
                  %222 = vst [vmem:[%s218 + $0x4] sm:%s210] %v221
                  %v223 = vld [vmem:[%s217 + $0xd8] sm:%s210]
                  %224 = vst [vmem:[%s218 + $0x8] sm:%s210] %v223
                $region59: #{alexnet_forward.17} parent=46 // loop_footer
                  %s216 = sadd.s32 1, %s212
                $region60: #{alexnet_forward.17} parent=46 // loop_footer_branch
                  %211 = sbr.rel target = $region56
                $region61: #{alexnet_forward.17} parent=46 // loop_exit
                  _
              $region47: #{alexnet_forward.17} parent=31 // pred_fallthru
                _
            $region32: #{alexnet_forward.17} parent=27 // pred_fallthru
              _
            // Predicated region
            $region33: #{alexnet_forward.17} parent=27 // pred_check
              _
            $region34: #{alexnet_forward.17} parent=27 // pred_check_branch
              %182 = sbr.rel (0) target = $region36
            $region35: #{alexnet_forward.17} parent=27 // pred_region
              %s184 = ssub.s32 16, 1
              loop: start=0, step=1, limit=1
              $region37: #{alexnet_forward.17} parent=35 // loop_pre_header
                _
              $region38: #{alexnet_forward.17} parent=35 // loop_header
                %s186 = sphi 0, %s190
                %p187 = scmp.ge.s32.totalorder %s186, 1
                %s191 = sphi %s176, %s176
                %s192 = sphi %s171, %s171
              $region39: #{alexnet_forward.17} parent=35 // loop_header_branch
                %189 = sbr.rel (%p187) target = $region43
              $region40: #{alexnet_forward.17} parent=35 // loop_body
                %v193 = vld [vmem:[%s191] sm:%s184]
                %194 = vst [vmem:[%s192] sm:%s184] %v193
                %v195 = vld [vmem:[%s191 + $0x6c] sm:%s184]
                %196 = vst [vmem:[%s192 + $0x4] sm:%s184] %v195
                %v197 = vld [vmem:[%s191 + $0xd8] sm:%s184]
                %198 = vst [vmem:[%s192 + $0x8] sm:%s184] %v197
              $region41: #{alexnet_forward.17} parent=35 // loop_footer
                %s190 = sadd.s32 1, %s186
              $region42: #{alexnet_forward.17} parent=35 // loop_footer_branch
                %185 = sbr.rel target = $region38
              $region43: #{alexnet_forward.17} parent=35 // loop_exit
                _
            $region36: #{alexnet_forward.17} parent=27 // pred_fallthru
              _
          $region28: #{alexnet_forward.17} parent=23 // pred_fallthru
            _
          %225 = vnop
        $region24: #{alexnet_forward.17} parent=19 // pred_fallthru
          _
        // Predicated region
        $region62: #{alexnet_forward.17} parent=19 // pred_check
          %p226 = pneg %p78
        $region63: #{alexnet_forward.17} parent=19 // pred_check_branch
          %228 = sbr.rel (%p226) target = $region65
        $region64: #{alexnet_forward.17} parent=19 // pred_region
          %s229 = smul.u32 16, %s18
          %s230 = smul.u32 2, %s17
          %p231 = scmp.lt.s32.totalorder %s229, 431
          %s232 = scalar_select %p231, %s229, 431
          %p233 = scmp.lt.s32.totalorder %s230, 1
          %s234 = scalar_select %p233, %s230, 1
          %s235 = smul.addr %s232, 2
          %s236 = sadd.s32 %s234, %s235
          %s237 = smul.addr %s236, 4
          %s238 = scalar_lea.vmem %s1, %s237
          %s239 = smul.u32 16, %s18
          %s240 = smul.u32 2, %s17
        $region65: #{alexnet_forward.17} parent=19 // pred_fallthru
          _
      $region20: #{alexnet_forward.17} parent=5 // pred_fallthru
        _
      %p241 = scmp.le.s32.totalorder 1, %s9
      %p242 = scmp.lt.s32.totalorder %s9, 28
      %p243 = pnand %p241, %p242
      %p244 = pneg %p243
      // Predicated region
      $region66: #{alexnet_forward.17} parent=5 // pred_check
        _
      $region67: #{alexnet_forward.17} parent=5 // pred_check_branch
        %246 = sbr.rel (%p243) target = $region69
      $region68: #{alexnet_forward.17} parent=5 // pred_region
        %s247 = ssub.s32 %s9, 1
        %s248 = sand.u32 %s43, 1
        %s249 = sand.u32 %s43, 1
        %s250 = smul.addr %s249, 12
        %s251 = scalar_lea.vmem [#allocation3], %s250
        // Predicated region
        $region70: #{alexnet_forward.17} parent=68 // pred_check
          %p252 = pneg %p56
        $region71: #{alexnet_forward.17} parent=68 // pred_check_branch
          %254 = sbr.rel (%p252) target = $region73
        $region72: #{alexnet_forward.17} parent=68 // pred_region
          _
        $region73: #{alexnet_forward.17} parent=68 // pred_fallthru
          _
        %s255 = sand.u32 %s43, 1
        %s256 = sand.u32 %s43, 1
        %s257 = smul.addr %s256, 12
        %s258 = scalar_lea.vmem [#allocation3], %s257
        %p259 = pneg %p56
        %p260 = pneg %p53
        %s261 = smul.u32 16, %s21
        %s262 = smul.u32 2, %s20
        %p263 = scmp.lt.s32.totalorder %s261, 431
        %s264 = scalar_select %p263, %s261, 431
        %p265 = scmp.lt.s32.totalorder %s262, 1
        %s266 = scalar_select %p265, %s262, 1
        %s267 = smul.addr %s264, 2
        %s268 = sadd.s32 %s266, %s267
        %s269 = smul.addr %s268, 4
        %s270 = scalar_lea.vmem %s1, %s269
        %p271 = pneg %p84
        %p272 = pneg %p81
        %s273 = smul.u32 2, %s20
        %p274 = scmp.lt.s32.totalorder %s273, 1
        %s275 = scalar_select %p274, %s273, 1
        %s276 = scalar_lea.vmem %s2, %s275
        %p277 = pneg %p110
        %p278 = pneg %p107
        %p279 = pneg %p138
        %p280 = pneg %p135
        %s281 = smul.u32 3, %s19
        %s282 = smul.u32 2, %s20
        %p283 = scmp.lt.s32.totalorder %s281, 2
        %s284 = scalar_select %p283, %s281, 2
        %p285 = scmp.lt.s32.totalorder %s282, 1
        %s286 = scalar_select %p285, %s282, 1
        %s287 = smul.addr %s284, 2
        %s288 = sadd.s32 %s286, %s287
        %s289 = smul.addr %s288, 8
        %s290 = scalar_lea.vmem %s3, %s289
        %s291 = smul.u32 3, %s19
        %s292 = smul.u32 16, %s21
        %s293 = smul.u32 2, %s20
        %p294 = scmp.lt.s32.totalorder %s292, 431
        %s295 = scalar_select %p294, %s292, 431
        %p296 = scmp.lt.s32.totalorder %s293, 1
        %s297 = scalar_select %p296, %s293, 1
        %s298 = smul.addr %s295, 2
        %s299 = sadd.s32 %s297, %s298
        %s300 = smul.addr %s299, 4
        %s301 = scalar_lea.vmem %s1, %s300
        %s302 = smul.u32 16, %s21
        %s303 = smul.u32 2, %s20
        %s304 = smul.u32 2, %s20
        %p305 = scmp.lt.s32.totalorder %s304, 1
        %s306 = scalar_select %p305, %s304, 1
        %s307 = scalar_lea.vmem %s2, %s306
        %s308 = smul.u32 2, %s20
        %s309 = smul.u32 3, %s19
        %s310 = smul.u32 2, %s20
        %p311 = scmp.lt.s32.totalorder %s309, 2
        %s312 = scalar_select %p311, %s309, 2
        %p313 = scmp.lt.s32.totalorder %s310, 1
        %s314 = scalar_select %p313, %s310, 1
        %s315 = smul.addr %s312, 2
        %s316 = sadd.s32 %s314, %s315
        %s317 = smul.addr %s316, 8
        %s318 = scalar_lea.vmem %s3, %s317
        %s319 = smul.u32 3, %s19
        %s320 = smul.u32 2, %s20
        %p321 = scmp.eq.s32.totalorder %s21, 0
        // Predicated region
        $region74: #{alexnet_forward.17} parent=68 // pred_check
          %p322 = pneg %p321
        $region75: #{alexnet_forward.17} parent=68 // pred_check_branch
          %324 = sbr.rel (%p322) target = $region77
        $region76: #{alexnet_forward.17} parent=68 // pred_region
          %325 = vst [vmem:[#allocation2] sm:$0xff] 0.0
          %326 = vst [vmem:[#allocation2 + $0x8] sm:$0xff] 0.0
          %327 = vst [vmem:[#allocation2 + $0x10] sm:$0xff] 0.0
          %328 = vst [vmem:[#allocation2 + $0x18] sm:$0xff] 0.0
          %329 = vst [vmem:[#allocation2 + $0x20] sm:$0xff] 0.0
          %330 = vst [vmem:[#allocation2 + $0x28] sm:$0xff] 0.0
        $region77: #{alexnet_forward.17} parent=68 // pred_fallthru
          _
        %v331 = vld [vmem:[#allocation2] sm:$0xff]
        %v332 = vld [vmem:[#allocation2 + $0x8] sm:$0xff]
        %v333 = vld [vmem:[#allocation2 + $0x10] sm:$0xff]
        %v334 = vld [vmem:[#allocation2 + $0x18] sm:$0xff]
        %v335 = vld [vmem:[#allocation2 + $0x20] sm:$0xff]
        %v336 = vld [vmem:[#allocation2 + $0x28] sm:$0xff]
        %v337 = vld [vmem:[%s251] sm:$0xf]
        %v338 = vld [vmem:[%s251 + $0x4] sm:$0xf]
        %v339 = vld [vmem:[%s251 + $0x8] sm:$0xf]
        %v340 = vld [vmem:[%s301] sm:$0xff]
        %v341 = vld [vmem:[%s301 + $0x8] sm:$0xff]
        %v342 = vld [vmem:[%s301 + $0x10] sm:$0xff]
        %v343 = vld [vmem:[%s301 + $0x18] sm:$0xff]
        %v344 = vld [vmem:[%s301 + $0x20] sm:$0xff]
        %v345 = vld [vmem:[%s301 + $0x28] sm:$0xff]
        %v346 = vld [vmem:[%s301 + $0x30] sm:$0xff]
        %v347 = vld [vmem:[%s301 + $0x38] sm:$0xff]
        %v348 = vld [vmem:[%s301 + $0x40] sm:$0xff]
        %v349 = vld [vmem:[%s301 + $0x48] sm:$0xff]
        %v350 = vld [vmem:[%s301 + $0x50] sm:$0xff]
        %v351 = vld [vmem:[%s301 + $0x58] sm:$0xff]
        %v352 = vld [vmem:[%s301 + $0x60] sm:$0xff]
        %v353 = vld [vmem:[%s301 + $0x68] sm:$0xff]
        %v354 = vld [vmem:[%s301 + $0x70] sm:$0xff]
        %v355 = vld [vmem:[%s301 + $0x78] sm:$0xff]
        %v359 = vunpack.c.l.b16 %v337
        %v360 = vunpack.c.l.b16 %v338
        %v361 = vunpack.c.l.b16 %v339
        %v362 = vpack.c.b16 %v360, %v359
        %v363 = vpack.c.b16 %v361, %v361
        %v382 = vunpack.c.l.b16 %v340
        %v383 = vunpack.c.h.b16 %v340
        %v384 = vunpack.c.l.b16 %v341
        %v385 = vunpack.c.h.b16 %v341
        %v386 = vunpack.c.l.b16 %v342
        %v387 = vunpack.c.h.b16 %v342
        %v388 = vunpack.c.l.b16 %v343
        %v389 = vunpack.c.h.b16 %v343
        %v390 = vunpack.c.l.b16 %v344
        %v391 = vunpack.c.h.b16 %v344
        %v392 = vunpack.c.l.b16 %v345
        %v393 = vunpack.c.h.b16 %v345
        %v394 = vunpack.c.l.b16 %v346
        %v395 = vunpack.c.h.b16 %v346
        %v396 = vunpack.c.l.b16 %v347
        %v397 = vunpack.c.h.b16 %v347
        %v398 = vunpack.c.l.b16 %v348
        %v399 = vunpack.c.h.b16 %v348
        %v400 = vunpack.c.l.b16 %v349
        %v401 = vunpack.c.h.b16 %v349
        %v402 = vunpack.c.l.b16 %v350
        %v403 = vunpack.c.h.b16 %v350
        %v404 = vunpack.c.l.b16 %v351
        %v405 = vunpack.c.h.b16 %v351
        %v406 = vunpack.c.l.b16 %v352
        %v407 = vunpack.c.h.b16 %v352
        %v408 = vunpack.c.l.b16 %v353
        %v409 = vunpack.c.h.b16 %v353
        %v410 = vunpack.c.l.b16 %v354
        %v411 = vunpack.c.h.b16 %v354
        %v412 = vunpack.c.l.b16 %v355
        %v413 = vunpack.c.h.b16 %v355
        %v414 = vpack.c.b16 %v384, %v382
        %v415 = vpack.c.b16 %v385, %v383
        %v416 = vpack.c.b16 %v388, %v386
        %v417 = vpack.c.b16 %v389, %v387
        %v418 = vpack.c.b16 %v392, %v390
        %v419 = vpack.c.b16 %v393, %v391
        %v420 = vpack.c.b16 %v396, %v394
        %v421 = vpack.c.b16 %v397, %v395
        %v422 = vpack.c.b16 %v400, %v398
        %v423 = vpack.c.b16 %v401, %v399
        %v424 = vpack.c.b16 %v404, %v402
        %v425 = vpack.c.b16 %v405, %v403
        %v426 = vpack.c.b16 %v408, %v406
        %v427 = vpack.c.b16 %v409, %v407
        %v428 = vpack.c.b16 %v412, %v410
        %v429 = vpack.c.b16 %v413, %v411
        %446 = vmatpush.bf16.msra.mxu0 %v428
        %447 = vmatpush.bf16.msra.mxu0 %v426
        %448 = vmatpush.bf16.msra.mxu0 %v424
        %449 = vmatpush.bf16.msra.mxu0 %v422
        %450 = vmatpush.bf16.msra.mxu0 %v420
        %451 = vmatpush.bf16.msra.mxu0 %v418
        %452 = vmatpush.bf16.msra.mxu0 %v416
        %453 = vmatpush.bf16.msra.mxu0 %v414
        %454 = vmatmul.bf16.gmra.mxu0 %v362
        %v455 = vpop.f32.mrf.mxu0
        %v456 = vadd.f32 0.0, %v455
        %v457 = vpop.f32.mrf.mxu0
        %v458 = vadd.f32 0.0, %v457
        %459 = vmatmul.bf16.gmra.mxu0 %v363
        %v460 = vpop.f32.mrf.mxu0
        %v461 = vadd.f32 0.0, %v460
        %v462 = vpop.f32.mrf.mxu0
        %463 = vdwg.mxu0
        %464 = vmatpush.bf16.msra.mxu0 %v429
        %465 = vmatpush.bf16.msra.mxu0 %v427
        %466 = vmatpush.bf16.msra.mxu0 %v425
        %467 = vmatpush.bf16.msra.mxu0 %v423
        %468 = vmatpush.bf16.msra.mxu0 %v421
        %469 = vmatpush.bf16.msra.mxu0 %v419
        %470 = vmatpush.bf16.msra.mxu0 %v417
        %471 = vmatpush.bf16.msra.mxu0 %v415
        %472 = vmatmul.bf16.gmra.mxu0 %v362
        %v473 = vpop.f32.mrf.mxu0
        %v474 = vadd.f32 0.0, %v473
        %v475 = vpop.f32.mrf.mxu0
        %v476 = vadd.f32 0.0, %v475
        %477 = vmatmul.bf16.gmra.mxu0 %v363
        %v478 = vpop.f32.mrf.mxu0
        %v479 = vadd.f32 0.0, %v478
        %v480 = vpop.f32.mrf.mxu0
        %481 = vdwg.mxu0
        %v482 = vadd.f32 %v331, %v456
        %v483 = vadd.f32 %v332, %v474
        %v484 = vadd.f32 %v333, %v458
        %v485 = vadd.f32 %v334, %v476
        %v486 = vadd.f32 %v335, %v461
        %v487 = vadd.f32 %v336, %v479
        %488 = vst [vmem:[#allocation2] sm:$0xff] %v482
        %489 = vst [vmem:[#allocation2 + $0x8] sm:$0xff] %v483
        %490 = vst [vmem:[#allocation2 + $0x10] sm:$0xff] %v484
        %491 = vst [vmem:[#allocation2 + $0x18] sm:$0xff] %v485
        %492 = vst [vmem:[#allocation2 + $0x20] sm:$0xff] %v486
        %493 = vst [vmem:[#allocation2 + $0x28] sm:$0xff] %v487
        %p494 = scmp.eq.s32.totalorder %s21, 26
        // Predicated region
        $region78: #{alexnet_forward.17} parent=68 // pred_check
          %p495 = pneg %p494
        $region79: #{alexnet_forward.17} parent=68 // pred_check_branch
          %497 = sbr.rel (%p495) target = $region81
        $region80: #{alexnet_forward.17} parent=68 // pred_region
          %v498 = vld [vmem:[#allocation2] sm:$0xff]
          %v499 = vld [vmem:[#allocation2 + $0x8] sm:$0xff]
          %v500 = vld [vmem:[#allocation2 + $0x10] sm:$0xff]
          %v501 = vld [vmem:[#allocation2 + $0x18] sm:$0xff]
          %v502 = vld [vmem:[#allocation2 + $0x20] sm:$0xff]
          %v503 = vld [vmem:[#allocation2 + $0x28] sm:$0xff]
          %v504 = vld [vmem:[%s307] sm:$0x3]
          %v506 = vperm.slane %v504, 0
          %v507 = vperm.slane %v504, 1
          %v510 = vadd.f32 %v498, %v506
          %v511 = vadd.f32 %v499, %v507
          %v512 = vadd.f32 %v500, %v506
          %v513 = vadd.f32 %v501, %v507
          %v514 = vadd.f32 %v502, %v506
          %v515 = vadd.f32 %v503, %v507
          %v516 = vmax.f32 %v510, 0.0
          %v517 = vmax.f32 %v511, 0.0
          %v518 = vmax.f32 %v512, 0.0
          %v519 = vmax.f32 %v513, 0.0
          %v520 = vmax.f32 %v514, 0.0
          %v521 = vmax.f32 %v515, 0.0
          %522 = vst [vmem:[%s318] sm:$0xff] %v516
          %523 = vst [vmem:[%s318 + $0x8] sm:$0xff] %v517
          %524 = vst [vmem:[%s318 + $0x10] sm:$0xff] %v518
          %525 = vst [vmem:[%s318 + $0x18] sm:$0xff] %v519
          %526 = vst [vmem:[%s318 + $0x20] sm:$0xff] %v520
          %527 = vst [vmem:[%s318 + $0x28] sm:$0xff] %v521
        $region81: #{alexnet_forward.17} parent=68 // pred_fallthru
          _
        %s528 = smul.u32 3, %s19
        %s529 = smul.u32 2, %s20
        %p530 = scmp.lt.s32.totalorder %s528, 2
        %s531 = scalar_select %p530, %s528, 2
        %p532 = scmp.lt.s32.totalorder %s529, 1
        %s533 = scalar_select %p532, %s529, 1
        %s534 = smul.addr %s531, 2
        %s535 = sadd.s32 %s533, %s534
        %s536 = smul.addr %s535, 8
        %s537 = scalar_lea.vmem %s3, %s536
        // Predicated region
        $region82: #{alexnet_forward.17} parent=68 // pred_check
          %p538 = pneg %p135
        $region83: #{alexnet_forward.17} parent=68 // pred_check_branch
          %540 = sbr.rel (%p538) target = $region85
        $region84: #{alexnet_forward.17} parent=68 // pred_region
          %s541 = smul.u32 3, %s19
          %s542 = smul.u32 2, %s20
        $region85: #{alexnet_forward.17} parent=68 // pred_fallthru
          _
        // Predicated region
        $region86: #{alexnet_forward.17} parent=68 // pred_check
          %p543 = pneg %p135
        $region87: #{alexnet_forward.17} parent=68 // pred_check_branch
          %545 = sbr.rel (%p543) target = $region89
        $region88: #{alexnet_forward.17} parent=68 // pred_region
          %s546 = smul.u32 3, %s19
          %s547 = smul.u32 2, %s20
          %p548 = scmp.lt.s32.totalorder %s546, 2
          %s549 = scalar_select %p548, %s546, 2
          %p550 = scmp.lt.s32.totalorder %s547, 1
          %s551 = scalar_select %p550, %s547, 1
          %s552 = smul.addr %s549, 2
          %s553 = sadd.s32 %s551, %s552
          %s554 = smul.addr %s553, 8
          %s555 = scalar_lea.vmem %s3, %s554
        $region89: #{alexnet_forward.17} parent=68 // pred_fallthru
          _
      $region69: #{alexnet_forward.17} parent=5 // pred_fallthru
        _
      %p556 = scmp.le.s32.totalorder 2, %s9
      // Predicated region
      $region90: #{alexnet_forward.17} parent=5 // pred_check
        %p557 = pneg %p556
      $region91: #{alexnet_forward.17} parent=5 // pred_check_branch
        %559 = sbr.rel (%p557) target = $region93
      $region92: #{alexnet_forward.17} parent=5 // pred_region
        %s560 = ssub.s32 %s9, 2
      $region93: #{alexnet_forward.17} parent=5 // pred_fallthru
        _
    $region6: #{alexnet_forward.17} parent=1 // loop_footer
      %s13 = sadd.s32 1, %s9
    $region7: #{alexnet_forward.17} parent=1 // loop_footer_branch
      %8 = sbr.rel target = $region3
    $region8: #{alexnet_forward.17} parent=1 // loop_exit
      _

// kernel: alexnet_forward.18
$region0: #{alexnet_forward.18}
  #allocation0 [shape = 'u32[]', space=smem, size = 0x4, offset = 0x4, fixed_abs, tag = 'smem constant byte address 0x4 - core index']
  #allocation1 [shape = 'u32[72,128]{1,0:T(1,128)}', space=vmem, size = 0x9000, scoped, tag = 'internal scratch']
  #allocation2 [shape = 'f32[24,256]{1,0:T(8,128)}', space=vmem, size = 0x6000, scoped, tag = 'scratch operand']
  %s0 = inlined_call_operand.vmem [shape: bf16[24,2304], index: 0, kind: input, shape index: {}]
  %s1 = inlined_call_operand.vmem [shape: bf16[2304,256], index: 1, kind: input, shape index: {}]
  %s2 = inlined_call_operand.vmem [shape: f32[1,256], index: 2, kind: input, shape index: {}]
  %s3 = inlined_call_operand.vmem [shape: f32[24,256], index: 3, kind: output, shape index: {}]
  %s4 = sld [smem:[#allocation0]]
  $region91: #{alexnet_forward.18} parent=0
    _
  %s6 = ssub.s32 1, %s4
  %s7 = scalar_select 0, %s6, %s4
  $region1: #{alexnet_forward.18} parent=0
    #allocation3 [shape = 'u8[24576]{0}', space=vmem, size = 0x6000, scoped, tag = 'input window, operand 0']
    loop: start=0, step=1, limit=11
    $region2: #{alexnet_forward.18} parent=1 // loop_pre_header
      _
    $region3: #{alexnet_forward.18} parent=1 // loop_header
      %s9 = sphi 0, %s13
      %p10 = scmp.ge.s32.totalorder %s9, 11
      %s16 = sphi 0, %s35
      %s17 = sphi 0, %s31
      %s18 = sphi 0, %s27
      %s19 = sphi 0, %s16
      %s20 = sphi 0, %s17
      %s21 = sphi 0, %s18
      %s22 = sphi 0, %s19
      %s23 = sphi 0, %s20
      %s24 = sphi 0, %s21
      %s40 = sphi 0, %s42
      %s43 = sphi 0, %s40
      %s44 = sphi 0, %s43
      %s60 = sphi 0, %s44
      %s68 = sphi 0, %s70
      %s71 = sphi 0, %s68
      %s72 = sphi 0, %s71
      %s88 = sphi 0, %s72
      %s94 = sphi 0, %s96
      %s97 = sphi 0, %s94
      %s98 = sphi 0, %s97
      %s114 = sphi 0, %s98
      %s122 = sphi 0, %s124
      %s125 = sphi 0, %s122
      %s126 = sphi 0, %s125
      %s142 = sphi 0, %s126
    $region4: #{alexnet_forward.18} parent=1 // loop_header_branch
      %12 = sbr.rel (%p10) target = $region8
    $region5: #{alexnet_forward.18} parent=1 // loop_body
      %s14 = ssub.s32 %s9, 1
      %s15 = ssub.s32 %s9, 2
      %s25 = sadd.s32 1, %s18
      %p26 = scmp.ge.s32.totalorder %s25, 9
      %s27 = scalar_select %p26, 0, %s25
      %s28 = sadd.s32 1, %s17
      %s29 = scalar_select %p26, %s28, %s17
      %p30 = scmp.ge.s32.totalorder %s29, 1
      %s31 = scalar_select %p30, 0, %s29
      %s32 = sadd.s32 1, %s16
      %s33 = scalar_select %p30, %s32, %s16
      %p34 = scmp.ge.s32.totalorder %s33, 1
      %s35 = scalar_select %p34, 0, %s33
      %s36 = ssub.s32 %s16, %s35
      %s37 = ssub.s32 %s18, %s27
      %s38 = sor.u32 %s36, %s37
      %p39 = scmp.eq.s32.totalorder %s38, 0
      %s41 = sadd.s32 %s40, 1
      %s42 = scalar_select %p39, %s40, %s41
      %p45 = pneg %p39
      %p46 = scmp.eq.s32.totalorder %s9, 8
      %p47 = por %p45, %p46
      %p48 = scmp.ne.s32.totalorder %s40, %s43
      %p49 = scmp.eq.s32.totalorder %s9, 0
      %p50 = por %p48, %p49
      %p51 = scmp.ne.s32.totalorder %s40, %s43
      %p52 = scmp.eq.s32.totalorder %s14, 8
      %p53 = por %p51, %p52
      %p54 = scmp.ne.s32.totalorder %s43, %s44
      %p55 = scmp.eq.s32.totalorder %s14, 0
      %p56 = por %p54, %p55
      %p57 = scmp.ne.s32.totalorder %s43, %s44
      %p58 = scmp.eq.s32.totalorder %s15, 8
      %p59 = por %p57, %p58
      %p61 = scmp.ne.s32.totalorder %s44, %s60
      %p62 = scmp.eq.s32.totalorder %s15, 0
      %p63 = por %p61, %p62
      %s64 = ssub.s32 %s18, %s27
      %s65 = ssub.s32 %s17, %s31
      %s66 = sor.u32 %s64, %s65
      %p67 = scmp.eq.s32.totalorder %s66, 0
      %s69 = sadd.s32 %s68, 1
      %s70 = scalar_select %p67, %s68, %s69
      %p73 = pneg %p67
      %p74 = scmp.eq.s32.totalorder %s9, 8
      %p75 = por %p73, %p74
      %p76 = scmp.ne.s32.totalorder %s68, %s71
      %p77 = scmp.eq.s32.totalorder %s9, 0
      %p78 = por %p76, %p77
      %p79 = scmp.ne.s32.totalorder %s68, %s71
      %p80 = scmp.eq.s32.totalorder %s14, 8
      %p81 = por %p79, %p80
      %p82 = scmp.ne.s32.totalorder %s71, %s72
      %p83 = scmp.eq.s32.totalorder %s14, 0
      %p84 = por %p82, %p83
      %p85 = scmp.ne.s32.totalorder %s71, %s72
      %p86 = scmp.eq.s32.totalorder %s15, 8
      %p87 = por %p85, %p86
      %p89 = scmp.ne.s32.totalorder %s72, %s88
      %p90 = scmp.eq.s32.totalorder %s15, 0
      %p91 = por %p89, %p90
      %s92 = ssub.s32 %s17, %s31
      %p93 = scmp.eq.s32.totalorder %s92, 0
      %s95 = sadd.s32 %s94, 1
      %s96 = scalar_select %p93, %s94, %s95
      %p99 = pneg %p93
      %p100 = scmp.eq.s32.totalorder %s9, 8
      %p101 = por %p99, %p100
      %p102 = scmp.ne.s32.totalorder %s94, %s97
      %p103 = scmp.eq.s32.totalorder %s9, 0
      %p104 = por %p102, %p103
      %p105 = scmp.ne.s32.totalorder %s94, %s97
      %p106 = scmp.eq.s32.totalorder %s14, 8
      %p107 = por %p105, %p106
      %p108 = scmp.ne.s32.totalorder %s97, %s98
      %p109 = scmp.eq.s32.totalorder %s14, 0
      %p110 = por %p108, %p109
      %p111 = scmp.ne.s32.totalorder %s97, %s98
      %p112 = scmp.eq.s32.totalorder %s15, 8
      %p113 = por %p111, %p112
      %p115 = scmp.ne.s32.totalorder %s98, %s114
      %p116 = scmp.eq.s32.totalorder %s15, 0
      %p117 = por %p115, %p116
      %s118 = ssub.s32 %s16, %s35
      %s119 = ssub.s32 %s17, %s31
      %s120 = sor.u32 %s118, %s119
      %p121 = scmp.eq.s32.totalorder %s120, 0
      %s123 = sadd.s32 %s122, 1
      %s124 = scalar_select %p121, %s122, %s123
      %p127 = pneg %p121
      %p128 = scmp.eq.s32.totalorder %s9, 8
      %p129 = por %p127, %p128
      %p130 = scmp.ne.s32.totalorder %s122, %s125
      %p131 = scmp.eq.s32.totalorder %s9, 0
      %p132 = por %p130, %p131
      %p133 = scmp.ne.s32.totalorder %s122, %s125
      %p134 = scmp.eq.s32.totalorder %s14, 8
      %p135 = por %p133, %p134
      %p136 = scmp.ne.s32.totalorder %s125, %s126
      %p137 = scmp.eq.s32.totalorder %s14, 0
      %p138 = por %p136, %p137
      %p139 = scmp.ne.s32.totalorder %s125, %s126
      %p140 = scmp.eq.s32.totalorder %s15, 8
      %p141 = por %p139, %p140
      %p143 = scmp.ne.s32.totalorder %s126, %s142
      %p144 = scmp.eq.s32.totalorder %s15, 0
      %p145 = por %p143, %p144
      %p146 = scmp.le.s32.totalorder 1, %s9
      %p147 = scmp.lt.s32.totalorder %s9, 10
      %p148 = pnand %p146, %p147
      %p149 = pneg %p148
      // Predicated region
      $region9: #{alexnet_forward.18} parent=5 // pred_check
        _
      $region10: #{alexnet_forward.18} parent=5 // pred_check_branch
        %151 = sbr.rel (%p148) target = $region12
      $region11: #{alexnet_forward.18} parent=5 // pred_region
        %s152 = ssub.s32 %s9, 1
        // Predicated region
        $region13: #{alexnet_forward.18} parent=11 // pred_check
          %p153 = pneg %p110
        $region14: #{alexnet_forward.18} parent=11 // pred_check_branch
          %155 = sbr.rel (%p153) target = $region16
        $region15: #{alexnet_forward.18} parent=11 // pred_region
          %s156 = smul.u32 2, %s20
          %p157 = scmp.lt.s32.totalorder %s156, 1
          %s158 = scalar_select %p157, %s156, 1
          %s159 = scalar_lea.vmem %s2, %s158
          %s160 = smul.u32 2, %s20
        $region16: #{alexnet_forward.18} parent=11 // pred_fallthru
          _
      $region12: #{alexnet_forward.18} parent=5 // pred_fallthru
        _
      %p161 = scmp.lt.s32.totalorder %s9, 9
      // Predicated region
      $region17: #{alexnet_forward.18} parent=5 // pred_check
        %p162 = pneg %p161
      $region18: #{alexnet_forward.18} parent=5 // pred_check_branch
        %164 = sbr.rel (%p162) target = $region20
      $region19: #{alexnet_forward.18} parent=5 // pred_region
        // Predicated region
        $region21: #{alexnet_forward.18} parent=19 // pred_check
          %p165 = pneg %p50
        $region22: #{alexnet_forward.18} parent=19 // pred_check_branch
          %167 = sbr.rel (%p165) target = $region24
        $region23: #{alexnet_forward.18} parent=19 // pred_region
          %s168 = sand.u32 %s40, 1
          %s169 = sand.u32 %s40, 1
          %s170 = smul.addr %s169, 24
          %s171 = scalar_lea.vmem [#allocation3], %s170
          %s172 = smul.u32 3, %s16
          %s173 = smul.u32 2, %s18
          %s174 = smul.addr %s172, 18
          %s175 = sadd.s32 %s173, %s174
          %s176 = smul.addr %s175, 4
          %s177 = scalar_lea.vmem %s0, %s176
          // Predicated region
          $region25: #{alexnet_forward.18} parent=23 // pred_check
            _
          $region26: #{alexnet_forward.18} parent=23 // pred_check_branch
            %179 = sbr.rel (0) target = $region28
          $region27: #{alexnet_forward.18} parent=23 // pred_region
            // Predicated region
            $region29: #{alexnet_forward.18} parent=27 // pred_check
              _
            $region30: #{alexnet_forward.18} parent=27 // pred_check_branch
              %181 = sbr.rel (0) target = $region32
            $region31: #{alexnet_forward.18} parent=27 // pred_region
              // Predicated region
              $region44: #{alexnet_forward.18} parent=31 // pred_check
                _
              $region45: #{alexnet_forward.18} parent=31 // pred_check_branch
                %201 = sbr.rel (0) target = $region47
              $region46: #{alexnet_forward.18} parent=31 // pred_region
                loop: start=0, step=1, limit=1
                $region48: #{alexnet_forward.18} parent=46 // loop_pre_header
                  _
                $region49: #{alexnet_forward.18} parent=46 // loop_header
                  %s203 = sphi 0, %s207
                  %p204 = scmp.ge.s32.totalorder %s203, 1
                  %s208 = sphi %s177, %s177
                  %s209 = sphi %s171, %s171
                $region50: #{alexnet_forward.18} parent=46 // loop_header_branch
                  %206 = sbr.rel (%p204) target = $region54
                $region51: #{alexnet_forward.18} parent=46 // loop_body
                  %v210 = vld [vmem:[%s208] sm:$0xff]
                  %211 = vst [vmem:[%s209] sm:$0xff] %v210
                  %v212 = vld [vmem:[%s208 + $0x48] sm:$0xff]
                  %213 = vst [vmem:[%s209 + $0x8] sm:$0xff] %v212
                  %v214 = vld [vmem:[%s208 + $0x90] sm:$0xff]
                  %215 = vst [vmem:[%s209 + $0x10] sm:$0xff] %v214
                $region52: #{alexnet_forward.18} parent=46 // loop_footer
                  %s207 = sadd.s32 1, %s203
                $region53: #{alexnet_forward.18} parent=46 // loop_footer_branch
                  %202 = sbr.rel target = $region49
                $region54: #{alexnet_forward.18} parent=46 // loop_exit
                  _
              $region47: #{alexnet_forward.18} parent=31 // pred_fallthru
                _
              // Predicated region
              $region55: #{alexnet_forward.18} parent=31 // pred_check
                _
              $region56: #{alexnet_forward.18} parent=31 // pred_check_branch
                %217 = sbr.rel target = $region58
              $region57: #{alexnet_forward.18} parent=31 // pred_region
                _
              $region58: #{alexnet_forward.18} parent=31 // pred_fallthru
                _
            $region32: #{alexnet_forward.18} parent=27 // pred_fallthru
              _
            // Predicated region
            $region33: #{alexnet_forward.18} parent=27 // pred_check
              _
            $region34: #{alexnet_forward.18} parent=27 // pred_check_branch
              %183 = sbr.rel target = $region36
            $region35: #{alexnet_forward.18} parent=27 // pred_region
              %s185 = ssub.s32 256, 1
              loop: start=0, step=1, limit=1
              $region37: #{alexnet_forward.18} parent=35 // loop_pre_header
                _
              $region38: #{alexnet_forward.18} parent=35 // loop_header
                %s187 = sphi 0, %s191
                %p188 = scmp.ge.s32.totalorder %s187, 1
                %s192 = sphi %s177, %s177
                %s193 = sphi %s171, %s171
              $region39: #{alexnet_forward.18} parent=35 // loop_header_branch
                %190 = sbr.rel (%p188) target = $region43
              $region40: #{alexnet_forward.18} parent=35 // loop_body
                %v194 = vld [vmem:[%s192] sm:%s185]
                %195 = vst [vmem:[%s193] sm:%s185] %v194
                %v196 = vld [vmem:[%s192 + $0x48] sm:%s185]
                %197 = vst [vmem:[%s193 + $0x8] sm:%s185] %v196
                %v198 = vld [vmem:[%s192 + $0x90] sm:%s185]
                %199 = vst [vmem:[%s193 + $0x10] sm:%s185] %v198
              $region41: #{alexnet_forward.18} parent=35 // loop_footer
                %s191 = sadd.s32 1, %s187
              $region42: #{alexnet_forward.18} parent=35 // loop_footer_branch
                %186 = sbr.rel target = $region38
              $region43: #{alexnet_forward.18} parent=35 // loop_exit
                _
            $region36: #{alexnet_forward.18} parent=27 // pred_fallthru
              _
          $region28: #{alexnet_forward.18} parent=23 // pred_fallthru
            _
          %218 = vnop
        $region24: #{alexnet_forward.18} parent=19 // pred_fallthru
          _
        // Predicated region
        $region59: #{alexnet_forward.18} parent=19 // pred_check
          %p219 = pneg %p78
        $region60: #{alexnet_forward.18} parent=19 // pred_check_branch
          %221 = sbr.rel (%p219) target = $region62
        $region61: #{alexnet_forward.18} parent=19 // pred_region
          %s222 = smul.u32 32, %s18
          %s223 = smul.u32 2, %s17
          %p224 = scmp.lt.s32.totalorder %s222, 287
          %s225 = scalar_select %p224, %s222, 287
          %p226 = scmp.lt.s32.totalorder %s223, 1
          %s227 = scalar_select %p226, %s223, 1
          %s228 = smul.addr %s225, 2
          %s229 = sadd.s32 %s227, %s228
          %s230 = smul.addr %s229, 4
          %s231 = scalar_lea.vmem %s1, %s230
          %s232 = smul.u32 32, %s18
          %s233 = smul.u32 2, %s17
        $region62: #{alexnet_forward.18} parent=19 // pred_fallthru
          _
      $region20: #{alexnet_forward.18} parent=5 // pred_fallthru
        _
      %p234 = scmp.le.s32.totalorder 1, %s9
      %p235 = scmp.lt.s32.totalorder %s9, 10
      %p236 = pnand %p234, %p235
      %p237 = pneg %p236
      // Predicated region
      $region63: #{alexnet_forward.18} parent=5 // pred_check
        _
      $region64: #{alexnet_forward.18} parent=5 // pred_check_branch
        %239 = sbr.rel (%p236) target = $region66
      $region65: #{alexnet_forward.18} parent=5 // pred_region
        %s240 = ssub.s32 %s9, 1
        %s241 = sand.u32 %s43, 1
        %s242 = sand.u32 %s43, 1
        %s243 = smul.addr %s242, 24
        %s244 = scalar_lea.vmem [#allocation3], %s243
        // Predicated region
        $region67: #{alexnet_forward.18} parent=65 // pred_check
          %p245 = pneg %p56
        $region68: #{alexnet_forward.18} parent=65 // pred_check_branch
          %247 = sbr.rel (%p245) target = $region70
        $region69: #{alexnet_forward.18} parent=65 // pred_region
          _
        $region70: #{alexnet_forward.18} parent=65 // pred_fallthru
          _
        %s248 = sand.u32 %s43, 1
        %s249 = sand.u32 %s43, 1
        %s250 = smul.addr %s249, 24
        %s251 = scalar_lea.vmem [#allocation3], %s250
        %p252 = pneg %p56
        %p253 = pneg %p53
        %s254 = smul.u32 32, %s21
        %s255 = smul.u32 2, %s20
        %p256 = scmp.lt.s32.totalorder %s254, 287
        %s257 = scalar_select %p256, %s254, 287
        %p258 = scmp.lt.s32.totalorder %s255, 1
        %s259 = scalar_select %p258, %s255, 1
        %s260 = smul.addr %s257, 2
        %s261 = sadd.s32 %s259, %s260
        %s262 = smul.addr %s261, 4
        %s263 = scalar_lea.vmem %s1, %s262
        %p264 = pneg %p84
        %p265 = pneg %p81
        %s266 = smul.u32 2, %s20
        %p267 = scmp.lt.s32.totalorder %s266, 1
        %s268 = scalar_select %p267, %s266, 1
        %s269 = scalar_lea.vmem %s2, %s268
        %p270 = pneg %p110
        %p271 = pneg %p107
        %p272 = pneg %p138
        %p273 = pneg %p135
        %s274 = smul.u32 3, %s19
        %s275 = smul.u32 2, %s20
        %p276 = scmp.lt.s32.totalorder %s274, 2
        %s277 = scalar_select %p276, %s274, 2
        %p278 = scmp.lt.s32.totalorder %s275, 1
        %s279 = scalar_select %p278, %s275, 1
        %s280 = smul.addr %s277, 2
        %s281 = sadd.s32 %s279, %s280
        %s282 = smul.addr %s281, 8
        %s283 = scalar_lea.vmem %s3, %s282
        %s284 = smul.u32 3, %s19
        %s285 = smul.u32 2, %s21
        %s286 = smul.u32 32, %s21
        %s287 = smul.u32 2, %s20
        %p288 = scmp.lt.s32.totalorder %s286, 287
        %s289 = scalar_select %p288, %s286, 287
        %p290 = scmp.lt.s32.totalorder %s287, 1
        %s291 = scalar_select %p290, %s287, 1
        %s292 = smul.addr %s289, 2
        %s293 = sadd.s32 %s291, %s292
        %s294 = smul.addr %s293, 4
        %s295 = scalar_lea.vmem %s1, %s294
        %s296 = smul.u32 32, %s21
        %s297 = smul.u32 2, %s20
        %s298 = smul.u32 2, %s20
        %p299 = scmp.lt.s32.totalorder %s298, 1
        %s300 = scalar_select %p299, %s298, 1
        %s301 = scalar_lea.vmem %s2, %s300
        %s302 = smul.u32 2, %s20
        %s303 = smul.u32 3, %s19
        %s304 = smul.u32 2, %s20
        %p305 = scmp.lt.s32.totalorder %s303, 2
        %s306 = scalar_select %p305, %s303, 2
        %p307 = scmp.lt.s32.totalorder %s304, 1
        %s308 = scalar_select %p307, %s304, 1
        %s309 = smul.addr %s306, 2
        %s310 = sadd.s32 %s308, %s309
        %s311 = smul.addr %s310, 8
        %s312 = scalar_lea.vmem %s3, %s311
        %s313 = smul.u32 3, %s19
        %s314 = smul.u32 2, %s20
        %p315 = scmp.eq.s32.totalorder %s21, 0
        // Predicated region
        $region71: #{alexnet_forward.18} parent=65 // pred_check
          %p316 = pneg %p315
        $region72: #{alexnet_forward.18} parent=65 // pred_check_branch
          %318 = sbr.rel (%p316) target = $region74
        $region73: #{alexnet_forward.18} parent=65 // pred_region
          %319 = vst [vmem:[#allocation2] sm:$0xff] 0.0
          %320 = vst [vmem:[#allocation2 + $0x8] sm:$0xff] 0.0
          %321 = vst [vmem:[#allocation2 + $0x10] sm:$0xff] 0.0
          %322 = vst [vmem:[#allocation2 + $0x18] sm:$0xff] 0.0
          %323 = vst [vmem:[#allocation2 + $0x20] sm:$0xff] 0.0
          %324 = vst [vmem:[#allocation2 + $0x28] sm:$0xff] 0.0
        $region74: #{alexnet_forward.18} parent=65 // pred_fallthru
          _
        %v325 = vld [vmem:[#allocation2] sm:$0xff]
        %v326 = vld [vmem:[#allocation2 + $0x8] sm:$0xff]
        %v327 = vld [vmem:[#allocation2 + $0x10] sm:$0xff]
        %v328 = vld [vmem:[#allocation2 + $0x18] sm:$0xff]
        %v329 = vld [vmem:[#allocation2 + $0x20] sm:$0xff]
        %v330 = vld [vmem:[#allocation2 + $0x28] sm:$0xff]
        %v331 = vld [vmem:[%s244] sm:$0xff]
        %v332 = vld [vmem:[%s244 + $0x8] sm:$0xff]
        %v333 = vld [vmem:[%s244 + $0x10] sm:$0xff]
        %v334 = vld [vmem:[%s295] sm:$0xff]
        %v335 = vld [vmem:[%s295 + $0x8] sm:$0xff]
        %v336 = vld [vmem:[%s295 + $0x10] sm:$0xff]
        %v337 = vld [vmem:[%s295 + $0x18] sm:$0xff]
        %v338 = vld [vmem:[%s295 + $0x20] sm:$0xff]
        %v339 = vld [vmem:[%s295 + $0x28] sm:$0xff]
        %v340 = vld [vmem:[%s295 + $0x30] sm:$0xff]
        %v341 = vld [vmem:[%s295 + $0x38] sm:$0xff]
        %v342 = vld [vmem:[%s295 + $0x40] sm:$0xff]
        %v343 = vld [vmem:[%s295 + $0x48] sm:$0xff]
        %v344 = vld [vmem:[%s295 + $0x50] sm:$0xff]
        %v345 = vld [vmem:[%s295 + $0x58] sm:$0xff]
        %v346 = vld [vmem:[%s295 + $0x60] sm:$0xff]
        %v347 = vld [vmem:[%s295 + $0x68] sm:$0xff]
        %v348 = vld [vmem:[%s295 + $0x70] sm:$0xff]
        %v349 = vld [vmem:[%s295 + $0x78] sm:$0xff]
        %v350 = vld [vmem:[%s295 + $0x80] sm:$0xff]
        %v351 = vld [vmem:[%s295 + $0x88] sm:$0xff]
        %v352 = vld [vmem:[%s295 + $0x90] sm:$0xff]
        %v353 = vld [vmem:[%s295 + $0x98] sm:$0xff]
        %v354 = vld [vmem:[%s295 + $0xa0] sm:$0xff]
        %v355 = vld [vmem:[%s295 + $0xa8] sm:$0xff]
        %v356 = vld [vmem:[%s295 + $0xb0] sm:$0xff]
        %v357 = vld [vmem:[%s295 + $0xb8] sm:$0xff]
        %v358 = vld [vmem:[%s295 + $0xc0] sm:$0xff]
        %v359 = vld [vmem:[%s295 + $0xc8] sm:$0xff]
        %v360 = vld [vmem:[%s295 + $0xd0] sm:$0xff]
        %v361 = vld [vmem:[%s295 + $0xd8] sm:$0xff]
        %v362 = vld [vmem:[%s295 + $0xe0] sm:$0xff]
        %v363 = vld [vmem:[%s295 + $0xe8] sm:$0xff]
        %v364 = vld [vmem:[%s295 + $0xf0] sm:$0xff]
        %v365 = vld [vmem:[%s295 + $0xf8] sm:$0xff]
        %v369 = vunpack.c.l.b16 %v331
        %v370 = vunpack.c.h.b16 %v331
        %v371 = vunpack.c.l.b16 %v332
        %v372 = vunpack.c.h.b16 %v332
        %v373 = vunpack.c.l.b16 %v333
        %v374 = vunpack.c.h.b16 %v333
        %v375 = vpack.c.b16 %v371, %v369
        %v376 = vpack.c.b16 %v372, %v370
        %v377 = vpack.c.b16 %v373, %v373
        %v378 = vpack.c.b16 %v374, %v374
        %v415 = vunpack.c.l.b16 %v334
        %v416 = vunpack.c.h.b16 %v334
        %v417 = vunpack.c.l.b16 %v335
        %v418 = vunpack.c.h.b16 %v335
        %v419 = vunpack.c.l.b16 %v336
        %v420 = vunpack.c.h.b16 %v336
        %v421 = vunpack.c.l.b16 %v337
        %v422 = vunpack.c.h.b16 %v337
        %v423 = vunpack.c.l.b16 %v338
        %v424 = vunpack.c.h.b16 %v338
        %v425 = vunpack.c.l.b16 %v339
        %v426 = vunpack.c.h.b16 %v339
        %v427 = vunpack.c.l.b16 %v340
        %v428 = vunpack.c.h.b16 %v340
        %v429 = vunpack.c.l.b16 %v341
        %v430 = vunpack.c.h.b16 %v341
        %v431 = vunpack.c.l.b16 %v342
        %v432 = vunpack.c.h.b16 %v342
        %v433 = vunpack.c.l.b16 %v343
        %v434 = vunpack.c.h.b16 %v343
        %v435 = vunpack.c.l.b16 %v344
        %v436 = vunpack.c.h.b16 %v344
        %v437 = vunpack.c.l.b16 %v345
        %v438 = vunpack.c.h.b16 %v345
        %v439 = vunpack.c.l.b16 %v346
        %v440 = vunpack.c.h.b16 %v346
        %v441 = vunpack.c.l.b16 %v347
        %v442 = vunpack.c.h.b16 %v347
        %v443 = vunpack.c.l.b16 %v348
        %v444 = vunpack.c.h.b16 %v348
        %v445 = vunpack.c.l.b16 %v349
        %v446 = vunpack.c.h.b16 %v349
        %v447 = vunpack.c.l.b16 %v350
        %v448 = vunpack.c.h.b16 %v350
        %v449 = vunpack.c.l.b16 %v351
        %v450 = vunpack.c.h.b16 %v351
        %v451 = vunpack.c.l.b16 %v352
        %v452 = vunpack.c.h.b16 %v352
        %v453 = vunpack.c.l.b16 %v353
        %v454 = vunpack.c.h.b16 %v353
        %v455 = vunpack.c.l.b16 %v354
        %v456 = vunpack.c.h.b16 %v354
        %v457 = vunpack.c.l.b16 %v355
        %v458 = vunpack.c.h.b16 %v355
        %v459 = vunpack.c.l.b16 %v356
        %v460 = vunpack.c.h.b16 %v356
        %v461 = vunpack.c.l.b16 %v357
        %v462 = vunpack.c.h.b16 %v357
        %v463 = vunpack.c.l.b16 %v358
        %v464 = vunpack.c.h.b16 %v358
        %v465 = vunpack.c.l.b16 %v359
        %v466 = vunpack.c.h.b16 %v359
        %v467 = vunpack.c.l.b16 %v360
        %v468 = vunpack.c.h.b16 %v360
        %v469 = vunpack.c.l.b16 %v361
        %v470 = vunpack.c.h.b16 %v361
        %v471 = vunpack.c.l.b16 %v362
        %v472 = vunpack.c.h.b16 %v362
        %v473 = vunpack.c.l.b16 %v363
        %v474 = vunpack.c.h.b16 %v363
        %v475 = vunpack.c.l.b16 %v364
        %v476 = vunpack.c.h.b16 %v364
        %v477 = vunpack.c.l.b16 %v365
        %v478 = vunpack.c.h.b16 %v365
        %v479 = vpack.c.b16 %v417, %v415
        %v480 = vpack.c.b16 %v418, %v416
        %v481 = vpack.c.b16 %v421, %v419
        %v482 = vpack.c.b16 %v422, %v420
        %v483 = vpack.c.b16 %v425, %v423
        %v484 = vpack.c.b16 %v426, %v424
        %v485 = vpack.c.b16 %v429, %v427
        %v486 = vpack.c.b16 %v430, %v428
        %v487 = vpack.c.b16 %v433, %v431
        %v488 = vpack.c.b16 %v434, %v432
        %v489 = vpack.c.b16 %v437, %v435
        %v490 = vpack.c.b16 %v438, %v436
        %v491 = vpack.c.b16 %v441, %v439
        %v492 = vpack.c.b16 %v442, %v440
        %v493 = vpack.c.b16 %v445, %v443
        %v494 = vpack.c.b16 %v446, %v444
        %v495 = vpack.c.b16 %v449, %v447
        %v496 = vpack.c.b16 %v450, %v448
        %v497 = vpack.c.b16 %v453, %v451
        %v498 = vpack.c.b16 %v454, %v452
        %v499 = vpack.c.b16 %v457, %v455
        %v500 = vpack.c.b16 %v458, %v456
        %v501 = vpack.c.b16 %v461, %v459
        %v502 = vpack.c.b16 %v462, %v460
        %v503 = vpack.c.b16 %v465, %v463
        %v504 = vpack.c.b16 %v466, %v464
        %v505 = vpack.c.b16 %v469, %v467
        %v506 = vpack.c.b16 %v470, %v468
        %v507 = vpack.c.b16 %v473, %v471
        %v508 = vpack.c.b16 %v474, %v472
        %v509 = vpack.c.b16 %v477, %v475
        %v510 = vpack.c.b16 %v478, %v476
        %543 = vmatpush.bf16.msra.mxu0 %v493
        %544 = vmatpush.bf16.msra.mxu0 %v491
        %545 = vmatpush.bf16.msra.mxu0 %v489
        %546 = vmatpush.bf16.msra.mxu0 %v487
        %547 = vmatpush.bf16.msra.mxu0 %v485
        %548 = vmatpush.bf16.msra.mxu0 %v483
        %549 = vmatpush.bf16.msra.mxu0 %v481
        %550 = vmatpush.bf16.msra.mxu0 %v479
        %551 = vmatmul.bf16.gmra.mxu0 %v375
        %v552 = vpop.f32.mrf.mxu0
        %v553 = vadd.f32 0.0, %v552
        %v554 = vpop.f32.mrf.mxu0
        %v555 = vadd.f32 0.0, %v554
        %556 = vmatmul.bf16.gmra.mxu0 %v377
        %v557 = vpop.f32.mrf.mxu0
        %v558 = vadd.f32 0.0, %v557
        %v559 = vpop.f32.mrf.mxu0
        %560 = vdwg.mxu0
        %561 = vmatpush.bf16.msra.mxu0 %v509
        %562 = vmatpush.bf16.msra.mxu0 %v507
        %563 = vmatpush.bf16.msra.mxu0 %v505
        %564 = vmatpush.bf16.msra.mxu0 %v503
        %565 = vmatpush.bf16.msra.mxu0 %v501
        %566 = vmatpush.bf16.msra.mxu0 %v499
        %567 = vmatpush.bf16.msra.mxu0 %v497
        %568 = vmatpush.bf16.msra.mxu0 %v495
        %569 = vmatmul.bf16.gmra.mxu0 %v376
        %v570 = vpop.f32.mrf.mxu0
        %v571 = vadd.f32 %v553, %v570
        %v572 = vpop.f32.mrf.mxu0
        %v573 = vadd.f32 %v555, %v572
        %574 = vmatmul.bf16.gmra.mxu0 %v378
        %v575 = vpop.f32.mrf.mxu0
        %v576 = vadd.f32 %v558, %v575
        %v577 = vpop.f32.mrf.mxu0
        %578 = vdwg.mxu0
        %579 = vmatpush.bf16.msra.mxu0 %v494
        %580 = vmatpush.bf16.msra.mxu0 %v492
        %581 = vmatpush.bf16.msra.mxu0 %v490
        %582 = vmatpush.bf16.msra.mxu0 %v488
        %583 = vmatpush.bf16.msra.mxu0 %v486
        %584 = vmatpush.bf16.msra.mxu0 %v484
        %585 = vmatpush.bf16.msra.mxu0 %v482
        %586 = vmatpush.bf16.msra.mxu0 %v480
        %587 = vmatmul.bf16.gmra.mxu0 %v375
        %v588 = vpop.f32.mrf.mxu0
        %v589 = vadd.f32 0.0, %v588
        %v590 = vpop.f32.mrf.mxu0
        %v591 = vadd.f32 0.0, %v590
        %592 = vmatmul.bf16.gmra.mxu0 %v377
        %v593 = vpop.f32.mrf.mxu0
        %v594 = vadd.f32 0.0, %v593
        %v595 = vpop.f32.mrf.mxu0
        %596 = vdwg.mxu0
        %597 = vmatpush.bf16.msra.mxu0 %v510
        %598 = vmatpush.bf16.msra.mxu0 %v508
        %599 = vmatpush.bf16.msra.mxu0 %v506
        %600 = vmatpush.bf16.msra.mxu0 %v504
        %601 = vmatpush.bf16.msra.mxu0 %v502
        %602 = vmatpush.bf16.msra.mxu0 %v500
        %603 = vmatpush.bf16.msra.mxu0 %v498
        %604 = vmatpush.bf16.msra.mxu0 %v496
        %605 = vmatmul.bf16.gmra.mxu0 %v376
        %v606 = vpop.f32.mrf.mxu0
        %v607 = vadd.f32 %v589, %v606
        %v608 = vpop.f32.mrf.mxu0
        %v609 = vadd.f32 %v591, %v608
        %610 = vmatmul.bf16.gmra.mxu0 %v378
        %v611 = vpop.f32.mrf.mxu0
        %v612 = vadd.f32 %v594, %v611
        %v613 = vpop.f32.mrf.mxu0
        %614 = vdwg.mxu0
        %v615 = vadd.f32 %v325, %v571
        %v616 = vadd.f32 %v326, %v607
        %v617 = vadd.f32 %v327, %v573
        %v618 = vadd.f32 %v328, %v609
        %v619 = vadd.f32 %v329, %v576
        %v620 = vadd.f32 %v330, %v612
        %621 = vst [vmem:[#allocation2] sm:$0xff] %v615
        %622 = vst [vmem:[#allocation2 + $0x8] sm:$0xff] %v616
        %623 = vst [vmem:[#allocation2 + $0x10] sm:$0xff] %v617
        %624 = vst [vmem:[#allocation2 + $0x18] sm:$0xff] %v618
        %625 = vst [vmem:[#allocation2 + $0x20] sm:$0xff] %v619
        %626 = vst [vmem:[#allocation2 + $0x28] sm:$0xff] %v620
        %p627 = scmp.eq.s32.totalorder %s21, 8
        // Predicated region
        $region75: #{alexnet_forward.18} parent=65 // pred_check
          %p628 = pneg %p627
        $region76: #{alexnet_forward.18} parent=65 // pred_check_branch
          %630 = sbr.rel (%p628) target = $region78
        $region77: #{alexnet_forward.18} parent=65 // pred_region
          %v631 = vld [vmem:[#allocation2] sm:$0xff]
          %v632 = vld [vmem:[#allocation2 + $0x8] sm:$0xff]
          %v633 = vld [vmem:[#allocation2 + $0x10] sm:$0xff]
          %v634 = vld [vmem:[#allocation2 + $0x18] sm:$0xff]
          %v635 = vld [vmem:[#allocation2 + $0x20] sm:$0xff]
          %v636 = vld [vmem:[#allocation2 + $0x28] sm:$0xff]
          %v637 = vld [vmem:[%s301] sm:$0x3]
          %v639 = vperm.slane %v637, 0
          %v640 = vperm.slane %v637, 1
          %v643 = vadd.f32 %v631, %v639
          %v644 = vadd.f32 %v632, %v640
          %v645 = vadd.f32 %v633, %v639
          %v646 = vadd.f32 %v634, %v640
          %v647 = vadd.f32 %v635, %v639
          %v648 = vadd.f32 %v636, %v640
          %v649 = vmax.f32 %v643, 0.0
          %v650 = vmax.f32 %v644, 0.0
          %v651 = vmax.f32 %v645, 0.0
          %v652 = vmax.f32 %v646, 0.0
          %v653 = vmax.f32 %v647, 0.0
          %v654 = vmax.f32 %v648, 0.0
          %655 = vst [vmem:[%s312] sm:$0xff] %v649
          %656 = vst [vmem:[%s312 + $0x8] sm:$0xff] %v650
          %657 = vst [vmem:[%s312 + $0x10] sm:$0xff] %v651
          %658 = vst [vmem:[%s312 + $0x18] sm:$0xff] %v652
          %659 = vst [vmem:[%s312 + $0x20] sm:$0xff] %v653
          %660 = vst [vmem:[%s312 + $0x28] sm:$0xff] %v654
        $region78: #{alexnet_forward.18} parent=65 // pred_fallthru
          _
        %s661 = smul.u32 3, %s19
        %s662 = smul.u32 2, %s20
        %p663 = scmp.lt.s32.totalorder %s661, 2
        %s664 = scalar_select %p663, %s661, 2
        %p665 = scmp.lt.s32.totalorder %s662, 1
        %s666 = scalar_select %p665, %s662, 1
        %s667 = smul.addr %s664, 2
        %s668 = sadd.s32 %s666, %s667
        %s669 = smul.addr %s668, 8
        %s670 = scalar_lea.vmem %s3, %s669
        // Predicated region
        $region79: #{alexnet_forward.18} parent=65 // pred_check
          %p671 = pneg %p135
        $region80: #{alexnet_forward.18} parent=65 // pred_check_branch
          %673 = sbr.rel (%p671) target = $region82
        $region81: #{alexnet_forward.18} parent=65 // pred_region
          %s674 = smul.u32 3, %s19
          %s675 = smul.u32 2, %s20
        $region82: #{alexnet_forward.18} parent=65 // pred_fallthru
          _
        // Predicated region
        $region83: #{alexnet_forward.18} parent=65 // pred_check
          %p676 = pneg %p135
        $region84: #{alexnet_forward.18} parent=65 // pred_check_branch
          %678 = sbr.rel (%p676) target = $region86
        $region85: #{alexnet_forward.18} parent=65 // pred_region
          %s679 = smul.u32 3, %s19
          %s680 = smul.u32 2, %s20
          %p681 = scmp.lt.s32.totalorder %s679, 2
          %s682 = scalar_select %p681, %s679, 2
          %p683 = scmp.lt.s32.totalorder %s680, 1
          %s684 = scalar_select %p683, %s680, 1
          %s685 = smul.addr %s682, 2
          %s686 = sadd.s32 %s684, %s685
          %s687 = smul.addr %s686, 8
          %s688 = scalar_lea.vmem %s3, %s687
        $region86: #{alexnet_forward.18} parent=65 // pred_fallthru
          _
      $region66: #{alexnet_forward.18} parent=5 // pred_fallthru
        _
      %p689 = scmp.le.s32.totalorder 2, %s9
      // Predicated region
      $region87: #{alexnet_forward.18} parent=5 // pred_check
        %p690 = pneg %p689
      $region88: #{alexnet_forward.18} parent=5 // pred_check_branch
        %692 = sbr.rel (%p690) target = $region90
      $region89: #{alexnet_forward.18} parent=5 // pred_region
        %s693 = ssub.s32 %s9, 2
      $region90: #{alexnet_forward.18} parent=5 // pred_fallthru
        _
    $region6: #{alexnet_forward.18} parent=1 // loop_footer
      %s13 = sadd.s32 1, %s9
    $region7: #{alexnet_forward.18} parent=1 // loop_footer_branch
      %8 = sbr.rel target = $region3
    $region8: #{alexnet_forward.18} parent=1 // loop_exit
      _

// kernel: alexnet_forward.19
$region0: #{alexnet_forward.19}
  #allocation0 [shape = 'u32[]', space=smem, size = 0x4, offset = 0x4, fixed_abs, tag = 'smem constant byte address 0x4 - core index']
  #allocation1 [shape = 'u32[72,128]{1,0:T(1,128)}', space=vmem, size = 0x9000, scoped, tag = 'internal scratch']
  %s0 = inlined_call_operand.vmem [shape: f32[8,256], index: 0, kind: input, shape index: {}]
  %s1 = inlined_call_operand.vmem [shape: f32[8,256], index: 1, kind: input, shape index: {}]
  %s2 = inlined_call_operand.vmem [shape: f32[8,256], index: 2, kind: input, shape index: {}]
  %s3 = inlined_call_operand.vmem [shape: f32[8,256], index: 3, kind: input, shape index: {}]
  %s4 = inlined_call_operand.vmem [shape: f32[8,256], index: 4, kind: input, shape index: {}]
  %s5 = inlined_call_operand.vmem [shape: f32[8,256], index: 5, kind: input, shape index: {}]
  %s6 = inlined_call_operand.vmem [shape: f32[8,256], index: 6, kind: input, shape index: {}]
  %s7 = inlined_call_operand.vmem [shape: f32[8,256], index: 7, kind: input, shape index: {}]
  %s8 = inlined_call_operand.vmem [shape: f32[8,256], index: 8, kind: input, shape index: {}]
  %s9 = inlined_call_operand.vmem [shape: f32[8,256], index: 9, kind: output, shape index: {}]
  %s10 = sld [smem:[#allocation0]]
  $region46: #{alexnet_forward.19} parent=0
    _
  %s12 = ssub.s32 1, %s10
  %s13 = scalar_select 0, %s12, %s10
  // Predicated region
  $region2: #{alexnet_forward.19} parent=0 // pred_check
    _
  $region3: #{alexnet_forward.19} parent=0 // pred_check_branch
    %15 = sbr.rel (0) target = $region5
  $region4: #{alexnet_forward.19} parent=0 // pred_region
    _
  $region5: #{alexnet_forward.19} parent=0 // pred_fallthru
    _
  // Predicated region
  $region6: #{alexnet_forward.19} parent=0 // pred_check
    _
  $region7: #{alexnet_forward.19} parent=0 // pred_check_branch
    %17 = sbr.rel (0) target = $region9
  $region8: #{alexnet_forward.19} parent=0 // pred_region
    _
  $region9: #{alexnet_forward.19} parent=0 // pred_fallthru
    _
  // Predicated region
  $region10: #{alexnet_forward.19} parent=0 // pred_check
    _
  $region11: #{alexnet_forward.19} parent=0 // pred_check_branch
    %19 = sbr.rel (0) target = $region13
  $region12: #{alexnet_forward.19} parent=0 // pred_region
    _
  $region13: #{alexnet_forward.19} parent=0 // pred_fallthru
    _
  // Predicated region
  $region14: #{alexnet_forward.19} parent=0 // pred_check
    _
  $region15: #{alexnet_forward.19} parent=0 // pred_check_branch
    %21 = sbr.rel (0) target = $region17
  $region16: #{alexnet_forward.19} parent=0 // pred_region
    _
  $region17: #{alexnet_forward.19} parent=0 // pred_fallthru
    _
  // Predicated region
  $region18: #{alexnet_forward.19} parent=0 // pred_check
    _
  $region19: #{alexnet_forward.19} parent=0 // pred_check_branch
    %23 = sbr.rel (0) target = $region21
  $region20: #{alexnet_forward.19} parent=0 // pred_region
    _
  $region21: #{alexnet_forward.19} parent=0 // pred_fallthru
    _
  // Predicated region
  $region22: #{alexnet_forward.19} parent=0 // pred_check
    _
  $region23: #{alexnet_forward.19} parent=0 // pred_check_branch
    %25 = sbr.rel (0) target = $region25
  $region24: #{alexnet_forward.19} parent=0 // pred_region
    _
  $region25: #{alexnet_forward.19} parent=0 // pred_fallthru
    _
  // Predicated region
  $region26: #{alexnet_forward.19} parent=0 // pred_check
    _
  $region27: #{alexnet_forward.19} parent=0 // pred_check_branch
    %27 = sbr.rel (0) target = $region29
  $region28: #{alexnet_forward.19} parent=0 // pred_region
    _
  $region29: #{alexnet_forward.19} parent=0 // pred_fallthru
    _
  // Predicated region
  $region30: #{alexnet_forward.19} parent=0 // pred_check
    _
  $region31: #{alexnet_forward.19} parent=0 // pred_check_branch
    %29 = sbr.rel (0) target = $region33
  $region32: #{alexnet_forward.19} parent=0 // pred_region
    _
  $region33: #{alexnet_forward.19} parent=0 // pred_fallthru
    _
  // Predicated region
  $region34: #{alexnet_forward.19} parent=0 // pred_check
    _
  $region35: #{alexnet_forward.19} parent=0 // pred_check_branch
    %31 = sbr.rel (0) target = $region37
  $region36: #{alexnet_forward.19} parent=0 // pred_region
    _
  $region37: #{alexnet_forward.19} parent=0 // pred_fallthru
    _
  %v32 = vld [vmem:[%s0] sm:$0xff]
  %v33 = vld [vmem:[%s0 + $0x8] sm:$0xff]
  %v34 = vld [vmem:[%s1] sm:$0xff]
  %v35 = vld [vmem:[%s1 + $0x8] sm:$0xff]
  %v36 = vmax.f32 %v32, %v34
  %v37 = vmax.f32 %v33, %v35
  %v38 = vld [vmem:[%s2] sm:$0xff]
  %v39 = vld [vmem:[%s2 + $0x8] sm:$0xff]
  %v40 = vmax.f32 %v36, %v38
  %v41 = vmax.f32 %v37, %v39
  %v42 = vld [vmem:[%s3] sm:$0xff]
  %v43 = vld [vmem:[%s3 + $0x8] sm:$0xff]
  %v44 = vmax.f32 %v40, %v42
  %v45 = vmax.f32 %v41, %v43
  %v46 = vld [vmem:[%s4] sm:$0xff]
  %v47 = vld [vmem:[%s4 + $0x8] sm:$0xff]
  %v48 = vmax.f32 %v44, %v46
  %v49 = vmax.f32 %v45, %v47
  %v50 = vld [vmem:[%s5] sm:$0xff]
  %v51 = vld [vmem:[%s5 + $0x8] sm:$0xff]
  %v52 = vmax.f32 %v48, %v50
  %v53 = vmax.f32 %v49, %v51
  %v54 = vld [vmem:[%s6] sm:$0xff]
  %v55 = vld [vmem:[%s6 + $0x8] sm:$0xff]
  %v56 = vmax.f32 %v52, %v54
  %v57 = vmax.f32 %v53, %v55
  %v58 = vld [vmem:[%s7] sm:$0xff]
  %v59 = vld [vmem:[%s7 + $0x8] sm:$0xff]
  %v60 = vmax.f32 %v56, %v58
  %v61 = vmax.f32 %v57, %v59
  %v62 = vld [vmem:[%s8] sm:$0xff]
  %v63 = vld [vmem:[%s8 + $0x8] sm:$0xff]
  %v64 = vmax.f32 %v60, %v62
  %v65 = vmax.f32 %v61, %v63
  %66 = vst [vmem:[%s9] sm:$0xff] %v64
  %67 = vst [vmem:[%s9 + $0x8] sm:$0xff] %v65
  // Predicated region
  $region38: #{alexnet_forward.19} parent=0 // pred_check
    _
  $region39: #{alexnet_forward.19} parent=0 // pred_check_branch
    %69 = sbr.rel (0) target = $region41
  $region40: #{alexnet_forward.19} parent=0 // pred_region
    _
  $region41: #{alexnet_forward.19} parent=0 // pred_fallthru
    _
  // Predicated region
  $region42: #{alexnet_forward.19} parent=0 // pred_check
    _
  $region43: #{alexnet_forward.19} parent=0 // pred_check_branch
    %71 = sbr.rel (0) target = $region45
  $region44: #{alexnet_forward.19} parent=0 // pred_region
    _
  $region45: #{alexnet_forward.19} parent=0 // pred_fallthru
    _

// kernel: alexnet_forward.20
$region0: #{alexnet_forward.20}
  #allocation0 [shape = 'u32[]', space=smem, size = 0x4, offset = 0x4, fixed_abs, tag = 'smem constant byte address 0x4 - core index']
  #allocation1 [shape = 'u32[72,128]{1,0:T(1,128)}', space=vmem, size = 0x9000, scoped, tag = 'internal scratch']
  #allocation2 [shape = 'f32[40,256]{1,0:T(8,128)}', space=vmem, size = 0xa000, scoped, tag = 'scratch operand']
  %s0 = inlined_call_operand.vmem [shape: bf16[40,128], index: 0, kind: input, shape index: {}]
  %s1 = inlined_call_operand.vmem [shape: bf16[128,512], index: 1, kind: input, shape index: {}]
  %s2 = inlined_call_operand.vmem [shape: f32[1,512], index: 2, kind: input, shape index: {}]
  %s3 = inlined_call_operand.vmem [shape: f32[40,512], index: 3, kind: output, shape index: {}]
  %s4 = sld [smem:[#allocation0]]
  $region110: #{alexnet_forward.20} parent=0
    _
  %s6 = ssub.s32 1, %s4
  %s7 = scalar_select 0, %s6, %s4
  $region1: #{alexnet_forward.20} parent=0
    #allocation3 [shape = 'u8[131072]{0}', space=vmem, size = 0x20000, scoped, tag = 'input window, operand 1']
    #allocation4 [shape = 'u8[81920]{0}', space=vmem, size = 0x14000, scoped, tag = 'output window, operand 0']
    loop: start=0, step=1, limit=4
    $region2: #{alexnet_forward.20} parent=1 // loop_pre_header
      _
    $region3: #{alexnet_forward.20} parent=1 // loop_header
      %s9 = sphi 0, %s13
      %p10 = scmp.ge.s32.totalorder %s9, 4
      %s16 = sphi 0, %s35
      %s17 = sphi 0, %s31
      %s18 = sphi 0, %s27
      %s19 = sphi 0, %s16
      %s20 = sphi 0, %s17
      %s21 = sphi 0, %s18
      %s22 = sphi 0, %s19
      %s23 = sphi 0, %s20
      %s24 = sphi 0, %s21
      %s40 = sphi 0, %s42
      %s43 = sphi 0, %s40
      %s44 = sphi 0, %s43
      %s60 = sphi 0, %s44
      %s68 = sphi 0, %s70
      %s71 = sphi 0, %s68
      %s72 = sphi 0, %s71
      %s88 = sphi 0, %s72
      %s94 = sphi 0, %s96
      %s97 = sphi 0, %s94
      %s98 = sphi 0, %s97
      %s114 = sphi 0, %s98
      %s122 = sphi 0, %s124
      %s125 = sphi 0, %s122
      %s126 = sphi 0, %s125
      %s142 = sphi 0, %s126
    $region4: #{alexnet_forward.20} parent=1 // loop_header_branch
      %12 = sbr.rel (%p10) target = $region8
    $region5: #{alexnet_forward.20} parent=1 // loop_body
      %s14 = ssub.s32 %s9, 1
      %s15 = ssub.s32 %s9, 2
      %s25 = sadd.s32 1, %s18
      %p26 = scmp.ge.s32.totalorder %s25, 1
      %s27 = scalar_select %p26, 0, %s25
      %s28 = sadd.s32 1, %s17
      %s29 = scalar_select %p26, %s28, %s17
      %p30 = scmp.ge.s32.totalorder %s29, 2
      %s31 = scalar_select %p30, 0, %s29
      %s32 = sadd.s32 1, %s16
      %s33 = scalar_select %p30, %s32, %s16
      %p34 = scmp.ge.s32.totalorder %s33, 1
      %s35 = scalar_select %p34, 0, %s33
      %s36 = ssub.s32 %s16, %s35
      %s37 = ssub.s32 %s18, %s27
      %s38 = sor.u32 %s36, %s37
      %p39 = scmp.eq.s32.totalorder %s38, 0
      %s41 = sadd.s32 %s40, 1
      %s42 = scalar_select %p39, %s40, %s41
      %p45 = pneg %p39
      %p46 = scmp.eq.s32.totalorder %s9, 1
      %p47 = por %p45, %p46
      %p48 = scmp.ne.s32.totalorder %s40, %s43
      %p49 = scmp.eq.s32.totalorder %s9, 0
      %p50 = por %p48, %p49
      %p51 = scmp.ne.s32.totalorder %s40, %s43
      %p52 = scmp.eq.s32.totalorder %s14, 1
      %p53 = por %p51, %p52
      %p54 = scmp.ne.s32.totalorder %s43, %s44
      %p55 = scmp.eq.s32.totalorder %s14, 0
      %p56 = por %p54, %p55
      %p57 = scmp.ne.s32.totalorder %s43, %s44
      %p58 = scmp.eq.s32.totalorder %s15, 1
      %p59 = por %p57, %p58
      %p61 = scmp.ne.s32.totalorder %s44, %s60
      %p62 = scmp.eq.s32.totalorder %s15, 0
      %p63 = por %p61, %p62
      %s64 = ssub.s32 %s18, %s27
      %s65 = ssub.s32 %s17, %s31
      %s66 = sor.u32 %s64, %s65
      %p67 = scmp.eq.s32.totalorder %s66, 0
      %s69 = sadd.s32 %s68, 1
      %s70 = scalar_select %p67, %s68, %s69
      %p73 = pneg %p67
      %p74 = scmp.eq.s32.totalorder %s9, 1
      %p75 = por %p73, %p74
      %p76 = scmp.ne.s32.totalorder %s68, %s71
      %p77 = scmp.eq.s32.totalorder %s9, 0
      %p78 = por %p76, %p77
      %p79 = scmp.ne.s32.totalorder %s68, %s71
      %p80 = scmp.eq.s32.totalorder %s14, 1
      %p81 = por %p79, %p80
      %p82 = scmp.ne.s32.totalorder %s71, %s72
      %p83 = scmp.eq.s32.totalorder %s14, 0
      %p84 = por %p82, %p83
      %p85 = scmp.ne.s32.totalorder %s71, %s72
      %p86 = scmp.eq.s32.totalorder %s15, 1
      %p87 = por %p85, %p86
      %p89 = scmp.ne.s32.totalorder %s72, %s88
      %p90 = scmp.eq.s32.totalorder %s15, 0
      %p91 = por %p89, %p90
      %s92 = ssub.s32 %s17, %s31
      %p93 = scmp.eq.s32.totalorder %s92, 0
      %s95 = sadd.s32 %s94, 1
      %s96 = scalar_select %p93, %s94, %s95
      %p99 = pneg %p93
      %p100 = scmp.eq.s32.totalorder %s9, 1
      %p101 = por %p99, %p100
      %p102 = scmp.ne.s32.totalorder %s94, %s97
      %p103 = scmp.eq.s32.totalorder %s9, 0
      %p104 = por %p102, %p103
      %p105 = scmp.ne.s32.totalorder %s94, %s97
      %p106 = scmp.eq.s32.totalorder %s14, 1
      %p107 = por %p105, %p106
      %p108 = scmp.ne.s32.totalorder %s97, %s98
      %p109 = scmp.eq.s32.totalorder %s14, 0
      %p110 = por %p108, %p109
      %p111 = scmp.ne.s32.totalorder %s97, %s98
      %p112 = scmp.eq.s32.totalorder %s15, 1
      %p113 = por %p111, %p112
      %p115 = scmp.ne.s32.totalorder %s98, %s114
      %p116 = scmp.eq.s32.totalorder %s15, 0
      %p117 = por %p115, %p116
      %s118 = ssub.s32 %s16, %s35
      %s119 = ssub.s32 %s17, %s31
      %s120 = sor.u32 %s118, %s119
      %p121 = scmp.eq.s32.totalorder %s120, 0
      %s123 = sadd.s32 %s122, 1
      %s124 = scalar_select %p121, %s122, %s123
      %p127 = pneg %p121
      %p128 = scmp.eq.s32.totalorder %s9, 1
      %p129 = por %p127, %p128
      %p130 = scmp.ne.s32.totalorder %s122, %s125
      %p131 = scmp.eq.s32.totalorder %s9, 0
      %p132 = por %p130, %p131
      %p133 = scmp.ne.s32.totalorder %s122, %s125
      %p134 = scmp.eq.s32.totalorder %s14, 1
      %p135 = por %p133, %p134
      %p136 = scmp.ne.s32.totalorder %s125, %s126
      %p137 = scmp.eq.s32.totalorder %s14, 0
      %p138 = por %p136, %p137
      %p139 = scmp.ne.s32.totalorder %s125, %s126
      %p140 = scmp.eq.s32.totalorder %s15, 1
      %p141 = por %p139, %p140
      %p143 = scmp.ne.s32.totalorder %s126, %s142
      %p144 = scmp.eq.s32.totalorder %s15, 0
      %p145 = por %p143, %p144
      %p146 = scmp.le.s32.totalorder 1, %s9
      %p147 = scmp.lt.s32.totalorder %s9, 3
      %p148 = pnand %p146, %p147
      %p149 = pneg %p148
      // Predicated region
      $region9: #{alexnet_forward.20} parent=5 // pred_check
        _
      $region10: #{alexnet_forward.20} parent=5 // pred_check_branch
        %151 = sbr.rel (%p148) target = $region12
      $region11: #{alexnet_forward.20} parent=5 // pred_region
        %s152 = ssub.s32 %s9, 1
        // Predicated region
        $region13: #{alexnet_forward.20} parent=11 // pred_check
          %p153 = pneg %p56
        $region14: #{alexnet_forward.20} parent=11 // pred_check_branch
          %155 = sbr.rel (%p153) target = $region16
        $region15: #{alexnet_forward.20} parent=11 // pred_region
          %s156 = smul.u32 5, %s19
          %p157 = scmp.lt.s32.totalorder %s156, 4
          %s158 = scalar_select %p157, %s156, 4
          %p159 = scmp.lt.s32.totalorder %s21, 0
          %s160 = scalar_select %p159, %s21, 0
          %s161 = sadd.s32 %s160, %s158
          %s162 = smul.addr %s161, 4
          %s163 = scalar_lea.vmem %s0, %s162
          %s164 = smul.u32 5, %s19
        $region16: #{alexnet_forward.20} parent=11 // pred_fallthru
          _
      $region12: #{alexnet_forward.20} parent=5 // pred_fallthru
        _
      %p165 = scmp.lt.s32.totalorder %s9, 2
      // Predicated region
      $region17: #{alexnet_forward.20} parent=5 // pred_check
        %p166 = pneg %p165
      $region18: #{alexnet_forward.20} parent=5 // pred_check_branch
        %168 = sbr.rel (%p166) target = $region20
      $region19: #{alexnet_forward.20} parent=5 // pred_region
        // Predicated region
        $region21: #{alexnet_forward.20} parent=19 // pred_check
          %p169 = pneg %p78
        $region22: #{alexnet_forward.20} parent=19 // pred_check_branch
          %171 = sbr.rel (%p169) target = $region24
        $region23: #{alexnet_forward.20} parent=19 // pred_region
          %s172 = sand.u32 %s68, 1
          %s173 = sand.u32 %s68, 1
          %s174 = smul.addr %s173, 128
          %s175 = scalar_lea.vmem [#allocation3], %s174
          %s176 = smul.u32 16, %s18
          %s177 = smul.u32 2, %s17
          %s178 = smul.addr %s176, 4
          %s179 = sadd.s32 %s177, %s178
          %s180 = smul.addr %s179, 4
          %s181 = scalar_lea.vmem %s1, %s180
          // Predicated region
          $region25: #{alexnet_forward.20} parent=23 // pred_check
            _
          $region26: #{alexnet_forward.20} parent=23 // pred_check_branch
            %183 = sbr.rel (0) target = $region28
          $region27: #{alexnet_forward.20} parent=23 // pred_region
            // Predicated region
            $region29: #{alexnet_forward.20} parent=27 // pred_check
              _
            $region30: #{alexnet_forward.20} parent=27 // pred_check_branch
              %185 = sbr.rel (0) target = $region32
            $region31: #{alexnet_forward.20} parent=27 // pred_region
              // Predicated region
              $region44: #{alexnet_forward.20} parent=31 // pred_check
                _
              $region45: #{alexnet_forward.20} parent=31 // pred_check_branch
                %231 = sbr.rel (0) target = $region47
              $region46: #{alexnet_forward.20} parent=31 // pred_region
                loop: start=0, step=1, limit=1
                $region48: #{alexnet_forward.20} parent=46 // loop_pre_header
                  _
                $region49: #{alexnet_forward.20} parent=46 // loop_header
                  %s233 = sphi 0, %s237
                  %p234 = scmp.ge.s32.totalorder %s233, 1
                  %s238 = sphi %s181, %s181
                  %s239 = sphi %s175, %s175
                $region50: #{alexnet_forward.20} parent=46 // loop_header_branch
                  %236 = sbr.rel (%p234) target = $region54
                $region51: #{alexnet_forward.20} parent=46 // loop_body
                  %v240 = vld [vmem:[%s238] sm:$0xff]
                  %241 = vst [vmem:[%s239] sm:$0xff] %v240
                  %v242 = vld [vmem:[%s238 + $0x10] sm:$0xff]
                  %243 = vst [vmem:[%s239 + $0x8] sm:$0xff] %v242
                  %v244 = vld [vmem:[%s238 + $0x20] sm:$0xff]
                  %245 = vst [vmem:[%s239 + $0x10] sm:$0xff] %v244
                  %v246 = vld [vmem:[%s238 + $0x30] sm:$0xff]
                  %247 = vst [vmem:[%s239 + $0x18] sm:$0xff] %v246
                  %v248 = vld [vmem:[%s238 + $0x40] sm:$0xff]
                  %249 = vst [vmem:[%s239 + $0x20] sm:$0xff] %v248
                  %v250 = vld [vmem:[%s238 + $0x50] sm:$0xff]
                  %251 = vst [vmem:[%s239 + $0x28] sm:$0xff] %v250
                  %v252 = vld [vmem:[%s238 + $0x60] sm:$0xff]
                  %253 = vst [vmem:[%s239 + $0x30] sm:$0xff] %v252
                  %v254 = vld [vmem:[%s238 + $0x70] sm:$0xff]
                  %255 = vst [vmem:[%s239 + $0x38] sm:$0xff] %v254
                  %v256 = vld [vmem:[%s238 + $0x80] sm:$0xff]
                  %257 = vst [vmem:[%s239 + $0x40] sm:$0xff] %v256
                  %v258 = vld [vmem:[%s238 + $0x90] sm:$0xff]
                  %259 = vst [vmem:[%s239 + $0x48] sm:$0xff] %v258
                  %v260 = vld [vmem:[%s238 + $0xa0] sm:$0xff]
                  %261 = vst [vmem:[%s239 + $0x50] sm:$0xff] %v260
                  %v262 = vld [vmem:[%s238 + $0xb0] sm:$0xff]
                  %263 = vst [vmem:[%s239 + $0x58] sm:$0xff] %v262
                  %v264 = vld [vmem:[%s238 + $0xc0] sm:$0xff]
                  %265 = vst [vmem:[%s239 + $0x60] sm:$0xff] %v264
                  %v266 = vld [vmem:[%s238 + $0xd0] sm:$0xff]
                  %267 = vst [vmem:[%s239 + $0x68] sm:$0xff] %v266
                  %v268 = vld [vmem:[%s238 + $0xe0] sm:$0xff]
                  %269 = vst [vmem:[%s239 + $0x70] sm:$0xff] %v268
                  %v270 = vld [vmem:[%s238 + $0xf0] sm:$0xff]
                  %271 = vst [vmem:[%s239 + $0x78] sm:$0xff] %v270
                $region52: #{alexnet_forward.20} parent=46 // loop_footer
                  %s237 = sadd.s32 1, %s233
                $region53: #{alexnet_forward.20} parent=46 // loop_footer_branch
                  %232 = sbr.rel target = $region49
                $region54: #{alexnet_forward.20} parent=46 // loop_exit
                  _
              $region47: #{alexnet_forward.20} parent=31 // pred_fallthru
                _
              // Predicated region
              $region55: #{alexnet_forward.20} parent=31 // pred_check
                _
              $region56: #{alexnet_forward.20} parent=31 // pred_check_branch
                %273 = sbr.rel target = $region58
              $region57: #{alexnet_forward.20} parent=31 // pred_region
                _
              $region58: #{alexnet_forward.20} parent=31 // pred_fallthru
                _
            $region32: #{alexnet_forward.20} parent=27 // pred_fallthru
              _
            // Predicated region
            $region33: #{alexnet_forward.20} parent=27 // pred_check
              _
            $region34: #{alexnet_forward.20} parent=27 // pred_check_branch
              %187 = sbr.rel target = $region36
            $region35: #{alexnet_forward.20} parent=27 // pred_region
              %s189 = ssub.s32 256, 1
              loop: start=0, step=1, limit=1
              $region37: #{alexnet_forward.20} parent=35 // loop_pre_header
                _
              $region38: #{alexnet_forward.20} parent=35 // loop_header
                %s191 = sphi 0, %s195
                %p192 = scmp.ge.s32.totalorder %s191, 1
                %s196 = sphi %s181, %s181
                %s197 = sphi %s175, %s175
              $region39: #{alexnet_forward.20} parent=35 // loop_header_branch
                %194 = sbr.rel (%p192) target = $region43
              $region40: #{alexnet_forward.20} parent=35 // loop_body
                %v198 = vld [vmem:[%s196] sm:%s189]
                %199 = vst [vmem:[%s197] sm:%s189] %v198
                %v200 = vld [vmem:[%s196 + $0x10] sm:%s189]
                %201 = vst [vmem:[%s197 + $0x8] sm:%s189] %v200
                %v202 = vld [vmem:[%s196 + $0x20] sm:%s189]
                %203 = vst [vmem:[%s197 + $0x10] sm:%s189] %v202
                %v204 = vld [vmem:[%s196 + $0x30] sm:%s189]
                %205 = vst [vmem:[%s197 + $0x18] sm:%s189] %v204
                %v206 = vld [vmem:[%s196 + $0x40] sm:%s189]
                %207 = vst [vmem:[%s197 + $0x20] sm:%s189] %v206
                %v208 = vld [vmem:[%s196 + $0x50] sm:%s189]
                %209 = vst [vmem:[%s197 + $0x28] sm:%s189] %v208
                %v210 = vld [vmem:[%s196 + $0x60] sm:%s189]
                %211 = vst [vmem:[%s197 + $0x30] sm:%s189] %v210
                %v212 = vld [vmem:[%s196 + $0x70] sm:%s189]
                %213 = vst [vmem:[%s197 + $0x38] sm:%s189] %v212
                %v214 = vld [vmem:[%s196 + $0x80] sm:%s189]
                %215 = vst [vmem:[%s197 + $0x40] sm:%s189] %v214
                %v216 = vld [vmem:[%s196 + $0x90] sm:%s189]
                %217 = vst [vmem:[%s197 + $0x48] sm:%s189] %v216
                %v218 = vld [vmem:[%s196 + $0xa0] sm:%s189]
                %219 = vst [vmem:[%s197 + $0x50] sm:%s189] %v218
                %v220 = vld [vmem:[%s196 + $0xb0] sm:%s189]
                %221 = vst [vmem:[%s197 + $0x58] sm:%s189] %v220
                %v222 = vld [vmem:[%s196 + $0xc0] sm:%s189]
                %223 = vst [vmem:[%s197 + $0x60] sm:%s189] %v222
                %v224 = vld [vmem:[%s196 + $0xd0] sm:%s189]
                %225 = vst [vmem:[%s197 + $0x68] sm:%s189] %v224
                %v226 = vld [vmem:[%s196 + $0xe0] sm:%s189]
                %227 = vst [vmem:[%s197 + $0x70] sm:%s189] %v226
                %v228 = vld [vmem:[%s196 + $0xf0] sm:%s189]
                %229 = vst [vmem:[%s197 + $0x78] sm:%s189] %v228
              $region41: #{alexnet_forward.20} parent=35 // loop_footer
                %s195 = sadd.s32 1, %s191
              $region42: #{alexnet_forward.20} parent=35 // loop_footer_branch
                %190 = sbr.rel target = $region38
              $region43: #{alexnet_forward.20} parent=35 // loop_exit
                _
            $region36: #{alexnet_forward.20} parent=27 // pred_fallthru
              _
          $region28: #{alexnet_forward.20} parent=23 // pred_fallthru
            _
          %274 = vnop
        $region24: #{alexnet_forward.20} parent=19 // pred_fallthru
          _
        // Predicated region
        $region59: #{alexnet_forward.20} parent=19 // pred_check
          %p275 = pneg %p104
        $region60: #{alexnet_forward.20} parent=19 // pred_check_branch
          %277 = sbr.rel (%p275) target = $region62
        $region61: #{alexnet_forward.20} parent=19 // pred_region
          %s278 = smul.u32 2, %s17
          %p279 = scmp.lt.s32.totalorder %s278, 3
          %s280 = scalar_select %p279, %s278, 3
          %s281 = scalar_lea.vmem %s2, %s280
          %s282 = smul.u32 2, %s17
        $region62: #{alexnet_forward.20} parent=19 // pred_fallthru
          _
      $region20: #{alexnet_forward.20} parent=5 // pred_fallthru
        _
      %p283 = scmp.le.s32.totalorder 1, %s9
      %p284 = scmp.lt.s32.totalorder %s9, 3
      %p285 = pnand %p283, %p284
      %p286 = pneg %p285
      // Predicated region
      $region63: #{alexnet_forward.20} parent=5 // pred_check
        _
      $region64: #{alexnet_forward.20} parent=5 // pred_check_branch
        %288 = sbr.rel (%p285) target = $region66
      $region65: #{alexnet_forward.20} parent=5 // pred_region
        %s289 = ssub.s32 %s9, 1
        %s290 = sand.u32 %s71, 1
        %s291 = sand.u32 %s71, 1
        %s292 = smul.addr %s291, 128
        %s293 = scalar_lea.vmem [#allocation3], %s292
        // Predicated region
        $region67: #{alexnet_forward.20} parent=65 // pred_check
          %p294 = pneg %p84
        $region68: #{alexnet_forward.20} parent=65 // pred_check_branch
          %296 = sbr.rel (%p294) target = $region70
        $region69: #{alexnet_forward.20} parent=65 // pred_region
          _
        $region70: #{alexnet_forward.20} parent=65 // pred_fallthru
          _
        %s297 = smul.u32 5, %s19
        %p298 = scmp.lt.s32.totalorder %s297, 4
        %s299 = scalar_select %p298, %s297, 4
        %p300 = scmp.lt.s32.totalorder %s21, 0
        %s301 = scalar_select %p300, %s21, 0
        %s302 = sadd.s32 %s301, %s299
        %s303 = smul.addr %s302, 4
        %s304 = scalar_lea.vmem %s0, %s303
        %p305 = pneg %p56
        %p306 = pneg %p53
        %s307 = sand.u32 %s71, 1
        %s308 = sand.u32 %s71, 1
        %s309 = smul.addr %s308, 128
        %s310 = scalar_lea.vmem [#allocation3], %s309
        %p311 = pneg %p84
        %p312 = pneg %p81
        %s313 = smul.u32 2, %s20
        %p314 = scmp.lt.s32.totalorder %s313, 3
        %s315 = scalar_select %p314, %s313, 3
        %s316 = scalar_lea.vmem %s2, %s315
        %p317 = pneg %p110
        %p318 = pneg %p107
        %p319 = pneg %p138
        %p320 = pneg %p135
        %s321 = sand.u32 %s125, 1
        %s322 = sand.u32 %s125, 1
        %s323 = smul.addr %s322, 80
        %s324 = scalar_lea.vmem [#allocation4], %s323
        %s325 = smul.u32 5, %s19
        %p326 = scmp.lt.s32.totalorder %s325, 4
        %s327 = scalar_select %p326, %s325, 4
        %p328 = scmp.lt.s32.totalorder %s21, 0
        %s329 = scalar_select %p328, %s21, 0
        %s330 = sadd.s32 %s329, %s327
        %s331 = smul.addr %s330, 4
        %s332 = scalar_lea.vmem %s0, %s331
        %s333 = smul.u32 5, %s19
        %s334 = smul.u32 16, %s21
        %s335 = smul.u32 2, %s20
        %s336 = smul.u32 2, %s20
        %p337 = scmp.lt.s32.totalorder %s336, 3
        %s338 = scalar_select %p337, %s336, 3
        %s339 = scalar_lea.vmem %s2, %s338
        %s340 = smul.u32 2, %s20
        %s341 = smul.u32 5, %s19
        %s342 = smul.u32 2, %s20
        %p343 = scmp.eq.s32.totalorder %s21, 0
        // Predicated region
        $region71: #{alexnet_forward.20} parent=65 // pred_check
          %p344 = pneg %p343
        $region72: #{alexnet_forward.20} parent=65 // pred_check_branch
          %346 = sbr.rel (%p344) target = $region74
        $region73: #{alexnet_forward.20} parent=65 // pred_region
          %347 = vst [vmem:[#allocation2] sm:$0xff] 0.0
          %348 = vst [vmem:[#allocation2 + $0x8] sm:$0xff] 0.0
          %349 = vst [vmem:[#allocation2 + $0x10] sm:$0xff] 0.0
          %350 = vst [vmem:[#allocation2 + $0x18] sm:$0xff] 0.0
          %351 = vst [vmem:[#allocation2 + $0x20] sm:$0xff] 0.0
          %352 = vst [vmem:[#allocation2 + $0x28] sm:$0xff] 0.0
          %353 = vst [vmem:[#allocation2 + $0x30] sm:$0xff] 0.0
          %354 = vst [vmem:[#allocation2 + $0x38] sm:$0xff] 0.0
          %355 = vst [vmem:[#allocation2 + $0x40] sm:$0xff] 0.0
          %356 = vst [vmem:[#allocation2 + $0x48] sm:$0xff] 0.0
        $region74: #{alexnet_forward.20} parent=65 // pred_fallthru
          _
        %v357 = vld [vmem:[#allocation2] sm:$0xff]
        %v358 = vld [vmem:[#allocation2 + $0x8] sm:$0xff]
        %v359 = vld [vmem:[#allocation2 + $0x10] sm:$0xff]
        %v360 = vld [vmem:[#allocation2 + $0x18] sm:$0xff]
        %v361 = vld [vmem:[#allocation2 + $0x20] sm:$0xff]
        %v362 = vld [vmem:[#allocation2 + $0x28] sm:$0xff]
        %v363 = vld [vmem:[#allocation2 + $0x30] sm:$0xff]
        %v364 = vld [vmem:[#allocation2 + $0x38] sm:$0xff]
        %v365 = vld [vmem:[#allocation2 + $0x40] sm:$0xff]
        %v366 = vld [vmem:[#allocation2 + $0x48] sm:$0xff]
        %v367 = vld [vmem:[%s332] sm:$0xf]
        %v368 = vld [vmem:[%s332 + $0x4] sm:$0xf]
        %v369 = vld [vmem:[%s332 + $0x8] sm:$0xf]
        %v370 = vld [vmem:[%s332 + $0xc] sm:$0xf]
        %v371 = vld [vmem:[%s332 + $0x10] sm:$0xf]
        %v372 = vld [vmem:[%s293] sm:$0xff]
        %v373 = vld [vmem:[%s293 + $0x8] sm:$0xff]
        %v374 = vld [vmem:[%s293 + $0x10] sm:$0xff]
        %v375 = vld [vmem:[%s293 + $0x18] sm:$0xff]
        %v376 = vld [vmem:[%s293 + $0x20] sm:$0xff]
        %v377 = vld [vmem:[%s293 + $0x28] sm:$0xff]
        %v378 = vld [vmem:[%s293 + $0x30] sm:$0xff]
        %v379 = vld [vmem:[%s293 + $0x38] sm:$0xff]
        %v380 = vld [vmem:[%s293 + $0x40] sm:$0xff]
        %v381 = vld [vmem:[%s293 + $0x48] sm:$0xff]
        %v382 = vld [vmem:[%s293 + $0x50] sm:$0xff]
        %v383 = vld [vmem:[%s293 + $0x58] sm:$0xff]
        %v384 = vld [vmem:[%s293 + $0x60] sm:$0xff]
        %v385 = vld [vmem:[%s293 + $0x68] sm:$0xff]
        %v386 = vld [vmem:[%s293 + $0x70] sm:$0xff]
        %v387 = vld [vmem:[%s293 + $0x78] sm:$0xff]
        %v393 = vunpack.c.l.b16 %v367
        %v394 = vunpack.c.l.b16 %v368
        %v395 = vunpack.c.l.b16 %v369
        %v396 = vunpack.c.l.b16 %v370
        %v397 = vunpack.c.l.b16 %v371
        %v398 = vpack.c.b16 %v394, %v393
        %v399 = vpack.c.b16 %v396, %v395
        %v400 = vpack.c.b16 %v397, %v397
        %v420 = vunpack.c.l.b16 %v372
        %v421 = vunpack.c.h.b16 %v372
        %v422 = vunpack.c.l.b16 %v373
        %v423 = vunpack.c.h.b16 %v373
        %v424 = vunpack.c.l.b16 %v374
        %v425 = vunpack.c.h.b16 %v374
        %v426 = vunpack.c.l.b16 %v375
        %v427 = vunpack.c.h.b16 %v375
        %v428 = vunpack.c.l.b16 %v376
        %v429 = vunpack.c.h.b16 %v376
        %v430 = vunpack.c.l.b16 %v377
        %v431 = vunpack.c.h.b16 %v377
        %v432 = vunpack.c.l.b16 %v378
        %v433 = vunpack.c.h.b16 %v378
        %v434 = vunpack.c.l.b16 %v379
        %v435 = vunpack.c.h.b16 %v379
        %v436 = vunpack.c.l.b16 %v380
        %v437 = vunpack.c.h.b16 %v380
        %v438 = vunpack.c.l.b16 %v381
        %v439 = vunpack.c.h.b16 %v381
        %v440 = vunpack.c.l.b16 %v382
        %v441 = vunpack.c.h.b16 %v382
        %v442 = vunpack.c.l.b16 %v383
        %v443 = vunpack.c.h.b16 %v383
        %v444 = vunpack.c.l.b16 %v384
        %v445 = vunpack.c.h.b16 %v384
        %v446 = vunpack.c.l.b16 %v385
        %v447 = vunpack.c.h.b16 %v385
        %v448 = vunpack.c.l.b16 %v386
        %v449 = vunpack.c.h.b16 %v386
        %v450 = vunpack.c.l.b16 %v387
        %v451 = vunpack.c.h.b16 %v387
        %v452 = vpack.c.b16 %v422, %v420
        %v453 = vpack.c.b16 %v423, %v421
        %v454 = vpack.c.b16 %v426, %v424
        %v455 = vpack.c.b16 %v427, %v425
        %v456 = vpack.c.b16 %v430, %v428
        %v457 = vpack.c.b16 %v431, %v429
        %v458 = vpack.c.b16 %v434, %v432
        %v459 = vpack.c.b16 %v435, %v433
        %v460 = vpack.c.b16 %v438, %v436
        %v461 = vpack.c.b16 %v439, %v437
        %v462 = vpack.c.b16 %v442, %v440
        %v463 = vpack.c.b16 %v443, %v441
        %v464 = vpack.c.b16 %v446, %v444
        %v465 = vpack.c.b16 %v447, %v445
        %v466 = vpack.c.b16 %v450, %v448
        %v467 = vpack.c.b16 %v451, %v449
        %484 = vmatpush.bf16.msra.mxu0 %v466
        %485 = vmatpush.bf16.msra.mxu0 %v464
        %486 = vmatpush.bf16.msra.mxu0 %v462
        %487 = vmatpush.bf16.msra.mxu0 %v460
        %488 = vmatpush.bf16.msra.mxu0 %v458
        %489 = vmatpush.bf16.msra.mxu0 %v456
        %490 = vmatpush.bf16.msra.mxu0 %v454
        %491 = vmatpush.bf16.msra.mxu0 %v452
        %492 = vmatmul.bf16.gmra.mxu0 %v398
        %v493 = vpop.f32.mrf.mxu0
        %v494 = vadd.f32 0.0, %v493
        %v495 = vpop.f32.mrf.mxu0
        %v496 = vadd.f32 0.0, %v495
        %497 = vmatmul.bf16.gmra.mxu0 %v399
        %v498 = vpop.f32.mrf.mxu0
        %v499 = vadd.f32 0.0, %v498
        %v500 = vpop.f32.mrf.mxu0
        %v501 = vadd.f32 0.0, %v500
        %502 = vmatmul.bf16.gmra.mxu0 %v400
        %v503 = vpop.f32.mrf.mxu0
        %v504 = vadd.f32 0.0, %v503
        %v505 = vpop.f32.mrf.mxu0
        %506 = vdwg.mxu0
        %507 = vmatpush.bf16.msra.mxu0 %v467
        %508 = vmatpush.bf16.msra.mxu0 %v465
        %509 = vmatpush.bf16.msra.mxu0 %v463
        %510 = vmatpush.bf16.msra.mxu0 %v461
        %511 = vmatpush.bf16.msra.mxu0 %v459
        %512 = vmatpush.bf16.msra.mxu0 %v457
        %513 = vmatpush.bf16.msra.mxu0 %v455
        %514 = vmatpush.bf16.msra.mxu0 %v453
        %515 = vmatmul.bf16.gmra.mxu0 %v398
        %v516 = vpop.f32.mrf.mxu0
        %v517 = vadd.f32 0.0, %v516
        %v518 = vpop.f32.mrf.mxu0
        %v519 = vadd.f32 0.0, %v518
        %520 = vmatmul.bf16.gmra.mxu0 %v399
        %v521 = vpop.f32.mrf.mxu0
        %v522 = vadd.f32 0.0, %v521
        %v523 = vpop.f32.mrf.mxu0
        %v524 = vadd.f32 0.0, %v523
        %525 = vmatmul.bf16.gmra.mxu0 %v400
        %v526 = vpop.f32.mrf.mxu0
        %v527 = vadd.f32 0.0, %v526
        %v528 = vpop.f32.mrf.mxu0
        %529 = vdwg.mxu0
        %v530 = vadd.f32 %v357, %v494
        %v531 = vadd.f32 %v358, %v517
        %v532 = vadd.f32 %v359, %v496
        %v533 = vadd.f32 %v360, %v519
        %v534 = vadd.f32 %v361, %v499
        %v535 = vadd.f32 %v362, %v522
        %v536 = vadd.f32 %v363, %v501
        %v537 = vadd.f32 %v364, %v524
        %v538 = vadd.f32 %v365, %v504
        %v539 = vadd.f32 %v366, %v527
        %540 = vst [vmem:[#allocation2] sm:$0xff] %v530
        %541 = vst [vmem:[#allocation2 + $0x8] sm:$0xff] %v531
        %542 = vst [vmem:[#allocation2 + $0x10] sm:$0xff] %v532
        %543 = vst [vmem:[#allocation2 + $0x18] sm:$0xff] %v533
        %544 = vst [vmem:[#allocation2 + $0x20] sm:$0xff] %v534
        %545 = vst [vmem:[#allocation2 + $0x28] sm:$0xff] %v535
        %546 = vst [vmem:[#allocation2 + $0x30] sm:$0xff] %v536
        %547 = vst [vmem:[#allocation2 + $0x38] sm:$0xff] %v537
        %548 = vst [vmem:[#allocation2 + $0x40] sm:$0xff] %v538
        %549 = vst [vmem:[#allocation2 + $0x48] sm:$0xff] %v539
        // Predicated region
        $region75: #{alexnet_forward.20} parent=65 // pred_check
          %p550 = pneg %p343
        $region76: #{alexnet_forward.20} parent=65 // pred_check_branch
          %552 = sbr.rel (%p550) target = $region78
        $region77: #{alexnet_forward.20} parent=65 // pred_region
          %v553 = vld [vmem:[#allocation2] sm:$0xff]
          %v554 = vld [vmem:[#allocation2 + $0x8] sm:$0xff]
          %v555 = vld [vmem:[#allocation2 + $0x10] sm:$0xff]
          %v556 = vld [vmem:[#allocation2 + $0x18] sm:$0xff]
          %v557 = vld [vmem:[#allocation2 + $0x20] sm:$0xff]
          %v558 = vld [vmem:[#allocation2 + $0x28] sm:$0xff]
          %v559 = vld [vmem:[#allocation2 + $0x30] sm:$0xff]
          %v560 = vld [vmem:[#allocation2 + $0x38] sm:$0xff]
          %v561 = vld [vmem:[#allocation2 + $0x40] sm:$0xff]
          %v562 = vld [vmem:[#allocation2 + $0x48] sm:$0xff]
          %v563 = vld [vmem:[%s339] sm:$0x3]
          %v565 = vperm.slane %v563, 0
          %v566 = vperm.slane %v563, 1
          %v569 = vadd.f32 %v553, %v565
          %v570 = vadd.f32 %v554, %v566
          %v571 = vadd.f32 %v555, %v565
          %v572 = vadd.f32 %v556, %v566
          %v573 = vadd.f32 %v557, %v565
          %v574 = vadd.f32 %v558, %v566
          %v575 = vadd.f32 %v559, %v565
          %v576 = vadd.f32 %v560, %v566
          %v577 = vadd.f32 %v561, %v565
          %v578 = vadd.f32 %v562, %v566
          %579 = vst [vmem:[%s324] sm:$0xff] %v569
          %580 = vst [vmem:[%s324 + $0x8] sm:$0xff] %v570
          %581 = vst [vmem:[%s324 + $0x10] sm:$0xff] %v571
          %582 = vst [vmem:[%s324 + $0x18] sm:$0xff] %v572
          %583 = vst [vmem:[%s324 + $0x20] sm:$0xff] %v573
          %584 = vst [vmem:[%s324 + $0x28] sm:$0xff] %v574
          %585 = vst [vmem:[%s324 + $0x30] sm:$0xff] %v575
          %586 = vst [vmem:[%s324 + $0x38] sm:$0xff] %v576
          %587 = vst [vmem:[%s324 + $0x40] sm:$0xff] %v577
          %588 = vst [vmem:[%s324 + $0x48] sm:$0xff] %v578
        $region78: #{alexnet_forward.20} parent=65 // pred_fallthru
          _
        %s589 = sand.u32 %s125, 1
        %s590 = sand.u32 %s125, 1
        %s591 = smul.addr %s590, 80
        %s592 = scalar_lea.vmem [#allocation4], %s591
        // Predicated region
        $region79: #{alexnet_forward.20} parent=65 // pred_check
          %p593 = pneg %p135
        $region80: #{alexnet_forward.20} parent=65 // pred_check_branch
          %595 = sbr.rel (%p593) target = $region82
        $region81: #{alexnet_forward.20} parent=65 // pred_region
          %s596 = smul.u32 5, %s19
          %s597 = smul.u32 2, %s20
          %s598 = smul.addr %s596, 4
          %s599 = sadd.s32 %s597, %s598
          %s600 = smul.addr %s599, 8
          %s601 = scalar_lea.vmem %s3, %s600
          // Predicated region
          $region83: #{alexnet_forward.20} parent=81 // pred_check
            _
          $region84: #{alexnet_forward.20} parent=81 // pred_check_branch
            %603 = sbr.rel (0) target = $region86
          $region85: #{alexnet_forward.20} parent=81 // pred_region
            // Predicated region
            $region87: #{alexnet_forward.20} parent=85 // pred_check
              _
            $region88: #{alexnet_forward.20} parent=85 // pred_check_branch
              %605 = sbr.rel (0) target = $region90
            $region89: #{alexnet_forward.20} parent=85 // pred_region
              loop: start=0, step=1, limit=1
              $region91: #{alexnet_forward.20} parent=89 // loop_pre_header
                _
              $region92: #{alexnet_forward.20} parent=89 // loop_header
                %s607 = sphi 0, %s611
                %p608 = scmp.ge.s32.totalorder %s607, 1
                %s612 = sphi %s592, %s592
                %s613 = sphi %s601, %s601
              $region93: #{alexnet_forward.20} parent=89 // loop_header_branch
                %610 = sbr.rel (%p608) target = $region97
              $region94: #{alexnet_forward.20} parent=89 // loop_body
                %v614 = vld [vmem:[%s612] sm:$0xff]
                %615 = vst [vmem:[%s613] sm:$0xff] %v614
                %v616 = vld [vmem:[%s612 + $0x8] sm:$0xff]
                %617 = vst [vmem:[%s613 + $0x8] sm:$0xff] %v616
                %v618 = vld [vmem:[%s612 + $0x10] sm:$0xff]
                %619 = vst [vmem:[%s613 + $0x20] sm:$0xff] %v618
                %v620 = vld [vmem:[%s612 + $0x18] sm:$0xff]
                %621 = vst [vmem:[%s613 + $0x28] sm:$0xff] %v620
                %v622 = vld [vmem:[%s612 + $0x20] sm:$0xff]
                %623 = vst [vmem:[%s613 + $0x40] sm:$0xff] %v622
                %v624 = vld [vmem:[%s612 + $0x28] sm:$0xff]
                %625 = vst [vmem:[%s613 + $0x48] sm:$0xff] %v624
                %v626 = vld [vmem:[%s612 + $0x30] sm:$0xff]
                %627 = vst [vmem:[%s613 + $0x60] sm:$0xff] %v626
                %v628 = vld [vmem:[%s612 + $0x38] sm:$0xff]
                %629 = vst [vmem:[%s613 + $0x68] sm:$0xff] %v628
                %v630 = vld [vmem:[%s612 + $0x40] sm:$0xff]
                %631 = vst [vmem:[%s613 + $0x80] sm:$0xff] %v630
                %v632 = vld [vmem:[%s612 + $0x48] sm:$0xff]
                %633 = vst [vmem:[%s613 + $0x88] sm:$0xff] %v632
              $region95: #{alexnet_forward.20} parent=89 // loop_footer
                %s611 = sadd.s32 1, %s607
              $region96: #{alexnet_forward.20} parent=89 // loop_footer_branch
                %606 = sbr.rel target = $region92
              $region97: #{alexnet_forward.20} parent=89 // loop_exit
                _
            $region90: #{alexnet_forward.20} parent=85 // pred_fallthru
              _
            // Predicated region
            $region98: #{alexnet_forward.20} parent=85 // pred_check
              _
            $region99: #{alexnet_forward.20} parent=85 // pred_check_branch
              %635 = sbr.rel target = $region101
            $region100: #{alexnet_forward.20} parent=85 // pred_region
              _
            $region101: #{alexnet_forward.20} parent=85 // pred_fallthru
              _
          $region86: #{alexnet_forward.20} parent=81 // pred_fallthru
            _
          %636 = vnop
        $region82: #{alexnet_forward.20} parent=65 // pred_fallthru
          _
      $region66: #{alexnet_forward.20} parent=5 // pred_fallthru
        _
      %p637 = scmp.le.s32.totalorder 2, %s9
      // Predicated region
      $region102: #{alexnet_forward.20} parent=5 // pred_check
        %p638 = pneg %p637
      $region103: #{alexnet_forward.20} parent=5 // pred_check_branch
        %640 = sbr.rel (%p638) target = $region105
      $region104: #{alexnet_forward.20} parent=5 // pred_region
        %s641 = ssub.s32 %s9, 2
        // Predicated region
        $region106: #{alexnet_forward.20} parent=104 // pred_check
          %p642 = pneg %p141
        $region107: #{alexnet_forward.20} parent=104 // pred_check_branch
          %644 = sbr.rel (%p642) target = $region109
        $region108: #{alexnet_forward.20} parent=104 // pred_region
          %s645 = sand.u32 %s126, 1
          %s646 = sand.u32 %s126, 1
          %s647 = smul.addr %s646, 80
          %s648 = scalar_lea.vmem [#allocation4], %s647
        $region109: #{alexnet_forward.20} parent=104 // pred_fallthru
          _
      $region105: #{alexnet_forward.20} parent=5 // pred_fallthru
        _
    $region6: #{alexnet_forward.20} parent=1 // loop_footer
      %s13 = sadd.s32 1, %s9
    $region7: #{alexnet_forward.20} parent=1 // loop_footer_branch
      %8 = sbr.rel target = $region3
    $region8: #{alexnet_forward.20} parent=1 // loop_exit
      _

// kernel: alexnet_forward.21
$region0: #{alexnet_forward.21}
  #allocation0 [shape = 'u32[]', space=smem, size = 0x4, offset = 0x4, fixed_abs, tag = 'smem constant byte address 0x4 - core index']
  #allocation1 [shape = 'u32[72,128]{1,0:T(1,128)}', space=vmem, size = 0x9000, scoped, tag = 'internal scratch']
  #allocation2 [shape = 'f32[8,256]{1,0:T(8,128)}', space=vmem, size = 0x2000, scoped, tag = 'scratch operand']
  %s0 = inlined_call_operand.vmem [shape: bf16[8,9216], index: 0, kind: input, shape index: {}]
  %s1 = inlined_call_operand.vmem [shape: bf16[9216,4096], index: 1, kind: input, shape index: {}]
  %s2 = inlined_call_operand.vmem [shape: f32[1,4096], index: 2, kind: input, shape index: {}]
  %s3 = inlined_call_operand.vmem [shape: f32[8,4096], index: 3, kind: output, shape index: {}]
  %s4 = sld [smem:[#allocation0]]
  $region91: #{alexnet_forward.21} parent=0
    _
  %s6 = ssub.s32 1, %s4
  %s7 = scalar_select 0, %s6, %s4
  $region1: #{alexnet_forward.21} parent=0
    #allocation3 [shape = 'u8[524288]{0}', space=vmem, size = 0x80000, scoped, tag = 'input window, operand 1']
    loop: start=0, step=1, limit=290
    $region2: #{alexnet_forward.21} parent=1 // loop_pre_header
      _
    $region3: #{alexnet_forward.21} parent=1 // loop_header
      %s9 = sphi 0, %s13
      %p10 = scmp.ge.s32.totalorder %s9, 290
      %s16 = sphi 0, %s35
      %s17 = sphi 0, %s31
      %s18 = sphi 0, %s27
      %s19 = sphi 0, %s16
      %s20 = sphi 0, %s17
      %s21 = sphi 0, %s18
      %s22 = sphi 0, %s19
      %s23 = sphi 0, %s20
      %s24 = sphi 0, %s21
      %s40 = sphi 0, %s42
      %s43 = sphi 0, %s40
      %s44 = sphi 0, %s43
      %s60 = sphi 0, %s44
      %s68 = sphi 0, %s70
      %s71 = sphi 0, %s68
      %s72 = sphi 0, %s71
      %s88 = sphi 0, %s72
      %s94 = sphi 0, %s96
      %s97 = sphi 0, %s94
      %s98 = sphi 0, %s97
      %s114 = sphi 0, %s98
      %s122 = sphi 0, %s124
      %s125 = sphi 0, %s122
      %s126 = sphi 0, %s125
      %s142 = sphi 0, %s126
    $region4: #{alexnet_forward.21} parent=1 // loop_header_branch
      %12 = sbr.rel (%p10) target = $region8
    $region5: #{alexnet_forward.21} parent=1 // loop_body
      %s14 = ssub.s32 %s9, 1
      %s15 = ssub.s32 %s9, 2
      %s25 = sadd.s32 1, %s18
      %p26 = scmp.ge.s32.totalorder %s25, 18
      %s27 = scalar_select %p26, 0, %s25
      %s28 = sadd.s32 1, %s17
      %s29 = scalar_select %p26, %s28, %s17
      %p30 = scmp.ge.s32.totalorder %s29, 16
      %s31 = scalar_select %p30, 0, %s29
      %s32 = sadd.s32 1, %s16
      %s33 = scalar_select %p30, %s32, %s16
      %p34 = scmp.ge.s32.totalorder %s33, 1
      %s35 = scalar_select %p34, 0, %s33
      %s36 = ssub.s32 %s16, %s35
      %s37 = ssub.s32 %s18, %s27
      %s38 = sor.u32 %s36, %s37
      %p39 = scmp.eq.s32.totalorder %s38, 0
      %s41 = sadd.s32 %s40, 1
      %s42 = scalar_select %p39, %s40, %s41
      %p45 = pneg %p39
      %p46 = scmp.eq.s32.totalorder %s9, 287
      %p47 = por %p45, %p46
      %p48 = scmp.ne.s32.totalorder %s40, %s43
      %p49 = scmp.eq.s32.totalorder %s9, 0
      %p50 = por %p48, %p49
      %p51 = scmp.ne.s32.totalorder %s40, %s43
      %p52 = scmp.eq.s32.totalorder %s14, 287
      %p53 = por %p51, %p52
      %p54 = scmp.ne.s32.totalorder %s43, %s44
      %p55 = scmp.eq.s32.totalorder %s14, 0
      %p56 = por %p54, %p55
      %p57 = scmp.ne.s32.totalorder %s43, %s44
      %p58 = scmp.eq.s32.totalorder %s15, 287
      %p59 = por %p57, %p58
      %p61 = scmp.ne.s32.totalorder %s44, %s60
      %p62 = scmp.eq.s32.totalorder %s15, 0
      %p63 = por %p61, %p62
      %s64 = ssub.s32 %s18, %s27
      %s65 = ssub.s32 %s17, %s31
      %s66 = sor.u32 %s64, %s65
      %p67 = scmp.eq.s32.totalorder %s66, 0
      %s69 = sadd.s32 %s68, 1
      %s70 = scalar_select %p67, %s68, %s69
      %p73 = pneg %p67
      %p74 = scmp.eq.s32.totalorder %s9, 287
      %p75 = por %p73, %p74
      %p76 = scmp.ne.s32.totalorder %s68, %s71
      %p77 = scmp.eq.s32.totalorder %s9, 0
      %p78 = por %p76, %p77
      %p79 = scmp.ne.s32.totalorder %s68, %s71
      %p80 = scmp.eq.s32.totalorder %s14, 287
      %p81 = por %p79, %p80
      %p82 = scmp.ne.s32.totalorder %s71, %s72
      %p83 = scmp.eq.s32.totalorder %s14, 0
      %p84 = por %p82, %p83
      %p85 = scmp.ne.s32.totalorder %s71, %s72
      %p86 = scmp.eq.s32.totalorder %s15, 287
      %p87 = por %p85, %p86
      %p89 = scmp.ne.s32.totalorder %s72, %s88
      %p90 = scmp.eq.s32.totalorder %s15, 0
      %p91 = por %p89, %p90
      %s92 = ssub.s32 %s17, %s31
      %p93 = scmp.eq.s32.totalorder %s92, 0
      %s95 = sadd.s32 %s94, 1
      %s96 = scalar_select %p93, %s94, %s95
      %p99 = pneg %p93
      %p100 = scmp.eq.s32.totalorder %s9, 287
      %p101 = por %p99, %p100
      %p102 = scmp.ne.s32.totalorder %s94, %s97
      %p103 = scmp.eq.s32.totalorder %s9, 0
      %p104 = por %p102, %p103
      %p105 = scmp.ne.s32.totalorder %s94, %s97
      %p106 = scmp.eq.s32.totalorder %s14, 287
      %p107 = por %p105, %p106
      %p108 = scmp.ne.s32.totalorder %s97, %s98
      %p109 = scmp.eq.s32.totalorder %s14, 0
      %p110 = por %p108, %p109
      %p111 = scmp.ne.s32.totalorder %s97, %s98
      %p112 = scmp.eq.s32.totalorder %s15, 287
      %p113 = por %p111, %p112
      %p115 = scmp.ne.s32.totalorder %s98, %s114
      %p116 = scmp.eq.s32.totalorder %s15, 0
      %p117 = por %p115, %p116
      %s118 = ssub.s32 %s16, %s35
      %s119 = ssub.s32 %s17, %s31
      %s120 = sor.u32 %s118, %s119
      %p121 = scmp.eq.s32.totalorder %s120, 0
      %s123 = sadd.s32 %s122, 1
      %s124 = scalar_select %p121, %s122, %s123
      %p127 = pneg %p121
      %p128 = scmp.eq.s32.totalorder %s9, 287
      %p129 = por %p127, %p128
      %p130 = scmp.ne.s32.totalorder %s122, %s125
      %p131 = scmp.eq.s32.totalorder %s9, 0
      %p132 = por %p130, %p131
      %p133 = scmp.ne.s32.totalorder %s122, %s125
      %p134 = scmp.eq.s32.totalorder %s14, 287
      %p135 = por %p133, %p134
      %p136 = scmp.ne.s32.totalorder %s125, %s126
      %p137 = scmp.eq.s32.totalorder %s14, 0
      %p138 = por %p136, %p137
      %p139 = scmp.ne.s32.totalorder %s125, %s126
      %p140 = scmp.eq.s32.totalorder %s15, 287
      %p141 = por %p139, %p140
      %p143 = scmp.ne.s32.totalorder %s126, %s142
      %p144 = scmp.eq.s32.totalorder %s15, 0
      %p145 = por %p143, %p144
      %p146 = scmp.le.s32.totalorder 1, %s9
      %p147 = scmp.lt.s32.totalorder %s9, 289
      %p148 = pnand %p146, %p147
      %p149 = pneg %p148
      // Predicated region
      $region9: #{alexnet_forward.21} parent=5 // pred_check
        _
      $region10: #{alexnet_forward.21} parent=5 // pred_check_branch
        %151 = sbr.rel (%p148) target = $region12
      $region11: #{alexnet_forward.21} parent=5 // pred_region
        %s152 = ssub.s32 %s9, 1
      $region12: #{alexnet_forward.21} parent=5 // pred_fallthru
        _
      %p153 = scmp.lt.s32.totalorder %s9, 288
      // Predicated region
      $region13: #{alexnet_forward.21} parent=5 // pred_check
        %p154 = pneg %p153
      $region14: #{alexnet_forward.21} parent=5 // pred_check_branch
        %156 = sbr.rel (%p154) target = $region16
      $region15: #{alexnet_forward.21} parent=5 // pred_region
        // Predicated region
        $region17: #{alexnet_forward.21} parent=15 // pred_check
          %p157 = pneg %p50
        $region18: #{alexnet_forward.21} parent=15 // pred_check_branch
          %159 = sbr.rel (%p157) target = $region20
        $region19: #{alexnet_forward.21} parent=15 // pred_region
          %s160 = smul.u32 4, %s18
          %p161 = scmp.lt.s32.totalorder %s16, 0
          %s162 = scalar_select %p161, %s16, 0
          %p163 = scmp.lt.s32.totalorder %s160, 71
          %s164 = scalar_select %p163, %s160, 71
          %s165 = smul.addr %s162, 72
          %s166 = sadd.s32 %s164, %s165
          %s167 = smul.addr %s166, 4
          %s168 = scalar_lea.vmem %s0, %s167
          %s169 = smul.u32 4, %s18
        $region20: #{alexnet_forward.21} parent=15 // pred_fallthru
          _
        // Predicated region
        $region21: #{alexnet_forward.21} parent=15 // pred_check
          %p170 = pneg %p78
        $region22: #{alexnet_forward.21} parent=15 // pred_check_branch
          %172 = sbr.rel (%p170) target = $region24
        $region23: #{alexnet_forward.21} parent=15 // pred_region
          %s173 = sand.u32 %s68, 1
          %s174 = sand.u32 %s68, 1
          %s175 = smul.addr %s174, 512
          %s176 = scalar_lea.vmem [#allocation3], %s175
          %s177 = smul.u32 64, %s18
          %s178 = smul.u32 2, %s17
          %s179 = smul.addr %s177, 32
          %s180 = sadd.s32 %s178, %s179
          %s181 = smul.addr %s180, 4
          %s182 = scalar_lea.vmem %s1, %s181
          // Predicated region
          $region25: #{alexnet_forward.21} parent=23 // pred_check
            _
          $region26: #{alexnet_forward.21} parent=23 // pred_check_branch
            %184 = sbr.rel (0) target = $region28
          $region27: #{alexnet_forward.21} parent=23 // pred_region
            // Predicated region
            $region29: #{alexnet_forward.21} parent=27 // pred_check
              _
            $region30: #{alexnet_forward.21} parent=27 // pred_check_branch
              %186 = sbr.rel (0) target = $region32
            $region31: #{alexnet_forward.21} parent=27 // pred_region
              // Predicated region
              $region44: #{alexnet_forward.21} parent=31 // pred_check
                _
              $region45: #{alexnet_forward.21} parent=31 // pred_check_branch
                %328 = sbr.rel (0) target = $region47
              $region46: #{alexnet_forward.21} parent=31 // pred_region
                loop: start=0, step=1, limit=1
                $region48: #{alexnet_forward.21} parent=46 // loop_pre_header
                  _
                $region49: #{alexnet_forward.21} parent=46 // loop_header
                  %s330 = sphi 0, %s334
                  %p331 = scmp.ge.s32.totalorder %s330, 1
                  %s335 = sphi %s182, %s182
                  %s336 = sphi %s176, %s176
                $region50: #{alexnet_forward.21} parent=46 // loop_header_branch
                  %333 = sbr.rel (%p331) target = $region54
                $region51: #{alexnet_forward.21} parent=46 // loop_body
                  %v337 = vld [vmem:[%s335] sm:$0xff]
                  %338 = vst [vmem:[%s336] sm:$0xff] %v337
                  %v339 = vld [vmem:[%s335 + $0x80] sm:$0xff]
                  %340 = vst [vmem:[%s336 + $0x8] sm:$0xff] %v339
                  %v341 = vld [vmem:[%s335 + $0x100] sm:$0xff]
                  %342 = vst [vmem:[%s336 + $0x10] sm:$0xff] %v341
                  %v343 = vld [vmem:[%s335 + $0x180] sm:$0xff]
                  %344 = vst [vmem:[%s336 + $0x18] sm:$0xff] %v343
                  %v345 = vld [vmem:[%s335 + $0x200] sm:$0xff]
                  %346 = vst [vmem:[%s336 + $0x20] sm:$0xff] %v345
                  %v347 = vld [vmem:[%s335 + $0x280] sm:$0xff]
                  %348 = vst [vmem:[%s336 + $0x28] sm:$0xff] %v347
                  %v349 = vld [vmem:[%s335 + $0x300] sm:$0xff]
                  %350 = vst [vmem:[%s336 + $0x30] sm:$0xff] %v349
                  %v351 = vld [vmem:[%s335 + $0x380] sm:$0xff]
                  %352 = vst [vmem:[%s336 + $0x38] sm:$0xff] %v351
                  %v353 = vld [vmem:[%s335 + $0x400] sm:$0xff]
                  %354 = vst [vmem:[%s336 + $0x40] sm:$0xff] %v353
                  %v355 = vld [vmem:[%s335 + $0x480] sm:$0xff]
                  %356 = vst [vmem:[%s336 + $0x48] sm:$0xff] %v355
                  %v357 = vld [vmem:[%s335 + $0x500] sm:$0xff]
                  %358 = vst [vmem:[%s336 + $0x50] sm:$0xff] %v357
                  %v359 = vld [vmem:[%s335 + $0x580] sm:$0xff]
                  %360 = vst [vmem:[%s336 + $0x58] sm:$0xff] %v359
                  %v361 = vld [vmem:[%s335 + $0x600] sm:$0xff]
                  %362 = vst [vmem:[%s336 + $0x60] sm:$0xff] %v361
                  %v363 = vld [vmem:[%s335 + $0x680] sm:$0xff]
                  %364 = vst [vmem:[%s336 + $0x68] sm:$0xff] %v363
                  %v365 = vld [vmem:[%s335 + $0x700] sm:$0xff]
                  %366 = vst [vmem:[%s336 + $0x70] sm:$0xff] %v365
                  %v367 = vld [vmem:[%s335 + $0x780] sm:$0xff]
                  %368 = vst [vmem:[%s336 + $0x78] sm:$0xff] %v367
                  %v369 = vld [vmem:[%s335 + $0x800] sm:$0xff]
                  %370 = vst [vmem:[%s336 + $0x80] sm:$0xff] %v369
                  %v371 = vld [vmem:[%s335 + $0x880] sm:$0xff]
                  %372 = vst [vmem:[%s336 + $0x88] sm:$0xff] %v371
                  %v373 = vld [vmem:[%s335 + $0x900] sm:$0xff]
                  %374 = vst [vmem:[%s336 + $0x90] sm:$0xff] %v373
                  %v375 = vld [vmem:[%s335 + $0x980] sm:$0xff]
                  %376 = vst [vmem:[%s336 + $0x98] sm:$0xff] %v375
                  %v377 = vld [vmem:[%s335 + $0xa00] sm:$0xff]
                  %378 = vst [vmem:[%s336 + $0xa0] sm:$0xff] %v377
                  %v379 = vld [vmem:[%s335 + $0xa80] sm:$0xff]
                  %380 = vst [vmem:[%s336 + $0xa8] sm:$0xff] %v379
                  %v381 = vld [vmem:[%s335 + $0xb00] sm:$0xff]
                  %382 = vst [vmem:[%s336 + $0xb0] sm:$0xff] %v381
                  %v383 = vld [vmem:[%s335 + $0xb80] sm:$0xff]
                  %384 = vst [vmem:[%s336 + $0xb8] sm:$0xff] %v383
                  %v385 = vld [vmem:[%s335 + $0xc00] sm:$0xff]
                  %386 = vst [vmem:[%s336 + $0xc0] sm:$0xff] %v385
                  %v387 = vld [vmem:[%s335 + $0xc80] sm:$0xff]
                  %388 = vst [vmem:[%s336 + $0xc8] sm:$0xff] %v387
                  %v389 = vld [vmem:[%s335 + $0xd00] sm:$0xff]
                  %390 = vst [vmem:[%s336 + $0xd0] sm:$0xff] %v389
                  %v391 = vld [vmem:[%s335 + $0xd80] sm:$0xff]
                  %392 = vst [vmem:[%s336 + $0xd8] sm:$0xff] %v391
                  %v393 = vld [vmem:[%s335 + $0xe00] sm:$0xff]
                  %394 = vst [vmem:[%s336 + $0xe0] sm:$0xff] %v393
                  %v395 = vld [vmem:[%s335 + $0xe80] sm:$0xff]
                  %396 = vst [vmem:[%s336 + $0xe8] sm:$0xff] %v395
                  %v397 = vld [vmem:[%s335 + $0xf00] sm:$0xff]
                  %398 = vst [vmem:[%s336 + $0xf0] sm:$0xff] %v397
                  %v399 = vld [vmem:[%s335 + $0xf80] sm:$0xff]
                  %400 = vst [vmem:[%s336 + $0xf8] sm:$0xff] %v399
                  %v401 = vld [vmem:[%s335 + $0x1000] sm:$0xff]
                  %402 = vst [vmem:[%s336 + $0x100] sm:$0xff] %v401
                  %v403 = vld [vmem:[%s335 + $0x1080] sm:$0xff]
                  %404 = vst [vmem:[%s336 + $0x108] sm:$0xff] %v403
                  %v405 = vld [vmem:[%s335 + $0x1100] sm:$0xff]
                  %406 = vst [vmem:[%s336 + $0x110] sm:$0xff] %v405
                  %v407 = vld [vmem:[%s335 + $0x1180] sm:$0xff]
                  %408 = vst [vmem:[%s336 + $0x118] sm:$0xff] %v407
                  %v409 = vld [vmem:[%s335 + $0x1200] sm:$0xff]
                  %410 = vst [vmem:[%s336 + $0x120] sm:$0xff] %v409
                  %v411 = vld [vmem:[%s335 + $0x1280] sm:$0xff]
                  %412 = vst [vmem:[%s336 + $0x128] sm:$0xff] %v411
                  %v413 = vld [vmem:[%s335 + $0x1300] sm:$0xff]
                  %414 = vst [vmem:[%s336 + $0x130] sm:$0xff] %v413
                  %v415 = vld [vmem:[%s335 + $0x1380] sm:$0xff]
                  %416 = vst [vmem:[%s336 + $0x138] sm:$0xff] %v415
                  %v417 = vld [vmem:[%s335 + $0x1400] sm:$0xff]
                  %418 = vst [vmem:[%s336 + $0x140] sm:$0xff] %v417
                  %v419 = vld [vmem:[%s335 + $0x1480] sm:$0xff]
                  %420 = vst [vmem:[%s336 + $0x148] sm:$0xff] %v419
                  %v421 = vld [vmem:[%s335 + $0x1500] sm:$0xff]
                  %422 = vst [vmem:[%s336 + $0x150] sm:$0xff] %v421
                  %v423 = vld [vmem:[%s335 + $0x1580] sm:$0xff]
                  %424 = vst [vmem:[%s336 + $0x158] sm:$0xff] %v423
                  %v425 = vld [vmem:[%s335 + $0x1600] sm:$0xff]
                  %426 = vst [vmem:[%s336 + $0x160] sm:$0xff] %v425
                  %v427 = vld [vmem:[%s335 + $0x1680] sm:$0xff]
                  %428 = vst [vmem:[%s336 + $0x168] sm:$0xff] %v427
                  %v429 = vld [vmem:[%s335 + $0x1700] sm:$0xff]
                  %430 = vst [vmem:[%s336 + $0x170] sm:$0xff] %v429
                  %v431 = vld [vmem:[%s335 + $0x1780] sm:$0xff]
                  %432 = vst [vmem:[%s336 + $0x178] sm:$0xff] %v431
                  %v433 = vld [vmem:[%s335 + $0x1800] sm:$0xff]
                  %434 = vst [vmem:[%s336 + $0x180] sm:$0xff] %v433
                  %v435 = vld [vmem:[%s335 + $0x1880] sm:$0xff]
                  %436 = vst [vmem:[%s336 + $0x188] sm:$0xff] %v435
                  %v437 = vld [vmem:[%s335 + $0x1900] sm:$0xff]
                  %438 = vst [vmem:[%s336 + $0x190] sm:$0xff] %v437
                  %v439 = vld [vmem:[%s335 + $0x1980] sm:$0xff]
                  %440 = vst [vmem:[%s336 + $0x198] sm:$0xff] %v439
                  %v441 = vld [vmem:[%s335 + $0x1a00] sm:$0xff]
                  %442 = vst [vmem:[%s336 + $0x1a0] sm:$0xff] %v441
                  %v443 = vld [vmem:[%s335 + $0x1a80] sm:$0xff]
                  %444 = vst [vmem:[%s336 + $0x1a8] sm:$0xff] %v443
                  %v445 = vld [vmem:[%s335 + $0x1b00] sm:$0xff]
                  %446 = vst [vmem:[%s336 + $0x1b0] sm:$0xff] %v445
                  %v447 = vld [vmem:[%s335 + $0x1b80] sm:$0xff]
                  %448 = vst [vmem:[%s336 + $0x1b8] sm:$0xff] %v447
                  %v449 = vld [vmem:[%s335 + $0x1c00] sm:$0xff]
                  %450 = vst [vmem:[%s336 + $0x1c0] sm:$0xff] %v449
                  %v451 = vld [vmem:[%s335 + $0x1c80] sm:$0xff]
                  %452 = vst [vmem:[%s336 + $0x1c8] sm:$0xff] %v451
                  %v453 = vld [vmem:[%s335 + $0x1d00] sm:$0xff]
                  %454 = vst [vmem:[%s336 + $0x1d0] sm:$0xff] %v453
                  %v455 = vld [vmem:[%s335 + $0x1d80] sm:$0xff]
                  %456 = vst [vmem:[%s336 + $0x1d8] sm:$0xff] %v455
                  %v457 = vld [vmem:[%s335 + $0x1e00] sm:$0xff]
                  %458 = vst [vmem:[%s336 + $0x1e0] sm:$0xff] %v457
                  %v459 = vld [vmem:[%s335 + $0x1e80] sm:$0xff]
                  %460 = vst [vmem:[%s336 + $0x1e8] sm:$0xff] %v459
                  %v461 = vld [vmem:[%s335 + $0x1f00] sm:$0xff]
                  %462 = vst [vmem:[%s336 + $0x1f0] sm:$0xff] %v461
                  %v463 = vld [vmem:[%s335 + $0x1f80] sm:$0xff]
                  %464 = vst [vmem:[%s336 + $0x1f8] sm:$0xff] %v463
                $region52: #{alexnet_forward.21} parent=46 // loop_footer
                  %s334 = sadd.s32 1, %s330
                $region53: #{alexnet_forward.21} parent=46 // loop_footer_branch
                  %329 = sbr.rel target = $region49
                $region54: #{alexnet_forward.21} parent=46 // loop_exit
                  _
              $region47: #{alexnet_forward.21} parent=31 // pred_fallthru
                _
              // Predicated region
              $region55: #{alexnet_forward.21} parent=31 // pred_check
                _
              $region56: #{alexnet_forward.21} parent=31 // pred_check_branch
                %466 = sbr.rel target = $region58
              $region57: #{alexnet_forward.21} parent=31 // pred_region
                _
              $region58: #{alexnet_forward.21} parent=31 // pred_fallthru
                _
            $region32: #{alexnet_forward.21} parent=27 // pred_fallthru
              _
            // Predicated region
            $region33: #{alexnet_forward.21} parent=27 // pred_check
              _
            $region34: #{alexnet_forward.21} parent=27 // pred_check_branch
              %188 = sbr.rel target = $region36
            $region35: #{alexnet_forward.21} parent=27 // pred_region
              %s190 = ssub.s32 256, 1
              loop: start=0, step=1, limit=1
              $region37: #{alexnet_forward.21} parent=35 // loop_pre_header
                _
              $region38: #{alexnet_forward.21} parent=35 // loop_header
                %s192 = sphi 0, %s196
                %p193 = scmp.ge.s32.totalorder %s192, 1
                %s197 = sphi %s182, %s182
                %s198 = sphi %s176, %s176
              $region39: #{alexnet_forward.21} parent=35 // loop_header_branch
                %195 = sbr.rel (%p193) target = $region43
              $region40: #{alexnet_forward.21} parent=35 // loop_body
                %v199 = vld [vmem:[%s197] sm:%s190]
                %200 = vst [vmem:[%s198] sm:%s190] %v199
                %v201 = vld [vmem:[%s197 + $0x80] sm:%s190]
                %202 = vst [vmem:[%s198 + $0x8] sm:%s190] %v201
                %v203 = vld [vmem:[%s197 + $0x100] sm:%s190]
                %204 = vst [vmem:[%s198 + $0x10] sm:%s190] %v203
                %v205 = vld [vmem:[%s197 + $0x180] sm:%s190]
                %206 = vst [vmem:[%s198 + $0x18] sm:%s190] %v205
                %v207 = vld [vmem:[%s197 + $0x200] sm:%s190]
                %208 = vst [vmem:[%s198 + $0x20] sm:%s190] %v207
                %v209 = vld [vmem:[%s197 + $0x280] sm:%s190]
                %210 = vst [vmem:[%s198 + $0x28] sm:%s190] %v209
                %v211 = vld [vmem:[%s197 + $0x300] sm:%s190]
                %212 = vst [vmem:[%s198 + $0x30] sm:%s190] %v211
                %v213 = vld [vmem:[%s197 + $0x380] sm:%s190]
                %214 = vst [vmem:[%s198 + $0x38] sm:%s190] %v213
                %v215 = vld [vmem:[%s197 + $0x400] sm:%s190]
                %216 = vst [vmem:[%s198 + $0x40] sm:%s190] %v215
                %v217 = vld [vmem:[%s197 + $0x480] sm:%s190]
                %218 = vst [vmem:[%s198 + $0x48] sm:%s190] %v217
                %v219 = vld [vmem:[%s197 + $0x500] sm:%s190]
                %220 = vst [vmem:[%s198 + $0x50] sm:%s190] %v219
                %v221 = vld [vmem:[%s197 + $0x580] sm:%s190]
                %222 = vst [vmem:[%s198 + $0x58] sm:%s190] %v221
                %v223 = vld [vmem:[%s197 + $0x600] sm:%s190]
                %224 = vst [vmem:[%s198 + $0x60] sm:%s190] %v223
                %v225 = vld [vmem:[%s197 + $0x680] sm:%s190]
                %226 = vst [vmem:[%s198 + $0x68] sm:%s190] %v225
                %v227 = vld [vmem:[%s197 + $0x700] sm:%s190]
                %228 = vst [vmem:[%s198 + $0x70] sm:%s190] %v227
                %v229 = vld [vmem:[%s197 + $0x780] sm:%s190]
                %230 = vst [vmem:[%s198 + $0x78] sm:%s190] %v229
                %v231 = vld [vmem:[%s197 + $0x800] sm:%s190]
                %232 = vst [vmem:[%s198 + $0x80] sm:%s190] %v231
                %v233 = vld [vmem:[%s197 + $0x880] sm:%s190]
                %234 = vst [vmem:[%s198 + $0x88] sm:%s190] %v233
                %v235 = vld [vmem:[%s197 + $0x900] sm:%s190]
                %236 = vst [vmem:[%s198 + $0x90] sm:%s190] %v235
                %v237 = vld [vmem:[%s197 + $0x980] sm:%s190]
                %238 = vst [vmem:[%s198 + $0x98] sm:%s190] %v237
                %v239 = vld [vmem:[%s197 + $0xa00] sm:%s190]
                %240 = vst [vmem:[%s198 + $0xa0] sm:%s190] %v239
                %v241 = vld [vmem:[%s197 + $0xa80] sm:%s190]
                %242 = vst [vmem:[%s198 + $0xa8] sm:%s190] %v241
                %v243 = vld [vmem:[%s197 + $0xb00] sm:%s190]
                %244 = vst [vmem:[%s198 + $0xb0] sm:%s190] %v243
                %v245 = vld [vmem:[%s197 + $0xb80] sm:%s190]
                %246 = vst [vmem:[%s198 + $0xb8] sm:%s190] %v245
                %v247 = vld [vmem:[%s197 + $0xc00] sm:%s190]
                %248 = vst [vmem:[%s198 + $0xc0] sm:%s190] %v247
                %v249 = vld [vmem:[%s197 + $0xc80] sm:%s190]
                %250 = vst [vmem:[%s198 + $0xc8] sm:%s190] %v249
                %v251 = vld [vmem:[%s197 + $0xd00] sm:%s190]
                %252 = vst [vmem:[%s198 + $0xd0] sm:%s190] %v251
                %v253 = vld [vmem:[%s197 + $0xd80] sm:%s190]
                %254 = vst [vmem:[%s198 + $0xd8] sm:%s190] %v253
                %v255 = vld [vmem:[%s197 + $0xe00] sm:%s190]
                %256 = vst [vmem:[%s198 + $0xe0] sm:%s190] %v255
                %v257 = vld [vmem:[%s197 + $0xe80] sm:%s190]
                %258 = vst [vmem:[%s198 + $0xe8] sm:%s190] %v257
                %v259 = vld [vmem:[%s197 + $0xf00] sm:%s190]
                %260 = vst [vmem:[%s198 + $0xf0] sm:%s190] %v259
                %v261 = vld [vmem:[%s197 + $0xf80] sm:%s190]
                %262 = vst [vmem:[%s198 + $0xf8] sm:%s190] %v261
                %v263 = vld [vmem:[%s197 + $0x1000] sm:%s190]
                %264 = vst [vmem:[%s198 + $0x100] sm:%s190] %v263
                %v265 = vld [vmem:[%s197 + $0x1080] sm:%s190]
                %266 = vst [vmem:[%s198 + $0x108] sm:%s190] %v265
                %v267 = vld [vmem:[%s197 + $0x1100] sm:%s190]
                %268 = vst [vmem:[%s198 + $0x110] sm:%s190] %v267
                %v269 = vld [vmem:[%s197 + $0x1180] sm:%s190]
                %270 = vst [vmem:[%s198 + $0x118] sm:%s190] %v269
                %v271 = vld [vmem:[%s197 + $0x1200] sm:%s190]
                %272 = vst [vmem:[%s198 + $0x120] sm:%s190] %v271
                %v273 = vld [vmem:[%s197 + $0x1280] sm:%s190]
                %274 = vst [vmem:[%s198 + $0x128] sm:%s190] %v273
                %v275 = vld [vmem:[%s197 + $0x1300] sm:%s190]
                %276 = vst [vmem:[%s198 + $0x130] sm:%s190] %v275
                %v277 = vld [vmem:[%s197 + $0x1380] sm:%s190]
                %278 = vst [vmem:[%s198 + $0x138] sm:%s190] %v277
                %v279 = vld [vmem:[%s197 + $0x1400] sm:%s190]
                %280 = vst [vmem:[%s198 + $0x140] sm:%s190] %v279
                %v281 = vld [vmem:[%s197 + $0x1480] sm:%s190]
                %282 = vst [vmem:[%s198 + $0x148] sm:%s190] %v281
                %v283 = vld [vmem:[%s197 + $0x1500] sm:%s190]
                %284 = vst [vmem:[%s198 + $0x150] sm:%s190] %v283
                %v285 = vld [vmem:[%s197 + $0x1580] sm:%s190]
                %286 = vst [vmem:[%s198 + $0x158] sm:%s190] %v285
                %v287 = vld [vmem:[%s197 + $0x1600] sm:%s190]
                %288 = vst [vmem:[%s198 + $0x160] sm:%s190] %v287
                %v289 = vld [vmem:[%s197 + $0x1680] sm:%s190]
                %290 = vst [vmem:[%s198 + $0x168] sm:%s190] %v289
                %v291 = vld [vmem:[%s197 + $0x1700] sm:%s190]
                %292 = vst [vmem:[%s198 + $0x170] sm:%s190] %v291
                %v293 = vld [vmem:[%s197 + $0x1780] sm:%s190]
                %294 = vst [vmem:[%s198 + $0x178] sm:%s190] %v293
                %v295 = vld [vmem:[%s197 + $0x1800] sm:%s190]
                %296 = vst [vmem:[%s198 + $0x180] sm:%s190] %v295
                %v297 = vld [vmem:[%s197 + $0x1880] sm:%s190]
                %298 = vst [vmem:[%s198 + $0x188] sm:%s190] %v297
                %v299 = vld [vmem:[%s197 + $0x1900] sm:%s190]
                %300 = vst [vmem:[%s198 + $0x190] sm:%s190] %v299
                %v301 = vld [vmem:[%s197 + $0x1980] sm:%s190]
                %302 = vst [vmem:[%s198 + $0x198] sm:%s190] %v301
                %v303 = vld [vmem:[%s197 + $0x1a00] sm:%s190]
                %304 = vst [vmem:[%s198 + $0x1a0] sm:%s190] %v303
                %v305 = vld [vmem:[%s197 + $0x1a80] sm:%s190]
                %306 = vst [vmem:[%s198 + $0x1a8] sm:%s190] %v305
                %v307 = vld [vmem:[%s197 + $0x1b00] sm:%s190]
                %308 = vst [vmem:[%s198 + $0x1b0] sm:%s190] %v307
                %v309 = vld [vmem:[%s197 + $0x1b80] sm:%s190]
                %310 = vst [vmem:[%s198 + $0x1b8] sm:%s190] %v309
                %v311 = vld [vmem:[%s197 + $0x1c00] sm:%s190]
                %312 = vst [vmem:[%s198 + $0x1c0] sm:%s190] %v311
                %v313 = vld [vmem:[%s197 + $0x1c80] sm:%s190]
                %314 = vst [vmem:[%s198 + $0x1c8] sm:%s190] %v313
                %v315 = vld [vmem:[%s197 + $0x1d00] sm:%s190]
                %316 = vst [vmem:[%s198 + $0x1d0] sm:%s190] %v315
                %v317 = vld [vmem:[%s197 + $0x1d80] sm:%s190]
                %318 = vst [vmem:[%s198 + $0x1d8] sm:%s190] %v317
                %v319 = vld [vmem:[%s197 + $0x1e00] sm:%s190]
                %320 = vst [vmem:[%s198 + $0x1e0] sm:%s190] %v319
                %v321 = vld [vmem:[%s197 + $0x1e80] sm:%s190]
                %322 = vst [vmem:[%s198 + $0x1e8] sm:%s190] %v321
                %v323 = vld [vmem:[%s197 + $0x1f00] sm:%s190]
                %324 = vst [vmem:[%s198 + $0x1f0] sm:%s190] %v323
                %v325 = vld [vmem:[%s197 + $0x1f80] sm:%s190]
                %326 = vst [vmem:[%s198 + $0x1f8] sm:%s190] %v325
              $region41: #{alexnet_forward.21} parent=35 // loop_footer
                %s196 = sadd.s32 1, %s192
              $region42: #{alexnet_forward.21} parent=35 // loop_footer_branch
                %191 = sbr.rel target = $region38
              $region43: #{alexnet_forward.21} parent=35 // loop_exit
                _
            $region36: #{alexnet_forward.21} parent=27 // pred_fallthru
              _
          $region28: #{alexnet_forward.21} parent=23 // pred_fallthru
            _
          %467 = vnop
        $region24: #{alexnet_forward.21} parent=15 // pred_fallthru
          _
        // Predicated region
        $region59: #{alexnet_forward.21} parent=15 // pred_check
          %p468 = pneg %p104
        $region60: #{alexnet_forward.21} parent=15 // pred_check_branch
          %470 = sbr.rel (%p468) target = $region62
        $region61: #{alexnet_forward.21} parent=15 // pred_region
          %s471 = smul.u32 2, %s17
          %p472 = scmp.lt.s32.totalorder %s471, 31
          %s473 = scalar_select %p472, %s471, 31
          %s474 = scalar_lea.vmem %s2, %s473
          %s475 = smul.u32 2, %s17
        $region62: #{alexnet_forward.21} parent=15 // pred_fallthru
          _
      $region16: #{alexnet_forward.21} parent=5 // pred_fallthru
        _
      %p476 = scmp.le.s32.totalorder 1, %s9
      %p477 = scmp.lt.s32.totalorder %s9, 289
      %p478 = pnand %p476, %p477
      %p479 = pneg %p478
      // Predicated region
      $region63: #{alexnet_forward.21} parent=5 // pred_check
        _
      $region64: #{alexnet_forward.21} parent=5 // pred_check_branch
        %481 = sbr.rel (%p478) target = $region66
      $region65: #{alexnet_forward.21} parent=5 // pred_region
        %s482 = ssub.s32 %s9, 1
        %s483 = sand.u32 %s71, 1
        %s484 = sand.u32 %s71, 1
        %s485 = smul.addr %s484, 512
        %s486 = scalar_lea.vmem [#allocation3], %s485
        // Predicated region
        $region67: #{alexnet_forward.21} parent=65 // pred_check
          %p487 = pneg %p84
        $region68: #{alexnet_forward.21} parent=65 // pred_check_branch
          %489 = sbr.rel (%p487) target = $region70
        $region69: #{alexnet_forward.21} parent=65 // pred_region
          _
        $region70: #{alexnet_forward.21} parent=65 // pred_fallthru
          _
        %s490 = smul.u32 4, %s21
        %p491 = scmp.lt.s32.totalorder %s19, 0
        %s492 = scalar_select %p491, %s19, 0
        %p493 = scmp.lt.s32.totalorder %s490, 71
        %s494 = scalar_select %p493, %s490, 71
        %s495 = smul.addr %s492, 72
        %s496 = sadd.s32 %s494, %s495
        %s497 = smul.addr %s496, 4
        %s498 = scalar_lea.vmem %s0, %s497
        %p499 = pneg %p56
        %p500 = pneg %p53
        %s501 = sand.u32 %s71, 1
        %s502 = sand.u32 %s71, 1
        %s503 = smul.addr %s502, 512
        %s504 = scalar_lea.vmem [#allocation3], %s503
        %p505 = pneg %p84
        %p506 = pneg %p81
        %s507 = smul.u32 2, %s20
        %p508 = scmp.lt.s32.totalorder %s507, 31
        %s509 = scalar_select %p508, %s507, 31
        %s510 = scalar_lea.vmem %s2, %s509
        %p511 = pneg %p110
        %p512 = pneg %p107
        %p513 = pneg %p138
        %p514 = pneg %p135
        %s515 = smul.u32 2, %s20
        %p516 = scmp.lt.s32.totalorder %s19, 0
        %s517 = scalar_select %p516, %s19, 0
        %p518 = scmp.lt.s32.totalorder %s515, 31
        %s519 = scalar_select %p518, %s515, 31
        %s520 = smul.addr %s517, 32
        %s521 = sadd.s32 %s519, %s520
        %s522 = smul.addr %s521, 8
        %s523 = scalar_lea.vmem %s3, %s522
        %s524 = smul.u32 4, %s21
        %p525 = scmp.lt.s32.totalorder %s19, 0
        %s526 = scalar_select %p525, %s19, 0
        %p527 = scmp.lt.s32.totalorder %s524, 71
        %s528 = scalar_select %p527, %s524, 71
        %s529 = smul.addr %s526, 72
        %s530 = sadd.s32 %s528, %s529
        %s531 = smul.addr %s530, 4
        %s532 = scalar_lea.vmem %s0, %s531
        %s533 = smul.u32 4, %s21
        %s534 = smul.u32 64, %s21
        %s535 = smul.u32 2, %s20
        %s536 = smul.u32 2, %s20
        %p537 = scmp.lt.s32.totalorder %s536, 31
        %s538 = scalar_select %p537, %s536, 31
        %s539 = scalar_lea.vmem %s2, %s538
        %s540 = smul.u32 2, %s20
        %s541 = smul.u32 2, %s20
        %p542 = scmp.lt.s32.totalorder %s19, 0
        %s543 = scalar_select %p542, %s19, 0
        %p544 = scmp.lt.s32.totalorder %s541, 31
        %s545 = scalar_select %p544, %s541, 31
        %s546 = smul.addr %s543, 32
        %s547 = sadd.s32 %s545, %s546
        %s548 = smul.addr %s547, 8
        %s549 = scalar_lea.vmem %s3, %s548
        %s550 = smul.u32 2, %s20
        %p551 = scmp.eq.s32.totalorder %s21, 0
        // Predicated region
        $region71: #{alexnet_forward.21} parent=65 // pred_check
          %p552 = pneg %p551
        $region72: #{alexnet_forward.21} parent=65 // pred_check_branch
          %554 = sbr.rel (%p552) target = $region74
        $region73: #{alexnet_forward.21} parent=65 // pred_region
          %555 = vst [vmem:[#allocation2] sm:$0xff] 0.0
          %556 = vst [vmem:[#allocation2 + $0x8] sm:$0xff] 0.0
        $region74: #{alexnet_forward.21} parent=65 // pred_fallthru
          _
        %v557 = vld [vmem:[#allocation2] sm:$0xff]
        %v558 = vld [vmem:[#allocation2 + $0x8] sm:$0xff]
        %v559 = vld [vmem:[%s532] sm:$0xff]
        %v560 = vld [vmem:[%s532 + $0x8] sm:$0xff]
        %v561 = vld [vmem:[%s486] sm:$0xff]
        %v562 = vld [vmem:[%s486 + $0x8] sm:$0xff]
        %v563 = vld [vmem:[%s486 + $0x10] sm:$0xff]
        %v564 = vld [vmem:[%s486 + $0x18] sm:$0xff]
        %v565 = vld [vmem:[%s486 + $0x20] sm:$0xff]
        %v566 = vld [vmem:[%s486 + $0x28] sm:$0xff]
        %v567 = vld [vmem:[%s486 + $0x30] sm:$0xff]
        %v568 = vld [vmem:[%s486 + $0x38] sm:$0xff]
        %v569 = vld [vmem:[%s486 + $0x40] sm:$0xff]
        %v570 = vld [vmem:[%s486 + $0x48] sm:$0xff]
        %v571 = vld [vmem:[%s486 + $0x50] sm:$0xff]
        %v572 = vld [vmem:[%s486 + $0x58] sm:$0xff]
        %v573 = vld [vmem:[%s486 + $0x60] sm:$0xff]
        %v574 = vld [vmem:[%s486 + $0x68] sm:$0xff]
        %v575 = vld [vmem:[%s486 + $0x70] sm:$0xff]
        %v576 = vld [vmem:[%s486 + $0x78] sm:$0xff]
        %v577 = vld [vmem:[%s486 + $0x80] sm:$0xff]
        %v578 = vld [vmem:[%s486 + $0x88] sm:$0xff]
        %v579 = vld [vmem:[%s486 + $0x90] sm:$0xff]
        %v580 = vld [vmem:[%s486 + $0x98] sm:$0xff]
        %v581 = vld [vmem:[%s486 + $0xa0] sm:$0xff]
        %v582 = vld [vmem:[%s486 + $0xa8] sm:$0xff]
        %v583 = vld [vmem:[%s486 + $0xb0] sm:$0xff]
        %v584 = vld [vmem:[%s486 + $0xb8] sm:$0xff]
        %v585 = vld [vmem:[%s486 + $0xc0] sm:$0xff]
        %v586 = vld [vmem:[%s486 + $0xc8] sm:$0xff]
        %v587 = vld [vmem:[%s486 + $0xd0] sm:$0xff]
        %v588 = vld [vmem:[%s486 + $0xd8] sm:$0xff]
        %v589 = vld [vmem:[%s486 + $0xe0] sm:$0xff]
        %v590 = vld [vmem:[%s486 + $0xe8] sm:$0xff]
        %v591 = vld [vmem:[%s486 + $0xf0] sm:$0xff]
        %v592 = vld [vmem:[%s486 + $0xf8] sm:$0xff]
        %v593 = vld [vmem:[%s486 + $0x100] sm:$0xff]
        %v594 = vld [vmem:[%s486 + $0x108] sm:$0xff]
        %v595 = vld [vmem:[%s486 + $0x110] sm:$0xff]
        %v596 = vld [vmem:[%s486 + $0x118] sm:$0xff]
        %v597 = vld [vmem:[%s486 + $0x120] sm:$0xff]
        %v598 = vld [vmem:[%s486 + $0x128] sm:$0xff]
        %v599 = vld [vmem:[%s486 + $0x130] sm:$0xff]
        %v600 = vld [vmem:[%s486 + $0x138] sm:$0xff]
        %v601 = vld [vmem:[%s486 + $0x140] sm:$0xff]
        %v602 = vld [vmem:[%s486 + $0x148] sm:$0xff]
        %v603 = vld [vmem:[%s486 + $0x150] sm:$0xff]
        %v604 = vld [vmem:[%s486 + $0x158] sm:$0xff]
        %v605 = vld [vmem:[%s486 + $0x160] sm:$0xff]
        %v606 = vld [vmem:[%s486 + $0x168] sm:$0xff]
        %v607 = vld [vmem:[%s486 + $0x170] sm:$0xff]
        %v608 = vld [vmem:[%s486 + $0x178] sm:$0xff]
        %v609 = vld [vmem:[%s486 + $0x180] sm:$0xff]
        %v610 = vld [vmem:[%s486 + $0x188] sm:$0xff]
        %v611 = vld [vmem:[%s486 + $0x190] sm:$0xff]
        %v612 = vld [vmem:[%s486 + $0x198] sm:$0xff]
        %v613 = vld [vmem:[%s486 + $0x1a0] sm:$0xff]
        %v614 = vld [vmem:[%s486 + $0x1a8] sm:$0xff]
        %v615 = vld [vmem:[%s486 + $0x1b0] sm:$0xff]
        %v616 = vld [vmem:[%s486 + $0x1b8] sm:$0xff]
        %v617 = vld [vmem:[%s486 + $0x1c0] sm:$0xff]
        %v618 = vld [vmem:[%s486 + $0x1c8] sm:$0xff]
        %v619 = vld [vmem:[%s486 + $0x1d0] sm:$0xff]
        %v620 = vld [vmem:[%s486 + $0x1d8] sm:$0xff]
        %v621 = vld [vmem:[%s486 + $0x1e0] sm:$0xff]
        %v622 = vld [vmem:[%s486 + $0x1e8] sm:$0xff]
        %v623 = vld [vmem:[%s486 + $0x1f0] sm:$0xff]
        %v624 = vld [vmem:[%s486 + $0x1f8] sm:$0xff]
        %v627 = vunpack.c.l.b16 %v559
        %v628 = vunpack.c.h.b16 %v559
        %v629 = vunpack.c.l.b16 %v560
        %v630 = vunpack.c.h.b16 %v560
        %v631 = vpack.c.b16 %v627, %v627
        %v632 = vpack.c.b16 %v628, %v628
        %v633 = vpack.c.b16 %v629, %v629
        %v634 = vpack.c.b16 %v630, %v630
        %v703 = vunpack.c.l.b16 %v561
        %v704 = vunpack.c.h.b16 %v561
        %v705 = vunpack.c.l.b16 %v562
        %v706 = vunpack.c.h.b16 %v562
        %v707 = vunpack.c.l.b16 %v563
        %v708 = vunpack.c.h.b16 %v563
        %v709 = vunpack.c.l.b16 %v564
        %v710 = vunpack.c.h.b16 %v564
        %v711 = vunpack.c.l.b16 %v565
        %v712 = vunpack.c.h.b16 %v565
        %v713 = vunpack.c.l.b16 %v566
        %v714 = vunpack.c.h.b16 %v566
        %v715 = vunpack.c.l.b16 %v567
        %v716 = vunpack.c.h.b16 %v567
        %v717 = vunpack.c.l.b16 %v568
        %v718 = vunpack.c.h.b16 %v568
        %v719 = vunpack.c.l.b16 %v569
        %v720 = vunpack.c.h.b16 %v569
        %v721 = vunpack.c.l.b16 %v570
        %v722 = vunpack.c.h.b16 %v570
        %v723 = vunpack.c.l.b16 %v571
        %v724 = vunpack.c.h.b16 %v571
        %v725 = vunpack.c.l.b16 %v572
        %v726 = vunpack.c.h.b16 %v572
        %v727 = vunpack.c.l.b16 %v573
        %v728 = vunpack.c.h.b16 %v573
        %v729 = vunpack.c.l.b16 %v574
        %v730 = vunpack.c.h.b16 %v574
        %v731 = vunpack.c.l.b16 %v575
        %v732 = vunpack.c.h.b16 %v575
        %v733 = vunpack.c.l.b16 %v576
        %v734 = vunpack.c.h.b16 %v576
        %v735 = vunpack.c.l.b16 %v577
        %v736 = vunpack.c.h.b16 %v577
        %v737 = vunpack.c.l.b16 %v578
        %v738 = vunpack.c.h.b16 %v578
        %v739 = vunpack.c.l.b16 %v579
        %v740 = vunpack.c.h.b16 %v579
        %v741 = vunpack.c.l.b16 %v580
        %v742 = vunpack.c.h.b16 %v580
        %v743 = vunpack.c.l.b16 %v581
        %v744 = vunpack.c.h.b16 %v581
        %v745 = vunpack.c.l.b16 %v582
        %v746 = vunpack.c.h.b16 %v582
        %v747 = vunpack.c.l.b16 %v583
        %v748 = vunpack.c.h.b16 %v583
        %v749 = vunpack.c.l.b16 %v584
        %v750 = vunpack.c.h.b16 %v584
        %v751 = vunpack.c.l.b16 %v585
        %v752 = vunpack.c.h.b16 %v585
        %v753 = vunpack.c.l.b16 %v586
        %v754 = vunpack.c.h.b16 %v586
        %v755 = vunpack.c.l.b16 %v587
        %v756 = vunpack.c.h.b16 %v587
        %v757 = vunpack.c.l.b16 %v588
        %v758 = vunpack.c.h.b16 %v588
        %v759 = vunpack.c.l.b16 %v589
        %v760 = vunpack.c.h.b16 %v589
        %v761 = vunpack.c.l.b16 %v590
        %v762 = vunpack.c.h.b16 %v590
        %v763 = vunpack.c.l.b16 %v591
        %v764 = vunpack.c.h.b16 %v591
        %v765 = vunpack.c.l.b16 %v592
        %v766 = vunpack.c.h.b16 %v592
        %v767 = vunpack.c.l.b16 %v593
        %v768 = vunpack.c.h.b16 %v593
        %v769 = vunpack.c.l.b16 %v594
        %v770 = vunpack.c.h.b16 %v594
        %v771 = vunpack.c.l.b16 %v595
        %v772 = vunpack.c.h.b16 %v595
        %v773 = vunpack.c.l.b16 %v596
        %v774 = vunpack.c.h.b16 %v596
        %v775 = vunpack.c.l.b16 %v597
        %v776 = vunpack.c.h.b16 %v597
        %v777 = vunpack.c.l.b16 %v598
        %v778 = vunpack.c.h.b16 %v598
        %v779 = vunpack.c.l.b16 %v599
        %v780 = vunpack.c.h.b16 %v599
        %v781 = vunpack.c.l.b16 %v600
        %v782 = vunpack.c.h.b16 %v600
        %v783 = vunpack.c.l.b16 %v601
        %v784 = vunpack.c.h.b16 %v601
        %v785 = vunpack.c.l.b16 %v602
        %v786 = vunpack.c.h.b16 %v602
        %v787 = vunpack.c.l.b16 %v603
        %v788 = vunpack.c.h.b16 %v603
        %v789 = vunpack.c.l.b16 %v604
        %v790 = vunpack.c.h.b16 %v604
        %v791 = vunpack.c.l.b16 %v605
        %v792 = vunpack.c.h.b16 %v605
        %v793 = vunpack.c.l.b16 %v606
        %v794 = vunpack.c.h.b16 %v606
        %v795 = vunpack.c.l.b16 %v607
        %v796 = vunpack.c.h.b16 %v607
        %v797 = vunpack.c.l.b16 %v608
        %v798 = vunpack.c.h.b16 %v608
        %v799 = vunpack.c.l.b16 %v609
        %v800 = vunpack.c.h.b16 %v609
        %v801 = vunpack.c.l.b16 %v610
        %v802 = vunpack.c.h.b16 %v610
        %v803 = vunpack.c.l.b16 %v611
        %v804 = vunpack.c.h.b16 %v611
        %v805 = vunpack.c.l.b16 %v612
        %v806 = vunpack.c.h.b16 %v612
        %v807 = vunpack.c.l.b16 %v613
        %v808 = vunpack.c.h.b16 %v613
        %v809 = vunpack.c.l.b16 %v614
        %v810 = vunpack.c.h.b16 %v614
        %v811 = vunpack.c.l.b16 %v615
        %v812 = vunpack.c.h.b16 %v615
        %v813 = vunpack.c.l.b16 %v616
        %v814 = vunpack.c.h.b16 %v616
        %v815 = vunpack.c.l.b16 %v617
        %v816 = vunpack.c.h.b16 %v617
        %v817 = vunpack.c.l.b16 %v618
        %v818 = vunpack.c.h.b16 %v618
        %v819 = vunpack.c.l.b16 %v619
        %v820 = vunpack.c.h.b16 %v619
        %v821 = vunpack.c.l.b16 %v620
        %v822 = vunpack.c.h.b16 %v620
        %v823 = vunpack.c.l.b16 %v621
        %v824 = vunpack.c.h.b16 %v621
        %v825 = vunpack.c.l.b16 %v622
        %v826 = vunpack.c.h.b16 %v622
        %v827 = vunpack.c.l.b16 %v623
        %v828 = vunpack.c.h.b16 %v623
        %v829 = vunpack.c.l.b16 %v624
        %v830 = vunpack.c.h.b16 %v624
        %v831 = vpack.c.b16 %v705, %v703
        %v832 = vpack.c.b16 %v706, %v704
        %v833 = vpack.c.b16 %v709, %v707
        %v834 = vpack.c.b16 %v710, %v708
        %v835 = vpack.c.b16 %v713, %v711
        %v836 = vpack.c.b16 %v714, %v712
        %v837 = vpack.c.b16 %v717, %v715
        %v838 = vpack.c.b16 %v718, %v716
        %v839 = vpack.c.b16 %v721, %v719
        %v840 = vpack.c.b16 %v722, %v720
        %v841 = vpack.c.b16 %v725, %v723
        %v842 = vpack.c.b16 %v726, %v724
        %v843 = vpack.c.b16 %v729, %v727
        %v844 = vpack.c.b16 %v730, %v728
        %v845 = vpack.c.b16 %v733, %v731
        %v846 = vpack.c.b16 %v734, %v732
        %v847 = vpack.c.b16 %v737, %v735
        %v848 = vpack.c.b16 %v738, %v736
        %v849 = vpack.c.b16 %v741, %v739
        %v850 = vpack.c.b16 %v742, %v740
        %v851 = vpack.c.b16 %v745, %v743
        %v852 = vpack.c.b16 %v746, %v744
        %v853 = vpack.c.b16 %v749, %v747
        %v854 = vpack.c.b16 %v750, %v748
        %v855 = vpack.c.b16 %v753, %v751
        %v856 = vpack.c.b16 %v754, %v752
        %v857 = vpack.c.b16 %v757, %v755
        %v858 = vpack.c.b16 %v758, %v756
        %v859 = vpack.c.b16 %v761, %v759
        %v860 = vpack.c.b16 %v762, %v760
        %v861 = vpack.c.b16 %v765, %v763
        %v862 = vpack.c.b16 %v766, %v764
        %v863 = vpack.c.b16 %v769, %v767
        %v864 = vpack.c.b16 %v770, %v768
        %v865 = vpack.c.b16 %v773, %v771
        %v866 = vpack.c.b16 %v774, %v772
        %v867 = vpack.c.b16 %v777, %v775
        %v868 = vpack.c.b16 %v778, %v776
        %v869 = vpack.c.b16 %v781, %v779
        %v870 = vpack.c.b16 %v782, %v780
        %v871 = vpack.c.b16 %v785, %v783
        %v872 = vpack.c.b16 %v786, %v784
        %v873 = vpack.c.b16 %v789, %v787
        %v874 = vpack.c.b16 %v790, %v788
        %v875 = vpack.c.b16 %v793, %v791
        %v876 = vpack.c.b16 %v794, %v792
        %v877 = vpack.c.b16 %v797, %v795
        %v878 = vpack.c.b16 %v798, %v796
        %v879 = vpack.c.b16 %v801, %v799
        %v880 = vpack.c.b16 %v802, %v800
        %v881 = vpack.c.b16 %v805, %v803
        %v882 = vpack.c.b16 %v806, %v804
        %v883 = vpack.c.b16 %v809, %v807
        %v884 = vpack.c.b16 %v810, %v808
        %v885 = vpack.c.b16 %v813, %v811
        %v886 = vpack.c.b16 %v814, %v812
        %v887 = vpack.c.b16 %v817, %v815
        %v888 = vpack.c.b16 %v818, %v816
        %v889 = vpack.c.b16 %v821, %v819
        %v890 = vpack.c.b16 %v822, %v820
        %v891 = vpack.c.b16 %v825, %v823
        %v892 = vpack.c.b16 %v826, %v824
        %v893 = vpack.c.b16 %v829, %v827
        %v894 = vpack.c.b16 %v830, %v828
        %959 = vmatpush.bf16.msra.mxu0 %v845
        %960 = vmatpush.bf16.msra.mxu0 %v843
        %961 = vmatpush.bf16.msra.mxu0 %v841
        %962 = vmatpush.bf16.msra.mxu0 %v839
        %963 = vmatpush.bf16.msra.mxu0 %v837
        %964 = vmatpush.bf16.msra.mxu0 %v835
        %965 = vmatpush.bf16.msra.mxu0 %v833
        %966 = vmatpush.bf16.msra.mxu0 %v831
        %967 = vmatmul.bf16.gmra.mxu0 %v631
        %v968 = vpop.f32.mrf.mxu0
        %v969 = vadd.f32 0.0, %v968
        %v970 = vpop.f32.mrf.mxu0
        %971 = vdwg.mxu0
        %972 = vmatpush.bf16.msra.mxu0 %v861
        %973 = vmatpush.bf16.msra.mxu0 %v859
        %974 = vmatpush.bf16.msra.mxu0 %v857
        %975 = vmatpush.bf16.msra.mxu0 %v855
        %976 = vmatpush.bf16.msra.mxu0 %v853
        %977 = vmatpush.bf16.msra.mxu0 %v851
        %978 = vmatpush.bf16.msra.mxu0 %v849
        %979 = vmatpush.bf16.msra.mxu0 %v847
        %980 = vmatmul.bf16.gmra.mxu0 %v632
        %v981 = vpop.f32.mrf.mxu0
        %v982 = vadd.f32 %v969, %v981
        %v983 = vpop.f32.mrf.mxu0
        %984 = vdwg.mxu0
        %985 = vmatpush.bf16.msra.mxu0 %v877
        %986 = vmatpush.bf16.msra.mxu0 %v875
        %987 = vmatpush.bf16.msra.mxu0 %v873
        %988 = vmatpush.bf16.msra.mxu0 %v871
        %989 = vmatpush.bf16.msra.mxu0 %v869
        %990 = vmatpush.bf16.msra.mxu0 %v867
        %991 = vmatpush.bf16.msra.mxu0 %v865
        %992 = vmatpush.bf16.msra.mxu0 %v863
        %993 = vmatmul.bf16.gmra.mxu0 %v633
        %v994 = vpop.f32.mrf.mxu0
        %v995 = vadd.f32 %v982, %v994
        %v996 = vpop.f32.mrf.mxu0
        %997 = vdwg.mxu0
        %998 = vmatpush.bf16.msra.mxu0 %v893
        %999 = vmatpush.bf16.msra.mxu0 %v891
        %1000 = vmatpush.bf16.msra.mxu0 %v889
        %1001 = vmatpush.bf16.msra.mxu0 %v887
        %1002 = vmatpush.bf16.msra.mxu0 %v885
        %1003 = vmatpush.bf16.msra.mxu0 %v883
        %1004 = vmatpush.bf16.msra.mxu0 %v881
        %1005 = vmatpush.bf16.msra.mxu0 %v879
        %1006 = vmatmul.bf16.gmra.mxu0 %v634
        %v1007 = vpop.f32.mrf.mxu0
        %v1008 = vadd.f32 %v995, %v1007
        %v1009 = vpop.f32.mrf.mxu0
        %1010 = vdwg.mxu0
        %1011 = vmatpush.bf16.msra.mxu0 %v846
        %1012 = vmatpush.bf16.msra.mxu0 %v844
        %1013 = vmatpush.bf16.msra.mxu0 %v842
        %1014 = vmatpush.bf16.msra.mxu0 %v840
        %1015 = vmatpush.bf16.msra.mxu0 %v838
        %1016 = vmatpush.bf16.msra.mxu0 %v836
        %1017 = vmatpush.bf16.msra.mxu0 %v834
        %1018 = vmatpush.bf16.msra.mxu0 %v832
        %1019 = vmatmul.bf16.gmra.mxu0 %v631
        %v1020 = vpop.f32.mrf.mxu0
        %v1021 = vadd.f32 0.0, %v1020
        %v1022 = vpop.f32.mrf.mxu0
        %1023 = vdwg.mxu0
        %1024 = vmatpush.bf16.msra.mxu0 %v862
        %1025 = vmatpush.bf16.msra.mxu0 %v860
        %1026 = vmatpush.bf16.msra.mxu0 %v858
        %1027 = vmatpush.bf16.msra.mxu0 %v856
        %1028 = vmatpush.bf16.msra.mxu0 %v854
        %1029 = vmatpush.bf16.msra.mxu0 %v852
        %1030 = vmatpush.bf16.msra.mxu0 %v850
        %1031 = vmatpush.bf16.msra.mxu0 %v848
        %1032 = vmatmul.bf16.gmra.mxu0 %v632
        %v1033 = vpop.f32.mrf.mxu0
        %v1034 = vadd.f32 %v1021, %v1033
        %v1035 = vpop.f32.mrf.mxu0
        %1036 = vdwg.mxu0
        %1037 = vmatpush.bf16.msra.mxu0 %v878
        %1038 = vmatpush.bf16.msra.mxu0 %v876
        %1039 = vmatpush.bf16.msra.mxu0 %v874
        %1040 = vmatpush.bf16.msra.mxu0 %v872
        %1041 = vmatpush.bf16.msra.mxu0 %v870
        %1042 = vmatpush.bf16.msra.mxu0 %v868
        %1043 = vmatpush.bf16.msra.mxu0 %v866
        %1044 = vmatpush.bf16.msra.mxu0 %v864
        %1045 = vmatmul.bf16.gmra.mxu0 %v633
        %v1046 = vpop.f32.mrf.mxu0
        %v1047 = vadd.f32 %v1034, %v1046
        %v1048 = vpop.f32.mrf.mxu0
        %1049 = vdwg.mxu0
        %1050 = vmatpush.bf16.msra.mxu0 %v894
        %1051 = vmatpush.bf16.msra.mxu0 %v892
        %1052 = vmatpush.bf16.msra.mxu0 %v890
        %1053 = vmatpush.bf16.msra.mxu0 %v888
        %1054 = vmatpush.bf16.msra.mxu0 %v886
        %1055 = vmatpush.bf16.msra.mxu0 %v884
        %1056 = vmatpush.bf16.msra.mxu0 %v882
        %1057 = vmatpush.bf16.msra.mxu0 %v880
        %1058 = vmatmul.bf16.gmra.mxu0 %v634
        %v1059 = vpop.f32.mrf.mxu0
        %v1060 = vadd.f32 %v1047, %v1059
        %v1061 = vpop.f32.mrf.mxu0
        %1062 = vdwg.mxu0
        %v1063 = vadd.f32 %v557, %v1008
        %v1064 = vadd.f32 %v558, %v1060
        %1065 = vst [vmem:[#allocation2] sm:$0xff] %v1063
        %1066 = vst [vmem:[#allocation2 + $0x8] sm:$0xff] %v1064
        %p1067 = scmp.eq.s32.totalorder %s21, 17
        // Predicated region
        $region75: #{alexnet_forward.21} parent=65 // pred_check
          %p1068 = pneg %p1067
        $region76: #{alexnet_forward.21} parent=65 // pred_check_branch
          %1070 = sbr.rel (%p1068) target = $region78
        $region77: #{alexnet_forward.21} parent=65 // pred_region
          %v1071 = vld [vmem:[#allocation2] sm:$0xff]
          %v1072 = vld [vmem:[#allocation2 + $0x8] sm:$0xff]
          %v1073 = vld [vmem:[%s539] sm:$0x3]
          %v1075 = vperm.slane %v1073, 0
          %v1076 = vperm.slane %v1073, 1
          %v1079 = vadd.f32 %v1071, %v1075
          %v1080 = vadd.f32 %v1072, %v1076
          %v1081 = vmax.f32 %v1079, 0.0
          %v1082 = vmax.f32 %v1080, 0.0
          %1083 = vst [vmem:[%s549] sm:$0xff] %v1081
          %1084 = vst [vmem:[%s549 + $0x8] sm:$0xff] %v1082
        $region78: #{alexnet_forward.21} parent=65 // pred_fallthru
          _
        %s1085 = smul.u32 2, %s20
        %p1086 = scmp.lt.s32.totalorder %s19, 0
        %s1087 = scalar_select %p1086, %s19, 0
        %p1088 = scmp.lt.s32.totalorder %s1085, 31
        %s1089 = scalar_select %p1088, %s1085, 31
        %s1090 = smul.addr %s1087, 32
        %s1091 = sadd.s32 %s1089, %s1090
        %s1092 = smul.addr %s1091, 8
        %s1093 = scalar_lea.vmem %s3, %s1092
        // Predicated region
        $region79: #{alexnet_forward.21} parent=65 // pred_check
          %p1094 = pneg %p135
        $region80: #{alexnet_forward.21} parent=65 // pred_check_branch
          %1096 = sbr.rel (%p1094) target = $region82
        $region81: #{alexnet_forward.21} parent=65 // pred_region
          %s1097 = smul.u32 2, %s20
        $region82: #{alexnet_forward.21} parent=65 // pred_fallthru
          _
      $region66: #{alexnet_forward.21} parent=5 // pred_fallthru
        _
      %p1098 = scmp.le.s32.totalorder 2, %s9
      // Predicated region
      $region83: #{alexnet_forward.21} parent=5 // pred_check
        %p1099 = pneg %p1098
      $region84: #{alexnet_forward.21} parent=5 // pred_check_branch
        %1101 = sbr.rel (%p1099) target = $region86
      $region85: #{alexnet_forward.21} parent=5 // pred_region
        %s1102 = ssub.s32 %s9, 2
        // Predicated region
        $region87: #{alexnet_forward.21} parent=85 // pred_check
          %p1103 = pneg %p141
        $region88: #{alexnet_forward.21} parent=85 // pred_check_branch
          %1105 = sbr.rel (%p1103) target = $region90
        $region89: #{alexnet_forward.21} parent=85 // pred_region
          %s1106 = smul.u32 2, %s23
          %p1107 = scmp.lt.s32.totalorder %s22, 0
          %s1108 = scalar_select %p1107, %s22, 0
          %p1109 = scmp.lt.s32.totalorder %s1106, 31
          %s1110 = scalar_select %p1109, %s1106, 31
          %s1111 = smul.addr %s1108, 32
          %s1112 = sadd.s32 %s1110, %s1111
          %s1113 = smul.addr %s1112, 8
          %s1114 = scalar_lea.vmem %s3, %s1113
        $region90: #{alexnet_forward.21} parent=85 // pred_fallthru
          _
      $region86: #{alexnet_forward.21} parent=5 // pred_fallthru
        _
    $region6: #{alexnet_forward.21} parent=1 // loop_footer
      %s13 = sadd.s32 1, %s9
    $region7: #{alexnet_forward.21} parent=1 // loop_footer_branch
      %8 = sbr.rel target = $region3
    $region8: #{alexnet_forward.21} parent=1 // loop_exit
      _

// kernel: alexnet_forward.22
$region0: #{alexnet_forward.22}
  #allocation0 [shape = 'u32[]', space=smem, size = 0x4, offset = 0x4, fixed_abs, tag = 'smem constant byte address 0x4 - core index']
  #allocation1 [shape = 'u32[72,128]{1,0:T(1,128)}', space=vmem, size = 0x9000, scoped, tag = 'internal scratch']
  #allocation2 [shape = 'f32[8,256]{1,0:T(8,128)}', space=vmem, size = 0x2000, scoped, tag = 'scratch operand']
  %s0 = inlined_call_operand.vmem [shape: bf16[8,4096], index: 0, kind: input, shape index: {}]
  %s1 = inlined_call_operand.vmem [shape: bf16[4096,4096], index: 1, kind: input, shape index: {}]
  %s2 = inlined_call_operand.vmem [shape: f32[1,4096], index: 2, kind: input, shape index: {}]
  %s3 = inlined_call_operand.vmem [shape: f32[8,4096], index: 3, kind: output, shape index: {}]
  %s4 = sld [smem:[#allocation0]]
  $region91: #{alexnet_forward.22} parent=0
    _
  %s6 = ssub.s32 1, %s4
  %s7 = scalar_select 0, %s6, %s4
  $region1: #{alexnet_forward.22} parent=0
    #allocation3 [shape = 'u8[524288]{0}', space=vmem, size = 0x80000, scoped, tag = 'input window, operand 1']
    loop: start=0, step=1, limit=130
    $region2: #{alexnet_forward.22} parent=1 // loop_pre_header
      _
    $region3: #{alexnet_forward.22} parent=1 // loop_header
      %s9 = sphi 0, %s13
      %p10 = scmp.ge.s32.totalorder %s9, 130
      %s16 = sphi 0, %s35
      %s17 = sphi 0, %s31
      %s18 = sphi 0, %s27
      %s19 = sphi 0, %s16
      %s20 = sphi 0, %s17
      %s21 = sphi 0, %s18
      %s22 = sphi 0, %s19
      %s23 = sphi 0, %s20
      %s24 = sphi 0, %s21
      %s40 = sphi 0, %s42
      %s43 = sphi 0, %s40
      %s44 = sphi 0, %s43
      %s60 = sphi 0, %s44
      %s68 = sphi 0, %s70
      %s71 = sphi 0, %s68
      %s72 = sphi 0, %s71
      %s88 = sphi 0, %s72
      %s94 = sphi 0, %s96
      %s97 = sphi 0, %s94
      %s98 = sphi 0, %s97
      %s114 = sphi 0, %s98
      %s122 = sphi 0, %s124
      %s125 = sphi 0, %s122
      %s126 = sphi 0, %s125
      %s142 = sphi 0, %s126
    $region4: #{alexnet_forward.22} parent=1 // loop_header_branch
      %12 = sbr.rel (%p10) target = $region8
    $region5: #{alexnet_forward.22} parent=1 // loop_body
      %s14 = ssub.s32 %s9, 1
      %s15 = ssub.s32 %s9, 2
      %s25 = sadd.s32 1, %s18
      %p26 = scmp.ge.s32.totalorder %s25, 8
      %s27 = scalar_select %p26, 0, %s25
      %s28 = sadd.s32 1, %s17
      %s29 = scalar_select %p26, %s28, %s17
      %p30 = scmp.ge.s32.totalorder %s29, 16
      %s31 = scalar_select %p30, 0, %s29
      %s32 = sadd.s32 1, %s16
      %s33 = scalar_select %p30, %s32, %s16
      %p34 = scmp.ge.s32.totalorder %s33, 1
      %s35 = scalar_select %p34, 0, %s33
      %s36 = ssub.s32 %s16, %s35
      %s37 = ssub.s32 %s18, %s27
      %s38 = sor.u32 %s36, %s37
      %p39 = scmp.eq.s32.totalorder %s38, 0
      %s41 = sadd.s32 %s40, 1
      %s42 = scalar_select %p39, %s40, %s41
      %p45 = pneg %p39
      %p46 = scmp.eq.s32.totalorder %s9, 127
      %p47 = por %p45, %p46
      %p48 = scmp.ne.s32.totalorder %s40, %s43
      %p49 = scmp.eq.s32.totalorder %s9, 0
      %p50 = por %p48, %p49
      %p51 = scmp.ne.s32.totalorder %s40, %s43
      %p52 = scmp.eq.s32.totalorder %s14, 127
      %p53 = por %p51, %p52
      %p54 = scmp.ne.s32.totalorder %s43, %s44
      %p55 = scmp.eq.s32.totalorder %s14, 0
      %p56 = por %p54, %p55
      %p57 = scmp.ne.s32.totalorder %s43, %s44
      %p58 = scmp.eq.s32.totalorder %s15, 127
      %p59 = por %p57, %p58
      %p61 = scmp.ne.s32.totalorder %s44, %s60
      %p62 = scmp.eq.s32.totalorder %s15, 0
      %p63 = por %p61, %p62
      %s64 = ssub.s32 %s18, %s27
      %s65 = ssub.s32 %s17, %s31
      %s66 = sor.u32 %s64, %s65
      %p67 = scmp.eq.s32.totalorder %s66, 0
      %s69 = sadd.s32 %s68, 1
      %s70 = scalar_select %p67, %s68, %s69
      %p73 = pneg %p67
      %p74 = scmp.eq.s32.totalorder %s9, 127
      %p75 = por %p73, %p74
      %p76 = scmp.ne.s32.totalorder %s68, %s71
      %p77 = scmp.eq.s32.totalorder %s9, 0
      %p78 = por %p76, %p77
      %p79 = scmp.ne.s32.totalorder %s68, %s71
      %p80 = scmp.eq.s32.totalorder %s14, 127
      %p81 = por %p79, %p80
      %p82 = scmp.ne.s32.totalorder %s71, %s72
      %p83 = scmp.eq.s32.totalorder %s14, 0
      %p84 = por %p82, %p83
      %p85 = scmp.ne.s32.totalorder %s71, %s72
      %p86 = scmp.eq.s32.totalorder %s15, 127
      %p87 = por %p85, %p86
      %p89 = scmp.ne.s32.totalorder %s72, %s88
      %p90 = scmp.eq.s32.totalorder %s15, 0
      %p91 = por %p89, %p90
      %s92 = ssub.s32 %s17, %s31
      %p93 = scmp.eq.s32.totalorder %s92, 0
      %s95 = sadd.s32 %s94, 1
      %s96 = scalar_select %p93, %s94, %s95
      %p99 = pneg %p93
      %p100 = scmp.eq.s32.totalorder %s9, 127
      %p101 = por %p99, %p100
      %p102 = scmp.ne.s32.totalorder %s94, %s97
      %p103 = scmp.eq.s32.totalorder %s9, 0
      %p104 = por %p102, %p103
      %p105 = scmp.ne.s32.totalorder %s94, %s97
      %p106 = scmp.eq.s32.totalorder %s14, 127
      %p107 = por %p105, %p106
      %p108 = scmp.ne.s32.totalorder %s97, %s98
      %p109 = scmp.eq.s32.totalorder %s14, 0
      %p110 = por %p108, %p109
      %p111 = scmp.ne.s32.totalorder %s97, %s98
      %p112 = scmp.eq.s32.totalorder %s15, 127
      %p113 = por %p111, %p112
      %p115 = scmp.ne.s32.totalorder %s98, %s114
      %p116 = scmp.eq.s32.totalorder %s15, 0
      %p117 = por %p115, %p116
      %s118 = ssub.s32 %s16, %s35
      %s119 = ssub.s32 %s17, %s31
      %s120 = sor.u32 %s118, %s119
      %p121 = scmp.eq.s32.totalorder %s120, 0
      %s123 = sadd.s32 %s122, 1
      %s124 = scalar_select %p121, %s122, %s123
      %p127 = pneg %p121
      %p128 = scmp.eq.s32.totalorder %s9, 127
      %p129 = por %p127, %p128
      %p130 = scmp.ne.s32.totalorder %s122, %s125
      %p131 = scmp.eq.s32.totalorder %s9, 0
      %p132 = por %p130, %p131
      %p133 = scmp.ne.s32.totalorder %s122, %s125
      %p134 = scmp.eq.s32.totalorder %s14, 127
      %p135 = por %p133, %p134
      %p136 = scmp.ne.s32.totalorder %s125, %s126
      %p137 = scmp.eq.s32.totalorder %s14, 0
      %p138 = por %p136, %p137
      %p139 = scmp.ne.s32.totalorder %s125, %s126
      %p140 = scmp.eq.s32.totalorder %s15, 127
      %p141 = por %p139, %p140
      %p143 = scmp.ne.s32.totalorder %s126, %s142
      %p144 = scmp.eq.s32.totalorder %s15, 0
      %p145 = por %p143, %p144
      %p146 = scmp.le.s32.totalorder 1, %s9
      %p147 = scmp.lt.s32.totalorder %s9, 129
      %p148 = pnand %p146, %p147
      %p149 = pneg %p148
      // Predicated region
      $region9: #{alexnet_forward.22} parent=5 // pred_check
        _
      $region10: #{alexnet_forward.22} parent=5 // pred_check_branch
        %151 = sbr.rel (%p148) target = $region12
      $region11: #{alexnet_forward.22} parent=5 // pred_region
        %s152 = ssub.s32 %s9, 1
      $region12: #{alexnet_forward.22} parent=5 // pred_fallthru
        _
      %p153 = scmp.lt.s32.totalorder %s9, 128
      // Predicated region
      $region13: #{alexnet_forward.22} parent=5 // pred_check
        %p154 = pneg %p153
      $region14: #{alexnet_forward.22} parent=5 // pred_check_branch
        %156 = sbr.rel (%p154) target = $region16
      $region15: #{alexnet_forward.22} parent=5 // pred_region
        // Predicated region
        $region17: #{alexnet_forward.22} parent=15 // pred_check
          %p157 = pneg %p50
        $region18: #{alexnet_forward.22} parent=15 // pred_check_branch
          %159 = sbr.rel (%p157) target = $region20
        $region19: #{alexnet_forward.22} parent=15 // pred_region
          %s160 = smul.u32 4, %s18
          %p161 = scmp.lt.s32.totalorder %s16, 0
          %s162 = scalar_select %p161, %s16, 0
          %p163 = scmp.lt.s32.totalorder %s160, 31
          %s164 = scalar_select %p163, %s160, 31
          %s165 = smul.addr %s162, 32
          %s166 = sadd.s32 %s164, %s165
          %s167 = smul.addr %s166, 4
          %s168 = scalar_lea.vmem %s0, %s167
          %s169 = smul.u32 4, %s18
        $region20: #{alexnet_forward.22} parent=15 // pred_fallthru
          _
        // Predicated region
        $region21: #{alexnet_forward.22} parent=15 // pred_check
          %p170 = pneg %p78
        $region22: #{alexnet_forward.22} parent=15 // pred_check_branch
          %172 = sbr.rel (%p170) target = $region24
        $region23: #{alexnet_forward.22} parent=15 // pred_region
          %s173 = sand.u32 %s68, 1
          %s174 = sand.u32 %s68, 1
          %s175 = smul.addr %s174, 512
          %s176 = scalar_lea.vmem [#allocation3], %s175
          %s177 = smul.u32 64, %s18
          %s178 = smul.u32 2, %s17
          %s179 = smul.addr %s177, 32
          %s180 = sadd.s32 %s178, %s179
          %s181 = smul.addr %s180, 4
          %s182 = scalar_lea.vmem %s1, %s181
          // Predicated region
          $region25: #{alexnet_forward.22} parent=23 // pred_check
            _
          $region26: #{alexnet_forward.22} parent=23 // pred_check_branch
            %184 = sbr.rel (0) target = $region28
          $region27: #{alexnet_forward.22} parent=23 // pred_region
            // Predicated region
            $region29: #{alexnet_forward.22} parent=27 // pred_check
              _
            $region30: #{alexnet_forward.22} parent=27 // pred_check_branch
              %186 = sbr.rel (0) target = $region32
            $region31: #{alexnet_forward.22} parent=27 // pred_region
              // Predicated region
              $region44: #{alexnet_forward.22} parent=31 // pred_check
                _
              $region45: #{alexnet_forward.22} parent=31 // pred_check_branch
                %328 = sbr.rel (0) target = $region47
              $region46: #{alexnet_forward.22} parent=31 // pred_region
                loop: start=0, step=1, limit=1
                $region48: #{alexnet_forward.22} parent=46 // loop_pre_header
                  _
                $region49: #{alexnet_forward.22} parent=46 // loop_header
                  %s330 = sphi 0, %s334
                  %p331 = scmp.ge.s32.totalorder %s330, 1
                  %s335 = sphi %s182, %s182
                  %s336 = sphi %s176, %s176
                $region50: #{alexnet_forward.22} parent=46 // loop_header_branch
                  %333 = sbr.rel (%p331) target = $region54
                $region51: #{alexnet_forward.22} parent=46 // loop_body
                  %v337 = vld [vmem:[%s335] sm:$0xff]
                  %338 = vst [vmem:[%s336] sm:$0xff] %v337
                  %v339 = vld [vmem:[%s335 + $0x80] sm:$0xff]
                  %340 = vst [vmem:[%s336 + $0x8] sm:$0xff] %v339
                  %v341 = vld [vmem:[%s335 + $0x100] sm:$0xff]
                  %342 = vst [vmem:[%s336 + $0x10] sm:$0xff] %v341
                  %v343 = vld [vmem:[%s335 + $0x180] sm:$0xff]
                  %344 = vst [vmem:[%s336 + $0x18] sm:$0xff] %v343
                  %v345 = vld [vmem:[%s335 + $0x200] sm:$0xff]
                  %346 = vst [vmem:[%s336 + $0x20] sm:$0xff] %v345
                  %v347 = vld [vmem:[%s335 + $0x280] sm:$0xff]
                  %348 = vst [vmem:[%s336 + $0x28] sm:$0xff] %v347
                  %v349 = vld [vmem:[%s335 + $0x300] sm:$0xff]
                  %350 = vst [vmem:[%s336 + $0x30] sm:$0xff] %v349
                  %v351 = vld [vmem:[%s335 + $0x380] sm:$0xff]
                  %352 = vst [vmem:[%s336 + $0x38] sm:$0xff] %v351
                  %v353 = vld [vmem:[%s335 + $0x400] sm:$0xff]
                  %354 = vst [vmem:[%s336 + $0x40] sm:$0xff] %v353
                  %v355 = vld [vmem:[%s335 + $0x480] sm:$0xff]
                  %356 = vst [vmem:[%s336 + $0x48] sm:$0xff] %v355
                  %v357 = vld [vmem:[%s335 + $0x500] sm:$0xff]
                  %358 = vst [vmem:[%s336 + $0x50] sm:$0xff] %v357
                  %v359 = vld [vmem:[%s335 + $0x580] sm:$0xff]
                  %360 = vst [vmem:[%s336 + $0x58] sm:$0xff] %v359
                  %v361 = vld [vmem:[%s335 + $0x600] sm:$0xff]
                  %362 = vst [vmem:[%s336 + $0x60] sm:$0xff] %v361
                  %v363 = vld [vmem:[%s335 + $0x680] sm:$0xff]
                  %364 = vst [vmem:[%s336 + $0x68] sm:$0xff] %v363
                  %v365 = vld [vmem:[%s335 + $0x700] sm:$0xff]
                  %366 = vst [vmem:[%s336 + $0x70] sm:$0xff] %v365
                  %v367 = vld [vmem:[%s335 + $0x780] sm:$0xff]
                  %368 = vst [vmem:[%s336 + $0x78] sm:$0xff] %v367
                  %v369 = vld [vmem:[%s335 + $0x800] sm:$0xff]
                  %370 = vst [vmem:[%s336 + $0x80] sm:$0xff] %v369
                  %v371 = vld [vmem:[%s335 + $0x880] sm:$0xff]
                  %372 = vst [vmem:[%s336 + $0x88] sm:$0xff] %v371
                  %v373 = vld [vmem:[%s335 + $0x900] sm:$0xff]
                  %374 = vst [vmem:[%s336 + $0x90] sm:$0xff] %v373
                  %v375 = vld [vmem:[%s335 + $0x980] sm:$0xff]
                  %376 = vst [vmem:[%s336 + $0x98] sm:$0xff] %v375
                  %v377 = vld [vmem:[%s335 + $0xa00] sm:$0xff]
                  %378 = vst [vmem:[%s336 + $0xa0] sm:$0xff] %v377
                  %v379 = vld [vmem:[%s335 + $0xa80] sm:$0xff]
                  %380 = vst [vmem:[%s336 + $0xa8] sm:$0xff] %v379
                  %v381 = vld [vmem:[%s335 + $0xb00] sm:$0xff]
                  %382 = vst [vmem:[%s336 + $0xb0] sm:$0xff] %v381
                  %v383 = vld [vmem:[%s335 + $0xb80] sm:$0xff]
                  %384 = vst [vmem:[%s336 + $0xb8] sm:$0xff] %v383
                  %v385 = vld [vmem:[%s335 + $0xc00] sm:$0xff]
                  %386 = vst [vmem:[%s336 + $0xc0] sm:$0xff] %v385
                  %v387 = vld [vmem:[%s335 + $0xc80] sm:$0xff]
                  %388 = vst [vmem:[%s336 + $0xc8] sm:$0xff] %v387
                  %v389 = vld [vmem:[%s335 + $0xd00] sm:$0xff]
                  %390 = vst [vmem:[%s336 + $0xd0] sm:$0xff] %v389
                  %v391 = vld [vmem:[%s335 + $0xd80] sm:$0xff]
                  %392 = vst [vmem:[%s336 + $0xd8] sm:$0xff] %v391
                  %v393 = vld [vmem:[%s335 + $0xe00] sm:$0xff]
                  %394 = vst [vmem:[%s336 + $0xe0] sm:$0xff] %v393
                  %v395 = vld [vmem:[%s335 + $0xe80] sm:$0xff]
                  %396 = vst [vmem:[%s336 + $0xe8] sm:$0xff] %v395
                  %v397 = vld [vmem:[%s335 + $0xf00] sm:$0xff]
                  %398 = vst [vmem:[%s336 + $0xf0] sm:$0xff] %v397
                  %v399 = vld [vmem:[%s335 + $0xf80] sm:$0xff]
                  %400 = vst [vmem:[%s336 + $0xf8] sm:$0xff] %v399
                  %v401 = vld [vmem:[%s335 + $0x1000] sm:$0xff]
                  %402 = vst [vmem:[%s336 + $0x100] sm:$0xff] %v401
                  %v403 = vld [vmem:[%s335 + $0x1080] sm:$0xff]
                  %404 = vst [vmem:[%s336 + $0x108] sm:$0xff] %v403
                  %v405 = vld [vmem:[%s335 + $0x1100] sm:$0xff]
                  %406 = vst [vmem:[%s336 + $0x110] sm:$0xff] %v405
                  %v407 = vld [vmem:[%s335 + $0x1180] sm:$0xff]
                  %408 = vst [vmem:[%s336 + $0x118] sm:$0xff] %v407
                  %v409 = vld [vmem:[%s335 + $0x1200] sm:$0xff]
                  %410 = vst [vmem:[%s336 + $0x120] sm:$0xff] %v409
                  %v411 = vld [vmem:[%s335 + $0x1280] sm:$0xff]
                  %412 = vst [vmem:[%s336 + $0x128] sm:$0xff] %v411
                  %v413 = vld [vmem:[%s335 + $0x1300] sm:$0xff]
                  %414 = vst [vmem:[%s336 + $0x130] sm:$0xff] %v413
                  %v415 = vld [vmem:[%s335 + $0x1380] sm:$0xff]
                  %416 = vst [vmem:[%s336 + $0x138] sm:$0xff] %v415
                  %v417 = vld [vmem:[%s335 + $0x1400] sm:$0xff]
                  %418 = vst [vmem:[%s336 + $0x140] sm:$0xff] %v417
                  %v419 = vld [vmem:[%s335 + $0x1480] sm:$0xff]
                  %420 = vst [vmem:[%s336 + $0x148] sm:$0xff] %v419
                  %v421 = vld [vmem:[%s335 + $0x1500] sm:$0xff]
                  %422 = vst [vmem:[%s336 + $0x150] sm:$0xff] %v421
                  %v423 = vld [vmem:[%s335 + $0x1580] sm:$0xff]
                  %424 = vst [vmem:[%s336 + $0x158] sm:$0xff] %v423
                  %v425 = vld [vmem:[%s335 + $0x1600] sm:$0xff]
                  %426 = vst [vmem:[%s336 + $0x160] sm:$0xff] %v425
                  %v427 = vld [vmem:[%s335 + $0x1680] sm:$0xff]
                  %428 = vst [vmem:[%s336 + $0x168] sm:$0xff] %v427
                  %v429 = vld [vmem:[%s335 + $0x1700] sm:$0xff]
                  %430 = vst [vmem:[%s336 + $0x170] sm:$0xff] %v429
                  %v431 = vld [vmem:[%s335 + $0x1780] sm:$0xff]
                  %432 = vst [vmem:[%s336 + $0x178] sm:$0xff] %v431
                  %v433 = vld [vmem:[%s335 + $0x1800] sm:$0xff]
                  %434 = vst [vmem:[%s336 + $0x180] sm:$0xff] %v433
                  %v435 = vld [vmem:[%s335 + $0x1880] sm:$0xff]
                  %436 = vst [vmem:[%s336 + $0x188] sm:$0xff] %v435
                  %v437 = vld [vmem:[%s335 + $0x1900] sm:$0xff]
                  %438 = vst [vmem:[%s336 + $0x190] sm:$0xff] %v437
                  %v439 = vld [vmem:[%s335 + $0x1980] sm:$0xff]
                  %440 = vst [vmem:[%s336 + $0x198] sm:$0xff] %v439
                  %v441 = vld [vmem:[%s335 + $0x1a00] sm:$0xff]
                  %442 = vst [vmem:[%s336 + $0x1a0] sm:$0xff] %v441
                  %v443 = vld [vmem:[%s335 + $0x1a80] sm:$0xff]
                  %444 = vst [vmem:[%s336 + $0x1a8] sm:$0xff] %v443
                  %v445 = vld [vmem:[%s335 + $0x1b00] sm:$0xff]
                  %446 = vst [vmem:[%s336 + $0x1b0] sm:$0xff] %v445
                  %v447 = vld [vmem:[%s335 + $0x1b80] sm:$0xff]
                  %448 = vst [vmem:[%s336 + $0x1b8] sm:$0xff] %v447
                  %v449 = vld [vmem:[%s335 + $0x1c00] sm:$0xff]
                  %450 = vst [vmem:[%s336 + $0x1c0] sm:$0xff] %v449
                  %v451 = vld [vmem:[%s335 + $0x1c80] sm:$0xff]
                  %452 = vst [vmem:[%s336 + $0x1c8] sm:$0xff] %v451
                  %v453 = vld [vmem:[%s335 + $0x1d00] sm:$0xff]
                  %454 = vst [vmem:[%s336 + $0x1d0] sm:$0xff] %v453
                  %v455 = vld [vmem:[%s335 + $0x1d80] sm:$0xff]
                  %456 = vst [vmem:[%s336 + $0x1d8] sm:$0xff] %v455
                  %v457 = vld [vmem:[%s335 + $0x1e00] sm:$0xff]
                  %458 = vst [vmem:[%s336 + $0x1e0] sm:$0xff] %v457
                  %v459 = vld [vmem:[%s335 + $0x1e80] sm:$0xff]
                  %460 = vst [vmem:[%s336 + $0x1e8] sm:$0xff] %v459
                  %v461 = vld [vmem:[%s335 + $0x1f00] sm:$0xff]
                  %462 = vst [vmem:[%s336 + $0x1f0] sm:$0xff] %v461
                  %v463 = vld [vmem:[%s335 + $0x1f80] sm:$0xff]
                  %464 = vst [vmem:[%s336 + $0x1f8] sm:$0xff] %v463
                $region52: #{alexnet_forward.22} parent=46 // loop_footer
                  %s334 = sadd.s32 1, %s330
                $region53: #{alexnet_forward.22} parent=46 // loop_footer_branch
                  %329 = sbr.rel target = $region49
                $region54: #{alexnet_forward.22} parent=46 // loop_exit
                  _
              $region47: #{alexnet_forward.22} parent=31 // pred_fallthru
                _
              // Predicated region
              $region55: #{alexnet_forward.22} parent=31 // pred_check
                _
              $region56: #{alexnet_forward.22} parent=31 // pred_check_branch
                %466 = sbr.rel target = $region58
              $region57: #{alexnet_forward.22} parent=31 // pred_region
                _
              $region58: #{alexnet_forward.22} parent=31 // pred_fallthru
                _
            $region32: #{alexnet_forward.22} parent=27 // pred_fallthru
              _
            // Predicated region
            $region33: #{alexnet_forward.22} parent=27 // pred_check
              _
            $region34: #{alexnet_forward.22} parent=27 // pred_check_branch
              %188 = sbr.rel target = $region36
            $region35: #{alexnet_forward.22} parent=27 // pred_region
              %s190 = ssub.s32 256, 1
              loop: start=0, step=1, limit=1
              $region37: #{alexnet_forward.22} parent=35 // loop_pre_header
                _
              $region38: #{alexnet_forward.22} parent=35 // loop_header
                %s192 = sphi 0, %s196
                %p193 = scmp.ge.s32.totalorder %s192, 1
                %s197 = sphi %s182, %s182
                %s198 = sphi %s176, %s176
              $region39: #{alexnet_forward.22} parent=35 // loop_header_branch
                %195 = sbr.rel (%p193) target = $region43
              $region40: #{alexnet_forward.22} parent=35 // loop_body
                %v199 = vld [vmem:[%s197] sm:%s190]
                %200 = vst [vmem:[%s198] sm:%s190] %v199
                %v201 = vld [vmem:[%s197 + $0x80] sm:%s190]
                %202 = vst [vmem:[%s198 + $0x8] sm:%s190] %v201
                %v203 = vld [vmem:[%s197 + $0x100] sm:%s190]
                %204 = vst [vmem:[%s198 + $0x10] sm:%s190] %v203
                %v205 = vld [vmem:[%s197 + $0x180] sm:%s190]
                %206 = vst [vmem:[%s198 + $0x18] sm:%s190] %v205
                %v207 = vld [vmem:[%s197 + $0x200] sm:%s190]
                %208 = vst [vmem:[%s198 + $0x20] sm:%s190] %v207
                %v209 = vld [vmem:[%s197 + $0x280] sm:%s190]
                %210 = vst [vmem:[%s198 + $0x28] sm:%s190] %v209
                %v211 = vld [vmem:[%s197 + $0x300] sm:%s190]
                %212 = vst [vmem:[%s198 + $0x30] sm:%s190] %v211
                %v213 = vld [vmem:[%s197 + $0x380] sm:%s190]
                %214 = vst [vmem:[%s198 + $0x38] sm:%s190] %v213
                %v215 = vld [vmem:[%s197 + $0x400] sm:%s190]
                %216 = vst [vmem:[%s198 + $0x40] sm:%s190] %v215
                %v217 = vld [vmem:[%s197 + $0x480] sm:%s190]
                %218 = vst [vmem:[%s198 + $0x48] sm:%s190] %v217
                %v219 = vld [vmem:[%s197 + $0x500] sm:%s190]
                %220 = vst [vmem:[%s198 + $0x50] sm:%s190] %v219
                %v221 = vld [vmem:[%s197 + $0x580] sm:%s190]
                %222 = vst [vmem:[%s198 + $0x58] sm:%s190] %v221
                %v223 = vld [vmem:[%s197 + $0x600] sm:%s190]
                %224 = vst [vmem:[%s198 + $0x60] sm:%s190] %v223
                %v225 = vld [vmem:[%s197 + $0x680] sm:%s190]
                %226 = vst [vmem:[%s198 + $0x68] sm:%s190] %v225
                %v227 = vld [vmem:[%s197 + $0x700] sm:%s190]
                %228 = vst [vmem:[%s198 + $0x70] sm:%s190] %v227
                %v229 = vld [vmem:[%s197 + $0x780] sm:%s190]
                %230 = vst [vmem:[%s198 + $0x78] sm:%s190] %v229
                %v231 = vld [vmem:[%s197 + $0x800] sm:%s190]
                %232 = vst [vmem:[%s198 + $0x80] sm:%s190] %v231
                %v233 = vld [vmem:[%s197 + $0x880] sm:%s190]
                %234 = vst [vmem:[%s198 + $0x88] sm:%s190] %v233
                %v235 = vld [vmem:[%s197 + $0x900] sm:%s190]
                %236 = vst [vmem:[%s198 + $0x90] sm:%s190] %v235
                %v237 = vld [vmem:[%s197 + $0x980] sm:%s190]
                %238 = vst [vmem:[%s198 + $0x98] sm:%s190] %v237
                %v239 = vld [vmem:[%s197 + $0xa00] sm:%s190]
                %240 = vst [vmem:[%s198 + $0xa0] sm:%s190] %v239
                %v241 = vld [vmem:[%s197 + $0xa80] sm:%s190]
                %242 = vst [vmem:[%s198 + $0xa8] sm:%s190] %v241
                %v243 = vld [vmem:[%s197 + $0xb00] sm:%s190]
                %244 = vst [vmem:[%s198 + $0xb0] sm:%s190] %v243
                %v245 = vld [vmem:[%s197 + $0xb80] sm:%s190]
                %246 = vst [vmem:[%s198 + $0xb8] sm:%s190] %v245
                %v247 = vld [vmem:[%s197 + $0xc00] sm:%s190]
                %248 = vst [vmem:[%s198 + $0xc0] sm:%s190] %v247
                %v249 = vld [vmem:[%s197 + $0xc80] sm:%s190]
                %250 = vst [vmem:[%s198 + $0xc8] sm:%s190] %v249
                %v251 = vld [vmem:[%s197 + $0xd00] sm:%s190]
                %252 = vst [vmem:[%s198 + $0xd0] sm:%s190] %v251
                %v253 = vld [vmem:[%s197 + $0xd80] sm:%s190]
                %254 = vst [vmem:[%s198 + $0xd8] sm:%s190] %v253
                %v255 = vld [vmem:[%s197 + $0xe00] sm:%s190]
                %256 = vst [vmem:[%s198 + $0xe0] sm:%s190] %v255
                %v257 = vld [vmem:[%s197 + $0xe80] sm:%s190]
                %258 = vst [vmem:[%s198 + $0xe8] sm:%s190] %v257
                %v259 = vld [vmem:[%s197 + $0xf00] sm:%s190]
                %260 = vst [vmem:[%s198 + $0xf0] sm:%s190] %v259
                %v261 = vld [vmem:[%s197 + $0xf80] sm:%s190]
                %262 = vst [vmem:[%s198 + $0xf8] sm:%s190] %v261
                %v263 = vld [vmem:[%s197 + $0x1000] sm:%s190]
                %264 = vst [vmem:[%s198 + $0x100] sm:%s190] %v263
                %v265 = vld [vmem:[%s197 + $0x1080] sm:%s190]
                %266 = vst [vmem:[%s198 + $0x108] sm:%s190] %v265
                %v267 = vld [vmem:[%s197 + $0x1100] sm:%s190]
                %268 = vst [vmem:[%s198 + $0x110] sm:%s190] %v267
                %v269 = vld [vmem:[%s197 + $0x1180] sm:%s190]
                %270 = vst [vmem:[%s198 + $0x118] sm:%s190] %v269
                %v271 = vld [vmem:[%s197 + $0x1200] sm:%s190]
                %272 = vst [vmem:[%s198 + $0x120] sm:%s190] %v271
                %v273 = vld [vmem:[%s197 + $0x1280] sm:%s190]
                %274 = vst [vmem:[%s198 + $0x128] sm:%s190] %v273
                %v275 = vld [vmem:[%s197 + $0x1300] sm:%s190]
                %276 = vst [vmem:[%s198 + $0x130] sm:%s190] %v275
                %v277 = vld [vmem:[%s197 + $0x1380] sm:%s190]
                %278 = vst [vmem:[%s198 + $0x138] sm:%s190] %v277
                %v279 = vld [vmem:[%s197 + $0x1400] sm:%s190]
                %280 = vst [vmem:[%s198 + $0x140] sm:%s190] %v279
                %v281 = vld [vmem:[%s197 + $0x1480] sm:%s190]
                %282 = vst [vmem:[%s198 + $0x148] sm:%s190] %v281
                %v283 = vld [vmem:[%s197 + $0x1500] sm:%s190]
                %284 = vst [vmem:[%s198 + $0x150] sm:%s190] %v283
                %v285 = vld [vmem:[%s197 + $0x1580] sm:%s190]
                %286 = vst [vmem:[%s198 + $0x158] sm:%s190] %v285
                %v287 = vld [vmem:[%s197 + $0x1600] sm:%s190]
                %288 = vst [vmem:[%s198 + $0x160] sm:%s190] %v287
                %v289 = vld [vmem:[%s197 + $0x1680] sm:%s190]
                %290 = vst [vmem:[%s198 + $0x168] sm:%s190] %v289
                %v291 = vld [vmem:[%s197 + $0x1700] sm:%s190]
                %292 = vst [vmem:[%s198 + $0x170] sm:%s190] %v291
                %v293 = vld [vmem:[%s197 + $0x1780] sm:%s190]
                %294 = vst [vmem:[%s198 + $0x178] sm:%s190] %v293
                %v295 = vld [vmem:[%s197 + $0x1800] sm:%s190]
                %296 = vst [vmem:[%s198 + $0x180] sm:%s190] %v295
                %v297 = vld [vmem:[%s197 + $0x1880] sm:%s190]
                %298 = vst [vmem:[%s198 + $0x188] sm:%s190] %v297
                %v299 = vld [vmem:[%s197 + $0x1900] sm:%s190]
                %300 = vst [vmem:[%s198 + $0x190] sm:%s190] %v299
                %v301 = vld [vmem:[%s197 + $0x1980] sm:%s190]
                %302 = vst [vmem:[%s198 + $0x198] sm:%s190] %v301
                %v303 = vld [vmem:[%s197 + $0x1a00] sm:%s190]
                %304 = vst [vmem:[%s198 + $0x1a0] sm:%s190] %v303
                %v305 = vld [vmem:[%s197 + $0x1a80] sm:%s190]
                %306 = vst [vmem:[%s198 + $0x1a8] sm:%s190] %v305
                %v307 = vld [vmem:[%s197 + $0x1b00] sm:%s190]
                %308 = vst [vmem:[%s198 + $0x1b0] sm:%s190] %v307
                %v309 = vld [vmem:[%s197 + $0x1b80] sm:%s190]
                %310 = vst [vmem:[%s198 + $0x1b8] sm:%s190] %v309
                %v311 = vld [vmem:[%s197 + $0x1c00] sm:%s190]
                %312 = vst [vmem:[%s198 + $0x1c0] sm:%s190] %v311
                %v313 = vld [vmem:[%s197 + $0x1c80] sm:%s190]
                %314 = vst [vmem:[%s198 + $0x1c8] sm:%s190] %v313
                %v315 = vld [vmem:[%s197 + $0x1d00] sm:%s190]
                %316 = vst [vmem:[%s198 + $0x1d0] sm:%s190] %v315
                %v317 = vld [vmem:[%s197 + $0x1d80] sm:%s190]
                %318 = vst [vmem:[%s198 + $0x1d8] sm:%s190] %v317
                %v319 = vld [vmem:[%s197 + $0x1e00] sm:%s190]
                %320 = vst [vmem:[%s198 + $0x1e0] sm:%s190] %v319
                %v321 = vld [vmem:[%s197 + $0x1e80] sm:%s190]
                %322 = vst [vmem:[%s198 + $0x1e8] sm:%s190] %v321
                %v323 = vld [vmem:[%s197 + $0x1f00] sm:%s190]
                %324 = vst [vmem:[%s198 + $0x1f0] sm:%s190] %v323
                %v325 = vld [vmem:[%s197 + $0x1f80] sm:%s190]
                %326 = vst [vmem:[%s198 + $0x1f8] sm:%s190] %v325
              $region41: #{alexnet_forward.22} parent=35 // loop_footer
                %s196 = sadd.s32 1, %s192
              $region42: #{alexnet_forward.22} parent=35 // loop_footer_branch
                %191 = sbr.rel target = $region38
              $region43: #{alexnet_forward.22} parent=35 // loop_exit
                _
            $region36: #{alexnet_forward.22} parent=27 // pred_fallthru
              _
          $region28: #{alexnet_forward.22} parent=23 // pred_fallthru
            _
          %467 = vnop
        $region24: #{alexnet_forward.22} parent=15 // pred_fallthru
          _
        // Predicated region
        $region59: #{alexnet_forward.22} parent=15 // pred_check
          %p468 = pneg %p104
        $region60: #{alexnet_forward.22} parent=15 // pred_check_branch
          %470 = sbr.rel (%p468) target = $region62
        $region61: #{alexnet_forward.22} parent=15 // pred_region
          %s471 = smul.u32 2, %s17
          %p472 = scmp.lt.s32.totalorder %s471, 31
          %s473 = scalar_select %p472, %s471, 31
          %s474 = scalar_lea.vmem %s2, %s473
          %s475 = smul.u32 2, %s17
        $region62: #{alexnet_forward.22} parent=15 // pred_fallthru
          _
      $region16: #{alexnet_forward.22} parent=5 // pred_fallthru
        _
      %p476 = scmp.le.s32.totalorder 1, %s9
      %p477 = scmp.lt.s32.totalorder %s9, 129
      %p478 = pnand %p476, %p477
      %p479 = pneg %p478
      // Predicated region
      $region63: #{alexnet_forward.22} parent=5 // pred_check
        _
      $region64: #{alexnet_forward.22} parent=5 // pred_check_branch
        %481 = sbr.rel (%p478) target = $region66
      $region65: #{alexnet_forward.22} parent=5 // pred_region
        %s482 = ssub.s32 %s9, 1
        %s483 = sand.u32 %s71, 1
        %s484 = sand.u32 %s71, 1
        %s485 = smul.addr %s484, 512
        %s486 = scalar_lea.vmem [#allocation3], %s485
        // Predicated region
        $region67: #{alexnet_forward.22} parent=65 // pred_check
          %p487 = pneg %p84
        $region68: #{alexnet_forward.22} parent=65 // pred_check_branch
          %489 = sbr.rel (%p487) target = $region70
        $region69: #{alexnet_forward.22} parent=65 // pred_region
          _
        $region70: #{alexnet_forward.22} parent=65 // pred_fallthru
          _
        %s490 = smul.u32 4, %s21
        %p491 = scmp.lt.s32.totalorder %s19, 0
        %s492 = scalar_select %p491, %s19, 0
        %p493 = scmp.lt.s32.totalorder %s490, 31
        %s494 = scalar_select %p493, %s490, 31
        %s495 = smul.addr %s492, 32
        %s496 = sadd.s32 %s494, %s495
        %s497 = smul.addr %s496, 4
        %s498 = scalar_lea.vmem %s0, %s497
        %p499 = pneg %p56
        %p500 = pneg %p53
        %s501 = sand.u32 %s71, 1
        %s502 = sand.u32 %s71, 1
        %s503 = smul.addr %s502, 512
        %s504 = scalar_lea.vmem [#allocation3], %s503
        %p505 = pneg %p84
        %p506 = pneg %p81
        %s507 = smul.u32 2, %s20
        %p508 = scmp.lt.s32.totalorder %s507, 31
        %s509 = scalar_select %p508, %s507, 31
        %s510 = scalar_lea.vmem %s2, %s509
        %p511 = pneg %p110
        %p512 = pneg %p107
        %p513 = pneg %p138
        %p514 = pneg %p135
        %s515 = smul.u32 2, %s20
        %p516 = scmp.lt.s32.totalorder %s19, 0
        %s517 = scalar_select %p516, %s19, 0
        %p518 = scmp.lt.s32.totalorder %s515, 31
        %s519 = scalar_select %p518, %s515, 31
        %s520 = smul.addr %s517, 32
        %s521 = sadd.s32 %s519, %s520
        %s522 = smul.addr %s521, 8
        %s523 = scalar_lea.vmem %s3, %s522
        %s524 = smul.u32 4, %s21
        %p525 = scmp.lt.s32.totalorder %s19, 0
        %s526 = scalar_select %p525, %s19, 0
        %p527 = scmp.lt.s32.totalorder %s524, 31
        %s528 = scalar_select %p527, %s524, 31
        %s529 = smul.addr %s526, 32
        %s530 = sadd.s32 %s528, %s529
        %s531 = smul.addr %s530, 4
        %s532 = scalar_lea.vmem %s0, %s531
        %s533 = smul.u32 4, %s21
        %s534 = smul.u32 64, %s21
        %s535 = smul.u32 2, %s20
        %s536 = smul.u32 2, %s20
        %p537 = scmp.lt.s32.totalorder %s536, 31
        %s538 = scalar_select %p537, %s536, 31
        %s539 = scalar_lea.vmem %s2, %s538
        %s540 = smul.u32 2, %s20
        %s541 = smul.u32 2, %s20
        %p542 = scmp.lt.s32.totalorder %s19, 0
        %s543 = scalar_select %p542, %s19, 0
        %p544 = scmp.lt.s32.totalorder %s541, 31
        %s545 = scalar_select %p544, %s541, 31
        %s546 = smul.addr %s543, 32
        %s547 = sadd.s32 %s545, %s546
        %s548 = smul.addr %s547, 8
        %s549 = scalar_lea.vmem %s3, %s548
        %s550 = smul.u32 2, %s20
        %p551 = scmp.eq.s32.totalorder %s21, 0
        // Predicated region
        $region71: #{alexnet_forward.22} parent=65 // pred_check
          %p552 = pneg %p551
        $region72: #{alexnet_forward.22} parent=65 // pred_check_branch
          %554 = sbr.rel (%p552) target = $region74
        $region73: #{alexnet_forward.22} parent=65 // pred_region
          %555 = vst [vmem:[#allocation2] sm:$0xff] 0.0
          %556 = vst [vmem:[#allocation2 + $0x8] sm:$0xff] 0.0
        $region74: #{alexnet_forward.22} parent=65 // pred_fallthru
          _
        %v557 = vld [vmem:[#allocation2] sm:$0xff]
        %v558 = vld [vmem:[#allocation2 + $0x8] sm:$0xff]
        %v559 = vld [vmem:[%s532] sm:$0xff]
        %v560 = vld [vmem:[%s532 + $0x8] sm:$0xff]
        %v561 = vld [vmem:[%s486] sm:$0xff]
        %v562 = vld [vmem:[%s486 + $0x8] sm:$0xff]
        %v563 = vld [vmem:[%s486 + $0x10] sm:$0xff]
        %v564 = vld [vmem:[%s486 + $0x18] sm:$0xff]
        %v565 = vld [vmem:[%s486 + $0x20] sm:$0xff]
        %v566 = vld [vmem:[%s486 + $0x28] sm:$0xff]
        %v567 = vld [vmem:[%s486 + $0x30] sm:$0xff]
        %v568 = vld [vmem:[%s486 + $0x38] sm:$0xff]
        %v569 = vld [vmem:[%s486 + $0x40] sm:$0xff]
        %v570 = vld [vmem:[%s486 + $0x48] sm:$0xff]
        %v571 = vld [vmem:[%s486 + $0x50] sm:$0xff]
        %v572 = vld [vmem:[%s486 + $0x58] sm:$0xff]
        %v573 = vld [vmem:[%s486 + $0x60] sm:$0xff]
        %v574 = vld [vmem:[%s486 + $0x68] sm:$0xff]
        %v575 = vld [vmem:[%s486 + $0x70] sm:$0xff]
        %v576 = vld [vmem:[%s486 + $0x78] sm:$0xff]
        %v577 = vld [vmem:[%s486 + $0x80] sm:$0xff]
        %v578 = vld [vmem:[%s486 + $0x88] sm:$0xff]
        %v579 = vld [vmem:[%s486 + $0x90] sm:$0xff]
        %v580 = vld [vmem:[%s486 + $0x98] sm:$0xff]
        %v581 = vld [vmem:[%s486 + $0xa0] sm:$0xff]
        %v582 = vld [vmem:[%s486 + $0xa8] sm:$0xff]
        %v583 = vld [vmem:[%s486 + $0xb0] sm:$0xff]
        %v584 = vld [vmem:[%s486 + $0xb8] sm:$0xff]
        %v585 = vld [vmem:[%s486 + $0xc0] sm:$0xff]
        %v586 = vld [vmem:[%s486 + $0xc8] sm:$0xff]
        %v587 = vld [vmem:[%s486 + $0xd0] sm:$0xff]
        %v588 = vld [vmem:[%s486 + $0xd8] sm:$0xff]
        %v589 = vld [vmem:[%s486 + $0xe0] sm:$0xff]
        %v590 = vld [vmem:[%s486 + $0xe8] sm:$0xff]
        %v591 = vld [vmem:[%s486 + $0xf0] sm:$0xff]
        %v592 = vld [vmem:[%s486 + $0xf8] sm:$0xff]
        %v593 = vld [vmem:[%s486 + $0x100] sm:$0xff]
        %v594 = vld [vmem:[%s486 + $0x108] sm:$0xff]
        %v595 = vld [vmem:[%s486 + $0x110] sm:$0xff]
        %v596 = vld [vmem:[%s486 + $0x118] sm:$0xff]
        %v597 = vld [vmem:[%s486 + $0x120] sm:$0xff]
        %v598 = vld [vmem:[%s486 + $0x128] sm:$0xff]
        %v599 = vld [vmem:[%s486 + $0x130] sm:$0xff]
        %v600 = vld [vmem:[%s486 + $0x138] sm:$0xff]
        %v601 = vld [vmem:[%s486 + $0x140] sm:$0xff]
        %v602 = vld [vmem:[%s486 + $0x148] sm:$0xff]
        %v603 = vld [vmem:[%s486 + $0x150] sm:$0xff]
        %v604 = vld [vmem:[%s486 + $0x158] sm:$0xff]
        %v605 = vld [vmem:[%s486 + $0x160] sm:$0xff]
        %v606 = vld [vmem:[%s486 + $0x168] sm:$0xff]
        %v607 = vld [vmem:[%s486 + $0x170] sm:$0xff]
        %v608 = vld [vmem:[%s486 + $0x178] sm:$0xff]
        %v609 = vld [vmem:[%s486 + $0x180] sm:$0xff]
        %v610 = vld [vmem:[%s486 + $0x188] sm:$0xff]
        %v611 = vld [vmem:[%s486 + $0x190] sm:$0xff]
        %v612 = vld [vmem:[%s486 + $0x198] sm:$0xff]
        %v613 = vld [vmem:[%s486 + $0x1a0] sm:$0xff]
        %v614 = vld [vmem:[%s486 + $0x1a8] sm:$0xff]
        %v615 = vld [vmem:[%s486 + $0x1b0] sm:$0xff]
        %v616 = vld [vmem:[%s486 + $0x1b8] sm:$0xff]
        %v617 = vld [vmem:[%s486 + $0x1c0] sm:$0xff]
        %v618 = vld [vmem:[%s486 + $0x1c8] sm:$0xff]
        %v619 = vld [vmem:[%s486 + $0x1d0] sm:$0xff]
        %v620 = vld [vmem:[%s486 + $0x1d8] sm:$0xff]
        %v621 = vld [vmem:[%s486 + $0x1e0] sm:$0xff]
        %v622 = vld [vmem:[%s486 + $0x1e8] sm:$0xff]
        %v623 = vld [vmem:[%s486 + $0x1f0] sm:$0xff]
        %v624 = vld [vmem:[%s486 + $0x1f8] sm:$0xff]
        %v627 = vunpack.c.l.b16 %v559
        %v628 = vunpack.c.h.b16 %v559
        %v629 = vunpack.c.l.b16 %v560
        %v630 = vunpack.c.h.b16 %v560
        %v631 = vpack.c.b16 %v627, %v627
        %v632 = vpack.c.b16 %v628, %v628
        %v633 = vpack.c.b16 %v629, %v629
        %v634 = vpack.c.b16 %v630, %v630
        %v703 = vunpack.c.l.b16 %v561
        %v704 = vunpack.c.h.b16 %v561
        %v705 = vunpack.c.l.b16 %v562
        %v706 = vunpack.c.h.b16 %v562
        %v707 = vunpack.c.l.b16 %v563
        %v708 = vunpack.c.h.b16 %v563
        %v709 = vunpack.c.l.b16 %v564
        %v710 = vunpack.c.h.b16 %v564
        %v711 = vunpack.c.l.b16 %v565
        %v712 = vunpack.c.h.b16 %v565
        %v713 = vunpack.c.l.b16 %v566
        %v714 = vunpack.c.h.b16 %v566
        %v715 = vunpack.c.l.b16 %v567
        %v716 = vunpack.c.h.b16 %v567
        %v717 = vunpack.c.l.b16 %v568
        %v718 = vunpack.c.h.b16 %v568
        %v719 = vunpack.c.l.b16 %v569
        %v720 = vunpack.c.h.b16 %v569
        %v721 = vunpack.c.l.b16 %v570
        %v722 = vunpack.c.h.b16 %v570
        %v723 = vunpack.c.l.b16 %v571
        %v724 = vunpack.c.h.b16 %v571
        %v725 = vunpack.c.l.b16 %v572
        %v726 = vunpack.c.h.b16 %v572
        %v727 = vunpack.c.l.b16 %v573
        %v728 = vunpack.c.h.b16 %v573
        %v729 = vunpack.c.l.b16 %v574
        %v730 = vunpack.c.h.b16 %v574
        %v731 = vunpack.c.l.b16 %v575
        %v732 = vunpack.c.h.b16 %v575
        %v733 = vunpack.c.l.b16 %v576
        %v734 = vunpack.c.h.b16 %v576
        %v735 = vunpack.c.l.b16 %v577
        %v736 = vunpack.c.h.b16 %v577
        %v737 = vunpack.c.l.b16 %v578
        %v738 = vunpack.c.h.b16 %v578
        %v739 = vunpack.c.l.b16 %v579
        %v740 = vunpack.c.h.b16 %v579
        %v741 = vunpack.c.l.b16 %v580
        %v742 = vunpack.c.h.b16 %v580
        %v743 = vunpack.c.l.b16 %v581
        %v744 = vunpack.c.h.b16 %v581
        %v745 = vunpack.c.l.b16 %v582
        %v746 = vunpack.c.h.b16 %v582
        %v747 = vunpack.c.l.b16 %v583
        %v748 = vunpack.c.h.b16 %v583
        %v749 = vunpack.c.l.b16 %v584
        %v750 = vunpack.c.h.b16 %v584
        %v751 = vunpack.c.l.b16 %v585
        %v752 = vunpack.c.h.b16 %v585
        %v753 = vunpack.c.l.b16 %v586
        %v754 = vunpack.c.h.b16 %v586
        %v755 = vunpack.c.l.b16 %v587
        %v756 = vunpack.c.h.b16 %v587
        %v757 = vunpack.c.l.b16 %v588
        %v758 = vunpack.c.h.b16 %v588
        %v759 = vunpack.c.l.b16 %v589
        %v760 = vunpack.c.h.b16 %v589
        %v761 = vunpack.c.l.b16 %v590
        %v762 = vunpack.c.h.b16 %v590
        %v763 = vunpack.c.l.b16 %v591
        %v764 = vunpack.c.h.b16 %v591
        %v765 = vunpack.c.l.b16 %v592
        %v766 = vunpack.c.h.b16 %v592
        %v767 = vunpack.c.l.b16 %v593
        %v768 = vunpack.c.h.b16 %v593
        %v769 = vunpack.c.l.b16 %v594
        %v770 = vunpack.c.h.b16 %v594
        %v771 = vunpack.c.l.b16 %v595
        %v772 = vunpack.c.h.b16 %v595
        %v773 = vunpack.c.l.b16 %v596
        %v774 = vunpack.c.h.b16 %v596
        %v775 = vunpack.c.l.b16 %v597
        %v776 = vunpack.c.h.b16 %v597
        %v777 = vunpack.c.l.b16 %v598
        %v778 = vunpack.c.h.b16 %v598
        %v779 = vunpack.c.l.b16 %v599
        %v780 = vunpack.c.h.b16 %v599
        %v781 = vunpack.c.l.b16 %v600
        %v782 = vunpack.c.h.b16 %v600
        %v783 = vunpack.c.l.b16 %v601
        %v784 = vunpack.c.h.b16 %v601
        %v785 = vunpack.c.l.b16 %v602
        %v786 = vunpack.c.h.b16 %v602
        %v787 = vunpack.c.l.b16 %v603
        %v788 = vunpack.c.h.b16 %v603
        %v789 = vunpack.c.l.b16 %v604
        %v790 = vunpack.c.h.b16 %v604
        %v791 = vunpack.c.l.b16 %v605
        %v792 = vunpack.c.h.b16 %v605
        %v793 = vunpack.c.l.b16 %v606
        %v794 = vunpack.c.h.b16 %v606
        %v795 = vunpack.c.l.b16 %v607
        %v796 = vunpack.c.h.b16 %v607
        %v797 = vunpack.c.l.b16 %v608
        %v798 = vunpack.c.h.b16 %v608
        %v799 = vunpack.c.l.b16 %v609
        %v800 = vunpack.c.h.b16 %v609
        %v801 = vunpack.c.l.b16 %v610
        %v802 = vunpack.c.h.b16 %v610
        %v803 = vunpack.c.l.b16 %v611
        %v804 = vunpack.c.h.b16 %v611
        %v805 = vunpack.c.l.b16 %v612
        %v806 = vunpack.c.h.b16 %v612
        %v807 = vunpack.c.l.b16 %v613
        %v808 = vunpack.c.h.b16 %v613
        %v809 = vunpack.c.l.b16 %v614
        %v810 = vunpack.c.h.b16 %v614
        %v811 = vunpack.c.l.b16 %v615
        %v812 = vunpack.c.h.b16 %v615
        %v813 = vunpack.c.l.b16 %v616
        %v814 = vunpack.c.h.b16 %v616
        %v815 = vunpack.c.l.b16 %v617
        %v816 = vunpack.c.h.b16 %v617
        %v817 = vunpack.c.l.b16 %v618
        %v818 = vunpack.c.h.b16 %v618
        %v819 = vunpack.c.l.b16 %v619
        %v820 = vunpack.c.h.b16 %v619
        %v821 = vunpack.c.l.b16 %v620
        %v822 = vunpack.c.h.b16 %v620
        %v823 = vunpack.c.l.b16 %v621
        %v824 = vunpack.c.h.b16 %v621
        %v825 = vunpack.c.l.b16 %v622
        %v826 = vunpack.c.h.b16 %v622
        %v827 = vunpack.c.l.b16 %v623
        %v828 = vunpack.c.h.b16 %v623
        %v829 = vunpack.c.l.b16 %v624
        %v830 = vunpack.c.h.b16 %v624
        %v831 = vpack.c.b16 %v705, %v703
        %v832 = vpack.c.b16 %v706, %v704
        %v833 = vpack.c.b16 %v709, %v707
        %v834 = vpack.c.b16 %v710, %v708
        %v835 = vpack.c.b16 %v713, %v711
        %v836 = vpack.c.b16 %v714, %v712
        %v837 = vpack.c.b16 %v717, %v715
        %v838 = vpack.c.b16 %v718, %v716
        %v839 = vpack.c.b16 %v721, %v719
        %v840 = vpack.c.b16 %v722, %v720
        %v841 = vpack.c.b16 %v725, %v723
        %v842 = vpack.c.b16 %v726, %v724
        %v843 = vpack.c.b16 %v729, %v727
        %v844 = vpack.c.b16 %v730, %v728
        %v845 = vpack.c.b16 %v733, %v731
        %v846 = vpack.c.b16 %v734, %v732
        %v847 = vpack.c.b16 %v737, %v735
        %v848 = vpack.c.b16 %v738, %v736
        %v849 = vpack.c.b16 %v741, %v739
        %v850 = vpack.c.b16 %v742, %v740
        %v851 = vpack.c.b16 %v745, %v743
        %v852 = vpack.c.b16 %v746, %v744
        %v853 = vpack.c.b16 %v749, %v747
        %v854 = vpack.c.b16 %v750, %v748
        %v855 = vpack.c.b16 %v753, %v751
        %v856 = vpack.c.b16 %v754, %v752
        %v857 = vpack.c.b16 %v757, %v755
        %v858 = vpack.c.b16 %v758, %v756
        %v859 = vpack.c.b16 %v761, %v759
        %v860 = vpack.c.b16 %v762, %v760
        %v861 = vpack.c.b16 %v765, %v763
        %v862 = vpack.c.b16 %v766, %v764
        %v863 = vpack.c.b16 %v769, %v767
        %v864 = vpack.c.b16 %v770, %v768
        %v865 = vpack.c.b16 %v773, %v771
        %v866 = vpack.c.b16 %v774, %v772
        %v867 = vpack.c.b16 %v777, %v775
        %v868 = vpack.c.b16 %v778, %v776
        %v869 = vpack.c.b16 %v781, %v779
        %v870 = vpack.c.b16 %v782, %v780
        %v871 = vpack.c.b16 %v785, %v783
        %v872 = vpack.c.b16 %v786, %v784
        %v873 = vpack.c.b16 %v789, %v787
        %v874 = vpack.c.b16 %v790, %v788
        %v875 = vpack.c.b16 %v793, %v791
        %v876 = vpack.c.b16 %v794, %v792
        %v877 = vpack.c.b16 %v797, %v795
        %v878 = vpack.c.b16 %v798, %v796
        %v879 = vpack.c.b16 %v801, %v799
        %v880 = vpack.c.b16 %v802, %v800
        %v881 = vpack.c.b16 %v805, %v803
        %v882 = vpack.c.b16 %v806, %v804
        %v883 = vpack.c.b16 %v809, %v807
        %v884 = vpack.c.b16 %v810, %v808
        %v885 = vpack.c.b16 %v813, %v811
        %v886 = vpack.c.b16 %v814, %v812
        %v887 = vpack.c.b16 %v817, %v815
        %v888 = vpack.c.b16 %v818, %v816
        %v889 = vpack.c.b16 %v821, %v819
        %v890 = vpack.c.b16 %v822, %v820
        %v891 = vpack.c.b16 %v825, %v823
        %v892 = vpack.c.b16 %v826, %v824
        %v893 = vpack.c.b16 %v829, %v827
        %v894 = vpack.c.b16 %v830, %v828
        %959 = vmatpush.bf16.msra.mxu0 %v845
        %960 = vmatpush.bf16.msra.mxu0 %v843
        %961 = vmatpush.bf16.msra.mxu0 %v841
        %962 = vmatpush.bf16.msra.mxu0 %v839
        %963 = vmatpush.bf16.msra.mxu0 %v837
        %964 = vmatpush.bf16.msra.mxu0 %v835
        %965 = vmatpush.bf16.msra.mxu0 %v833
        %966 = vmatpush.bf16.msra.mxu0 %v831
        %967 = vmatmul.bf16.gmra.mxu0 %v631
        %v968 = vpop.f32.mrf.mxu0
        %v969 = vadd.f32 0.0, %v968
        %v970 = vpop.f32.mrf.mxu0
        %971 = vdwg.mxu0
        %972 = vmatpush.bf16.msra.mxu0 %v861
        %973 = vmatpush.bf16.msra.mxu0 %v859
        %974 = vmatpush.bf16.msra.mxu0 %v857
        %975 = vmatpush.bf16.msra.mxu0 %v855
        %976 = vmatpush.bf16.msra.mxu0 %v853
        %977 = vmatpush.bf16.msra.mxu0 %v851
        %978 = vmatpush.bf16.msra.mxu0 %v849
        %979 = vmatpush.bf16.msra.mxu0 %v847
        %980 = vmatmul.bf16.gmra.mxu0 %v632
        %v981 = vpop.f32.mrf.mxu0
        %v982 = vadd.f32 %v969, %v981
        %v983 = vpop.f32.mrf.mxu0
        %984 = vdwg.mxu0
        %985 = vmatpush.bf16.msra.mxu0 %v877
        %986 = vmatpush.bf16.msra.mxu0 %v875
        %987 = vmatpush.bf16.msra.mxu0 %v873
        %988 = vmatpush.bf16.msra.mxu0 %v871
        %989 = vmatpush.bf16.msra.mxu0 %v869
        %990 = vmatpush.bf16.msra.mxu0 %v867
        %991 = vmatpush.bf16.msra.mxu0 %v865
        %992 = vmatpush.bf16.msra.mxu0 %v863
        %993 = vmatmul.bf16.gmra.mxu0 %v633
        %v994 = vpop.f32.mrf.mxu0
        %v995 = vadd.f32 %v982, %v994
        %v996 = vpop.f32.mrf.mxu0
        %997 = vdwg.mxu0
        %998 = vmatpush.bf16.msra.mxu0 %v893
        %999 = vmatpush.bf16.msra.mxu0 %v891
        %1000 = vmatpush.bf16.msra.mxu0 %v889
        %1001 = vmatpush.bf16.msra.mxu0 %v887
        %1002 = vmatpush.bf16.msra.mxu0 %v885
        %1003 = vmatpush.bf16.msra.mxu0 %v883
        %1004 = vmatpush.bf16.msra.mxu0 %v881
        %1005 = vmatpush.bf16.msra.mxu0 %v879
        %1006 = vmatmul.bf16.gmra.mxu0 %v634
        %v1007 = vpop.f32.mrf.mxu0
        %v1008 = vadd.f32 %v995, %v1007
        %v1009 = vpop.f32.mrf.mxu0
        %1010 = vdwg.mxu0
        %1011 = vmatpush.bf16.msra.mxu0 %v846
        %1012 = vmatpush.bf16.msra.mxu0 %v844
        %1013 = vmatpush.bf16.msra.mxu0 %v842
        %1014 = vmatpush.bf16.msra.mxu0 %v840
        %1015 = vmatpush.bf16.msra.mxu0 %v838
        %1016 = vmatpush.bf16.msra.mxu0 %v836
        %1017 = vmatpush.bf16.msra.mxu0 %v834
        %1018 = vmatpush.bf16.msra.mxu0 %v832
        %1019 = vmatmul.bf16.gmra.mxu0 %v631
        %v1020 = vpop.f32.mrf.mxu0
        %v1021 = vadd.f32 0.0, %v1020
        %v1022 = vpop.f32.mrf.mxu0
        %1023 = vdwg.mxu0
        %1024 = vmatpush.bf16.msra.mxu0 %v862
        %1025 = vmatpush.bf16.msra.mxu0 %v860
        %1026 = vmatpush.bf16.msra.mxu0 %v858
        %1027 = vmatpush.bf16.msra.mxu0 %v856
        %1028 = vmatpush.bf16.msra.mxu0 %v854
        %1029 = vmatpush.bf16.msra.mxu0 %v852
        %1030 = vmatpush.bf16.msra.mxu0 %v850
        %1031 = vmatpush.bf16.msra.mxu0 %v848
        %1032 = vmatmul.bf16.gmra.mxu0 %v632
        %v1033 = vpop.f32.mrf.mxu0
        %v1034 = vadd.f32 %v1021, %v1033
        %v1035 = vpop.f32.mrf.mxu0
        %1036 = vdwg.mxu0
        %1037 = vmatpush.bf16.msra.mxu0 %v878
        %1038 = vmatpush.bf16.msra.mxu0 %v876
        %1039 = vmatpush.bf16.msra.mxu0 %v874
        %1040 = vmatpush.bf16.msra.mxu0 %v872
        %1041 = vmatpush.bf16.msra.mxu0 %v870
        %1042 = vmatpush.bf16.msra.mxu0 %v868
        %1043 = vmatpush.bf16.msra.mxu0 %v866
        %1044 = vmatpush.bf16.msra.mxu0 %v864
        %1045 = vmatmul.bf16.gmra.mxu0 %v633
        %v1046 = vpop.f32.mrf.mxu0
        %v1047 = vadd.f32 %v1034, %v1046
        %v1048 = vpop.f32.mrf.mxu0
        %1049 = vdwg.mxu0
        %1050 = vmatpush.bf16.msra.mxu0 %v894
        %1051 = vmatpush.bf16.msra.mxu0 %v892
        %1052 = vmatpush.bf16.msra.mxu0 %v890
        %1053 = vmatpush.bf16.msra.mxu0 %v888
        %1054 = vmatpush.bf16.msra.mxu0 %v886
        %1055 = vmatpush.bf16.msra.mxu0 %v884
        %1056 = vmatpush.bf16.msra.mxu0 %v882
        %1057 = vmatpush.bf16.msra.mxu0 %v880
        %1058 = vmatmul.bf16.gmra.mxu0 %v634
        %v1059 = vpop.f32.mrf.mxu0
        %v1060 = vadd.f32 %v1047, %v1059
        %v1061 = vpop.f32.mrf.mxu0
        %1062 = vdwg.mxu0
        %v1063 = vadd.f32 %v557, %v1008
        %v1064 = vadd.f32 %v558, %v1060
        %1065 = vst [vmem:[#allocation2] sm:$0xff] %v1063
        %1066 = vst [vmem:[#allocation2 + $0x8] sm:$0xff] %v1064
        %p1067 = scmp.eq.s32.totalorder %s21, 7
        // Predicated region
        $region75: #{alexnet_forward.22} parent=65 // pred_check
          %p1068 = pneg %p1067
        $region76: #{alexnet_forward.22} parent=65 // pred_check_branch
          %1070 = sbr.rel (%p1068) target = $region78
        $region77: #{alexnet_forward.22} parent=65 // pred_region
          %v1071 = vld [vmem:[#allocation2] sm:$0xff]
          %v1072 = vld [vmem:[#allocation2 + $0x8] sm:$0xff]
          %v1073 = vld [vmem:[%s539] sm:$0x3]
          %v1075 = vperm.slane %v1073, 0
          %v1076 = vperm.slane %v1073, 1
          %v1079 = vadd.f32 %v1071, %v1075
          %v1080 = vadd.f32 %v1072, %v1076
          %v1081 = vmax.f32 %v1079, 0.0
          %v1082 = vmax.f32 %v1080, 0.0
          %1083 = vst [vmem:[%s549] sm:$0xff] %v1081
          %1084 = vst [vmem:[%s549 + $0x8] sm:$0xff] %v1082
        $region78: #{alexnet_forward.22} parent=65 // pred_fallthru
          _
        %s1085 = smul.u32 2, %s20
        %p1086 = scmp.lt.s32.totalorder %s19, 0
        %s1087 = scalar_select %p1086, %s19, 0
        %p1088 = scmp.lt.s32.totalorder %s1085, 31
        %s1089 = scalar_select %p1088, %s1085, 31
        %s1090 = smul.addr %s1087, 32
        %s1091 = sadd.s32 %s1089, %s1090
        %s1092 = smul.addr %s1091, 8
        %s1093 = scalar_lea.vmem %s3, %s1092
        // Predicated region
        $region79: #{alexnet_forward.22} parent=65 // pred_check
          %p1094 = pneg %p135
        $region80: #{alexnet_forward.22} parent=65 // pred_check_branch
          %1096 = sbr.rel (%p1094) target = $region82
        $region81: #{alexnet_forward.22} parent=65 // pred_region
          %s1097 = smul.u32 2, %s20
        $region82: #{alexnet_forward.22} parent=65 // pred_fallthru
          _
      $region66: #{alexnet_forward.22} parent=5 // pred_fallthru
        _
      %p1098 = scmp.le.s32.totalorder 2, %s9
      // Predicated region
      $region83: #{alexnet_forward.22} parent=5 // pred_check
        %p1099 = pneg %p1098
      $region84: #{alexnet_forward.22} parent=5 // pred_check_branch
        %1101 = sbr.rel (%p1099) target = $region86
      $region85: #{alexnet_forward.22} parent=5 // pred_region
        %s1102 = ssub.s32 %s9, 2
        // Predicated region
        $region87: #{alexnet_forward.22} parent=85 // pred_check
          %p1103 = pneg %p141
        $region88: #{alexnet_forward.22} parent=85 // pred_check_branch
          %1105 = sbr.rel (%p1103) target = $region90
        $region89: #{alexnet_forward.22} parent=85 // pred_region
          %s1106 = smul.u32 2, %s23
          %p1107 = scmp.lt.s32.totalorder %s22, 0
          %s1108 = scalar_select %p1107, %s22, 0
          %p1109 = scmp.lt.s32.totalorder %s1106, 31
          %s1110 = scalar_select %p1109, %s1106, 31
          %s1111 = smul.addr %s1108, 32
          %s1112 = sadd.s32 %s1110, %s1111
          %s1113 = smul.addr %s1112, 8
          %s1114 = scalar_lea.vmem %s3, %s1113
        $region90: #{alexnet_forward.22} parent=85 // pred_fallthru
          _
      $region86: #{alexnet_forward.22} parent=5 // pred_fallthru
        _
    $region6: #{alexnet_forward.22} parent=1 // loop_footer
      %s13 = sadd.s32 1, %s9
    $region7: #{alexnet_forward.22} parent=1 // loop_footer_branch
      %8 = sbr.rel target = $region3
    $region8: #{alexnet_forward.22} parent=1 // loop_exit
      _

// kernel: alexnet_forward.23
$region0: #{alexnet_forward.23}
  #allocation0 [shape = 'u32[]', space=smem, size = 0x4, offset = 0x4, fixed_abs, tag = 'smem constant byte address 0x4 - core index']
  #allocation1 [shape = 'u32[72,128]{1,0:T(1,128)}', space=vmem, size = 0x9000, scoped, tag = 'internal scratch']
  #allocation2 [shape = 'f32[8,128]{1,0:T(8,128)}', space=vmem, size = 0x1000, scoped, tag = 'scratch operand']
  %s0 = inlined_call_operand.vmem [shape: bf16[8,4096], index: 0, kind: input, shape index: {}]
  %s1 = inlined_call_operand.vmem [shape: bf16[4096,128], index: 1, kind: input, shape index: {}]
  %s2 = inlined_call_operand.vmem [shape: f32[1,128], index: 2, kind: input, shape index: {}]
  %s3 = inlined_call_operand.vmem [shape: f32[8,128], index: 3, kind: output, shape index: {}]
  %s4 = sld [smem:[#allocation0]]
  $region53: #{alexnet_forward.23} parent=0
    _
  %s6 = ssub.s32 1, %s4
  %s7 = scalar_select 0, %s6, %s4
  loop: start=0, step=1, limit=10
  $region2: #{alexnet_forward.23} parent=0 // loop_pre_header
    _
  $region3: #{alexnet_forward.23} parent=0 // loop_header
    %s9 = sphi 0, %s13
    %p10 = scmp.ge.s32.totalorder %s9, 10
    %s16 = sphi 0, %s35
    %s17 = sphi 0, %s31
    %s18 = sphi 0, %s27
    %s19 = sphi 0, %s16
    %s20 = sphi 0, %s17
    %s21 = sphi 0, %s18
    %s22 = sphi 0, %s19
    %s23 = sphi 0, %s20
    %s24 = sphi 0, %s21
    %s40 = sphi 0, %s42
    %s43 = sphi 0, %s40
    %s44 = sphi 0, %s43
    %s60 = sphi 0, %s44
    %s68 = sphi 0, %s70
    %s71 = sphi 0, %s68
    %s72 = sphi 0, %s71
    %s88 = sphi 0, %s72
    %s94 = sphi 0, %s96
    %s97 = sphi 0, %s94
    %s98 = sphi 0, %s97
    %s114 = sphi 0, %s98
    %s122 = sphi 0, %s124
    %s125 = sphi 0, %s122
    %s126 = sphi 0, %s125
    %s142 = sphi 0, %s126
  $region4: #{alexnet_forward.23} parent=0 // loop_header_branch
    %12 = sbr.rel (%p10) target = $region8
  $region5: #{alexnet_forward.23} parent=0 // loop_body
    %s14 = ssub.s32 %s9, 1
    %s15 = ssub.s32 %s9, 2
    %s25 = sadd.s32 1, %s18
    %p26 = scmp.ge.s32.totalorder %s25, 8
    %s27 = scalar_select %p26, 0, %s25
    %s28 = sadd.s32 1, %s17
    %s29 = scalar_select %p26, %s28, %s17
    %p30 = scmp.ge.s32.totalorder %s29, 1
    %s31 = scalar_select %p30, 0, %s29
    %s32 = sadd.s32 1, %s16
    %s33 = scalar_select %p30, %s32, %s16
    %p34 = scmp.ge.s32.totalorder %s33, 1
    %s35 = scalar_select %p34, 0, %s33
    %s36 = ssub.s32 %s16, %s35
    %s37 = ssub.s32 %s18, %s27
    %s38 = sor.u32 %s36, %s37
    %p39 = scmp.eq.s32.totalorder %s38, 0
    %s41 = sadd.s32 %s40, 1
    %s42 = scalar_select %p39, %s40, %s41
    %p45 = pneg %p39
    %p46 = scmp.eq.s32.totalorder %s9, 7
    %p47 = por %p45, %p46
    %p48 = scmp.ne.s32.totalorder %s40, %s43
    %p49 = scmp.eq.s32.totalorder %s9, 0
    %p50 = por %p48, %p49
    %p51 = scmp.ne.s32.totalorder %s40, %s43
    %p52 = scmp.eq.s32.totalorder %s14, 7
    %p53 = por %p51, %p52
    %p54 = scmp.ne.s32.totalorder %s43, %s44
    %p55 = scmp.eq.s32.totalorder %s14, 0
    %p56 = por %p54, %p55
    %p57 = scmp.ne.s32.totalorder %s43, %s44
    %p58 = scmp.eq.s32.totalorder %s15, 7
    %p59 = por %p57, %p58
    %p61 = scmp.ne.s32.totalorder %s44, %s60
    %p62 = scmp.eq.s32.totalorder %s15, 0
    %p63 = por %p61, %p62
    %s64 = ssub.s32 %s18, %s27
    %s65 = ssub.s32 %s17, %s31
    %s66 = sor.u32 %s64, %s65
    %p67 = scmp.eq.s32.totalorder %s66, 0
    %s69 = sadd.s32 %s68, 1
    %s70 = scalar_select %p67, %s68, %s69
    %p73 = pneg %p67
    %p74 = scmp.eq.s32.totalorder %s9, 7
    %p75 = por %p73, %p74
    %p76 = scmp.ne.s32.totalorder %s68, %s71
    %p77 = scmp.eq.s32.totalorder %s9, 0
    %p78 = por %p76, %p77
    %p79 = scmp.ne.s32.totalorder %s68, %s71
    %p80 = scmp.eq.s32.totalorder %s14, 7
    %p81 = por %p79, %p80
    %p82 = scmp.ne.s32.totalorder %s71, %s72
    %p83 = scmp.eq.s32.totalorder %s14, 0
    %p84 = por %p82, %p83
    %p85 = scmp.ne.s32.totalorder %s71, %s72
    %p86 = scmp.eq.s32.totalorder %s15, 7
    %p87 = por %p85, %p86
    %p89 = scmp.ne.s32.totalorder %s72, %s88
    %p90 = scmp.eq.s32.totalorder %s15, 0
    %p91 = por %p89, %p90
    %s92 = ssub.s32 %s17, %s31
    %p93 = scmp.eq.s32.totalorder %s92, 0
    %s95 = sadd.s32 %s94, 1
    %s96 = scalar_select %p93, %s94, %s95
    %p99 = pneg %p93
    %p100 = scmp.eq.s32.totalorder %s9, 7
    %p101 = por %p99, %p100
    %p102 = scmp.ne.s32.totalorder %s94, %s97
    %p103 = scmp.eq.s32.totalorder %s9, 0
    %p104 = por %p102, %p103
    %p105 = scmp.ne.s32.totalorder %s94, %s97
    %p106 = scmp.eq.s32.totalorder %s14, 7
    %p107 = por %p105, %p106
    %p108 = scmp.ne.s32.totalorder %s97, %s98
    %p109 = scmp.eq.s32.totalorder %s14, 0
    %p110 = por %p108, %p109
    %p111 = scmp.ne.s32.totalorder %s97, %s98
    %p112 = scmp.eq.s32.totalorder %s15, 7
    %p113 = por %p111, %p112
    %p115 = scmp.ne.s32.totalorder %s98, %s114
    %p116 = scmp.eq.s32.totalorder %s15, 0
    %p117 = por %p115, %p116
    %s118 = ssub.s32 %s16, %s35
    %s119 = ssub.s32 %s17, %s31
    %s120 = sor.u32 %s118, %s119
    %p121 = scmp.eq.s32.totalorder %s120, 0
    %s123 = sadd.s32 %s122, 1
    %s124 = scalar_select %p121, %s122, %s123
    %p127 = pneg %p121
    %p128 = scmp.eq.s32.totalorder %s9, 7
    %p129 = por %p127, %p128
    %p130 = scmp.ne.s32.totalorder %s122, %s125
    %p131 = scmp.eq.s32.totalorder %s9, 0
    %p132 = por %p130, %p131
    %p133 = scmp.ne.s32.totalorder %s122, %s125
    %p134 = scmp.eq.s32.totalorder %s14, 7
    %p135 = por %p133, %p134
    %p136 = scmp.ne.s32.totalorder %s125, %s126
    %p137 = scmp.eq.s32.totalorder %s14, 0
    %p138 = por %p136, %p137
    %p139 = scmp.ne.s32.totalorder %s125, %s126
    %p140 = scmp.eq.s32.totalorder %s15, 7
    %p141 = por %p139, %p140
    %p143 = scmp.ne.s32.totalorder %s126, %s142
    %p144 = scmp.eq.s32.totalorder %s15, 0
    %p145 = por %p143, %p144
    %p146 = scmp.le.s32.totalorder 1, %s9
    %p147 = scmp.lt.s32.totalorder %s9, 9
    %p148 = pnand %p146, %p147
    %p149 = pneg %p148
    // Predicated region
    $region9: #{alexnet_forward.23} parent=5 // pred_check
      _
    $region10: #{alexnet_forward.23} parent=5 // pred_check_branch
      %151 = sbr.rel (%p148) target = $region12
    $region11: #{alexnet_forward.23} parent=5 // pred_region
      %s152 = ssub.s32 %s9, 1
      // Predicated region
      $region13: #{alexnet_forward.23} parent=11 // pred_check
        %p153 = pneg %p110
      $region14: #{alexnet_forward.23} parent=11 // pred_check_branch
        %155 = sbr.rel (%p153) target = $region16
      $region15: #{alexnet_forward.23} parent=11 // pred_region
        %p156 = scmp.lt.s32.totalorder %s20, 0
        %s157 = scalar_select %p156, %s20, 0
        %s158 = scalar_lea.vmem %s2, %s157
      $region16: #{alexnet_forward.23} parent=11 // pred_fallthru
        _
    $region12: #{alexnet_forward.23} parent=5 // pred_fallthru
      _
    %p159 = scmp.lt.s32.totalorder %s9, 8
    // Predicated region
    $region17: #{alexnet_forward.23} parent=5 // pred_check
      %p160 = pneg %p159
    $region18: #{alexnet_forward.23} parent=5 // pred_check_branch
      %162 = sbr.rel (%p160) target = $region20
    $region19: #{alexnet_forward.23} parent=5 // pred_region
      // Predicated region
      $region21: #{alexnet_forward.23} parent=19 // pred_check
        %p163 = pneg %p50
      $region22: #{alexnet_forward.23} parent=19 // pred_check_branch
        %165 = sbr.rel (%p163) target = $region24
      $region23: #{alexnet_forward.23} parent=19 // pred_region
        %s166 = smul.u32 4, %s18
        %p167 = scmp.lt.s32.totalorder %s16, 0
        %s168 = scalar_select %p167, %s16, 0
        %p169 = scmp.lt.s32.totalorder %s166, 31
        %s170 = scalar_select %p169, %s166, 31
        %s171 = smul.addr %s168, 32
        %s172 = sadd.s32 %s170, %s171
        %s173 = smul.addr %s172, 4
        %s174 = scalar_lea.vmem %s0, %s173
        %s175 = smul.u32 4, %s18
      $region24: #{alexnet_forward.23} parent=19 // pred_fallthru
        _
      // Predicated region
      $region25: #{alexnet_forward.23} parent=19 // pred_check
        %p176 = pneg %p78
      $region26: #{alexnet_forward.23} parent=19 // pred_check_branch
        %178 = sbr.rel (%p176) target = $region28
      $region27: #{alexnet_forward.23} parent=19 // pred_region
        %s179 = smul.u32 64, %s18
        %p180 = scmp.lt.s32.totalorder %s179, 511
        %s181 = scalar_select %p180, %s179, 511
        %p182 = scmp.lt.s32.totalorder %s17, 0
        %s183 = scalar_select %p182, %s17, 0
        %s184 = sadd.s32 %s183, %s181
        %s185 = smul.addr %s184, 4
        %s186 = scalar_lea.vmem %s1, %s185
        %s187 = smul.u32 64, %s18
      $region28: #{alexnet_forward.23} parent=19 // pred_fallthru
        _
    $region20: #{alexnet_forward.23} parent=5 // pred_fallthru
      _
    %p188 = scmp.le.s32.totalorder 1, %s9
    %p189 = scmp.lt.s32.totalorder %s9, 9
    %p190 = pnand %p188, %p189
    %p191 = pneg %p190
    // Predicated region
    $region29: #{alexnet_forward.23} parent=5 // pred_check
      _
    $region30: #{alexnet_forward.23} parent=5 // pred_check_branch
      %193 = sbr.rel (%p190) target = $region32
    $region31: #{alexnet_forward.23} parent=5 // pred_region
      %s194 = ssub.s32 %s9, 1
      %s195 = smul.u32 4, %s21
      %p196 = scmp.lt.s32.totalorder %s19, 0
      %s197 = scalar_select %p196, %s19, 0
      %p198 = scmp.lt.s32.totalorder %s195, 31
      %s199 = scalar_select %p198, %s195, 31
      %s200 = smul.addr %s197, 32
      %s201 = sadd.s32 %s199, %s200
      %s202 = smul.addr %s201, 4
      %s203 = scalar_lea.vmem %s0, %s202
      %p204 = pneg %p56
      %p205 = pneg %p53
      %s206 = smul.u32 64, %s21
      %p207 = scmp.lt.s32.totalorder %s206, 511
      %s208 = scalar_select %p207, %s206, 511
      %p209 = scmp.lt.s32.totalorder %s20, 0
      %s210 = scalar_select %p209, %s20, 0
      %s211 = sadd.s32 %s210, %s208
      %s212 = smul.addr %s211, 4
      %s213 = scalar_lea.vmem %s1, %s212
      %p214 = pneg %p84
      %p215 = pneg %p81
      %p216 = scmp.lt.s32.totalorder %s20, 0
      %s217 = scalar_select %p216, %s20, 0
      %s218 = scalar_lea.vmem %s2, %s217
      %p219 = pneg %p110
      %p220 = pneg %p107
      %p221 = pneg %p138
      %p222 = pneg %p135
      %p223 = scmp.lt.s32.totalorder %s19, 0
      %s224 = scalar_select %p223, %s19, 0
      %p225 = scmp.lt.s32.totalorder %s20, 0
      %s226 = scalar_select %p225, %s20, 0
      %s227 = sadd.s32 %s226, %s224
      %s228 = smul.addr %s227, 8
      %s229 = scalar_lea.vmem %s3, %s228
      %s230 = smul.u32 4, %s21
      %p231 = scmp.lt.s32.totalorder %s19, 0
      %s232 = scalar_select %p231, %s19, 0
      %p233 = scmp.lt.s32.totalorder %s230, 31
      %s234 = scalar_select %p233, %s230, 31
      %s235 = smul.addr %s232, 32
      %s236 = sadd.s32 %s234, %s235
      %s237 = smul.addr %s236, 4
      %s238 = scalar_lea.vmem %s0, %s237
      %s239 = smul.u32 4, %s21
      %s240 = smul.u32 64, %s21
      %p241 = scmp.lt.s32.totalorder %s240, 511
      %s242 = scalar_select %p241, %s240, 511
      %p243 = scmp.lt.s32.totalorder %s20, 0
      %s244 = scalar_select %p243, %s20, 0
      %s245 = sadd.s32 %s244, %s242
      %s246 = smul.addr %s245, 4
      %s247 = scalar_lea.vmem %s1, %s246
      %s248 = smul.u32 64, %s21
      %p249 = scmp.lt.s32.totalorder %s20, 0
      %s250 = scalar_select %p249, %s20, 0
      %s251 = scalar_lea.vmem %s2, %s250
      %p252 = scmp.lt.s32.totalorder %s19, 0
      %s253 = scalar_select %p252, %s19, 0
      %p254 = scmp.lt.s32.totalorder %s20, 0
      %s255 = scalar_select %p254, %s20, 0
      %s256 = sadd.s32 %s255, %s253
      %s257 = smul.addr %s256, 8
      %s258 = scalar_lea.vmem %s3, %s257
      %p259 = scmp.eq.s32.totalorder %s21, 0
      // Predicated region
      $region33: #{alexnet_forward.23} parent=31 // pred_check
        %p260 = pneg %p259
      $region34: #{alexnet_forward.23} parent=31 // pred_check_branch
        %262 = sbr.rel (%p260) target = $region36
      $region35: #{alexnet_forward.23} parent=31 // pred_region
        %263 = vst [vmem:[#allocation2] sm:$0xff] 0.0
      $region36: #{alexnet_forward.23} parent=31 // pred_fallthru
        _
      %v264 = vld [vmem:[#allocation2] sm:$0xff]
      %v265 = vld [vmem:[%s238] sm:$0xff]
      %v266 = vld [vmem:[%s238 + $0x8] sm:$0xff]
      %v267 = vld [vmem:[%s247] sm:$0xf]
      %v268 = vld [vmem:[%s247 + $0x4] sm:$0xf]
      %v269 = vld [vmem:[%s247 + $0x8] sm:$0xf]
      %v270 = vld [vmem:[%s247 + $0xc] sm:$0xf]
      %v271 = vld [vmem:[%s247 + $0x10] sm:$0xf]
      %v272 = vld [vmem:[%s247 + $0x14] sm:$0xf]
      %v273 = vld [vmem:[%s247 + $0x18] sm:$0xf]
      %v274 = vld [vmem:[%s247 + $0x1c] sm:$0xf]
      %v275 = vld [vmem:[%s247 + $0x20] sm:$0xf]
      %v276 = vld [vmem:[%s247 + $0x24] sm:$0xf]
      %v277 = vld [vmem:[%s247 + $0x28] sm:$0xf]
      %v278 = vld [vmem:[%s247 + $0x2c] sm:$0xf]
      %v279 = vld [vmem:[%s247 + $0x30] sm:$0xf]
      %v280 = vld [vmem:[%s247 + $0x34] sm:$0xf]
      %v281 = vld [vmem:[%s247 + $0x38] sm:$0xf]
      %v282 = vld [vmem:[%s247 + $0x3c] sm:$0xf]
      %v283 = vld [vmem:[%s247 + $0x40] sm:$0xf]
      %v284 = vld [vmem:[%s247 + $0x44] sm:$0xf]
      %v285 = vld [vmem:[%s247 + $0x48] sm:$0xf]
      %v286 = vld [vmem:[%s247 + $0x4c] sm:$0xf]
      %v287 = vld [vmem:[%s247 + $0x50] sm:$0xf]
      %v288 = vld [vmem:[%s247 + $0x54] sm:$0xf]
      %v289 = vld [vmem:[%s247 + $0x58] sm:$0xf]
      %v290 = vld [vmem:[%s247 + $0x5c] sm:$0xf]
      %v291 = vld [vmem:[%s247 + $0x60] sm:$0xf]
      %v292 = vld [vmem:[%s247 + $0x64] sm:$0xf]
      %v293 = vld [vmem:[%s247 + $0x68] sm:$0xf]
      %v294 = vld [vmem:[%s247 + $0x6c] sm:$0xf]
      %v295 = vld [vmem:[%s247 + $0x70] sm:$0xf]
      %v296 = vld [vmem:[%s247 + $0x74] sm:$0xf]
      %v297 = vld [vmem:[%s247 + $0x78] sm:$0xf]
      %v298 = vld [vmem:[%s247 + $0x7c] sm:$0xf]
      %v299 = vld [vmem:[%s247 + $0x80] sm:$0xf]
      %v300 = vld [vmem:[%s247 + $0x84] sm:$0xf]
      %v301 = vld [vmem:[%s247 + $0x88] sm:$0xf]
      %v302 = vld [vmem:[%s247 + $0x8c] sm:$0xf]
      %v303 = vld [vmem:[%s247 + $0x90] sm:$0xf]
      %v304 = vld [vmem:[%s247 + $0x94] sm:$0xf]
      %v305 = vld [vmem:[%s247 + $0x98] sm:$0xf]
      %v306 = vld [vmem:[%s247 + $0x9c] sm:$0xf]
      %v307 = vld [vmem:[%s247 + $0xa0] sm:$0xf]
      %v308 = vld [vmem:[%s247 + $0xa4] sm:$0xf]
      %v309 = vld [vmem:[%s247 + $0xa8] sm:$0xf]
      %v310 = vld [vmem:[%s247 + $0xac] sm:$0xf]
      %v311 = vld [vmem:[%s247 + $0xb0] sm:$0xf]
      %v312 = vld [vmem:[%s247 + $0xb4] sm:$0xf]
      %v313 = vld [vmem:[%s247 + $0xb8] sm:$0xf]
      %v314 = vld [vmem:[%s247 + $0xbc] sm:$0xf]
      %v315 = vld [vmem:[%s247 + $0xc0] sm:$0xf]
      %v316 = vld [vmem:[%s247 + $0xc4] sm:$0xf]
      %v317 = vld [vmem:[%s247 + $0xc8] sm:$0xf]
      %v318 = vld [vmem:[%s247 + $0xcc] sm:$0xf]
      %v319 = vld [vmem:[%s247 + $0xd0] sm:$0xf]
      %v320 = vld [vmem:[%s247 + $0xd4] sm:$0xf]
      %v321 = vld [vmem:[%s247 + $0xd8] sm:$0xf]
      %v322 = vld [vmem:[%s247 + $0xdc] sm:$0xf]
      %v323 = vld [vmem:[%s247 + $0xe0] sm:$0xf]
      %v324 = vld [vmem:[%s247 + $0xe4] sm:$0xf]
      %v325 = vld [vmem:[%s247 + $0xe8] sm:$0xf]
      %v326 = vld [vmem:[%s247 + $0xec] sm:$0xf]
      %v327 = vld [vmem:[%s247 + $0xf0] sm:$0xf]
      %v328 = vld [vmem:[%s247 + $0xf4] sm:$0xf]
      %v329 = vld [vmem:[%s247 + $0xf8] sm:$0xf]
      %v330 = vld [vmem:[%s247 + $0xfc] sm:$0xf]
      %v333 = vunpack.c.l.b16 %v265
      %v334 = vunpack.c.h.b16 %v265
      %v335 = vunpack.c.l.b16 %v266
      %v336 = vunpack.c.h.b16 %v266
      %v337 = vpack.c.b16 %v333, %v333
      %v338 = vpack.c.b16 %v334, %v334
      %v339 = vpack.c.b16 %v335, %v335
      %v340 = vpack.c.b16 %v336, %v336
      %v409 = vunpack.c.l.b16 %v267
      %v410 = vunpack.c.l.b16 %v268
      %v411 = vunpack.c.l.b16 %v269
      %v412 = vunpack.c.l.b16 %v270
      %v413 = vunpack.c.l.b16 %v271
      %v414 = vunpack.c.l.b16 %v272
      %v415 = vunpack.c.l.b16 %v273
      %v416 = vunpack.c.l.b16 %v274
      %v417 = vunpack.c.l.b16 %v275
      %v418 = vunpack.c.l.b16 %v276
      %v419 = vunpack.c.l.b16 %v277
      %v420 = vunpack.c.l.b16 %v278
      %v421 = vunpack.c.l.b16 %v279
      %v422 = vunpack.c.l.b16 %v280
      %v423 = vunpack.c.l.b16 %v281
      %v424 = vunpack.c.l.b16 %v282
      %v425 = vunpack.c.l.b16 %v283
      %v426 = vunpack.c.l.b16 %v284
      %v427 = vunpack.c.l.b16 %v285
      %v428 = vunpack.c.l.b16 %v286
      %v429 = vunpack.c.l.b16 %v287
      %v430 = vunpack.c.l.b16 %v288
      %v431 = vunpack.c.l.b16 %v289
      %v432 = vunpack.c.l.b16 %v290
      %v433 = vunpack.c.l.b16 %v291
      %v434 = vunpack.c.l.b16 %v292
      %v435 = vunpack.c.l.b16 %v293
      %v436 = vunpack.c.l.b16 %v294
      %v437 = vunpack.c.l.b16 %v295
      %v438 = vunpack.c.l.b16 %v296
      %v439 = vunpack.c.l.b16 %v297
      %v440 = vunpack.c.l.b16 %v298
      %v441 = vunpack.c.l.b16 %v299
      %v442 = vunpack.c.l.b16 %v300
      %v443 = vunpack.c.l.b16 %v301
      %v444 = vunpack.c.l.b16 %v302
      %v445 = vunpack.c.l.b16 %v303
      %v446 = vunpack.c.l.b16 %v304
      %v447 = vunpack.c.l.b16 %v305
      %v448 = vunpack.c.l.b16 %v306
      %v449 = vunpack.c.l.b16 %v307
      %v450 = vunpack.c.l.b16 %v308
      %v451 = vunpack.c.l.b16 %v309
      %v452 = vunpack.c.l.b16 %v310
      %v453 = vunpack.c.l.b16 %v311
      %v454 = vunpack.c.l.b16 %v312
      %v455 = vunpack.c.l.b16 %v313
      %v456 = vunpack.c.l.b16 %v314
      %v457 = vunpack.c.l.b16 %v315
      %v458 = vunpack.c.l.b16 %v316
      %v459 = vunpack.c.l.b16 %v317
      %v460 = vunpack.c.l.b16 %v318
      %v461 = vunpack.c.l.b16 %v319
      %v462 = vunpack.c.l.b16 %v320
      %v463 = vunpack.c.l.b16 %v321
      %v464 = vunpack.c.l.b16 %v322
      %v465 = vunpack.c.l.b16 %v323
      %v466 = vunpack.c.l.b16 %v324
      %v467 = vunpack.c.l.b16 %v325
      %v468 = vunpack.c.l.b16 %v326
      %v469 = vunpack.c.l.b16 %v327
      %v470 = vunpack.c.l.b16 %v328
      %v471 = vunpack.c.l.b16 %v329
      %v472 = vunpack.c.l.b16 %v330
      %v473 = vpack.c.b16 %v410, %v409
      %v474 = vpack.c.b16 %v412, %v411
      %v475 = vpack.c.b16 %v414, %v413
      %v476 = vpack.c.b16 %v416, %v415
      %v477 = vpack.c.b16 %v418, %v417
      %v478 = vpack.c.b16 %v420, %v419
      %v479 = vpack.c.b16 %v422, %v421
      %v480 = vpack.c.b16 %v424, %v423
      %v481 = vpack.c.b16 %v426, %v425
      %v482 = vpack.c.b16 %v428, %v427
      %v483 = vpack.c.b16 %v430, %v429
      %v484 = vpack.c.b16 %v432, %v431
      %v485 = vpack.c.b16 %v434, %v433
      %v486 = vpack.c.b16 %v436, %v435
      %v487 = vpack.c.b16 %v438, %v437
      %v488 = vpack.c.b16 %v440, %v439
      %v489 = vpack.c.b16 %v442, %v441
      %v490 = vpack.c.b16 %v444, %v443
      %v491 = vpack.c.b16 %v446, %v445
      %v492 = vpack.c.b16 %v448, %v447
      %v493 = vpack.c.b16 %v450, %v449
      %v494 = vpack.c.b16 %v452, %v451
      %v495 = vpack.c.b16 %v454, %v453
      %v496 = vpack.c.b16 %v456, %v455
      %v497 = vpack.c.b16 %v458, %v457
      %v498 = vpack.c.b16 %v460, %v459
      %v499 = vpack.c.b16 %v462, %v461
      %v500 = vpack.c.b16 %v464, %v463
      %v501 = vpack.c.b16 %v466, %v465
      %v502 = vpack.c.b16 %v468, %v467
      %v503 = vpack.c.b16 %v470, %v469
      %v504 = vpack.c.b16 %v472, %v471
      %537 = vmatpush.bf16.msra.mxu0 %v480
      %538 = vmatpush.bf16.msra.mxu0 %v479
      %539 = vmatpush.bf16.msra.mxu0 %v478
      %540 = vmatpush.bf16.msra.mxu0 %v477
      %541 = vmatpush.bf16.msra.mxu0 %v476
      %542 = vmatpush.bf16.msra.mxu0 %v475
      %543 = vmatpush.bf16.msra.mxu0 %v474
      %544 = vmatpush.bf16.msra.mxu0 %v473
      %545 = vmatmul.bf16.gmra.mxu0 %v337
      %v546 = vpop.f32.mrf.mxu0
      %v547 = vadd.f32 0.0, %v546
      %v548 = vpop.f32.mrf.mxu0
      %549 = vdwg.mxu0
      %550 = vmatpush.bf16.msra.mxu0 %v488
      %551 = vmatpush.bf16.msra.mxu0 %v487
      %552 = vmatpush.bf16.msra.mxu0 %v486
      %553 = vmatpush.bf16.msra.mxu0 %v485
      %554 = vmatpush.bf16.msra.mxu0 %v484
      %555 = vmatpush.bf16.msra.mxu0 %v483
      %556 = vmatpush.bf16.msra.mxu0 %v482
      %557 = vmatpush.bf16.msra.mxu0 %v481
      %558 = vmatmul.bf16.gmra.mxu0 %v338
      %v559 = vpop.f32.mrf.mxu0
      %v560 = vadd.f32 %v547, %v559
      %v561 = vpop.f32.mrf.mxu0
      %562 = vdwg.mxu0
      %563 = vmatpush.bf16.msra.mxu0 %v496
      %564 = vmatpush.bf16.msra.mxu0 %v495
      %565 = vmatpush.bf16.msra.mxu0 %v494
      %566 = vmatpush.bf16.msra.mxu0 %v493
      %567 = vmatpush.bf16.msra.mxu0 %v492
      %568 = vmatpush.bf16.msra.mxu0 %v491
      %569 = vmatpush.bf16.msra.mxu0 %v490
      %570 = vmatpush.bf16.msra.mxu0 %v489
      %571 = vmatmul.bf16.gmra.mxu0 %v339
      %v572 = vpop.f32.mrf.mxu0
      %v573 = vadd.f32 %v560, %v572
      %v574 = vpop.f32.mrf.mxu0
      %575 = vdwg.mxu0
      %576 = vmatpush.bf16.msra.mxu0 %v504
      %577 = vmatpush.bf16.msra.mxu0 %v503
      %578 = vmatpush.bf16.msra.mxu0 %v502
      %579 = vmatpush.bf16.msra.mxu0 %v501
      %580 = vmatpush.bf16.msra.mxu0 %v500
      %581 = vmatpush.bf16.msra.mxu0 %v499
      %582 = vmatpush.bf16.msra.mxu0 %v498
      %583 = vmatpush.bf16.msra.mxu0 %v497
      %584 = vmatmul.bf16.gmra.mxu0 %v340
      %v585 = vpop.f32.mrf.mxu0
      %v586 = vadd.f32 %v573, %v585
      %v587 = vpop.f32.mrf.mxu0
      %588 = vdwg.mxu0
      %v589 = vadd.f32 %v264, %v586
      %590 = vst [vmem:[#allocation2] sm:$0xff] %v589
      %p591 = scmp.eq.s32.totalorder %s21, 7
      // Predicated region
      $region37: #{alexnet_forward.23} parent=31 // pred_check
        %p592 = pneg %p591
      $region38: #{alexnet_forward.23} parent=31 // pred_check_branch
        %594 = sbr.rel (%p592) target = $region40
      $region39: #{alexnet_forward.23} parent=31 // pred_region
        %v595 = vld [vmem:[#allocation2] sm:$0xff]
        %v596 = vld [vmem:[%s251] sm:$0x1]
        %v598 = vperm.slane %v596, 0
        %v600 = vadd.f32 %v595, %v598
        %v601 = vxor.u32 %v600, 2147483648
        %v602 = vmul.f32 %v601, 1.442695
        %v603 = vpow.pop %v602
        %v604 = vadd.f32 %v603, 1.0
        %v605 = vrcp.pop %v604
        %v606 = vmul.f32 %v604, %v605
        %v607 = vsub.f32 1.0, %v606
        %v608 = vmul.f32 %v605, %v607
        %v609 = vadd.f32 %v605, %v608
        %vm610 = vweird.f32 %v604
        %vm611 = vweird.f32 %v605
        %vm612 = vmor %vm610, %vm611
        %v613 = vsel %vm612, %v605, %v609
        %v614 = vand.u32 2147483647, %v604
        %vm615 = vcmp.eq.f32.partialorder %v614, 8.507059e+37
        %v616 = vand.u32 %v604, 2147483648
        %v617 = vor.u32 1.1754944e-38, %v616
        %v618 = vsel %vm615, %v617, %v613
        %v619 = vmul.f32 1.0, %v618
        %620 = vst [vmem:[%s258] sm:$0xff] %v619
      $region40: #{alexnet_forward.23} parent=31 // pred_fallthru
        _
      %p621 = scmp.lt.s32.totalorder %s19, 0
      %s622 = scalar_select %p621, %s19, 0
      %p623 = scmp.lt.s32.totalorder %s20, 0
      %s624 = scalar_select %p623, %s20, 0
      %s625 = sadd.s32 %s624, %s622
      %s626 = smul.addr %s625, 8
      %s627 = scalar_lea.vmem %s3, %s626
      // Predicated region
      $region41: #{alexnet_forward.23} parent=31 // pred_check
        %p628 = pneg %p135
      $region42: #{alexnet_forward.23} parent=31 // pred_check_branch
        %630 = sbr.rel (%p628) target = $region44
      $region43: #{alexnet_forward.23} parent=31 // pred_region
        _
      $region44: #{alexnet_forward.23} parent=31 // pred_fallthru
        _
      // Predicated region
      $region45: #{alexnet_forward.23} parent=31 // pred_check
        %p631 = pneg %p135
      $region46: #{alexnet_forward.23} parent=31 // pred_check_branch
        %633 = sbr.rel (%p631) target = $region48
      $region47: #{alexnet_forward.23} parent=31 // pred_region
        %p634 = scmp.lt.s32.totalorder %s19, 0
        %s635 = scalar_select %p634, %s19, 0
        %p636 = scmp.lt.s32.totalorder %s20, 0
        %s637 = scalar_select %p636, %s20, 0
        %s638 = sadd.s32 %s637, %s635
        %s639 = smul.addr %s638, 8
        %s640 = scalar_lea.vmem %s3, %s639
      $region48: #{alexnet_forward.23} parent=31 // pred_fallthru
        _
    $region32: #{alexnet_forward.23} parent=5 // pred_fallthru
      _
    %p641 = scmp.le.s32.totalorder 2, %s9
    // Predicated region
    $region49: #{alexnet_forward.23} parent=5 // pred_check
      %p642 = pneg %p641
    $region50: #{alexnet_forward.23} parent=5 // pred_check_branch
      %644 = sbr.rel (%p642) target = $region52
    $region51: #{alexnet_forward.23} parent=5 // pred_region
      %s645 = ssub.s32 %s9, 2
    $region52: #{alexnet_forward.23} parent=5 // pred_fallthru
      _
  $region6: #{alexnet_forward.23} parent=0 // loop_footer
    %s13 = sadd.s32 1, %s9
  $region7: #{alexnet_forward.23} parent=0 // loop_footer_branch
    %8 = sbr.rel target = $region3
  $region8: #{alexnet_forward.23} parent=0 // loop_exit
    _

</llo_original>
